<compile_context>
chip_gen: v7x
topology: tpu7x:2x2x1
jax: 0.10.0
libtpu: 0.0.40
codegen_flags: <defaults>
</compile_context>

<pallas_src>
import functools

import jax
import jax.numpy as jnp
import numpy as np
from jax.experimental import pallas as pl
from jax.experimental.pallas import tpu as pltpu

EPS = 1e-5


# ---------------------------------------------------------------------------
# helpers
# ---------------------------------------------------------------------------
def _spatial_tile(hw, target):
    """Largest multiple-of-128 divisor of `hw` that is <= target, else hw."""
    cands = [t for t in range(128, min(target, hw) + 1, 128) if hw % t == 0]
    return max(cands) if cands else hw


def _compiler_params(step_bytes, grid_rank):
    # Double-buffered per-step footprint + headroom for compiler temps/spills;
    # capped at 48 MiB so v7x's 64 MiB physical VMEM keeps margin.
    limit = int(min(max(2 * step_bytes + (8 << 20), 24 << 20), 48 << 20))
    return pltpu.CompilerParams(
        dimension_semantics=("parallel",) * grid_rank,
        vmem_limit_bytes=limit,
    )


def _finalize_bn(total_sum, total_sumsq, gamma, beta, count):
    """Per-channel sums -> BN scale/shift (f32, biased variance, eps)."""
    mean = total_sum / count
    var = total_sumsq / count - mean * mean
    inv = jax.lax.rsqrt(var + EPS)
    scale = gamma.reshape(-1) * inv
    shift = beta.reshape(-1) - mean * scale
    return scale, shift


# ---------------------------------------------------------------------------
# kernels
# ---------------------------------------------------------------------------
def _k1_kernel(x_ref, w1t_ref, h_ref, stats_ref):
    """conv1 (1x1): NCHW block in, NHWC bf16 rows out, + BN1 partial stats."""
    _, cin, thw = x_ref.shape
    xb = x_ref[...].reshape(cin, thw)                                  # (Cin, thw)
    ht = jnp.dot(w1t_ref[...], xb, preferred_element_type=jnp.float32)  # (P, thw)
    hq = jnp.transpose(ht).astype(jnp.bfloat16)                         # (thw, P)
    h_ref[...] = hq
    hf = hq.astype(jnp.float32)                   # stats on the stored values
    s1 = jnp.sum(hf, axis=0, keepdims=True)
    s2 = jnp.sum(hf * hf, axis=0, keepdims=True)
    stats_ref[...] = jnp.concatenate([s1, s2], axis=0).reshape(stats_ref.shape)


def _k2_kernel(h1_ref, scale_ref, shift_ref, w2_ref, h2_ref, stats_ref, pad_ref):
    """bn1-apply+relu -> 3x3 conv (9 shifted f32 matmuls) + BN2 partial stats."""
    _, H, W, P = h1_ref.shape
    a = jnp.maximum(
        h1_ref[...].reshape(H, W, P).astype(jnp.float32) * scale_ref[...]
        + shift_ref[...], 0.0)

    # Zero-padded activation staged in VMEM: zero only the 1-pixel border,
    # write the interior exactly once.
    zr = jnp.zeros((1, W + 2, P), jnp.float32)
    zc = jnp.zeros((H, 1, P), jnp.float32)
    pad_ref[0:1, :, :] = zr
    pad_ref[H + 1:H + 2, :, :] = zr
    pad_ref[1:H + 1, 0:1, :] = zc
    pad_ref[1:H + 1, W + 1:W + 2, :] = zc
    pad_ref[1:H + 1, 1:W + 1, :] = a

    # 3x3 conv as 9 direct matmuls on contiguous padded slices (no im2col
    # concatenates to materialise).
    acc = jnp.zeros((H * W, P), jnp.float32)
    for ky in range(3):
        for kx in range(3):
            slab = pad_ref[ky:ky + H, kx:kx + W, :].reshape(H * W, P)
            acc = acc + jnp.dot(slab, w2_ref[ky, kx],
                                preferred_element_type=jnp.float32)

    hq = acc.astype(jnp.bfloat16)
    h2_ref[...] = hq.reshape(h2_ref.shape)
    hf = hq.astype(jnp.float32)
    s1 = jnp.sum(hf, axis=0, keepdims=True)
    s2 = jnp.sum(hf * hf, axis=0, keepdims=True)
    stats_ref[...] = jnp.concatenate([s1, s2], axis=0).reshape(stats_ref.shape)


def _k3_kernel(h2_ref, scale_ref, shift_ref, w3t_ref, h3_ref, stats_ref):
    """bn2-apply+relu -> conv3 (1x1 expand), channels-first bf16 out + stats."""
    a = jnp.maximum(
        h2_ref[...].astype(jnp.float32) * scale_ref[...] + shift_ref[...], 0.0)
    at = jnp.transpose(a)                                              # (P, thw)
    h3t = jnp.dot(w3t_ref[...], at, preferred_element_type=jnp.float32)  # (Cout, thw)
    hq = h3t.astype(jnp.bfloat16)
    h3_ref[...] = hq.reshape(h3_ref.shape)
    hf = hq.astype(jnp.float32)
    s1 = jnp.sum(hf, axis=1, keepdims=True)
    s2 = jnp.sum(hf * hf, axis=1, keepdims=True)
    stats_ref[...] = jnp.concatenate([s1, s2], axis=1).reshape(stats_ref.shape)


def _k4_kernel(h3_ref, x_ref, scale_ref, shift_ref, o_ref):
    """bn3-apply + identity residual (NCHW) + relu, NCHW f32 out."""
    _, cout, thw = h3_ref.shape
    y = (h3_ref[...].reshape(cout, thw).astype(jnp.float32) * scale_ref[...]
         + shift_ref[...])
    o = jnp.maximum(y + x_ref[...].reshape(cout, thw), 0.0)
    o_ref[...] = o.reshape(o_ref.shape)


# ---------------------------------------------------------------------------
# pallas_call wrappers
# ---------------------------------------------------------------------------
def _k1_conv1x1(x3, w1t, thw):
    N, Cin, HW = x3.shape
    P = w1t.shape[0]
    T = HW // thw
    R = N * HW
    step = Cin * thw * 4 + P * Cin * 4 + thw * P * 2 + P * thw * 4 + 2 * P * 4
    return pl.pallas_call(
        _k1_kernel,
        grid=(N, T),
        in_specs=[pl.BlockSpec((1, Cin, thw), lambda n, j: (n, 0, j)),
                  pl.BlockSpec((P, Cin), lambda n, j: (0, 0))],
        out_specs=[pl.BlockSpec((thw, P), lambda n, j: (n * T + j, 0)),
                   pl.BlockSpec((1, 2, P), lambda n, j: (n * T + j, 0, 0))],
        out_shape=[jax.ShapeDtypeStruct((R, P), jnp.bfloat16),
                   jax.ShapeDtypeStruct((N * T, 2, P), jnp.float32)],
        compiler_params=_compiler_params(step, 2),
    )(x3, w1t)


def _k2_conv3x3(h1, scale, shift, w2):
    N, H, W, P = h1.shape
    step = (2 * H * W * P * 2                    # h1 in + h2 out (bf16)
            + (H + 2) * (W + 2) * P * 4          # padded scratch (f32)
            + H * W * P * 4                      # f32 accumulator
            + 9 * P * P * 4 + 4 * P * 4)
    return pl.pallas_call(
        _k2_kernel,
        grid=(N,),
        in_specs=[pl.BlockSpec((1, H, W, P), lambda n: (n, 0, 0, 0)),
                  pl.BlockSpec((1, P), lambda n: (0, 0)),
                  pl.BlockSpec((1, P), lambda n: (0, 0)),
                  pl.BlockSpec((3, 3, P, P), lambda n: (0, 0, 0, 0))],
        out_specs=[pl.BlockSpec((1, H, W, P), lambda n: (n, 0, 0, 0)),
                   pl.BlockSpec((1, 2, P), lambda n: (n, 0, 0))],
        out_shape=[jax.ShapeDtypeStruct((N, H, W, P), jnp.bfloat16),
                   jax.ShapeDtypeStruct((N, 2, P), jnp.float32)],
        scratch_shapes=[pltpu.VMEM((H + 2, W + 2, P), jnp.float32)],
        compiler_params=_compiler_params(step, 1),
    )(h1, scale, shift, w2)


def _k3_conv1x1(h2_2d, scale, shift, w3t, thw, N, HW):
    R, P = h2_2d.shape
    Cout = w3t.shape[0]
    T = HW // thw
    step = thw * P * 2 + Cout * P * 4 + Cout * thw * (2 + 4) + Cout * 2 * 4
    return pl.pallas_call(
        _k3_kernel,
        grid=(N, T),
        in_specs=[pl.BlockSpec((thw, P), lambda n, j: (n * T + j, 0)),
                  pl.BlockSpec((1, P), lambda n, j: (0, 0)),
                  pl.BlockSpec((1, P), lambda n, j: (0, 0)),
                  pl.BlockSpec((Cout, P), lambda n, j: (0, 0))],
        out_specs=[pl.BlockSpec((1, Cout, thw), lambda n, j: (n, 0, j)),
                   pl.BlockSpec((1, Cout, 2), lambda n, j: (n * T + j, 0, 0))],
        out_shape=[jax.ShapeDtypeStruct((N, Cout, HW), jnp.bfloat16),
                   jax.ShapeDtypeStruct((N * T, Cout, 2), jnp.float32)],
        compiler_params=_compiler_params(step, 2),
    )(h2_2d, scale, shift, w3t)


def _k4_bn_add_relu(h3, x3, scale, shift, thw):
    N, Cout, HW = h3.shape
    T = HW // thw
    step = Cout * thw * (2 + 4 + 4) + 2 * Cout * 4
    return pl.pallas_call(
        _k4_kernel,
        grid=(N, T),
        in_specs=[pl.BlockSpec((1, Cout, thw), lambda n, j: (n, 0, j)),
                  pl.BlockSpec((1, Cout, thw), lambda n, j: (n, 0, j)),
                  pl.BlockSpec((Cout, 1), lambda n, j: (0, 0)),
                  pl.BlockSpec((Cout, 1), lambda n, j: (0, 0))],
        out_specs=pl.BlockSpec((1, Cout, thw), lambda n, j: (n, 0, j)),
        out_shape=jax.ShapeDtypeStruct((N, Cout, HW), jnp.float32),
        compiler_params=_compiler_params(step, 2),
    )(h3, x3, scale, shift)


# ---------------------------------------------------------------------------
# top-level forward
# ---------------------------------------------------------------------------
@functools.partial(jax.jit, static_argnames=("spatial_block",))
def bottleneck_forward(x_nchw, params, *, spatial_block=2048):
    """Fused Bottleneck forward. x_nchw: (N, C, H, W) float32, NCHW in/out."""
    w1, g1, b1, w2, g2, b2, w3, g3, b3 = params
    N, Cin, H, W = x_nchw.shape
    P = w1.shape[1]
    Cout = w3.shape[1]
    assert Cout == Cin, "identity shortcut requires inplanes == planes * 4"
    HW = H * W
    R = N * HW
    thw = _spatial_tile(HW, spatial_block)
    T = HW // thw

    x3 = x_nchw.reshape(N, Cin, HW).astype(jnp.float32)   # free reshape, no transpose
    # f32 matmul operands (f32 accumulation): no bf16-operand dots anywhere.
    w1t = jnp.transpose(w1).astype(jnp.float32)            # (P, Cin)
    w2m = w2.astype(jnp.float32)                            # (3, 3, P, P) HWIO
    w3t = jnp.transpose(w3).astype(jnp.float32)             # (Cout, P)

    # K1: conv1 + BN1 partial stats (grid over images x spatial tiles).
    h1, st1 = _k1_conv1x1(x3, w1t, thw)
    t1 = jnp.sum(st1, axis=0)
    sc1, sh1 = _finalize_bn(t1[0], t1[1], g1, b1, R)

    # K2: bn1+relu -> conv2 (3x3) + BN2 partial stats (grid over images).
    h2, st2 = _k2_conv3x3(h1.reshape(N, H, W, P),
                          sc1.reshape(1, P), sh1.reshape(1, P), w2m)
    t2 = jnp.sum(st2, axis=0)
    sc2, sh2 = _finalize_bn(t2[0], t2[1], g2, b2, R)

    # K3: bn2+relu -> conv3 (1x1 expand), channels-first output + BN3 stats.
    h3, st3 = _k3_conv1x1(h2.reshape(R, P), sc2.reshape(1, P),
                          sh2.reshape(1, P), w3t, thw, N, HW)
    t3 = jnp.sum(st3, axis=0)                               # (Cout, 2)
    sc3, sh3 = _finalize_bn(t3[:, 0], t3[:, 1], g3, b3, R)

    # K4: bn3 + identity residual (NCHW x re-read) + relu, NCHW f32 out.
    out = _k4_bn_add_relu(h3, x3, sc3.reshape(Cout, 1), sh3.reshape(Cout, 1), thw)
    return out.reshape(N, Cout, H, W)


# ---------------------------------------------------------------------------
# pure-JAX reference (NCHW). Emulates the kernel's bf16 intermediate storage
# (conv outputs rounded to bf16 before BN stats/apply) so the comparison is a
# tight structural check; all matmuls are f32.
# ---------------------------------------------------------------------------
def ref_forward(x, params):
    w1, g1, b1, w2, g2, b2, w3, g3, b3 = params

    def q(h):   # bf16 intermediate storage emulation
        return h.astype(jnp.bfloat16).astype(jnp.float32)

    def bn(h, g, bta, relu=True):
        mean = jnp.mean(h, axis=(0, 2, 3), keepdims=True)
        var = jnp.mean(h * h, axis=(0, 2, 3), keepdims=True) - mean * mean
        y = (h - mean) * jax.lax.rsqrt(var + EPS) * g.reshape(1, -1, 1, 1) \
            + bta.reshape(1, -1, 1, 1)
        return jnp.maximum(y, 0.0) if relu else y

    h = q(jnp.einsum('nchw,cp->nphw', x, w1, preferred_element_type=jnp.float32))
    h = bn(h, g1, b1)
    h = q(jax.lax.conv_general_dilated(
        h, w2, window_strides=(1, 1), padding=((1, 1), (1, 1)),
        dimension_numbers=('NCHW', 'HWIO', 'NCHW'),
        preferred_element_type=jnp.float32))
    h = bn(h, g2, b2)
    h = q(jnp.einsum('nchw,cp->nphw', h, w3, preferred_element_type=jnp.float32))
    h = bn(h, g3, b3, relu=False)
    return jnp.maximum(h + x, 0.0)


if __name__ == "__main__":
    key = jax.random.PRNGKey(0)
    N, H, W = 2, 16, 16
    planes = 64
    inplanes = planes * 4      # identity shortcut: downsample=None, stride=1

    ks = jax.random.split(key, 10)
    x = jax.random.normal(ks[0], (N, inplanes, H, W), jnp.float32)
    # Weight layouts (PyTorch -> here):
    #   conv1.weight (P, Cin, 1, 1)        -> w1 (Cin, P)
    #   conv2.weight (P, P, 3, 3)   (OIHW) -> w2 (3, 3, P, P)  (HWIO)
    #   conv3.weight (Cout, P, 1, 1)       -> w3 (P, Cout)
    w1 = 0.1 * jax.random.normal(ks[1], (inplanes, planes), jnp.float32)
    w2 = 0.1 * jax.random.normal(ks[2], (3, 3, planes, planes), jnp.float32)
    w3 = 0.1 * jax.random.normal(ks[3], (planes, planes * 4), jnp.float32)
    g1 = 1.0 + 0.1 * jax.random.normal(ks[4], (1, planes), jnp.float32)
    b1 = 0.1 * jax.random.normal(ks[5], (1, planes), jnp.float32)
    g2 = 1.0 + 0.1 * jax.random.normal(ks[6], (1, planes), jnp.float32)
    b2 = 0.1 * jax.random.normal(ks[7], (1, planes), jnp.float32)
    g3 = 1.0 + 0.1 * jax.random.normal(ks[8], (1, planes * 4), jnp.float32)
    b3 = 0.1 * jax.random.normal(ks[9], (1, planes * 4), jnp.float32)
    params = (w1, g1, b1, w2, g2, b2, w3, g3, b3)

    # spatial_block=128 so the toy image (H*W = 256) exercises a multi-tile
    # grid; the default (2048) is sized for real ResNet activation maps.
    out = jax.block_until_ready(bottleneck_forward(x, params, spatial_block=128))
    ref = jax.block_until_ready(ref_forward(x, params))
    # Tolerance covers occasional 1-ulp bf16 rounding divergence between the
    # kernel and the bf16-storage-emulating reference (structural bugs give
    # O(1) errors).
    np.testing.assert_allclose(np.asarray(out), np.asarray(ref),
                               rtol=2e-2, atol=2e-2)
    print("KERNEL_OK")
</pallas_src>

<mosaic_0001>
module attributes {stable_mosaic.version = 11 : i64} {
  func.func @_k1_kernel(%arg0: i32, %arg1: i32, %arg2: memref<1x256x128xf32, #tpu.memory_space<vmem>>, %arg3: memref<64x256xf32, #tpu.memory_space<vmem>>, %arg4: memref<128x64xbf16, #tpu.memory_space<vmem>>, %arg5: memref<1x2x64xf32, #tpu.memory_space<vmem>>) attributes {dimension_semantics = [#tpu.dimension_semantics<parallel>, #tpu.dimension_semantics<parallel>], iteration_bounds = array<i64: 2, 2>, scalar_prefetch = 0 : i64, scratch_operands = 0 : i64, tpu.core_type = #tpu.core_type<tc>, window_params = [{transform_indices = @transform_0, window_bounds = array<i64: 1, 256, 128>}, {pipeline_mode = #tpu.pipeline_mode<synchronous>, transform_indices = @transform_1, window_bounds = array<i64: 64, 256>}, {transform_indices = @transform_2, window_bounds = array<i64: 128, 64>}, {transform_indices = @transform_3, window_bounds = array<i64: 1, 2, 64>}]} {
    %c0 = arith.constant 0 : index
    %c0_0 = arith.constant 0 : index
    %c0_1 = arith.constant 0 : index
    %0 = vector.load %arg2[%c0, %c0_0, %c0_1] : memref<1x256x128xf32, #tpu.memory_space<vmem>>, vector<1x256x128xf32>
    %1 = vector.shape_cast %0 : vector<1x256x128xf32> to vector<256x128xf32>
    %c0_2 = arith.constant 0 : index
    %c0_3 = arith.constant 0 : index
    %2 = vector.load %arg3[%c0_2, %c0_3] : memref<64x256xf32, #tpu.memory_space<vmem>>, vector<64x256xf32>
    %cst = arith.constant dense<0.000000e+00> : vector<64x128xf32>
    %3 = tpu.matmul %2, %1, %cst {dimension_numbers = #tpu.dot_dimension_numbers<[1], [0], [0], [1], [0, 0, 1, 1], [], []>} : vector<64x256xf32>, vector<256x128xf32>, vector<64x128xf32> -> vector<64x128xf32>
    %4 = tpu.transpose %3, [1, 0] : vector<64x128xf32> -> vector<128x64xf32>
    %5 = arith.truncf %4 : vector<128x64xf32> to vector<128x64xbf16>
    %c0_4 = arith.constant 0 : index
    %c0_5 = arith.constant 0 : index
    %6 = vector.load %arg4[%c0_4, %c0_5] : memref<128x64xbf16, #tpu.memory_space<vmem>>, vector<128x64xbf16>
    tpu.vector_store %arg4[%c0_4, %c0_5], %5 {strides = array<i32>} : memref<128x64xbf16, #tpu.memory_space<vmem>>, vector<128x64xbf16>,
    %7 = arith.extf %5 : vector<128x64xbf16> to vector<128x64xf32>
    %cst_6 = arith.constant dense<0.000000e+00> : vector<64xf32>
    %8 = vector.multi_reduction <add>, %7, %cst_6 [0] : vector<128x64xf32> to vector<64xf32>
    %9 = vector.shape_cast %8 : vector<64xf32> to vector<1x64xf32>
    %10 = arith.mulf %7, %7 : vector<128x64xf32>
    %cst_7 = arith.constant dense<0.000000e+00> : vector<64xf32>
    %11 = vector.multi_reduction <add>, %10, %cst_7 [0] : vector<128x64xf32> to vector<64xf32>
    %12 = vector.shape_cast %11 : vector<64xf32> to vector<1x64xf32>
    %13 = tpu.concatenate %9, %12 in 0 : vector<1x64xf32>, vector<1x64xf32> -> vector<2x64xf32>
    %14 = vector.shape_cast %13 : vector<2x64xf32> to vector<1x2x64xf32>
    %c0_8 = arith.constant 0 : index
    %c0_9 = arith.constant 0 : index
    %c0_10 = arith.constant 0 : index
    %15 = vector.load %arg5[%c0_8, %c0_9, %c0_10] : memref<1x2x64xf32, #tpu.memory_space<vmem>>, vector<1x2x64xf32>
    tpu.vector_store %arg5[%c0_8, %c0_9, %c0_10], %14 {strides = array<i32>} : memref<1x2x64xf32, #tpu.memory_space<vmem>>, vector<1x2x64xf32>,
    return
  }
  func.func @transform_0(%arg0: i32, %arg1: i32) -> (i32, i32, i32) {
    %c0_i32 = arith.constant 0 : i32
    %c0_i32_0 = arith.constant 0 : i32
    return %arg0, %c0_i32, %arg1 : i32, i32, i32
  }
  func.func @transform_1(%arg0: i32, %arg1: i32) -> (i32, i32) {
    %c0_i32 = arith.constant 0 : i32
    %c0_i32_0 = arith.constant 0 : i32
    %c0_i32_1 = arith.constant 0 : i32
    return %c0_i32, %c0_i32_0 : i32, i32
  }
  func.func @transform_2(%arg0: i32, %arg1: i32) -> (i32, i32) {
    %c2_i32 = arith.constant 2 : i32
    %0 = arith.muli %arg0, %c2_i32 : i32
    %1 = arith.addi %0, %arg1 : i32
    %c0_i32 = arith.constant 0 : i32
    %c0_i32_0 = arith.constant 0 : i32
    return %1, %c0_i32 : i32, i32
  }
  func.func @transform_3(%arg0: i32, %arg1: i32) -> (i32, i32, i32) {
    %c2_i32 = arith.constant 2 : i32
    %0 = arith.muli %arg0, %c2_i32 : i32
    %1 = arith.addi %0, %arg1 : i32
    %c0_i32 = arith.constant 0 : i32
    %c0_i32_0 = arith.constant 0 : i32
    %c0_i32_1 = arith.constant 0 : i32
    return %1, %c0_i32, %c0_i32_0 : i32, i32, i32
  }
}

module attributes {stable_mosaic.version = 11 : i64} {
  func.func @_k2_kernel(%arg0: i32, %arg1: memref<1x16x16x64xbf16, #tpu.memory_space<vmem>>, %arg2: memref<1x64xf32, #tpu.memory_space<vmem>>, %arg3: memref<1x64xf32, #tpu.memory_space<vmem>>, %arg4: memref<3x3x64x64xf32, #tpu.memory_space<vmem>>, %arg5: memref<1x16x16x64xbf16, #tpu.memory_space<vmem>>, %arg6: memref<1x2x64xf32, #tpu.memory_space<vmem>>, %arg7: memref<18x18x64xf32, #tpu.memory_space<vmem>>) attributes {dimension_semantics = [#tpu.dimension_semantics<parallel>], iteration_bounds = array<i64: 2>, scalar_prefetch = 0 : i64, scratch_operands = 1 : i64, tpu.core_type = #tpu.core_type<tc>, window_params = [{transform_indices = @transform_0, window_bounds = array<i64: 1, 16, 16, 64>}, {pipeline_mode = #tpu.pipeline_mode<synchronous>, transform_indices = @transform_1, window_bounds = array<i64: 1, 64>}, {pipeline_mode = #tpu.pipeline_mode<synchronous>, transform_indices = @transform_2, window_bounds = array<i64: 1, 64>}, {pipeline_mode = #tpu.pipeline_mode<synchronous>, transform_indices = @transform_3, window_bounds = array<i64: 3, 3, 64, 64>}, {transform_indices = @transform_4, window_bounds = array<i64: 1, 16, 16, 64>}, {transform_indices = @transform_5, window_bounds = array<i64: 1, 2, 64>}]} {
    %c0 = arith.constant 0 : index
    %c0_0 = arith.constant 0 : index
    %c0_1 = arith.constant 0 : index
    %c0_2 = arith.constant 0 : index
    %0 = vector.load %arg1[%c0, %c0_0, %c0_1, %c0_2] : memref<1x16x16x64xbf16, #tpu.memory_space<vmem>>, vector<1x16x16x64xbf16>
    %1 = vector.shape_cast %0 : vector<1x16x16x64xbf16> to vector<16x16x64xbf16>
    %2 = arith.extf %1 : vector<16x16x64xbf16> to vector<16x16x64xf32>
    %c0_3 = arith.constant 0 : index
    %c0_4 = arith.constant 0 : index
    %3 = vector.load %arg2[%c0_3, %c0_4] : memref<1x64xf32, #tpu.memory_space<vmem>>, vector<1x64xf32>
    %4 = vector.shape_cast %3 : vector<1x64xf32> to vector<1x1x64xf32>
    %5 = vector.broadcast %4 : vector<1x1x64xf32> to vector<16x16x64xf32>
    %6 = arith.mulf %2, %5 : vector<16x16x64xf32>
    %c0_5 = arith.constant 0 : index
    %c0_6 = arith.constant 0 : index
    %7 = vector.load %arg3[%c0_5, %c0_6] : memref<1x64xf32, #tpu.memory_space<vmem>>, vector<1x64xf32>
    %8 = vector.shape_cast %7 : vector<1x64xf32> to vector<1x1x64xf32>
    %9 = vector.broadcast %8 : vector<1x1x64xf32> to vector<16x16x64xf32>
    %10 = arith.addf %6, %9 : vector<16x16x64xf32>
    %cst = arith.constant 0.000000e+00 : f32
    %11 = vector.broadcast %cst : f32 to vector<16x16x64xf32>
    %12 = arith.maximumf %10, %11 : vector<16x16x64xf32>
    %cst_7 = arith.constant 0.000000e+00 : f32
    %13 = vector.broadcast %cst_7 : f32 to vector<1x18x64xf32>
    %cst_8 = arith.constant 0.000000e+00 : f32
    %14 = vector.broadcast %cst_8 : f32 to vector<16x1x64xf32>
    %c0_9 = arith.constant 0 : index
    %c0_10 = arith.constant 0 : index
    %c0_11 = arith.constant 0 : index
    %15 = vector.load %arg7[%c0_9, %c0_10, %c0_11] : memref<18x18x64xf32, #tpu.memory_space<vmem>>, vector<1x18x64xf32>
    tpu.vector_store %arg7[%c0_9, %c0_10, %c0_11], %13 {strides = array<i32>} : memref<18x18x64xf32, #tpu.memory_space<vmem>>, vector<1x18x64xf32>,
    %c17 = arith.constant 17 : index
    %c0_12 = arith.constant 0 : index
    %c0_13 = arith.constant 0 : index
    %16 = vector.load %arg7[%c17, %c0_12, %c0_13] : memref<18x18x64xf32, #tpu.memory_space<vmem>>, vector<1x18x64xf32>
    tpu.vector_store %arg7[%c17, %c0_12, %c0_13], %13 {strides = array<i32>} : memref<18x18x64xf32, #tpu.memory_space<vmem>>, vector<1x18x64xf32>,
    %c1 = arith.constant 1 : index
    %c0_14 = arith.constant 0 : index
    %c0_15 = arith.constant 0 : index
    %17 = vector.load %arg7[%c1, %c0_14, %c0_15] : memref<18x18x64xf32, #tpu.memory_space<vmem>>, vector<16x1x64xf32>
    tpu.vector_store %arg7[%c1, %c0_14, %c0_15], %14 {strides = array<i32>} : memref<18x18x64xf32, #tpu.memory_space<vmem>>, vector<16x1x64xf32>,
    %c1_16 = arith.constant 1 : index
    %c17_17 = arith.constant 17 : index
    %c0_18 = arith.constant 0 : index
    %18 = vector.load %arg7[%c1_16, %c17_17, %c0_18] : memref<18x18x64xf32, #tpu.memory_space<vmem>>, vector<16x1x64xf32>
    tpu.vector_store %arg7[%c1_16, %c17_17, %c0_18], %14 {strides = array<i32>} : memref<18x18x64xf32, #tpu.memory_space<vmem>>, vector<16x1x64xf32>,
    %c1_19 = arith.constant 1 : index
    %c1_20 = arith.constant 1 : index
    %c0_21 = arith.constant 0 : index
    %19 = vector.load %arg7[%c1_19, %c1_20, %c0_21] : memref<18x18x64xf32, #tpu.memory_space<vmem>>, vector<16x16x64xf32>
    tpu.vector_store %arg7[%c1_19, %c1_20, %c0_21], %12 {strides = array<i32>} : memref<18x18x64xf32, #tpu.memory_space<vmem>>, vector<16x16x64xf32>,
    %cst_22 = arith.constant 0.000000e+00 : f32
    %20 = vector.broadcast %cst_22 : f32 to vector<256x64xf32>
    %c0_23 = arith.constant 0 : index
    %c0_24 = arith.constant 0 : index
    %c0_25 = arith.constant 0 : index
    %21 = vector.load %arg7[%c0_23, %c0_24, %c0_25] : memref<18x18x64xf32, #tpu.memory_space<vmem>>, vector<16x16x64xf32>
    %22 = vector.shape_cast %21 : vector<16x16x64xf32> to vector<256x64xf32>
    %c0_26 = arith.constant 0 : index
    %c0_27 = arith.constant 0 : index
    %c0_28 = arith.constant 0 : index
    %c0_29 = arith.constant 0 : index
    %23 = vector.load %arg4[%c0_26, %c0_27, %c0_28, %c0_29] : memref<3x3x64x64xf32, #tpu.memory_space<vmem>>, vector<1x1x64x64xf32>
    %24 = vector.shape_cast %23 : vector<1x1x64x64xf32> to vector<64x64xf32>
    %cst_30 = arith.constant dense<0.000000e+00> : vector<256x64xf32>
    %25 = tpu.matmul %22, %24, %cst_30 {dimension_numbers = #tpu.dot_dimension_numbers<[1], [0], [0], [1], [0, 0, 1, 1], [], []>} : vector<256x64xf32>, vector<64x64xf32>, vector<256x64xf32> -> vector<256x64xf32>
    %26 = arith.addf %20, %25 : vector<256x64xf32>
    %c0_31 = arith.constant 0 : index
    %c1_32 = arith.constant 1 : index
    %c0_33 = arith.constant 0 : index
    %27 = vector.load %arg7[%c0_31, %c1_32, %c0_33] : memref<18x18x64xf32, #tpu.memory_space<vmem>>, vector<16x16x64xf32>
    %28 = vector.shape_cast %27 : vector<16x16x64xf32> to vector<256x64xf32>
    %c0_34 = arith.constant 0 : index
    %c1_35 = arith.constant 1 : index
    %c0_36 = arith.constant 0 : index
    %c0_37 = arith.constant 0 : index
    %29 = vector.load %arg4[%c0_34, %c1_35, %c0_36, %c0_37] : memref<3x3x64x64xf32, #tpu.memory_space<vmem>>, vector<1x1x64x64xf32>
    %30 = vector.shape_cast %29 : vector<1x1x64x64xf32> to vector<64x64xf32>
    %cst_38 = arith.constant dense<0.000000e+00> : vector<256x64xf32>
    %31 = tpu.matmul %28, %30, %cst_38 {dimension_numbers = #tpu.dot_dimension_numbers<[1], [0], [0], [1], [0, 0, 1, 1], [], []>} : vector<256x64xf32>, vector<64x64xf32>, vector<256x64xf32> -> vector<256x64xf32>
    %32 = arith.addf %26, %31 : vector<256x64xf32>
    %c0_39 = arith.constant 0 : index
    %c2 = arith.constant 2 : index
    %c0_40 = arith.constant 0 : index
    %33 = vector.load %arg7[%c0_39, %c2, %c0_40] : memref<18x18x64xf32, #tpu.memory_space<vmem>>, vector<16x16x64xf32>
    %34 = vector.shape_cast %33 : vector<16x16x64xf32> to vector<256x64xf32>
    %c0_41 = arith.constant 0 : index
    %c2_42 = arith.constant 2 : index
    %c0_43 = arith.constant 0 : index
    %c0_44 = arith.constant 0 : index
    %35 = vector.load %arg4[%c0_41, %c2_42, %c0_43, %c0_44] : memref<3x3x64x64xf32, #tpu.memory_space<vmem>>, vector<1x1x64x64xf32>
    %36 = vector.shape_cast %35 : vector<1x1x64x64xf32> to vector<64x64xf32>
    %cst_45 = arith.constant dense<0.000000e+00> : vector<256x64xf32>
    %37 = tpu.matmul %34, %36, %cst_45 {dimension_numbers = #tpu.dot_dimension_numbers<[1], [0], [0], [1], [0, 0, 1, 1], [], []>} : vector<256x64xf32>, vector<64x64xf32>, vector<256x64xf32> -> vector<256x64xf32>
    %38 = arith.addf %32, %37 : vector<256x64xf32>
    %c1_46 = arith.constant 1 : index
    %c0_47 = arith.constant 0 : index
    %c0_48 = arith.constant 0 : index
    %39 = vector.load %arg7[%c1_46, %c0_47, %c0_48] : memref<18x18x64xf32, #tpu.memory_space<vmem>>, vector<16x16x64xf32>
    %40 = vector.shape_cast %39 : vector<16x16x64xf32> to vector<256x64xf32>
    %c1_49 = arith.constant 1 : index
    %c0_50 = arith.constant 0 : index
    %c0_51 = arith.constant 0 : index
    %c0_52 = arith.constant 0 : index
    %41 = vector.load %arg4[%c1_49, %c0_50, %c0_51, %c0_52] : memref<3x3x64x64xf32, #tpu.memory_space<vmem>>, vector<1x1x64x64xf32>
    %42 = vector.shape_cast %41 : vector<1x1x64x64xf32> to vector<64x64xf32>
    %cst_53 = arith.constant dense<0.000000e+00> : vector<256x64xf32>
    %43 = tpu.matmul %40, %42, %cst_53 {dimension_numbers = #tpu.dot_dimension_numbers<[1], [0], [0], [1], [0, 0, 1, 1], [], []>} : vector<256x64xf32>, vector<64x64xf32>, vector<256x64xf32> -> vector<256x64xf32>
    %44 = arith.addf %38, %43 : vector<256x64xf32>
    %c1_54 = arith.constant 1 : index
    %c1_55 = arith.constant 1 : index
    %c0_56 = arith.constant 0 : index
    %45 = vector.load %arg7[%c1_54, %c1_55, %c0_56] : memref<18x18x64xf32, #tpu.memory_space<vmem>>, vector<16x16x64xf32>
    %46 = vector.shape_cast %45 : vector<16x16x64xf32> to vector<256x64xf32>
    %c1_57 = arith.constant 1 : index
    %c1_58 = arith.constant 1 : index
    %c0_59 = arith.constant 0 : index
    %c0_60 = arith.constant 0 : index
    %47 = vector.load %arg4[%c1_57, %c1_58, %c0_59, %c0_60] : memref<3x3x64x64xf32, #tpu.memory_space<vmem>>, vector<1x1x64x64xf32>
    %48 = vector.shape_cast %47 : vector<1x1x64x64xf32> to vector<64x64xf32>
    %cst_61 = arith.constant dense<0.000000e+00> : vector<256x64xf32>
    %49 = tpu.matmul %46, %48, %cst_61 {dimension_numbers = #tpu.dot_dimension_numbers<[1], [0], [0], [1], [0, 0, 1, 1], [], []>} : vector<256x64xf32>, vector<64x64xf32>, vector<256x64xf32> -> vector<256x64xf32>
    %50 = arith.addf %44, %49 : vector<256x64xf32>
    %c1_62 = arith.constant 1 : index
    %c2_63 = arith.constant 2 : index
    %c0_64 = arith.constant 0 : index
    %51 = vector.load %arg7[%c1_62, %c2_63, %c0_64] : memref<18x18x64xf32, #tpu.memory_space<vmem>>, vector<16x16x64xf32>
    %52 = vector.shape_cast %51 : vector<16x16x64xf32> to vector<256x64xf32>
    %c1_65 = arith.constant 1 : index
    %c2_66 = arith.constant 2 : index
    %c0_67 = arith.constant 0 : index
    %c0_68 = arith.constant 0 : index
    %53 = vector.load %arg4[%c1_65, %c2_66, %c0_67, %c0_68] : memref<3x3x64x64xf32, #tpu.memory_space<vmem>>, vector<1x1x64x64xf32>
    %54 = vector.shape_cast %53 : vector<1x1x64x64xf32> to vector<64x64xf32>
    %cst_69 = arith.constant dense<0.000000e+00> : vector<256x64xf32>
    %55 = tpu.matmul %52, %54, %cst_69 {dimension_numbers = #tpu.dot_dimension_numbers<[1], [0], [0], [1], [0, 0, 1, 1], [], []>} : vector<256x64xf32>, vector<64x64xf32>, vector<256x64xf32> -> vector<256x64xf32>
    %56 = arith.addf %50, %55 : vector<256x64xf32>
    %c2_70 = arith.constant 2 : index
    %c0_71 = arith.constant 0 : index
    %c0_72 = arith.constant 0 : index
    %57 = vector.load %arg7[%c2_70, %c0_71, %c0_72] : memref<18x18x64xf32, #tpu.memory_space<vmem>>, vector<16x16x64xf32>
    %58 = vector.shape_cast %57 : vector<16x16x64xf32> to vector<256x64xf32>
    %c2_73 = arith.constant 2 : index
    %c0_74 = arith.constant 0 : index
    %c0_75 = arith.constant 0 : index
    %c0_76 = arith.constant 0 : index
    %59 = vector.load %arg4[%c2_73, %c0_74, %c0_75, %c0_76] : memref<3x3x64x64xf32, #tpu.memory_space<vmem>>, vector<1x1x64x64xf32>
    %60 = vector.shape_cast %59 : vector<1x1x64x64xf32> to vector<64x64xf32>
    %cst_77 = arith.constant dense<0.000000e+00> : vector<256x64xf32>
    %61 = tpu.matmul %58, %60, %cst_77 {dimension_numbers = #tpu.dot_dimension_numbers<[1], [0], [0], [1], [0, 0, 1, 1], [], []>} : vector<256x64xf32>, vector<64x64xf32>, vector<256x64xf32> -> vector<256x64xf32>
    %62 = arith.addf %56, %61 : vector<256x64xf32>
    %c2_78 = arith.constant 2 : index
    %c1_79 = arith.constant 1 : index
    %c0_80 = arith.constant 0 : index
    %63 = vector.load %arg7[%c2_78, %c1_79, %c0_80] : memref<18x18x64xf32, #tpu.memory_space<vmem>>, vector<16x16x64xf32>
    %64 = vector.shape_cast %63 : vector<16x16x64xf32> to vector<256x64xf32>
    %c2_81 = arith.constant 2 : index
    %c1_82 = arith.constant 1 : index
    %c0_83 = arith.constant 0 : index
    %c0_84 = arith.constant 0 : index
    %65 = vector.load %arg4[%c2_81, %c1_82, %c0_83, %c0_84] : memref<3x3x64x64xf32, #tpu.memory_space<vmem>>, vector<1x1x64x64xf32>
    %66 = vector.shape_cast %65 : vector<1x1x64x64xf32> to vector<64x64xf32>
    %cst_85 = arith.constant dense<0.000000e+00> : vector<256x64xf32>
    %67 = tpu.matmul %64, %66, %cst_85 {dimension_numbers = #tpu.dot_dimension_numbers<[1], [0], [0], [1], [0, 0, 1, 1], [], []>} : vector<256x64xf32>, vector<64x64xf32>, vector<256x64xf32> -> vector<256x64xf32>
    %68 = arith.addf %62, %67 : vector<256x64xf32>
    %c2_86 = arith.constant 2 : index
    %c2_87 = arith.constant 2 : index
    %c0_88 = arith.constant 0 : index
    %69 = vector.load %arg7[%c2_86, %c2_87, %c0_88] : memref<18x18x64xf32, #tpu.memory_space<vmem>>, vector<16x16x64xf32>
    %70 = vector.shape_cast %69 : vector<16x16x64xf32> to vector<256x64xf32>
    %c2_89 = arith.constant 2 : index
    %c2_90 = arith.constant 2 : index
    %c0_91 = arith.constant 0 : index
    %c0_92 = arith.constant 0 : index
    %71 = vector.load %arg4[%c2_89, %c2_90, %c0_91, %c0_92] : memref<3x3x64x64xf32, #tpu.memory_space<vmem>>, vector<1x1x64x64xf32>
    %72 = vector.shape_cast %71 : vector<1x1x64x64xf32> to vector<64x64xf32>
    %cst_93 = arith.constant dense<0.000000e+00> : vector<256x64xf32>
    %73 = tpu.matmul %70, %72, %cst_93 {dimension_numbers = #tpu.dot_dimension_numbers<[1], [0], [0], [1], [0, 0, 1, 1], [], []>} : vector<256x64xf32>, vector<64x64xf32>, vector<256x64xf32> -> vector<256x64xf32>
    %74 = arith.addf %68, %73 : vector<256x64xf32>
    %75 = arith.truncf %74 : vector<256x64xf32> to vector<256x64xbf16>
    %76 = vector.shape_cast %75 : vector<256x64xbf16> to vector<1x16x16x64xbf16>
    %c0_94 = arith.constant 0 : index
    %c0_95 = arith.constant 0 : index
    %c0_96 = arith.constant 0 : index
    %c0_97 = arith.constant 0 : index
    %77 = vector.load %arg5[%c0_94, %c0_95, %c0_96, %c0_97] : memref<1x16x16x64xbf16, #tpu.memory_space<vmem>>, vector<1x16x16x64xbf16>
    tpu.vector_store %arg5[%c0_94, %c0_95, %c0_96, %c0_97], %76 {strides = array<i32>} : memref<1x16x16x64xbf16, #tpu.memory_space<vmem>>, vector<1x16x16x64xbf16>,
    %78 = arith.extf %75 : vector<256x64xbf16> to vector<256x64xf32>
    %cst_98 = arith.constant dense<0.000000e+00> : vector<64xf32>
    %79 = vector.multi_reduction <add>, %78, %cst_98 [0] : vector<256x64xf32> to vector<64xf32>
    %80 = vector.shape_cast %79 : vector<64xf32> to vector<1x64xf32>
    %81 = arith.mulf %78, %78 : vector<256x64xf32>
    %cst_99 = arith.constant dense<0.000000e+00> : vector<64xf32>
    %82 = vector.multi_reduction <add>, %81, %cst_99 [0] : vector<256x64xf32> to vector<64xf32>
    %83 = vector.shape_cast %82 : vector<64xf32> to vector<1x64xf32>
    %84 = tpu.concatenate %80, %83 in 0 : vector<1x64xf32>, vector<1x64xf32> -> vector<2x64xf32>
    %85 = vector.shape_cast %84 : vector<2x64xf32> to vector<1x2x64xf32>
    %c0_100 = arith.constant 0 : index
    %c0_101 = arith.constant 0 : index
    %c0_102 = arith.constant 0 : index
    %86 = vector.load %arg6[%c0_100, %c0_101, %c0_102] : memref<1x2x64xf32, #tpu.memory_space<vmem>>, vector<1x2x64xf32>
    tpu.vector_store %arg6[%c0_100, %c0_101, %c0_102], %85 {strides = array<i32>} : memref<1x2x64xf32, #tpu.memory_space<vmem>>, vector<1x2x64xf32>,
    return
  }
  func.func @transform_0(%arg0: i32) -> (i32, i32, i32, i32) {
    %c0_i32 = arith.constant 0 : i32
    %c0_i32_0 = arith.constant 0 : i32
    %c0_i32_1 = arith.constant 0 : i32
    %c0_i32_2 = arith.constant 0 : i32
    return %arg0, %c0_i32, %c0_i32_0, %c0_i32_1 : i32, i32, i32, i32
  }
  func.func @transform_1(%arg0: i32) -> (i32, i32) {
    %c0_i32 = arith.constant 0 : i32
    %c0_i32_0 = arith.constant 0 : i32
    %c0_i32_1 = arith.constant 0 : i32
    return %c0_i32, %c0_i32_0 : i32, i32
  }
  func.func @transform_2(%arg0: i32) -> (i32, i32) {
    %c0_i32 = arith.constant 0 : i32
    %c0_i32_0 = arith.constant 0 : i32
    %c0_i32_1 = arith.constant 0 : i32
    return %c0_i32, %c0_i32_0 : i32, i32
  }
  func.func @transform_3(%arg0: i32) -> (i32, i32, i32, i32) {
    %c0_i32 = arith.constant 0 : i32
    %c0_i32_0 = arith.constant 0 : i32
    %c0_i32_1 = arith.constant 0 : i32
    %c0_i32_2 = arith.constant 0 : i32
    %c0_i32_3 = arith.constant 0 : i32
    return %c0_i32, %c0_i32_0, %c0_i32_1, %c0_i32_2 : i32, i32, i32, i32
  }
  func.func @transform_4(%arg0: i32) -> (i32, i32, i32, i32) {
    %c0_i32 = arith.constant 0 : i32
    %c0_i32_0 = arith.constant 0 : i32
    %c0_i32_1 = arith.constant 0 : i32
    %c0_i32_2 = arith.constant 0 : i32
    return %arg0, %c0_i32, %c0_i32_0, %c0_i32_1 : i32, i32, i32, i32
  }
  func.func @transform_5(%arg0: i32) -> (i32, i32, i32) {
    %c0_i32 = arith.constant 0 : i32
    %c0_i32_0 = arith.constant 0 : i32
    %c0_i32_1 = arith.constant 0 : i32
    return %arg0, %c0_i32, %c0_i32_0 : i32, i32, i32
  }
}

module attributes {stable_mosaic.version = 11 : i64} {
  func.func @_k3_kernel(%arg0: i32, %arg1: i32, %arg2: memref<128x64xbf16, #tpu.memory_space<vmem>>, %arg3: memref<1x64xf32, #tpu.memory_space<vmem>>, %arg4: memref<1x64xf32, #tpu.memory_space<vmem>>, %arg5: memref<256x64xf32, #tpu.memory_space<vmem>>, %arg6: memref<1x256x128xbf16, #tpu.memory_space<vmem>>, %arg7: memref<1x256x2xf32, #tpu.memory_space<vmem>>) attributes {dimension_semantics = [#tpu.dimension_semantics<parallel>, #tpu.dimension_semantics<parallel>], iteration_bounds = array<i64: 2, 2>, scalar_prefetch = 0 : i64, scratch_operands = 0 : i64, tpu.core_type = #tpu.core_type<tc>, window_params = [{transform_indices = @transform_0, window_bounds = array<i64: 128, 64>}, {pipeline_mode = #tpu.pipeline_mode<synchronous>, transform_indices = @transform_1, window_bounds = array<i64: 1, 64>}, {pipeline_mode = #tpu.pipeline_mode<synchronous>, transform_indices = @transform_2, window_bounds = array<i64: 1, 64>}, {pipeline_mode = #tpu.pipeline_mode<synchronous>, transform_indices = @transform_3, window_bounds = array<i64: 256, 64>}, {transform_indices = @transform_4, window_bounds = array<i64: 1, 256, 128>}, {transform_indices = @transform_5, window_bounds = array<i64: 1, 256, 2>}]} {
    %c0 = arith.constant 0 : index
    %c0_0 = arith.constant 0 : index
    %0 = vector.load %arg2[%c0, %c0_0] : memref<128x64xbf16, #tpu.memory_space<vmem>>, vector<128x64xbf16>
    %1 = arith.extf %0 : vector<128x64xbf16> to vector<128x64xf32>
    %c0_1 = arith.constant 0 : index
    %c0_2 = arith.constant 0 : index
    %2 = vector.load %arg3[%c0_1, %c0_2] : memref<1x64xf32, #tpu.memory_space<vmem>>, vector<1x64xf32>
    %3 = vector.broadcast %2 : vector<1x64xf32> to vector<128x64xf32>
    %4 = arith.mulf %1, %3 : vector<128x64xf32>
    %c0_3 = arith.constant 0 : index
    %c0_4 = arith.constant 0 : index
    %5 = vector.load %arg4[%c0_3, %c0_4] : memref<1x64xf32, #tpu.memory_space<vmem>>, vector<1x64xf32>
    %6 = vector.broadcast %5 : vector<1x64xf32> to vector<128x64xf32>
    %7 = arith.addf %4, %6 : vector<128x64xf32>
    %cst = arith.constant 0.000000e+00 : f32
    %8 = vector.broadcast %cst : f32 to vector<128x64xf32>
    %9 = arith.maximumf %7, %8 : vector<128x64xf32>
    %10 = tpu.transpose %9, [1, 0] : vector<128x64xf32> -> vector<64x128xf32>
    %c0_5 = arith.constant 0 : index
    %c0_6 = arith.constant 0 : index
    %11 = vector.load %arg5[%c0_5, %c0_6] : memref<256x64xf32, #tpu.memory_space<vmem>>, vector<256x64xf32>
    %cst_7 = arith.constant dense<0.000000e+00> : vector<256x128xf32>
    %12 = tpu.matmul %11, %10, %cst_7 {dimension_numbers = #tpu.dot_dimension_numbers<[1], [0], [0], [1], [0, 0, 1, 1], [], []>} : vector<256x64xf32>, vector<64x128xf32>, vector<256x128xf32> -> vector<256x128xf32>
    %13 = arith.truncf %12 : vector<256x128xf32> to vector<256x128xbf16>
    %14 = vector.shape_cast %13 : vector<256x128xbf16> to vector<1x256x128xbf16>
    %c0_8 = arith.constant 0 : index
    %c0_9 = arith.constant 0 : index
    %c0_10 = arith.constant 0 : index
    %15 = vector.load %arg6[%c0_8, %c0_9, %c0_10] : memref<1x256x128xbf16, #tpu.memory_space<vmem>>, vector<1x256x128xbf16>
    tpu.vector_store %arg6[%c0_8, %c0_9, %c0_10], %14 {strides = array<i32>} : memref<1x256x128xbf16, #tpu.memory_space<vmem>>, vector<1x256x128xbf16>,
    %16 = arith.extf %13 : vector<256x128xbf16> to vector<256x128xf32>
    %cst_11 = arith.constant dense<0.000000e+00> : vector<256xf32>
    %17 = vector.multi_reduction <add>, %16, %cst_11 [1] : vector<256x128xf32> to vector<256xf32>
    %18 = vector.shape_cast %17 : vector<256xf32> to vector<256x1xf32>
    %19 = arith.mulf %16, %16 : vector<256x128xf32>
    %cst_12 = arith.constant dense<0.000000e+00> : vector<256xf32>
    %20 = vector.multi_reduction <add>, %19, %cst_12 [1] : vector<256x128xf32> to vector<256xf32>
    %21 = vector.shape_cast %20 : vector<256xf32> to vector<256x1xf32>
    %22 = tpu.concatenate %18, %21 in 1 : vector<256x1xf32>, vector<256x1xf32> -> vector<256x2xf32>
    %23 = vector.shape_cast %22 : vector<256x2xf32> to vector<1x256x2xf32>
    %c0_13 = arith.constant 0 : index
    %c0_14 = arith.constant 0 : index
    %c0_15 = arith.constant 0 : index
    %24 = vector.load %arg7[%c0_13, %c0_14, %c0_15] : memref<1x256x2xf32, #tpu.memory_space<vmem>>, vector<1x256x2xf32>
    tpu.vector_store %arg7[%c0_13, %c0_14, %c0_15], %23 {strides = array<i32>} : memref<1x256x2xf32, #tpu.memory_space<vmem>>, vector<1x256x2xf32>,
    return
  }
  func.func @transform_0(%arg0: i32, %arg1: i32) -> (i32, i32) {
    %c2_i32 = arith.constant 2 : i32
    %0 = arith.muli %arg0, %c2_i32 : i32
    %1 = arith.addi %0, %arg1 : i32
    %c0_i32 = arith.constant 0 : i32
    %c0_i32_0 = arith.constant 0 : i32
    return %1, %c0_i32 : i32, i32
  }
  func.func @transform_1(%arg0: i32, %arg1: i32) -> (i32, i32) {
    %c0_i32 = arith.constant 0 : i32
    %c0_i32_0 = arith.constant 0 : i32
    %c0_i32_1 = arith.constant 0 : i32
    return %c0_i32, %c0_i32_0 : i32, i32
  }
  func.func @transform_2(%arg0: i32, %arg1: i32) -> (i32, i32) {
    %c0_i32 = arith.constant 0 : i32
    %c0_i32_0 = arith.constant 0 : i32
    %c0_i32_1 = arith.constant 0 : i32
    return %c0_i32, %c0_i32_0 : i32, i32
  }
  func.func @transform_3(%arg0: i32, %arg1: i32) -> (i32, i32) {
    %c0_i32 = arith.constant 0 : i32
    %c0_i32_0 = arith.constant 0 : i32
    %c0_i32_1 = arith.constant 0 : i32
    return %c0_i32, %c0_i32_0 : i32, i32
  }
  func.func @transform_4(%arg0: i32, %arg1: i32) -> (i32, i32, i32) {
    %c0_i32 = arith.constant 0 : i32
    %c0_i32_0 = arith.constant 0 : i32
    return %arg0, %c0_i32, %arg1 : i32, i32, i32
  }
  func.func @transform_5(%arg0: i32, %arg1: i32) -> (i32, i32, i32) {
    %c2_i32 = arith.constant 2 : i32
    %0 = arith.muli %arg0, %c2_i32 : i32
    %1 = arith.addi %0, %arg1 : i32
    %c0_i32 = arith.constant 0 : i32
    %c0_i32_0 = arith.constant 0 : i32
    %c0_i32_1 = arith.constant 0 : i32
    return %1, %c0_i32, %c0_i32_0 : i32, i32, i32
  }
}

module attributes {stable_mosaic.version = 11 : i64} {
  func.func @_k4_kernel(%arg0: i32, %arg1: i32, %arg2: memref<1x256x128xbf16, #tpu.memory_space<vmem>>, %arg3: memref<1x256x128xf32, #tpu.memory_space<vmem>>, %arg4: memref<256x1xf32, #tpu.memory_space<vmem>>, %arg5: memref<256x1xf32, #tpu.memory_space<vmem>>, %arg6: memref<1x256x128xf32, #tpu.memory_space<vmem>>) attributes {dimension_semantics = [#tpu.dimension_semantics<parallel>, #tpu.dimension_semantics<parallel>], iteration_bounds = array<i64: 2, 2>, scalar_prefetch = 0 : i64, scratch_operands = 0 : i64, tpu.core_type = #tpu.core_type<tc>, window_params = [{transform_indices = @transform_0, window_bounds = array<i64: 1, 256, 128>}, {transform_indices = @transform_1, window_bounds = array<i64: 1, 256, 128>}, {pipeline_mode = #tpu.pipeline_mode<synchronous>, transform_indices = @transform_2, window_bounds = array<i64: 256, 1>}, {pipeline_mode = #tpu.pipeline_mode<synchronous>, transform_indices = @transform_3, window_bounds = array<i64: 256, 1>}, {transform_indices = @transform_4, window_bounds = array<i64: 1, 256, 128>}]} {
    %c0 = arith.constant 0 : index
    %c0_0 = arith.constant 0 : index
    %c0_1 = arith.constant 0 : index
    %0 = vector.load %arg2[%c0, %c0_0, %c0_1] : memref<1x256x128xbf16, #tpu.memory_space<vmem>>, vector<1x256x128xbf16>
    %1 = vector.shape_cast %0 : vector<1x256x128xbf16> to vector<256x128xbf16>
    %2 = arith.extf %1 : vector<256x128xbf16> to vector<256x128xf32>
    %c0_2 = arith.constant 0 : index
    %c0_3 = arith.constant 0 : index
    %3 = vector.load %arg4[%c0_2, %c0_3] : memref<256x1xf32, #tpu.memory_space<vmem>>, vector<256x1xf32>
    %4 = vector.broadcast %3 : vector<256x1xf32> to vector<256x128xf32>
    %5 = arith.mulf %2, %4 : vector<256x128xf32>
    %c0_4 = arith.constant 0 : index
    %c0_5 = arith.constant 0 : index
    %6 = vector.load %arg5[%c0_4, %c0_5] : memref<256x1xf32, #tpu.memory_space<vmem>>, vector<256x1xf32>
    %7 = vector.broadcast %6 : vector<256x1xf32> to vector<256x128xf32>
    %8 = arith.addf %5, %7 : vector<256x128xf32>
    %c0_6 = arith.constant 0 : index
    %c0_7 = arith.constant 0 : index
    %c0_8 = arith.constant 0 : index
    %9 = vector.load %arg3[%c0_6, %c0_7, %c0_8] : memref<1x256x128xf32, #tpu.memory_space<vmem>>, vector<1x256x128xf32>
    %10 = vector.shape_cast %9 : vector<1x256x128xf32> to vector<256x128xf32>
    %11 = arith.addf %8, %10 : vector<256x128xf32>
    %cst = arith.constant 0.000000e+00 : f32
    %12 = vector.broadcast %cst : f32 to vector<256x128xf32>
    %13 = arith.maximumf %11, %12 : vector<256x128xf32>
    %14 = vector.shape_cast %13 : vector<256x128xf32> to vector<1x256x128xf32>
    %c0_9 = arith.constant 0 : index
    %c0_10 = arith.constant 0 : index
    %c0_11 = arith.constant 0 : index
    %15 = vector.load %arg6[%c0_9, %c0_10, %c0_11] : memref<1x256x128xf32, #tpu.memory_space<vmem>>, vector<1x256x128xf32>
    tpu.vector_store %arg6[%c0_9, %c0_10, %c0_11], %14 {strides = array<i32>} : memref<1x256x128xf32, #tpu.memory_space<vmem>>, vector<1x256x128xf32>,
    return
  }
  func.func @transform_0(%arg0: i32, %arg1: i32) -> (i32, i32, i32) {
    %c0_i32 = arith.constant 0 : i32
    %c0_i32_0 = arith.constant 0 : i32
    return %arg0, %c0_i32, %arg1 : i32, i32, i32
  }
  func.func @transform_1(%arg0: i32, %arg1: i32) -> (i32, i32, i32) {
    %c0_i32 = arith.constant 0 : i32
    %c0_i32_0 = arith.constant 0 : i32
    return %arg0, %c0_i32, %arg1 : i32, i32, i32
  }
  func.func @transform_2(%arg0: i32, %arg1: i32) -> (i32, i32) {
    %c0_i32 = arith.constant 0 : i32
    %c0_i32_0 = arith.constant 0 : i32
    %c0_i32_1 = arith.constant 0 : i32
    return %c0_i32, %c0_i32_0 : i32, i32
  }
  func.func @transform_3(%arg0: i32, %arg1: i32) -> (i32, i32) {
    %c0_i32 = arith.constant 0 : i32
    %c0_i32_0 = arith.constant 0 : i32
    %c0_i32_1 = arith.constant 0 : i32
    return %c0_i32, %c0_i32_0 : i32, i32
  }
  func.func @transform_4(%arg0: i32, %arg1: i32) -> (i32, i32, i32) {
    %c0_i32 = arith.constant 0 : i32
    %c0_i32_0 = arith.constant 0 : i32
    return %arg0, %c0_i32, %arg1 : i32, i32, i32
  }
}

</mosaic_0001>

<llo_original>
// kernel: bottleneck_forward.4
$region0: #{bottleneck_forward.4}
  #allocation0 [shape = 'u32[]', space=smem, size = 0x4, offset = 0x4, fixed_abs, tag = 'smem constant byte address 0x4 - core index']
  #allocation1 [shape = 'u32[144,128]{1,0:T(1,128)}', space=vmem, size = 0x12000, scoped, tag = 'internal scratch']
  %s0 = inlined_call_operand.vmem [shape: f32[2,256,256], index: 0, kind: input, shape index: {}]
  %s1 = inlined_call_operand.vmem [shape: f32[64,256], index: 1, kind: input, shape index: {}]
  %s2 = inlined_call_operand.vmem [shape: bf16[512,64], index: 2, kind: output, shape index: {0}]
  %s3 = inlined_call_operand.vmem [shape: f32[4,2,64], index: 3, kind: output, shape index: {1}]
  %4 = xla_tuple %s2, %s3
  %s5 = sld [smem:[#allocation0]]
  $region87: #{bottleneck_forward.4} parent=0
    _
  %s7 = ssub.s32 1, %s5
  %s8 = scalar_select 0, %s7, %s5
  $region1: #{bottleneck_forward.4} parent=0
    #allocation2 [shape = 'u8[262144]{0}', space=vmem, size = 0x40000, scoped, tag = 'input window, operand 0']
    loop: start=0, step=1, limit=6
    $region2: #{bottleneck_forward.4} parent=1 // loop_pre_header
      _
    $region3: #{bottleneck_forward.4} parent=1 // loop_header
      %s10 = sphi 0, %s14
      %p11 = scmp.ge.s32.totalorder %s10, 6
      %s17 = sphi 0, %s29
      %s18 = sphi 0, %s25
      %s19 = sphi 0, %s17
      %s20 = sphi 0, %s18
      %s21 = sphi 0, %s19
      %s22 = sphi 0, %s20
      %s34 = sphi 0, %s36
      %s37 = sphi 0, %s34
      %s38 = sphi 0, %s37
      %s54 = sphi 0, %s38
      %s58 = sphi 0, %s58
      %s60 = sphi 0, %s58
      %s61 = sphi 0, %s60
      %s75 = sphi 0, %s61
      %s85 = sphi 0, %s87
      %s88 = sphi 0, %s85
      %s89 = sphi 0, %s88
      %s105 = sphi 0, %s89
      %s115 = sphi 0, %s117
      %s118 = sphi 0, %s115
      %s119 = sphi 0, %s118
      %s135 = sphi 0, %s119
    $region4: #{bottleneck_forward.4} parent=1 // loop_header_branch
      %13 = sbr.rel (%p11) target = $region8
    $region5: #{bottleneck_forward.4} parent=1 // loop_body
      %s15 = ssub.s32 %s10, 1
      %s16 = ssub.s32 %s10, 2
      %s23 = sadd.s32 1, %s18
      %p24 = scmp.ge.s32.totalorder %s23, 2
      %s25 = scalar_select %p24, 0, %s23
      %s26 = sadd.s32 1, %s17
      %s27 = scalar_select %p24, %s26, %s17
      %p28 = scmp.ge.s32.totalorder %s27, 2
      %s29 = scalar_select %p28, 0, %s27
      %s30 = ssub.s32 %s17, %s29
      %s31 = ssub.s32 %s18, %s25
      %s32 = sor.u32 %s30, %s31
      %p33 = scmp.eq.s32.totalorder %s32, 0
      %s35 = sadd.s32 %s34, 1
      %s36 = scalar_select %p33, %s34, %s35
      %p39 = pneg %p33
      %p40 = scmp.eq.s32.totalorder %s10, 3
      %p41 = por %p39, %p40
      %p42 = scmp.ne.s32.totalorder %s34, %s37
      %p43 = scmp.eq.s32.totalorder %s10, 0
      %p44 = por %p42, %p43
      %p45 = scmp.ne.s32.totalorder %s34, %s37
      %p46 = scmp.eq.s32.totalorder %s15, 3
      %p47 = por %p45, %p46
      %p48 = scmp.ne.s32.totalorder %s37, %s38
      %p49 = scmp.eq.s32.totalorder %s15, 0
      %p50 = por %p48, %p49
      %p51 = scmp.ne.s32.totalorder %s37, %s38
      %p52 = scmp.eq.s32.totalorder %s16, 3
      %p53 = por %p51, %p52
      %p55 = scmp.ne.s32.totalorder %s38, %s54
      %p56 = scmp.eq.s32.totalorder %s16, 0
      %p57 = por %p55, %p56
      %s59 = sadd.s32 %s58, 1
      %p62 = scmp.eq.s32.totalorder %s10, 3
      %p63 = scmp.ne.s32.totalorder %s58, %s60
      %p64 = scmp.eq.s32.totalorder %s10, 0
      %p65 = por %p63, %p64
      %p66 = scmp.ne.s32.totalorder %s58, %s60
      %p67 = scmp.eq.s32.totalorder %s15, 3
      %p68 = por %p66, %p67
      %p69 = scmp.ne.s32.totalorder %s60, %s61
      %p70 = scmp.eq.s32.totalorder %s15, 0
      %p71 = por %p69, %p70
      %p72 = scmp.ne.s32.totalorder %s60, %s61
      %p73 = scmp.eq.s32.totalorder %s16, 3
      %p74 = por %p72, %p73
      %p76 = scmp.ne.s32.totalorder %s61, %s75
      %p77 = scmp.eq.s32.totalorder %s16, 0
      %p78 = por %p76, %p77
      %s79 = smul.u32 %s17, 2
      %s80 = sadd.s32 %s79, %s18
      %s81 = smul.u32 %s29, 2
      %s82 = sadd.s32 %s81, %s25
      %s83 = ssub.s32 %s80, %s82
      %p84 = scmp.eq.s32.totalorder %s83, 0
      %s86 = sadd.s32 %s85, 1
      %s87 = scalar_select %p84, %s85, %s86
      %p90 = pneg %p84
      %p91 = scmp.eq.s32.totalorder %s10, 3
      %p92 = por %p90, %p91
      %p93 = scmp.ne.s32.totalorder %s85, %s88
      %p94 = scmp.eq.s32.totalorder %s10, 0
      %p95 = por %p93, %p94
      %p96 = scmp.ne.s32.totalorder %s85, %s88
      %p97 = scmp.eq.s32.totalorder %s15, 3
      %p98 = por %p96, %p97
      %p99 = scmp.ne.s32.totalorder %s88, %s89
      %p100 = scmp.eq.s32.totalorder %s15, 0
      %p101 = por %p99, %p100
      %p102 = scmp.ne.s32.totalorder %s88, %s89
      %p103 = scmp.eq.s32.totalorder %s16, 3
      %p104 = por %p102, %p103
      %p106 = scmp.ne.s32.totalorder %s89, %s105
      %p107 = scmp.eq.s32.totalorder %s16, 0
      %p108 = por %p106, %p107
      %s109 = smul.u32 %s17, 2
      %s110 = sadd.s32 %s109, %s18
      %s111 = smul.u32 %s29, 2
      %s112 = sadd.s32 %s111, %s25
      %s113 = ssub.s32 %s110, %s112
      %p114 = scmp.eq.s32.totalorder %s113, 0
      %s116 = sadd.s32 %s115, 1
      %s117 = scalar_select %p114, %s115, %s116
      %p120 = pneg %p114
      %p121 = scmp.eq.s32.totalorder %s10, 3
      %p122 = por %p120, %p121
      %p123 = scmp.ne.s32.totalorder %s115, %s118
      %p124 = scmp.eq.s32.totalorder %s10, 0
      %p125 = por %p123, %p124
      %p126 = scmp.ne.s32.totalorder %s115, %s118
      %p127 = scmp.eq.s32.totalorder %s15, 3
      %p128 = por %p126, %p127
      %p129 = scmp.ne.s32.totalorder %s118, %s119
      %p130 = scmp.eq.s32.totalorder %s15, 0
      %p131 = por %p129, %p130
      %p132 = scmp.ne.s32.totalorder %s118, %s119
      %p133 = scmp.eq.s32.totalorder %s16, 3
      %p134 = por %p132, %p133
      %p136 = scmp.ne.s32.totalorder %s119, %s135
      %p137 = scmp.eq.s32.totalorder %s16, 0
      %p138 = por %p136, %p137
      %p139 = scmp.le.s32.totalorder 1, %s10
      %p140 = scmp.lt.s32.totalorder %s10, 5
      %p141 = pnand %p139, %p140
      %p142 = pneg %p141
      // Predicated region
      $region9: #{bottleneck_forward.4} parent=5 // pred_check
        _
      $region10: #{bottleneck_forward.4} parent=5 // pred_check_branch
        %144 = sbr.rel (%p141) target = $region12
      $region11: #{bottleneck_forward.4} parent=5 // pred_region
        %s145 = ssub.s32 %s10, 1
        // Predicated region
        $region13: #{bottleneck_forward.4} parent=11 // pred_check
          %p146 = pneg %p71
        $region14: #{bottleneck_forward.4} parent=11 // pred_check_branch
          %148 = sbr.rel (%p146) target = $region16
        $region15: #{bottleneck_forward.4} parent=11 // pred_region
          _
        $region16: #{bottleneck_forward.4} parent=11 // pred_fallthru
          _
      $region12: #{bottleneck_forward.4} parent=5 // pred_fallthru
        _
      %p149 = scmp.lt.s32.totalorder %s10, 4
      // Predicated region
      $region17: #{bottleneck_forward.4} parent=5 // pred_check
        %p150 = pneg %p149
      $region18: #{bottleneck_forward.4} parent=5 // pred_check_branch
        %152 = sbr.rel (%p150) target = $region20
      $region19: #{bottleneck_forward.4} parent=5 // pred_region
        // Predicated region
        $region21: #{bottleneck_forward.4} parent=19 // pred_check
          %p153 = pneg %p44
        $region22: #{bottleneck_forward.4} parent=19 // pred_check_branch
          %155 = sbr.rel (%p153) target = $region24
        $region23: #{bottleneck_forward.4} parent=19 // pred_region
          %s156 = sand.u32 %s34, 1
          %s157 = sand.u32 %s34, 1
          %s158 = smul.addr %s157, 256
          %s159 = scalar_lea.vmem [#allocation2], %s158
          %s160 = smul.addr %s17, 64
          %s161 = sadd.s32 %s18, %s160
          %s162 = smul.addr %s161, 8
          %s163 = scalar_lea.vmem %s0, %s162
          // Predicated region
          $region25: #{bottleneck_forward.4} parent=23 // pred_check
            _
          $region26: #{bottleneck_forward.4} parent=23 // pred_check_branch
            %165 = sbr.rel (0) target = $region28
          $region27: #{bottleneck_forward.4} parent=23 // pred_region
            // Predicated region
            $region29: #{bottleneck_forward.4} parent=27 // pred_check
              _
            $region30: #{bottleneck_forward.4} parent=27 // pred_check_branch
              %167 = sbr.rel (0) target = $region32
            $region31: #{bottleneck_forward.4} parent=27 // pred_region
              // Predicated region
              $region44: #{bottleneck_forward.4} parent=31 // pred_check
                _
              $region45: #{bottleneck_forward.4} parent=31 // pred_check_branch
                %244 = sbr.rel (0) target = $region47
              $region46: #{bottleneck_forward.4} parent=31 // pred_region
                loop: start=0, step=1, limit=1
                $region48: #{bottleneck_forward.4} parent=46 // loop_pre_header
                  _
                $region49: #{bottleneck_forward.4} parent=46 // loop_header
                  %s246 = sphi 0, %s250
                  %p247 = scmp.ge.s32.totalorder %s246, 1
                  %s251 = sphi %s163, %s163
                  %s252 = sphi %s159, %s159
                $region50: #{bottleneck_forward.4} parent=46 // loop_header_branch
                  %249 = sbr.rel (%p247) target = $region54
                $region51: #{bottleneck_forward.4} parent=46 // loop_body
                  %v253 = vld [vmem:[%s251] sm:$0xff]
                  %254 = vst [vmem:[%s252] sm:$0xff] %v253
                  %v255 = vld [vmem:[%s251 + $0x10] sm:$0xff]
                  %256 = vst [vmem:[%s252 + $0x8] sm:$0xff] %v255
                  %v257 = vld [vmem:[%s251 + $0x20] sm:$0xff]
                  %258 = vst [vmem:[%s252 + $0x10] sm:$0xff] %v257
                  %v259 = vld [vmem:[%s251 + $0x30] sm:$0xff]
                  %260 = vst [vmem:[%s252 + $0x18] sm:$0xff] %v259
                  %v261 = vld [vmem:[%s251 + $0x40] sm:$0xff]
                  %262 = vst [vmem:[%s252 + $0x20] sm:$0xff] %v261
                  %v263 = vld [vmem:[%s251 + $0x50] sm:$0xff]
                  %264 = vst [vmem:[%s252 + $0x28] sm:$0xff] %v263
                  %v265 = vld [vmem:[%s251 + $0x60] sm:$0xff]
                  %266 = vst [vmem:[%s252 + $0x30] sm:$0xff] %v265
                  %v267 = vld [vmem:[%s251 + $0x70] sm:$0xff]
                  %268 = vst [vmem:[%s252 + $0x38] sm:$0xff] %v267
                  %v269 = vld [vmem:[%s251 + $0x80] sm:$0xff]
                  %270 = vst [vmem:[%s252 + $0x40] sm:$0xff] %v269
                  %v271 = vld [vmem:[%s251 + $0x90] sm:$0xff]
                  %272 = vst [vmem:[%s252 + $0x48] sm:$0xff] %v271
                  %v273 = vld [vmem:[%s251 + $0xa0] sm:$0xff]
                  %274 = vst [vmem:[%s252 + $0x50] sm:$0xff] %v273
                  %v275 = vld [vmem:[%s251 + $0xb0] sm:$0xff]
                  %276 = vst [vmem:[%s252 + $0x58] sm:$0xff] %v275
                  %v277 = vld [vmem:[%s251 + $0xc0] sm:$0xff]
                  %278 = vst [vmem:[%s252 + $0x60] sm:$0xff] %v277
                  %v279 = vld [vmem:[%s251 + $0xd0] sm:$0xff]
                  %280 = vst [vmem:[%s252 + $0x68] sm:$0xff] %v279
                  %v281 = vld [vmem:[%s251 + $0xe0] sm:$0xff]
                  %282 = vst [vmem:[%s252 + $0x70] sm:$0xff] %v281
                  %v283 = vld [vmem:[%s251 + $0xf0] sm:$0xff]
                  %284 = vst [vmem:[%s252 + $0x78] sm:$0xff] %v283
                  %v285 = vld [vmem:[%s251 + $0x100] sm:$0xff]
                  %286 = vst [vmem:[%s252 + $0x80] sm:$0xff] %v285
                  %v287 = vld [vmem:[%s251 + $0x110] sm:$0xff]
                  %288 = vst [vmem:[%s252 + $0x88] sm:$0xff] %v287
                  %v289 = vld [vmem:[%s251 + $0x120] sm:$0xff]
                  %290 = vst [vmem:[%s252 + $0x90] sm:$0xff] %v289
                  %v291 = vld [vmem:[%s251 + $0x130] sm:$0xff]
                  %292 = vst [vmem:[%s252 + $0x98] sm:$0xff] %v291
                  %v293 = vld [vmem:[%s251 + $0x140] sm:$0xff]
                  %294 = vst [vmem:[%s252 + $0xa0] sm:$0xff] %v293
                  %v295 = vld [vmem:[%s251 + $0x150] sm:$0xff]
                  %296 = vst [vmem:[%s252 + $0xa8] sm:$0xff] %v295
                  %v297 = vld [vmem:[%s251 + $0x160] sm:$0xff]
                  %298 = vst [vmem:[%s252 + $0xb0] sm:$0xff] %v297
                  %v299 = vld [vmem:[%s251 + $0x170] sm:$0xff]
                  %300 = vst [vmem:[%s252 + $0xb8] sm:$0xff] %v299
                  %v301 = vld [vmem:[%s251 + $0x180] sm:$0xff]
                  %302 = vst [vmem:[%s252 + $0xc0] sm:$0xff] %v301
                  %v303 = vld [vmem:[%s251 + $0x190] sm:$0xff]
                  %304 = vst [vmem:[%s252 + $0xc8] sm:$0xff] %v303
                  %v305 = vld [vmem:[%s251 + $0x1a0] sm:$0xff]
                  %306 = vst [vmem:[%s252 + $0xd0] sm:$0xff] %v305
                  %v307 = vld [vmem:[%s251 + $0x1b0] sm:$0xff]
                  %308 = vst [vmem:[%s252 + $0xd8] sm:$0xff] %v307
                  %v309 = vld [vmem:[%s251 + $0x1c0] sm:$0xff]
                  %310 = vst [vmem:[%s252 + $0xe0] sm:$0xff] %v309
                  %v311 = vld [vmem:[%s251 + $0x1d0] sm:$0xff]
                  %312 = vst [vmem:[%s252 + $0xe8] sm:$0xff] %v311
                  %v313 = vld [vmem:[%s251 + $0x1e0] sm:$0xff]
                  %314 = vst [vmem:[%s252 + $0xf0] sm:$0xff] %v313
                  %v315 = vld [vmem:[%s251 + $0x1f0] sm:$0xff]
                  %316 = vst [vmem:[%s252 + $0xf8] sm:$0xff] %v315
                $region52: #{bottleneck_forward.4} parent=46 // loop_footer
                  %s250 = sadd.s32 1, %s246
                $region53: #{bottleneck_forward.4} parent=46 // loop_footer_branch
                  %245 = sbr.rel target = $region49
                $region54: #{bottleneck_forward.4} parent=46 // loop_exit
                  _
              $region47: #{bottleneck_forward.4} parent=31 // pred_fallthru
                _
              // Predicated region
              $region55: #{bottleneck_forward.4} parent=31 // pred_check
                _
              $region56: #{bottleneck_forward.4} parent=31 // pred_check_branch
                %318 = sbr.rel target = $region58
              $region57: #{bottleneck_forward.4} parent=31 // pred_region
                _
              $region58: #{bottleneck_forward.4} parent=31 // pred_fallthru
                _
            $region32: #{bottleneck_forward.4} parent=27 // pred_fallthru
              _
            // Predicated region
            $region33: #{bottleneck_forward.4} parent=27 // pred_check
              _
            $region34: #{bottleneck_forward.4} parent=27 // pred_check_branch
              %169 = sbr.rel target = $region36
            $region35: #{bottleneck_forward.4} parent=27 // pred_region
              loop: start=0, step=1, limit=1
              $region37: #{bottleneck_forward.4} parent=35 // loop_pre_header
                _
              $region38: #{bottleneck_forward.4} parent=35 // loop_header
                %s172 = sphi 0, %s176
                %p173 = scmp.ge.s32.totalorder %s172, 1
                %s177 = sphi %s163, %s163
                %s178 = sphi %s159, %s159
              $region39: #{bottleneck_forward.4} parent=35 // loop_header_branch
                %175 = sbr.rel (%p173) target = $region43
              $region40: #{bottleneck_forward.4} parent=35 // loop_body
                %v179 = vld [vmem:[%s177] sm:$0xff]
                %180 = vst [vmem:[%s178] sm:$0xff] %v179
                %v181 = vld [vmem:[%s177 + $0x10] sm:$0xff]
                %182 = vst [vmem:[%s178 + $0x8] sm:$0xff] %v181
                %v183 = vld [vmem:[%s177 + $0x20] sm:$0xff]
                %184 = vst [vmem:[%s178 + $0x10] sm:$0xff] %v183
                %v185 = vld [vmem:[%s177 + $0x30] sm:$0xff]
                %186 = vst [vmem:[%s178 + $0x18] sm:$0xff] %v185
                %v187 = vld [vmem:[%s177 + $0x40] sm:$0xff]
                %188 = vst [vmem:[%s178 + $0x20] sm:$0xff] %v187
                %v189 = vld [vmem:[%s177 + $0x50] sm:$0xff]
                %190 = vst [vmem:[%s178 + $0x28] sm:$0xff] %v189
                %v191 = vld [vmem:[%s177 + $0x60] sm:$0xff]
                %192 = vst [vmem:[%s178 + $0x30] sm:$0xff] %v191
                %v193 = vld [vmem:[%s177 + $0x70] sm:$0xff]
                %194 = vst [vmem:[%s178 + $0x38] sm:$0xff] %v193
                %v195 = vld [vmem:[%s177 + $0x80] sm:$0xff]
                %196 = vst [vmem:[%s178 + $0x40] sm:$0xff] %v195
                %v197 = vld [vmem:[%s177 + $0x90] sm:$0xff]
                %198 = vst [vmem:[%s178 + $0x48] sm:$0xff] %v197
                %v199 = vld [vmem:[%s177 + $0xa0] sm:$0xff]
                %200 = vst [vmem:[%s178 + $0x50] sm:$0xff] %v199
                %v201 = vld [vmem:[%s177 + $0xb0] sm:$0xff]
                %202 = vst [vmem:[%s178 + $0x58] sm:$0xff] %v201
                %v203 = vld [vmem:[%s177 + $0xc0] sm:$0xff]
                %204 = vst [vmem:[%s178 + $0x60] sm:$0xff] %v203
                %v205 = vld [vmem:[%s177 + $0xd0] sm:$0xff]
                %206 = vst [vmem:[%s178 + $0x68] sm:$0xff] %v205
                %v207 = vld [vmem:[%s177 + $0xe0] sm:$0xff]
                %208 = vst [vmem:[%s178 + $0x70] sm:$0xff] %v207
                %v209 = vld [vmem:[%s177 + $0xf0] sm:$0xff]
                %210 = vst [vmem:[%s178 + $0x78] sm:$0xff] %v209
                %v211 = vld [vmem:[%s177 + $0x100] sm:$0xff]
                %212 = vst [vmem:[%s178 + $0x80] sm:$0xff] %v211
                %v213 = vld [vmem:[%s177 + $0x110] sm:$0xff]
                %214 = vst [vmem:[%s178 + $0x88] sm:$0xff] %v213
                %v215 = vld [vmem:[%s177 + $0x120] sm:$0xff]
                %216 = vst [vmem:[%s178 + $0x90] sm:$0xff] %v215
                %v217 = vld [vmem:[%s177 + $0x130] sm:$0xff]
                %218 = vst [vmem:[%s178 + $0x98] sm:$0xff] %v217
                %v219 = vld [vmem:[%s177 + $0x140] sm:$0xff]
                %220 = vst [vmem:[%s178 + $0xa0] sm:$0xff] %v219
                %v221 = vld [vmem:[%s177 + $0x150] sm:$0xff]
                %222 = vst [vmem:[%s178 + $0xa8] sm:$0xff] %v221
                %v223 = vld [vmem:[%s177 + $0x160] sm:$0xff]
                %224 = vst [vmem:[%s178 + $0xb0] sm:$0xff] %v223
                %v225 = vld [vmem:[%s177 + $0x170] sm:$0xff]
                %226 = vst [vmem:[%s178 + $0xb8] sm:$0xff] %v225
                %v227 = vld [vmem:[%s177 + $0x180] sm:$0xff]
                %228 = vst [vmem:[%s178 + $0xc0] sm:$0xff] %v227
                %v229 = vld [vmem:[%s177 + $0x190] sm:$0xff]
                %230 = vst [vmem:[%s178 + $0xc8] sm:$0xff] %v229
                %v231 = vld [vmem:[%s177 + $0x1a0] sm:$0xff]
                %232 = vst [vmem:[%s178 + $0xd0] sm:$0xff] %v231
                %v233 = vld [vmem:[%s177 + $0x1b0] sm:$0xff]
                %234 = vst [vmem:[%s178 + $0xd8] sm:$0xff] %v233
                %v235 = vld [vmem:[%s177 + $0x1c0] sm:$0xff]
                %236 = vst [vmem:[%s178 + $0xe0] sm:$0xff] %v235
                %v237 = vld [vmem:[%s177 + $0x1d0] sm:$0xff]
                %238 = vst [vmem:[%s178 + $0xe8] sm:$0xff] %v237
                %v239 = vld [vmem:[%s177 + $0x1e0] sm:$0xff]
                %240 = vst [vmem:[%s178 + $0xf0] sm:$0xff] %v239
                %v241 = vld [vmem:[%s177 + $0x1f0] sm:$0xff]
                %242 = vst [vmem:[%s178 + $0xf8] sm:$0xff] %v241
              $region41: #{bottleneck_forward.4} parent=35 // loop_footer
                %s176 = sadd.s32 1, %s172
              $region42: #{bottleneck_forward.4} parent=35 // loop_footer_branch
                %171 = sbr.rel target = $region38
              $region43: #{bottleneck_forward.4} parent=35 // loop_exit
                _
            $region36: #{bottleneck_forward.4} parent=27 // pred_fallthru
              _
          $region28: #{bottleneck_forward.4} parent=23 // pred_fallthru
            _
          %319 = vnop
        $region24: #{bottleneck_forward.4} parent=19 // pred_fallthru
          _
      $region20: #{bottleneck_forward.4} parent=5 // pred_fallthru
        _
      %p320 = scmp.le.s32.totalorder 1, %s10
      %p321 = scmp.lt.s32.totalorder %s10, 5
      %p322 = pnand %p320, %p321
      %p323 = pneg %p322
      // Predicated region
      $region59: #{bottleneck_forward.4} parent=5 // pred_check
        _
      $region60: #{bottleneck_forward.4} parent=5 // pred_check_branch
        %325 = sbr.rel (%p322) target = $region62
      $region61: #{bottleneck_forward.4} parent=5 // pred_region
        %s326 = ssub.s32 %s10, 1
        %s327 = sand.u32 %s37, 1
        %s328 = sand.u32 %s37, 1
        %s329 = smul.addr %s328, 256
        %s330 = scalar_lea.vmem [#allocation2], %s329
        // Predicated region
        $region63: #{bottleneck_forward.4} parent=61 // pred_check
          %p331 = pneg %p50
        $region64: #{bottleneck_forward.4} parent=61 // pred_check_branch
          %333 = sbr.rel (%p331) target = $region66
        $region65: #{bottleneck_forward.4} parent=61 // pred_region
          _
        $region66: #{bottleneck_forward.4} parent=61 // pred_fallthru
          _
        %s334 = sand.u32 %s37, 1
        %s335 = sand.u32 %s37, 1
        %s336 = smul.addr %s335, 256
        %s337 = scalar_lea.vmem [#allocation2], %s336
        %p338 = pneg %p50
        %p339 = pneg %p47
        %p340 = pneg %p71
        %p341 = pneg %p68
        %p342 = pneg %p101
        %p343 = pneg %p98
        %s344 = smul.u32 %s19, 2
        %s345 = sadd.s32 %s344, %s20
        %s346 = smul.u32 16, %s345
        %p347 = scmp.lt.s32.totalorder %s346, 63
        %s348 = scalar_select %p347, %s346, 63
        %s349 = smul.addr %s348, 4
        %s350 = scalar_lea.vmem %s2, %s349
        %p351 = pneg %p131
        %p352 = pneg %p128
        %s353 = smul.u32 %s19, 2
        %s354 = sadd.s32 %s353, %s20
        %p355 = scmp.lt.s32.totalorder %s354, 3
        %s356 = scalar_select %p355, %s354, 3
        %s357 = smul.addr %s356, 2
        %s358 = scalar_lea.vmem %s3, %s357
        %s359 = smul.u32 %s19, 2
        %s360 = sadd.s32 %s359, %s20
        %s361 = smul.u32 16, %s360
        %p362 = scmp.lt.s32.totalorder %s361, 63
        %s363 = scalar_select %p362, %s361, 63
        %s364 = smul.addr %s363, 4
        %s365 = scalar_lea.vmem %s2, %s364
        %s366 = smul.u32 %s19, 2
        %s367 = sadd.s32 %s366, %s20
        %s368 = smul.u32 16, %s367
        %s369 = smul.u32 %s19, 2
        %s370 = sadd.s32 %s369, %s20
        %p371 = scmp.lt.s32.totalorder %s370, 3
        %s372 = scalar_select %p371, %s370, 3
        %s373 = smul.addr %s372, 2
        %s374 = scalar_lea.vmem %s3, %s373
        %s375 = smul.u32 %s19, 2
        %s376 = sadd.s32 %s375, %s20
        %v377 = vld [vmem:[%s330] sm:$0xff]
        %v378 = vld [vmem:[%s330 + $0x8] sm:$0xff]
        %v379 = vld [vmem:[%s330 + $0x10] sm:$0xff]
        %v380 = vld [vmem:[%s330 + $0x18] sm:$0xff]
        %v381 = vld [vmem:[%s330 + $0x20] sm:$0xff]
        %v382 = vld [vmem:[%s330 + $0x28] sm:$0xff]
        %v383 = vld [vmem:[%s330 + $0x30] sm:$0xff]
        %v384 = vld [vmem:[%s330 + $0x38] sm:$0xff]
        %v385 = vld [vmem:[%s330 + $0x40] sm:$0xff]
        %v386 = vld [vmem:[%s330 + $0x48] sm:$0xff]
        %v387 = vld [vmem:[%s330 + $0x50] sm:$0xff]
        %v388 = vld [vmem:[%s330 + $0x58] sm:$0xff]
        %v389 = vld [vmem:[%s330 + $0x60] sm:$0xff]
        %v390 = vld [vmem:[%s330 + $0x68] sm:$0xff]
        %v391 = vld [vmem:[%s330 + $0x70] sm:$0xff]
        %v392 = vld [vmem:[%s330 + $0x78] sm:$0xff]
        %v393 = vld [vmem:[%s330 + $0x80] sm:$0xff]
        %v394 = vld [vmem:[%s330 + $0x88] sm:$0xff]
        %v395 = vld [vmem:[%s330 + $0x90] sm:$0xff]
        %v396 = vld [vmem:[%s330 + $0x98] sm:$0xff]
        %v397 = vld [vmem:[%s330 + $0xa0] sm:$0xff]
        %v398 = vld [vmem:[%s330 + $0xa8] sm:$0xff]
        %v399 = vld [vmem:[%s330 + $0xb0] sm:$0xff]
        %v400 = vld [vmem:[%s330 + $0xb8] sm:$0xff]
        %v401 = vld [vmem:[%s330 + $0xc0] sm:$0xff]
        %v402 = vld [vmem:[%s330 + $0xc8] sm:$0xff]
        %v403 = vld [vmem:[%s330 + $0xd0] sm:$0xff]
        %v404 = vld [vmem:[%s330 + $0xd8] sm:$0xff]
        %v405 = vld [vmem:[%s330 + $0xe0] sm:$0xff]
        %v406 = vld [vmem:[%s330 + $0xe8] sm:$0xff]
        %v407 = vld [vmem:[%s330 + $0xf0] sm:$0xff]
        %v408 = vld [vmem:[%s330 + $0xf8] sm:$0xff]
        %v409 = vld [vmem:[%s1] sm:$0xff]
        %v410 = vld [vmem:[%s1 + $0x8] sm:$0xff]
        %v411 = vld [vmem:[%s1 + $0x10] sm:$0xff]
        %v412 = vld [vmem:[%s1 + $0x18] sm:$0xff]
        %v413 = vld [vmem:[%s1 + $0x20] sm:$0xff]
        %v414 = vld [vmem:[%s1 + $0x28] sm:$0xff]
        %v415 = vld [vmem:[%s1 + $0x30] sm:$0xff]
        %v416 = vld [vmem:[%s1 + $0x38] sm:$0xff]
        %v417 = vld [vmem:[%s1 + $0x40] sm:$0xff]
        %v418 = vld [vmem:[%s1 + $0x48] sm:$0xff]
        %v419 = vld [vmem:[%s1 + $0x50] sm:$0xff]
        %v420 = vld [vmem:[%s1 + $0x58] sm:$0xff]
        %v421 = vld [vmem:[%s1 + $0x60] sm:$0xff]
        %v422 = vld [vmem:[%s1 + $0x68] sm:$0xff]
        %v423 = vld [vmem:[%s1 + $0x70] sm:$0xff]
        %v424 = vld [vmem:[%s1 + $0x78] sm:$0xff]
        %425 = vmatprep.subr.mxu0 0.0
        %426 = vmatpush1.msra.mxu0 %v377
        %427 = vmatprep.subr.mxu0 0.0
        %428 = vmatpush1.msra.mxu0 %v378
        %429 = vmatprep.subr.mxu0 0.0
        %430 = vmatpush1.msra.mxu0 %v379
        %431 = vmatprep.subr.mxu0 0.0
        %432 = vmatpush1.msra.mxu0 %v380
        %433 = vmatprep.subr.mxu0 0.0
        %434 = vmatpush1.msra.mxu0 %v381
        %435 = vmatprep.subr.mxu0 0.0
        %436 = vmatpush1.msra.mxu0 %v382
        %437 = vmatprep.subr.mxu0 0.0
        %438 = vmatpush1.msra.mxu0 %v383
        %439 = vmatprep.subr.mxu0 0.0
        %440 = vmatpush1.msra.mxu0 %v384
        %441 = vmatprep.subr.mxu0 0.0
        %442 = vmatpush1.msra.mxu0 %v385
        %443 = vmatprep.subr.mxu0 0.0
        %444 = vmatpush1.msra.mxu0 %v386
        %445 = vmatprep.subr.mxu0 0.0
        %446 = vmatpush1.msra.mxu0 %v387
        %447 = vmatprep.subr.mxu0 0.0
        %448 = vmatpush1.msra.mxu0 %v388
        %449 = vmatprep.subr.mxu0 0.0
        %450 = vmatpush1.msra.mxu0 %v389
        %451 = vmatprep.subr.mxu0 0.0
        %452 = vmatpush1.msra.mxu0 %v390
        %453 = vmatprep.subr.mxu0 0.0
        %454 = vmatpush1.msra.mxu0 %v391
        %455 = vmatprep.subr.mxu0 0.0
        %456 = vmatpush1.msra.mxu0 %v392
        %457 = vmatprep.subr.mxu0 0.0
        %458 = vmatpush1.msra.mxu0 %v393
        %459 = vmatprep.subr.mxu0 0.0
        %460 = vmatpush1.msra.mxu0 %v394
        %461 = vmatprep.subr.mxu0 0.0
        %462 = vmatpush1.msra.mxu0 %v395
        %463 = vmatprep.subr.mxu0 0.0
        %464 = vmatpush1.msra.mxu0 %v396
        %465 = vmatprep.subr.mxu0 0.0
        %466 = vmatpush1.msra.mxu0 %v397
        %467 = vmatprep.subr.mxu0 0.0
        %468 = vmatpush1.msra.mxu0 %v398
        %469 = vmatprep.subr.mxu0 0.0
        %470 = vmatpush1.msra.mxu0 %v399
        %471 = vmatprep.subr.mxu0 0.0
        %472 = vmatpush1.msra.mxu0 %v400
        %473 = vmatprep.subr.mxu0 0.0
        %474 = vmatpush1.msra.mxu0 %v401
        %475 = vmatprep.subr.mxu0 0.0
        %476 = vmatpush1.msra.mxu0 %v402
        %477 = vmatprep.subr.mxu0 0.0
        %478 = vmatpush1.msra.mxu0 %v403
        %479 = vmatprep.subr.mxu0 0.0
        %480 = vmatpush1.msra.mxu0 %v404
        %481 = vmatprep.subr.mxu0 0.0
        %482 = vmatpush1.msra.mxu0 %v405
        %483 = vmatprep.subr.mxu0 0.0
        %484 = vmatpush1.msra.mxu0 %v406
        %485 = vmatprep.subr.mxu0 0.0
        %486 = vmatpush1.msra.mxu0 %v407
        %487 = vmatprep.subr.mxu0 0.0
        %488 = vmatpush1.msra.mxu0 %v408
        %489 = vmatprep.mubr.f32.mxu0 %v410
        %490 = vmatmul.mubr.f32.gmra.mrb[0].mxu0 %v409
        %v491 = vpop.f32.mrb[0].mxu0
        %v492 = vadd.f32 0.0, %v491
        %v493 = vpop.f32.mrb[0].mxu0
        %494 = vmatprep.mubr.f32.mxu0 %v412
        %495 = vmatmul.mubr.f32.gmra.mrb[0].mxu0 %v411
        %v496 = vpop.f32.mrb[0].mxu0
        %v497 = vadd.f32 0.0, %v496
        %v498 = vpop.f32.mrb[0].mxu0
        %499 = vmatprep.mubr.f32.mxu0 %v414
        %500 = vmatmul.mubr.f32.gmra.mrb[0].mxu0 %v413
        %v501 = vpop.f32.mrb[0].mxu0
        %v502 = vadd.f32 0.0, %v501
        %v503 = vpop.f32.mrb[0].mxu0
        %504 = vmatprep.mubr.f32.mxu0 %v416
        %505 = vmatmul.mubr.f32.gmra.mrb[0].mxu0 %v415
        %v506 = vpop.f32.mrb[0].mxu0
        %v507 = vadd.f32 0.0, %v506
        %v508 = vpop.f32.mrb[0].mxu0
        %509 = vmatprep.mubr.f32.mxu0 %v418
        %510 = vmatmul.mubr.f32.gmra.mrb[0].mxu0 %v417
        %v511 = vpop.f32.mrb[0].mxu0
        %v512 = vadd.f32 0.0, %v511
        %v513 = vpop.f32.mrb[0].mxu0
        %514 = vmatprep.mubr.f32.mxu0 %v420
        %515 = vmatmul.mubr.f32.gmra.mrb[0].mxu0 %v419
        %v516 = vpop.f32.mrb[0].mxu0
        %v517 = vadd.f32 0.0, %v516
        %v518 = vpop.f32.mrb[0].mxu0
        %519 = vmatprep.mubr.f32.mxu0 %v422
        %520 = vmatmul.mubr.f32.gmra.mrb[0].mxu0 %v421
        %v521 = vpop.f32.mrb[0].mxu0
        %v522 = vadd.f32 0.0, %v521
        %v523 = vpop.f32.mrb[0].mxu0
        %524 = vmatprep.mubr.f32.mxu0 %v424
        %525 = vmatmul.mubr.f32.gmra.mrb[0].mxu0 %v423
        %v526 = vpop.f32.mrb[0].mxu0
        %v527 = vadd.f32 0.0, %v526
        %v528 = vpop.f32.mrb[0].mxu0
        %529 = vdwg.mxu0
        %530 = vxpose.xlu0.b32.start [1/16] %v492, 128
        %531 = vxpose.xlu0.b32.cont [2/16] %v497, 128
        %532 = vxpose.xlu0.b32.cont [3/16] %v502, 128
        %533 = vxpose.xlu0.b32.cont [4/16] %v507, 128
        %534 = vxpose.xlu0.b32.cont [5/16] %v512, 128
        %535 = vxpose.xlu0.b32.cont [6/16] %v517, 128
        %536 = vxpose.xlu0.b32.cont [7/16] %v522, 128
        %537 = vxpose.xlu0.b32.cont [8/16] %v527, 128
        %538 = vxpose.xlu0.b32.cont [9/16] 0.0, 128
        %539 = vxpose.xlu0.b32.cont [10/16] 0.0, 128
        %540 = vxpose.xlu0.b32.cont [11/16] 0.0, 128
        %541 = vxpose.xlu0.b32.cont [12/16] 0.0, 128
        %542 = vxpose.xlu0.b32.cont [13/16] 0.0, 128
        %543 = vxpose.xlu0.b32.cont [14/16] 0.0, 128
        %544 = vxpose.xlu0.b32.cont [15/16] 0.0, 128
        %545 = vxpose.xlu0.b32.end [16/16] 0.0, 128
        %v546 = vpop.trf.xlu0
        %v547 = vpop.trf.xlu0
        %v548 = vpop.trf.xlu0
        %v549 = vpop.trf.xlu0
        %v550 = vpop.trf.xlu0
        %v551 = vpop.trf.xlu0
        %v552 = vpop.trf.xlu0
        %v553 = vpop.trf.xlu0
        %v554 = vpop.trf.xlu0
        %v555 = vpop.trf.xlu0
        %v556 = vpop.trf.xlu0
        %v557 = vpop.trf.xlu0
        %v558 = vpop.trf.xlu0
        %v559 = vpop.trf.xlu0
        %v560 = vpop.trf.xlu0
        %v561 = vpop.trf.xlu0
        %v562 = vpack.c.bf16 %v547, %v546
        %v563 = vpack.c.bf16 %v549, %v548
        %v564 = vpack.c.bf16 %v551, %v550
        %v565 = vpack.c.bf16 %v553, %v552
        %v566 = vpack.c.bf16 %v555, %v554
        %v567 = vpack.c.bf16 %v557, %v556
        %v568 = vpack.c.bf16 %v559, %v558
        %v569 = vpack.c.bf16 %v561, %v560
        %v578 = vunpack.c.l.b16 %v562
        %v579 = vunpack.c.h.b16 %v562
        %v580 = vunpack.c.l.b16 %v563
        %v581 = vunpack.c.h.b16 %v563
        %v582 = vunpack.c.l.b16 %v564
        %v583 = vunpack.c.h.b16 %v564
        %v584 = vunpack.c.l.b16 %v565
        %v585 = vunpack.c.h.b16 %v565
        %v586 = vunpack.c.l.b16 %v566
        %v587 = vunpack.c.h.b16 %v566
        %v588 = vunpack.c.l.b16 %v567
        %v589 = vunpack.c.h.b16 %v567
        %v590 = vunpack.c.l.b16 %v568
        %v591 = vunpack.c.h.b16 %v568
        %v592 = vunpack.c.l.b16 %v569
        %v593 = vunpack.c.h.b16 %v569
        %v594 = vpack.c.b16 %v578, %v578
        %v595 = vpack.c.b16 %v579, %v579
        %v596 = vpack.c.b16 %v580, %v580
        %v597 = vpack.c.b16 %v581, %v581
        %v598 = vpack.c.b16 %v582, %v582
        %v599 = vpack.c.b16 %v583, %v583
        %v600 = vpack.c.b16 %v584, %v584
        %v601 = vpack.c.b16 %v585, %v585
        %v602 = vpack.c.b16 %v586, %v586
        %v603 = vpack.c.b16 %v587, %v587
        %v604 = vpack.c.b16 %v588, %v588
        %v605 = vpack.c.b16 %v589, %v589
        %v606 = vpack.c.b16 %v590, %v590
        %v607 = vpack.c.b16 %v591, %v591
        %v608 = vpack.c.b16 %v592, %v592
        %v609 = vpack.c.b16 %v593, %v593
        %vm626 = vcmask 519168
        %627 = vst.msk [vmem:[%s365] sm:$0xf] %vm626, %v594
        %628 = vst.msk [vmem:[%s365 + $0x4] sm:$0xf] %vm626, %v595
        %629 = vst.msk [vmem:[%s365 + $0x8] sm:$0xf] %vm626, %v596
        %630 = vst.msk [vmem:[%s365 + $0xc] sm:$0xf] %vm626, %v597
        %631 = vst.msk [vmem:[%s365 + $0x10] sm:$0xf] %vm626, %v598
        %632 = vst.msk [vmem:[%s365 + $0x14] sm:$0xf] %vm626, %v599
        %633 = vst.msk [vmem:[%s365 + $0x18] sm:$0xf] %vm626, %v600
        %634 = vst.msk [vmem:[%s365 + $0x1c] sm:$0xf] %vm626, %v601
        %635 = vst.msk [vmem:[%s365 + $0x20] sm:$0xf] %vm626, %v602
        %636 = vst.msk [vmem:[%s365 + $0x24] sm:$0xf] %vm626, %v603
        %637 = vst.msk [vmem:[%s365 + $0x28] sm:$0xf] %vm626, %v604
        %638 = vst.msk [vmem:[%s365 + $0x2c] sm:$0xf] %vm626, %v605
        %639 = vst.msk [vmem:[%s365 + $0x30] sm:$0xf] %vm626, %v606
        %640 = vst.msk [vmem:[%s365 + $0x34] sm:$0xf] %vm626, %v607
        %641 = vst.msk [vmem:[%s365 + $0x38] sm:$0xf] %vm626, %v608
        %642 = vst.msk [vmem:[%s365 + $0x3c] sm:$0xf] %vm626, %v609
        %v643 = vunpack.c.l.bf16 %v562
        %v644 = vunpack.c.h.bf16 %v562
        %v645 = vunpack.c.l.bf16 %v563
        %v646 = vunpack.c.h.bf16 %v563
        %v647 = vunpack.c.l.bf16 %v564
        %v648 = vunpack.c.h.bf16 %v564
        %v649 = vunpack.c.l.bf16 %v565
        %v650 = vunpack.c.h.bf16 %v565
        %v651 = vunpack.c.l.bf16 %v566
        %v652 = vunpack.c.h.bf16 %v566
        %v653 = vunpack.c.l.bf16 %v567
        %v654 = vunpack.c.h.bf16 %v567
        %v655 = vunpack.c.l.bf16 %v568
        %v656 = vunpack.c.h.bf16 %v568
        %v657 = vunpack.c.l.bf16 %v569
        %v658 = vunpack.c.h.bf16 %v569
        %vm659 = vcmask 523264
        %v660 = vsel %vm659, %v643, 0.0
        %v661 = vsel %vm659, %v644, 0.0
        %v662 = vadd.f32 %v660, %v661
        %v663 = vsel %vm659, %v645, 0.0
        %v664 = vadd.f32 %v662, %v663
        %v665 = vsel %vm659, %v646, 0.0
        %v666 = vadd.f32 %v664, %v665
        %v667 = vsel %vm659, %v647, 0.0
        %v668 = vadd.f32 %v666, %v667
        %v669 = vsel %vm659, %v648, 0.0
        %v670 = vadd.f32 %v668, %v669
        %v671 = vsel %vm659, %v649, 0.0
        %v672 = vadd.f32 %v670, %v671
        %v673 = vsel %vm659, %v650, 0.0
        %v674 = vadd.f32 %v672, %v673
        %v675 = vsel %vm659, %v651, 0.0
        %v676 = vadd.f32 %v674, %v675
        %v677 = vsel %vm659, %v652, 0.0
        %v678 = vadd.f32 %v676, %v677
        %v679 = vsel %vm659, %v653, 0.0
        %v680 = vadd.f32 %v678, %v679
        %v681 = vsel %vm659, %v654, 0.0
        %v682 = vadd.f32 %v680, %v681
        %v683 = vsel %vm659, %v655, 0.0
        %v684 = vadd.f32 %v682, %v683
        %v685 = vsel %vm659, %v656, 0.0
        %v686 = vadd.f32 %v684, %v685
        %v687 = vsel %vm659, %v657, 0.0
        %v688 = vadd.f32 %v686, %v687
        %v689 = vsel %vm659, %v658, 0.0
        %v690 = vadd.f32 %v688, %v689
        %v691 = vrot.slane %v690, 4
        %v692 = vadd.f32 %v690, %v691
        %v693 = vrot.slane %v692, 2
        %v694 = vadd.f32 %v692, %v693
        %v695 = vrot.slane %v694, 1
        %v696 = vadd.f32 %v694, %v695
        %v697 = vmul.f32 %v643, %v643
        %v698 = vmul.f32 %v644, %v644
        %v699 = vmul.f32 %v645, %v645
        %v700 = vmul.f32 %v646, %v646
        %v701 = vmul.f32 %v647, %v647
        %v702 = vmul.f32 %v648, %v648
        %v703 = vmul.f32 %v649, %v649
        %v704 = vmul.f32 %v650, %v650
        %v705 = vmul.f32 %v651, %v651
        %v706 = vmul.f32 %v652, %v652
        %v707 = vmul.f32 %v653, %v653
        %v708 = vmul.f32 %v654, %v654
        %v709 = vmul.f32 %v655, %v655
        %v710 = vmul.f32 %v656, %v656
        %v711 = vmul.f32 %v657, %v657
        %v712 = vmul.f32 %v658, %v658
        %v713 = vsel %vm659, %v697, 0.0
        %v714 = vsel %vm659, %v698, 0.0
        %v715 = vadd.f32 %v713, %v714
        %v716 = vsel %vm659, %v699, 0.0
        %v717 = vadd.f32 %v715, %v716
        %v718 = vsel %vm659, %v700, 0.0
        %v719 = vadd.f32 %v717, %v718
        %v720 = vsel %vm659, %v701, 0.0
        %v721 = vadd.f32 %v719, %v720
        %v722 = vsel %vm659, %v702, 0.0
        %v723 = vadd.f32 %v721, %v722
        %v724 = vsel %vm659, %v703, 0.0
        %v725 = vadd.f32 %v723, %v724
        %v726 = vsel %vm659, %v704, 0.0
        %v727 = vadd.f32 %v725, %v726
        %v728 = vsel %vm659, %v705, 0.0
        %v729 = vadd.f32 %v727, %v728
        %v730 = vsel %vm659, %v706, 0.0
        %v731 = vadd.f32 %v729, %v730
        %v732 = vsel %vm659, %v707, 0.0
        %v733 = vadd.f32 %v731, %v732
        %v734 = vsel %vm659, %v708, 0.0
        %v735 = vadd.f32 %v733, %v734
        %v736 = vsel %vm659, %v709, 0.0
        %v737 = vadd.f32 %v735, %v736
        %v738 = vsel %vm659, %v710, 0.0
        %v739 = vadd.f32 %v737, %v738
        %v740 = vsel %vm659, %v711, 0.0
        %v741 = vadd.f32 %v739, %v740
        %v742 = vsel %vm659, %v712, 0.0
        %v743 = vadd.f32 %v741, %v742
        %v744 = vrot.slane %v743, 4
        %v745 = vadd.f32 %v743, %v744
        %v746 = vrot.slane %v745, 2
        %v747 = vadd.f32 %v745, %v746
        %v748 = vrot.slane %v747, 1
        %v749 = vadd.f32 %v747, %v748
        %vm750 = vcmask 1040384
        %v751 = vsel %vm750, %v696, %v749
        %vm752 = vcmask 517120
        %753 = vst.msk [vmem:[%s374] sm:$0x3] %vm752, %v751
        %s754 = smul.u32 %s19, 2
        %s755 = sadd.s32 %s754, %s20
        %s756 = smul.u32 16, %s755
        %p757 = scmp.lt.s32.totalorder %s756, 63
        %s758 = scalar_select %p757, %s756, 63
        %s759 = smul.addr %s758, 4
        %s760 = scalar_lea.vmem %s2, %s759
        %s761 = smul.u32 %s19, 2
        %s762 = sadd.s32 %s761, %s20
        %p763 = scmp.lt.s32.totalorder %s762, 3
        %s764 = scalar_select %p763, %s762, 3
        %s765 = smul.addr %s764, 2
        %s766 = scalar_lea.vmem %s3, %s765
        // Predicated region
        $region67: #{bottleneck_forward.4} parent=61 // pred_check
          %p767 = pneg %p98
        $region68: #{bottleneck_forward.4} parent=61 // pred_check_branch
          %769 = sbr.rel (%p767) target = $region70
        $region69: #{bottleneck_forward.4} parent=61 // pred_region
          %s770 = smul.u32 %s19, 2
          %s771 = sadd.s32 %s770, %s20
          %s772 = smul.u32 16, %s771
        $region70: #{bottleneck_forward.4} parent=61 // pred_fallthru
          _
        // Predicated region
        $region71: #{bottleneck_forward.4} parent=61 // pred_check
          %p773 = pneg %p128
        $region72: #{bottleneck_forward.4} parent=61 // pred_check_branch
          %775 = sbr.rel (%p773) target = $region74
        $region73: #{bottleneck_forward.4} parent=61 // pred_region
          %s776 = smul.u32 %s19, 2
          %s777 = sadd.s32 %s776, %s20
        $region74: #{bottleneck_forward.4} parent=61 // pred_fallthru
          _
      $region62: #{bottleneck_forward.4} parent=5 // pred_fallthru
        _
      %p778 = scmp.le.s32.totalorder 2, %s10
      // Predicated region
      $region75: #{bottleneck_forward.4} parent=5 // pred_check
        %p779 = pneg %p778
      $region76: #{bottleneck_forward.4} parent=5 // pred_check_branch
        %781 = sbr.rel (%p779) target = $region78
      $region77: #{bottleneck_forward.4} parent=5 // pred_region
        %s782 = ssub.s32 %s10, 2
        // Predicated region
        $region79: #{bottleneck_forward.4} parent=77 // pred_check
          %p783 = pneg %p104
        $region80: #{bottleneck_forward.4} parent=77 // pred_check_branch
          %785 = sbr.rel (%p783) target = $region82
        $region81: #{bottleneck_forward.4} parent=77 // pred_region
          %s786 = smul.u32 %s21, 2
          %s787 = sadd.s32 %s786, %s22
          %s788 = smul.u32 16, %s787
          %p789 = scmp.lt.s32.totalorder %s788, 63
          %s790 = scalar_select %p789, %s788, 63
          %s791 = smul.addr %s790, 4
          %s792 = scalar_lea.vmem %s2, %s791
        $region82: #{bottleneck_forward.4} parent=77 // pred_fallthru
          _
        // Predicated region
        $region83: #{bottleneck_forward.4} parent=77 // pred_check
          %p793 = pneg %p134
        $region84: #{bottleneck_forward.4} parent=77 // pred_check_branch
          %795 = sbr.rel (%p793) target = $region86
        $region85: #{bottleneck_forward.4} parent=77 // pred_region
          %s796 = smul.u32 %s21, 2
          %s797 = sadd.s32 %s796, %s22
          %p798 = scmp.lt.s32.totalorder %s797, 3
          %s799 = scalar_select %p798, %s797, 3
          %s800 = smul.addr %s799, 2
          %s801 = scalar_lea.vmem %s3, %s800
        $region86: #{bottleneck_forward.4} parent=77 // pred_fallthru
          _
      $region78: #{bottleneck_forward.4} parent=5 // pred_fallthru
        _
    $region6: #{bottleneck_forward.4} parent=1 // loop_footer
      %s14 = sadd.s32 1, %s10
    $region7: #{bottleneck_forward.4} parent=1 // loop_footer_branch
      %9 = sbr.rel target = $region3
    $region8: #{bottleneck_forward.4} parent=1 // loop_exit
      _

// kernel: bottleneck_forward.6
$region0: #{bottleneck_forward.6}
  #allocation0 [shape = 'u32[]', space=smem, size = 0x4, offset = 0x4, fixed_abs, tag = 'smem constant byte address 0x4 - core index']
  #allocation1 [shape = 'u32[144,128]{1,0:T(1,128)}', space=vmem, size = 0x12000, scoped, tag = 'internal scratch']
  %s0 = inlined_call_operand.vmem [shape: bf16[512,64], index: 0, kind: input, shape index: {}]
  %s1 = inlined_call_operand.vmem [shape: f32[1,64], index: 1, kind: input, shape index: {}]
  %s2 = inlined_call_operand.vmem [shape: f32[1,64], index: 2, kind: input, shape index: {}]
  %s3 = inlined_call_operand.vmem [shape: f32[256,64], index: 3, kind: input, shape index: {}]
  %s4 = inlined_call_operand.vmem [shape: bf16[2,256,256], index: 4, kind: output, shape index: {0}]
  %s5 = inlined_call_operand.vmem [shape: f32[4,256,2], index: 5, kind: output, shape index: {1}]
  %6 = xla_tuple %s4, %s5
  %s7 = sld [smem:[#allocation0]]
  $region94: #{bottleneck_forward.6} parent=0
    _
  %s9 = ssub.s32 1, %s7
  %s10 = scalar_select 0, %s9, %s7
  $region1: #{bottleneck_forward.6} parent=0
    #allocation2 [shape = 'u8[131072]{0}', space=vmem, size = 0x20000, scoped, tag = 'output window, operand 0']
    loop: start=0, step=1, limit=6
    $region2: #{bottleneck_forward.6} parent=1 // loop_pre_header
      _
    $region3: #{bottleneck_forward.6} parent=1 // loop_header
      %s12 = sphi 0, %s16
      %p13 = scmp.ge.s32.totalorder %s12, 6
      %s19 = sphi 0, %s31
      %s20 = sphi 0, %s27
      %s21 = sphi 0, %s19
      %s22 = sphi 0, %s20
      %s23 = sphi 0, %s21
      %s24 = sphi 0, %s22
      %s38 = sphi 0, %s40
      %s41 = sphi 0, %s38
      %s42 = sphi 0, %s41
      %s58 = sphi 0, %s42
      %s62 = sphi 0, %s62
      %s64 = sphi 0, %s62
      %s65 = sphi 0, %s64
      %s79 = sphi 0, %s65
      %s83 = sphi 0, %s83
      %s85 = sphi 0, %s83
      %s86 = sphi 0, %s85
      %s100 = sphi 0, %s86
      %s104 = sphi 0, %s104
      %s106 = sphi 0, %s104
      %s107 = sphi 0, %s106
      %s121 = sphi 0, %s107
      %s129 = sphi 0, %s131
      %s132 = sphi 0, %s129
      %s133 = sphi 0, %s132
      %s149 = sphi 0, %s133
      %s159 = sphi 0, %s161
      %s162 = sphi 0, %s159
      %s163 = sphi 0, %s162
      %s179 = sphi 0, %s163
    $region4: #{bottleneck_forward.6} parent=1 // loop_header_branch
      %15 = sbr.rel (%p13) target = $region8
    $region5: #{bottleneck_forward.6} parent=1 // loop_body
      %s17 = ssub.s32 %s12, 1
      %s18 = ssub.s32 %s12, 2
      %s25 = sadd.s32 1, %s20
      %p26 = scmp.ge.s32.totalorder %s25, 2
      %s27 = scalar_select %p26, 0, %s25
      %s28 = sadd.s32 1, %s19
      %s29 = scalar_select %p26, %s28, %s19
      %p30 = scmp.ge.s32.totalorder %s29, 2
      %s31 = scalar_select %p30, 0, %s29
      %s32 = smul.u32 %s19, 2
      %s33 = sadd.s32 %s32, %s20
      %s34 = smul.u32 %s31, 2
      %s35 = sadd.s32 %s34, %s27
      %s36 = ssub.s32 %s33, %s35
      %p37 = scmp.eq.s32.totalorder %s36, 0
      %s39 = sadd.s32 %s38, 1
      %s40 = scalar_select %p37, %s38, %s39
      %p43 = pneg %p37
      %p44 = scmp.eq.s32.totalorder %s12, 3
      %p45 = por %p43, %p44
      %p46 = scmp.ne.s32.totalorder %s38, %s41
      %p47 = scmp.eq.s32.totalorder %s12, 0
      %p48 = por %p46, %p47
      %p49 = scmp.ne.s32.totalorder %s38, %s41
      %p50 = scmp.eq.s32.totalorder %s17, 3
      %p51 = por %p49, %p50
      %p52 = scmp.ne.s32.totalorder %s41, %s42
      %p53 = scmp.eq.s32.totalorder %s17, 0
      %p54 = por %p52, %p53
      %p55 = scmp.ne.s32.totalorder %s41, %s42
      %p56 = scmp.eq.s32.totalorder %s18, 3
      %p57 = por %p55, %p56
      %p59 = scmp.ne.s32.totalorder %s42, %s58
      %p60 = scmp.eq.s32.totalorder %s18, 0
      %p61 = por %p59, %p60
      %s63 = sadd.s32 %s62, 1
      %p66 = scmp.eq.s32.totalorder %s12, 3
      %p67 = scmp.ne.s32.totalorder %s62, %s64
      %p68 = scmp.eq.s32.totalorder %s12, 0
      %p69 = por %p67, %p68
      %p70 = scmp.ne.s32.totalorder %s62, %s64
      %p71 = scmp.eq.s32.totalorder %s17, 3
      %p72 = por %p70, %p71
      %p73 = scmp.ne.s32.totalorder %s64, %s65
      %p74 = scmp.eq.s32.totalorder %s17, 0
      %p75 = por %p73, %p74
      %p76 = scmp.ne.s32.totalorder %s64, %s65
      %p77 = scmp.eq.s32.totalorder %s18, 3
      %p78 = por %p76, %p77
      %p80 = scmp.ne.s32.totalorder %s65, %s79
      %p81 = scmp.eq.s32.totalorder %s18, 0
      %p82 = por %p80, %p81
      %s84 = sadd.s32 %s83, 1
      %p87 = scmp.eq.s32.totalorder %s12, 3
      %p88 = scmp.ne.s32.totalorder %s83, %s85
      %p89 = scmp.eq.s32.totalorder %s12, 0
      %p90 = por %p88, %p89
      %p91 = scmp.ne.s32.totalorder %s83, %s85
      %p92 = scmp.eq.s32.totalorder %s17, 3
      %p93 = por %p91, %p92
      %p94 = scmp.ne.s32.totalorder %s85, %s86
      %p95 = scmp.eq.s32.totalorder %s17, 0
      %p96 = por %p94, %p95
      %p97 = scmp.ne.s32.totalorder %s85, %s86
      %p98 = scmp.eq.s32.totalorder %s18, 3
      %p99 = por %p97, %p98
      %p101 = scmp.ne.s32.totalorder %s86, %s100
      %p102 = scmp.eq.s32.totalorder %s18, 0
      %p103 = por %p101, %p102
      %s105 = sadd.s32 %s104, 1
      %p108 = scmp.eq.s32.totalorder %s12, 3
      %p109 = scmp.ne.s32.totalorder %s104, %s106
      %p110 = scmp.eq.s32.totalorder %s12, 0
      %p111 = por %p109, %p110
      %p112 = scmp.ne.s32.totalorder %s104, %s106
      %p113 = scmp.eq.s32.totalorder %s17, 3
      %p114 = por %p112, %p113
      %p115 = scmp.ne.s32.totalorder %s106, %s107
      %p116 = scmp.eq.s32.totalorder %s17, 0
      %p117 = por %p115, %p116
      %p118 = scmp.ne.s32.totalorder %s106, %s107
      %p119 = scmp.eq.s32.totalorder %s18, 3
      %p120 = por %p118, %p119
      %p122 = scmp.ne.s32.totalorder %s107, %s121
      %p123 = scmp.eq.s32.totalorder %s18, 0
      %p124 = por %p122, %p123
      %s125 = ssub.s32 %s19, %s31
      %s126 = ssub.s32 %s20, %s27
      %s127 = sor.u32 %s125, %s126
      %p128 = scmp.eq.s32.totalorder %s127, 0
      %s130 = sadd.s32 %s129, 1
      %s131 = scalar_select %p128, %s129, %s130
      %p134 = pneg %p128
      %p135 = scmp.eq.s32.totalorder %s12, 3
      %p136 = por %p134, %p135
      %p137 = scmp.ne.s32.totalorder %s129, %s132
      %p138 = scmp.eq.s32.totalorder %s12, 0
      %p139 = por %p137, %p138
      %p140 = scmp.ne.s32.totalorder %s129, %s132
      %p141 = scmp.eq.s32.totalorder %s17, 3
      %p142 = por %p140, %p141
      %p143 = scmp.ne.s32.totalorder %s132, %s133
      %p144 = scmp.eq.s32.totalorder %s17, 0
      %p145 = por %p143, %p144
      %p146 = scmp.ne.s32.totalorder %s132, %s133
      %p147 = scmp.eq.s32.totalorder %s18, 3
      %p148 = por %p146, %p147
      %p150 = scmp.ne.s32.totalorder %s133, %s149
      %p151 = scmp.eq.s32.totalorder %s18, 0
      %p152 = por %p150, %p151
      %s153 = smul.u32 %s19, 2
      %s154 = sadd.s32 %s153, %s20
      %s155 = smul.u32 %s31, 2
      %s156 = sadd.s32 %s155, %s27
      %s157 = ssub.s32 %s154, %s156
      %p158 = scmp.eq.s32.totalorder %s157, 0
      %s160 = sadd.s32 %s159, 1
      %s161 = scalar_select %p158, %s159, %s160
      %p164 = pneg %p158
      %p165 = scmp.eq.s32.totalorder %s12, 3
      %p166 = por %p164, %p165
      %p167 = scmp.ne.s32.totalorder %s159, %s162
      %p168 = scmp.eq.s32.totalorder %s12, 0
      %p169 = por %p167, %p168
      %p170 = scmp.ne.s32.totalorder %s159, %s162
      %p171 = scmp.eq.s32.totalorder %s17, 3
      %p172 = por %p170, %p171
      %p173 = scmp.ne.s32.totalorder %s162, %s163
      %p174 = scmp.eq.s32.totalorder %s17, 0
      %p175 = por %p173, %p174
      %p176 = scmp.ne.s32.totalorder %s162, %s163
      %p177 = scmp.eq.s32.totalorder %s18, 3
      %p178 = por %p176, %p177
      %p180 = scmp.ne.s32.totalorder %s163, %s179
      %p181 = scmp.eq.s32.totalorder %s18, 0
      %p182 = por %p180, %p181
      %p183 = scmp.le.s32.totalorder 1, %s12
      %p184 = scmp.lt.s32.totalorder %s12, 5
      %p185 = pnand %p183, %p184
      %p186 = pneg %p185
      // Predicated region
      $region9: #{bottleneck_forward.6} parent=5 // pred_check
        _
      $region10: #{bottleneck_forward.6} parent=5 // pred_check_branch
        %188 = sbr.rel (%p185) target = $region12
      $region11: #{bottleneck_forward.6} parent=5 // pred_region
        %s189 = ssub.s32 %s12, 1
        // Predicated region
        $region13: #{bottleneck_forward.6} parent=11 // pred_check
          %p190 = pneg %p75
        $region14: #{bottleneck_forward.6} parent=11 // pred_check_branch
          %192 = sbr.rel (%p190) target = $region16
        $region15: #{bottleneck_forward.6} parent=11 // pred_region
          _
        $region16: #{bottleneck_forward.6} parent=11 // pred_fallthru
          _
        // Predicated region
        $region17: #{bottleneck_forward.6} parent=11 // pred_check
          %p193 = pneg %p96
        $region18: #{bottleneck_forward.6} parent=11 // pred_check_branch
          %195 = sbr.rel (%p193) target = $region20
        $region19: #{bottleneck_forward.6} parent=11 // pred_region
          _
        $region20: #{bottleneck_forward.6} parent=11 // pred_fallthru
          _
        // Predicated region
        $region21: #{bottleneck_forward.6} parent=11 // pred_check
          %p196 = pneg %p117
        $region22: #{bottleneck_forward.6} parent=11 // pred_check_branch
          %198 = sbr.rel (%p196) target = $region24
        $region23: #{bottleneck_forward.6} parent=11 // pred_region
          _
        $region24: #{bottleneck_forward.6} parent=11 // pred_fallthru
          _
      $region12: #{bottleneck_forward.6} parent=5 // pred_fallthru
        _
      %p199 = scmp.lt.s32.totalorder %s12, 4
      // Predicated region
      $region25: #{bottleneck_forward.6} parent=5 // pred_check
        %p200 = pneg %p199
      $region26: #{bottleneck_forward.6} parent=5 // pred_check_branch
        %202 = sbr.rel (%p200) target = $region28
      $region27: #{bottleneck_forward.6} parent=5 // pred_region
        // Predicated region
        $region29: #{bottleneck_forward.6} parent=27 // pred_check
          %p203 = pneg %p48
        $region30: #{bottleneck_forward.6} parent=27 // pred_check_branch
          %205 = sbr.rel (%p203) target = $region32
        $region31: #{bottleneck_forward.6} parent=27 // pred_region
          %s206 = smul.u32 %s19, 2
          %s207 = sadd.s32 %s206, %s20
          %s208 = smul.u32 16, %s207
          %p209 = scmp.lt.s32.totalorder %s208, 63
          %s210 = scalar_select %p209, %s208, 63
          %s211 = smul.addr %s210, 4
          %s212 = scalar_lea.vmem %s0, %s211
          %s213 = smul.u32 %s19, 2
          %s214 = sadd.s32 %s213, %s20
          %s215 = smul.u32 16, %s214
        $region32: #{bottleneck_forward.6} parent=27 // pred_fallthru
          _
      $region28: #{bottleneck_forward.6} parent=5 // pred_fallthru
        _
      %p216 = scmp.le.s32.totalorder 1, %s12
      %p217 = scmp.lt.s32.totalorder %s12, 5
      %p218 = pnand %p216, %p217
      %p219 = pneg %p218
      // Predicated region
      $region33: #{bottleneck_forward.6} parent=5 // pred_check
        _
      $region34: #{bottleneck_forward.6} parent=5 // pred_check_branch
        %221 = sbr.rel (%p218) target = $region36
      $region35: #{bottleneck_forward.6} parent=5 // pred_region
        %s222 = ssub.s32 %s12, 1
        %s223 = smul.u32 %s21, 2
        %s224 = sadd.s32 %s223, %s22
        %s225 = smul.u32 16, %s224
        %p226 = scmp.lt.s32.totalorder %s225, 63
        %s227 = scalar_select %p226, %s225, 63
        %s228 = smul.addr %s227, 4
        %s229 = scalar_lea.vmem %s0, %s228
        %p230 = pneg %p54
        %p231 = pneg %p51
        %p232 = pneg %p75
        %p233 = pneg %p72
        %p234 = pneg %p96
        %p235 = pneg %p93
        %p236 = pneg %p117
        %p237 = pneg %p114
        %p238 = pneg %p145
        %p239 = pneg %p142
        %s240 = sand.u32 %s132, 1
        %s241 = sand.u32 %s132, 1
        %s242 = smul.addr %s241, 128
        %s243 = scalar_lea.vmem [#allocation2], %s242
        %p244 = pneg %p175
        %p245 = pneg %p172
        %s246 = smul.u32 %s21, 2
        %s247 = sadd.s32 %s246, %s22
        %p248 = scmp.lt.s32.totalorder %s247, 3
        %s249 = scalar_select %p248, %s247, 3
        %s250 = smul.addr %s249, 32
        %s251 = smul.addr %s250, 8
        %s252 = scalar_lea.vmem %s5, %s251
        %s253 = smul.u32 %s21, 2
        %s254 = sadd.s32 %s253, %s22
        %s255 = smul.u32 16, %s254
        %p256 = scmp.lt.s32.totalorder %s255, 63
        %s257 = scalar_select %p256, %s255, 63
        %s258 = smul.addr %s257, 4
        %s259 = scalar_lea.vmem %s0, %s258
        %s260 = smul.u32 %s21, 2
        %s261 = sadd.s32 %s260, %s22
        %s262 = smul.u32 16, %s261
        %s263 = smul.u32 %s21, 2
        %s264 = sadd.s32 %s263, %s22
        %p265 = scmp.lt.s32.totalorder %s264, 3
        %s266 = scalar_select %p265, %s264, 3
        %s267 = smul.addr %s266, 32
        %s268 = smul.addr %s267, 8
        %s269 = scalar_lea.vmem %s5, %s268
        %s270 = smul.u32 %s21, 2
        %s271 = sadd.s32 %s270, %s22
        %v272 = vld [vmem:[%s259] sm:$0xf]
        %v273 = vld [vmem:[%s259 + $0x4] sm:$0xf]
        %v274 = vld [vmem:[%s259 + $0x8] sm:$0xf]
        %v275 = vld [vmem:[%s259 + $0xc] sm:$0xf]
        %v276 = vld [vmem:[%s259 + $0x10] sm:$0xf]
        %v277 = vld [vmem:[%s259 + $0x14] sm:$0xf]
        %v278 = vld [vmem:[%s259 + $0x18] sm:$0xf]
        %v279 = vld [vmem:[%s259 + $0x1c] sm:$0xf]
        %v280 = vld [vmem:[%s259 + $0x20] sm:$0xf]
        %v281 = vld [vmem:[%s259 + $0x24] sm:$0xf]
        %v282 = vld [vmem:[%s259 + $0x28] sm:$0xf]
        %v283 = vld [vmem:[%s259 + $0x2c] sm:$0xf]
        %v284 = vld [vmem:[%s259 + $0x30] sm:$0xf]
        %v285 = vld [vmem:[%s259 + $0x34] sm:$0xf]
        %v286 = vld [vmem:[%s259 + $0x38] sm:$0xf]
        %v287 = vld [vmem:[%s259 + $0x3c] sm:$0xf]
        %v288 = vunpack.c.l.bf16 %v272
        %v289 = vunpack.c.l.bf16 %v273
        %v290 = vunpack.c.l.bf16 %v274
        %v291 = vunpack.c.l.bf16 %v275
        %v292 = vunpack.c.l.bf16 %v276
        %v293 = vunpack.c.l.bf16 %v277
        %v294 = vunpack.c.l.bf16 %v278
        %v295 = vunpack.c.l.bf16 %v279
        %v296 = vunpack.c.l.bf16 %v280
        %v297 = vunpack.c.l.bf16 %v281
        %v298 = vunpack.c.l.bf16 %v282
        %v299 = vunpack.c.l.bf16 %v283
        %v300 = vunpack.c.l.bf16 %v284
        %v301 = vunpack.c.l.bf16 %v285
        %v302 = vunpack.c.l.bf16 %v286
        %v303 = vunpack.c.l.bf16 %v287
        %v304 = vld [vmem:[%s1] sm:$0x1]
        %v306 = vlaneseq
        %v307 = vshrl.u32 %v306, 7
        %v308 = vsub.s32 0, %v307
        %v309 = vrot.slane %v304, %v308
        %v311 = vmul.f32 %v288, %v309
        %v312 = vmul.f32 %v289, %v309
        %v313 = vmul.f32 %v290, %v309
        %v314 = vmul.f32 %v291, %v309
        %v315 = vmul.f32 %v292, %v309
        %v316 = vmul.f32 %v293, %v309
        %v317 = vmul.f32 %v294, %v309
        %v318 = vmul.f32 %v295, %v309
        %v319 = vmul.f32 %v296, %v309
        %v320 = vmul.f32 %v297, %v309
        %v321 = vmul.f32 %v298, %v309
        %v322 = vmul.f32 %v299, %v309
        %v323 = vmul.f32 %v300, %v309
        %v324 = vmul.f32 %v301, %v309
        %v325 = vmul.f32 %v302, %v309
        %v326 = vmul.f32 %v303, %v309
        %v327 = vld [vmem:[%s2] sm:$0x1]
        %v329 = vlaneseq
        %v330 = vshrl.u32 %v329, 7
        %v331 = vsub.s32 0, %v330
        %v332 = vrot.slane %v327, %v331
        %v334 = vadd.f32 %v311, %v332
        %v335 = vadd.f32 %v312, %v332
        %v336 = vadd.f32 %v313, %v332
        %v337 = vadd.f32 %v314, %v332
        %v338 = vadd.f32 %v315, %v332
        %v339 = vadd.f32 %v316, %v332
        %v340 = vadd.f32 %v317, %v332
        %v341 = vadd.f32 %v318, %v332
        %v342 = vadd.f32 %v319, %v332
        %v343 = vadd.f32 %v320, %v332
        %v344 = vadd.f32 %v321, %v332
        %v345 = vadd.f32 %v322, %v332
        %v346 = vadd.f32 %v323, %v332
        %v347 = vadd.f32 %v324, %v332
        %v348 = vadd.f32 %v325, %v332
        %v349 = vadd.f32 %v326, %v332
        %v350 = vmax.f32 %v334, 0.0
        %v351 = vmax.f32 %v335, 0.0
        %v352 = vmax.f32 %v336, 0.0
        %v353 = vmax.f32 %v337, 0.0
        %v354 = vmax.f32 %v338, 0.0
        %v355 = vmax.f32 %v339, 0.0
        %v356 = vmax.f32 %v340, 0.0
        %v357 = vmax.f32 %v341, 0.0
        %v358 = vmax.f32 %v342, 0.0
        %v359 = vmax.f32 %v343, 0.0
        %v360 = vmax.f32 %v344, 0.0
        %v361 = vmax.f32 %v345, 0.0
        %v362 = vmax.f32 %v346, 0.0
        %v363 = vmax.f32 %v347, 0.0
        %v364 = vmax.f32 %v348, 0.0
        %v365 = vmax.f32 %v349, 0.0
        %v366 = vld [vmem:[%s3] sm:$0xff]
        %v367 = vld [vmem:[%s3 + $0x8] sm:$0xff]
        %v368 = vld [vmem:[%s3 + $0x10] sm:$0xff]
        %v369 = vld [vmem:[%s3 + $0x18] sm:$0xff]
        %v370 = vld [vmem:[%s3 + $0x20] sm:$0xff]
        %v371 = vld [vmem:[%s3 + $0x28] sm:$0xff]
        %v372 = vld [vmem:[%s3 + $0x30] sm:$0xff]
        %v373 = vld [vmem:[%s3 + $0x38] sm:$0xff]
        %v374 = vld [vmem:[%s3 + $0x40] sm:$0xff]
        %v375 = vld [vmem:[%s3 + $0x48] sm:$0xff]
        %v376 = vld [vmem:[%s3 + $0x50] sm:$0xff]
        %v377 = vld [vmem:[%s3 + $0x58] sm:$0xff]
        %v378 = vld [vmem:[%s3 + $0x60] sm:$0xff]
        %v379 = vld [vmem:[%s3 + $0x68] sm:$0xff]
        %v380 = vld [vmem:[%s3 + $0x70] sm:$0xff]
        %v381 = vld [vmem:[%s3 + $0x78] sm:$0xff]
        %v382 = vld [vmem:[%s3 + $0x80] sm:$0xff]
        %v383 = vld [vmem:[%s3 + $0x88] sm:$0xff]
        %v384 = vld [vmem:[%s3 + $0x90] sm:$0xff]
        %v385 = vld [vmem:[%s3 + $0x98] sm:$0xff]
        %v386 = vld [vmem:[%s3 + $0xa0] sm:$0xff]
        %v387 = vld [vmem:[%s3 + $0xa8] sm:$0xff]
        %v388 = vld [vmem:[%s3 + $0xb0] sm:$0xff]
        %v389 = vld [vmem:[%s3 + $0xb8] sm:$0xff]
        %v390 = vld [vmem:[%s3 + $0xc0] sm:$0xff]
        %v391 = vld [vmem:[%s3 + $0xc8] sm:$0xff]
        %v392 = vld [vmem:[%s3 + $0xd0] sm:$0xff]
        %v393 = vld [vmem:[%s3 + $0xd8] sm:$0xff]
        %v394 = vld [vmem:[%s3 + $0xe0] sm:$0xff]
        %v395 = vld [vmem:[%s3 + $0xe8] sm:$0xff]
        %v396 = vld [vmem:[%s3 + $0xf0] sm:$0xff]
        %v397 = vld [vmem:[%s3 + $0xf8] sm:$0xff]
        %vm398 = vcmask 523264
        %v400 = vsel %vm398, %v366, 0
        %v403 = vsel %vm398, %v367, 0
        %v406 = vsel %vm398, %v368, 0
        %v409 = vsel %vm398, %v369, 0
        %v412 = vsel %vm398, %v370, 0
        %v415 = vsel %vm398, %v371, 0
        %v418 = vsel %vm398, %v372, 0
        %v421 = vsel %vm398, %v373, 0
        %v424 = vsel %vm398, %v374, 0
        %v427 = vsel %vm398, %v375, 0
        %v430 = vsel %vm398, %v376, 0
        %v433 = vsel %vm398, %v377, 0
        %v436 = vsel %vm398, %v378, 0
        %v439 = vsel %vm398, %v379, 0
        %v442 = vsel %vm398, %v380, 0
        %v445 = vsel %vm398, %v381, 0
        %v448 = vsel %vm398, %v382, 0
        %v451 = vsel %vm398, %v383, 0
        %v454 = vsel %vm398, %v384, 0
        %v457 = vsel %vm398, %v385, 0
        %v460 = vsel %vm398, %v386, 0
        %v463 = vsel %vm398, %v387, 0
        %v466 = vsel %vm398, %v388, 0
        %v469 = vsel %vm398, %v389, 0
        %v472 = vsel %vm398, %v390, 0
        %v475 = vsel %vm398, %v391, 0
        %v478 = vsel %vm398, %v392, 0
        %v481 = vsel %vm398, %v393, 0
        %v484 = vsel %vm398, %v394, 0
        %v487 = vsel %vm398, %v395, 0
        %v490 = vsel %vm398, %v396, 0
        %v493 = vsel %vm398, %v397, 0
        %v496 = vsel %vm398, %v350, 0
        %v499 = vsel %vm398, %v351, 0
        %v502 = vsel %vm398, %v352, 0
        %v505 = vsel %vm398, %v353, 0
        %v508 = vsel %vm398, %v354, 0
        %v511 = vsel %vm398, %v355, 0
        %v514 = vsel %vm398, %v356, 0
        %v517 = vsel %vm398, %v357, 0
        %v520 = vsel %vm398, %v358, 0
        %v523 = vsel %vm398, %v359, 0
        %v526 = vsel %vm398, %v360, 0
        %v529 = vsel %vm398, %v361, 0
        %v532 = vsel %vm398, %v362, 0
        %v535 = vsel %vm398, %v363, 0
        %v538 = vsel %vm398, %v364, 0
        %v541 = vsel %vm398, %v365, 0
        %543 = vmatprep.subr.mxu0 0.0
        %544 = vmatpush1.xpose.msra.mxu0 %v496
        %545 = vmatprep.subr.mxu0 0.0
        %546 = vmatpush1.xpose.msra.mxu0 %v499
        %547 = vmatprep.subr.mxu0 0.0
        %548 = vmatpush1.xpose.msra.mxu0 %v502
        %549 = vmatprep.subr.mxu0 0.0
        %550 = vmatpush1.xpose.msra.mxu0 %v505
        %551 = vmatprep.subr.mxu0 0.0
        %552 = vmatpush1.xpose.msra.mxu0 %v508
        %553 = vmatprep.subr.mxu0 0.0
        %554 = vmatpush1.xpose.msra.mxu0 %v511
        %555 = vmatprep.subr.mxu0 0.0
        %556 = vmatpush1.xpose.msra.mxu0 %v514
        %557 = vmatprep.subr.mxu0 0.0
        %558 = vmatpush1.xpose.msra.mxu0 %v517
        %559 = vmatprep.subr.mxu0 0.0
        %560 = vmatpush1.xpose.msra.mxu0 %v520
        %561 = vmatprep.subr.mxu0 0.0
        %562 = vmatpush1.xpose.msra.mxu0 %v523
        %563 = vmatprep.subr.mxu0 0.0
        %564 = vmatpush1.xpose.msra.mxu0 %v526
        %565 = vmatprep.subr.mxu0 0.0
        %566 = vmatpush1.xpose.msra.mxu0 %v529
        %567 = vmatprep.subr.mxu0 0.0
        %568 = vmatpush1.xpose.msra.mxu0 %v532
        %569 = vmatprep.subr.mxu0 0.0
        %570 = vmatpush1.xpose.msra.mxu0 %v535
        %571 = vmatprep.subr.mxu0 0.0
        %572 = vmatpush1.xpose.msra.mxu0 %v538
        %573 = vmatprep.subr.mxu0 0.0
        %574 = vmatpush1.xpose.msra.mxu0 %v541
        %575 = vmatprep.subr.mxu0 0.0
        %576 = vmatpush1.xpose.msra.mxu0 0.0
        %577 = vmatprep.subr.mxu0 0.0
        %578 = vmatpush1.xpose.msra.mxu0 0.0
        %579 = vmatprep.subr.mxu0 0.0
        %580 = vmatpush1.xpose.msra.mxu0 0.0
        %581 = vmatprep.subr.mxu0 0.0
        %582 = vmatpush1.xpose.msra.mxu0 0.0
        %583 = vmatprep.subr.mxu0 0.0
        %584 = vmatpush1.xpose.msra.mxu0 0.0
        %585 = vmatprep.subr.mxu0 0.0
        %586 = vmatpush1.xpose.msra.mxu0 0.0
        %587 = vmatprep.subr.mxu0 0.0
        %588 = vmatpush1.xpose.msra.mxu0 0.0
        %589 = vmatprep.subr.mxu0 0.0
        %590 = vmatpush1.xpose.msra.mxu0 0.0
        %591 = vmatprep.subr.mxu0 0.0
        %592 = vmatpush1.xpose.msra.mxu0 0.0
        %593 = vmatprep.subr.mxu0 0.0
        %594 = vmatpush1.xpose.msra.mxu0 0.0
        %595 = vmatprep.subr.mxu0 0.0
        %596 = vmatpush1.xpose.msra.mxu0 0.0
        %597 = vmatprep.subr.mxu0 0.0
        %598 = vmatpush1.xpose.msra.mxu0 0.0
        %599 = vmatprep.subr.mxu0 0.0
        %600 = vmatpush1.xpose.msra.mxu0 0.0
        %601 = vmatprep.subr.mxu0 0.0
        %602 = vmatpush1.xpose.msra.mxu0 0.0
        %603 = vmatprep.subr.mxu0 0.0
        %604 = vmatpush1.xpose.msra.mxu0 0.0
        %605 = vmatprep.subr.mxu0 0.0
        %606 = vmatpush1.xpose.msra.mxu0 0.0
        %607 = vmatprep.mubr.f32.mxu0 0.0
        %608 = vmatmul.mubr.f32.gmra.mrb[0].mxu0 %v400
        %v609 = vpop.f32.mrb[0].mxu0
        %v610 = vadd.f32 0.0, %v609
        %v611 = vpop.f32.mrb[0].mxu0
        %612 = vmatprep.mubr.f32.mxu0 0.0
        %613 = vmatmul.mubr.f32.gmra.mrb[0].mxu0 %v403
        %v614 = vpop.f32.mrb[0].mxu0
        %v615 = vadd.f32 0.0, %v614
        %v616 = vpop.f32.mrb[0].mxu0
        %617 = vmatprep.mubr.f32.mxu0 0.0
        %618 = vmatmul.mubr.f32.gmra.mrb[0].mxu0 %v406
        %v619 = vpop.f32.mrb[0].mxu0
        %v620 = vadd.f32 0.0, %v619
        %v621 = vpop.f32.mrb[0].mxu0
        %622 = vmatprep.mubr.f32.mxu0 0.0
        %623 = vmatmul.mubr.f32.gmra.mrb[0].mxu0 %v409
        %v624 = vpop.f32.mrb[0].mxu0
        %v625 = vadd.f32 0.0, %v624
        %v626 = vpop.f32.mrb[0].mxu0
        %627 = vmatprep.mubr.f32.mxu0 0.0
        %628 = vmatmul.mubr.f32.gmra.mrb[0].mxu0 %v412
        %v629 = vpop.f32.mrb[0].mxu0
        %v630 = vadd.f32 0.0, %v629
        %v631 = vpop.f32.mrb[0].mxu0
        %632 = vmatprep.mubr.f32.mxu0 0.0
        %633 = vmatmul.mubr.f32.gmra.mrb[0].mxu0 %v415
        %v634 = vpop.f32.mrb[0].mxu0
        %v635 = vadd.f32 0.0, %v634
        %v636 = vpop.f32.mrb[0].mxu0
        %637 = vmatprep.mubr.f32.mxu0 0.0
        %638 = vmatmul.mubr.f32.gmra.mrb[0].mxu0 %v418
        %v639 = vpop.f32.mrb[0].mxu0
        %v640 = vadd.f32 0.0, %v639
        %v641 = vpop.f32.mrb[0].mxu0
        %642 = vmatprep.mubr.f32.mxu0 0.0
        %643 = vmatmul.mubr.f32.gmra.mrb[0].mxu0 %v421
        %v644 = vpop.f32.mrb[0].mxu0
        %v645 = vadd.f32 0.0, %v644
        %v646 = vpop.f32.mrb[0].mxu0
        %647 = vmatprep.mubr.f32.mxu0 0.0
        %648 = vmatmul.mubr.f32.gmra.mrb[0].mxu0 %v424
        %v649 = vpop.f32.mrb[0].mxu0
        %v650 = vadd.f32 0.0, %v649
        %v651 = vpop.f32.mrb[0].mxu0
        %652 = vmatprep.mubr.f32.mxu0 0.0
        %653 = vmatmul.mubr.f32.gmra.mrb[0].mxu0 %v427
        %v654 = vpop.f32.mrb[0].mxu0
        %v655 = vadd.f32 0.0, %v654
        %v656 = vpop.f32.mrb[0].mxu0
        %657 = vmatprep.mubr.f32.mxu0 0.0
        %658 = vmatmul.mubr.f32.gmra.mrb[0].mxu0 %v430
        %v659 = vpop.f32.mrb[0].mxu0
        %v660 = vadd.f32 0.0, %v659
        %v661 = vpop.f32.mrb[0].mxu0
        %662 = vmatprep.mubr.f32.mxu0 0.0
        %663 = vmatmul.mubr.f32.gmra.mrb[0].mxu0 %v433
        %v664 = vpop.f32.mrb[0].mxu0
        %v665 = vadd.f32 0.0, %v664
        %v666 = vpop.f32.mrb[0].mxu0
        %667 = vmatprep.mubr.f32.mxu0 0.0
        %668 = vmatmul.mubr.f32.gmra.mrb[0].mxu0 %v436
        %v669 = vpop.f32.mrb[0].mxu0
        %v670 = vadd.f32 0.0, %v669
        %v671 = vpop.f32.mrb[0].mxu0
        %672 = vmatprep.mubr.f32.mxu0 0.0
        %673 = vmatmul.mubr.f32.gmra.mrb[0].mxu0 %v439
        %v674 = vpop.f32.mrb[0].mxu0
        %v675 = vadd.f32 0.0, %v674
        %v676 = vpop.f32.mrb[0].mxu0
        %677 = vmatprep.mubr.f32.mxu0 0.0
        %678 = vmatmul.mubr.f32.gmra.mrb[0].mxu0 %v442
        %v679 = vpop.f32.mrb[0].mxu0
        %v680 = vadd.f32 0.0, %v679
        %v681 = vpop.f32.mrb[0].mxu0
        %682 = vmatprep.mubr.f32.mxu0 0.0
        %683 = vmatmul.mubr.f32.gmra.mrb[0].mxu0 %v445
        %v684 = vpop.f32.mrb[0].mxu0
        %v685 = vadd.f32 0.0, %v684
        %v686 = vpop.f32.mrb[0].mxu0
        %687 = vmatprep.mubr.f32.mxu0 0.0
        %688 = vmatmul.mubr.f32.gmra.mrb[0].mxu0 %v448
        %v689 = vpop.f32.mrb[0].mxu0
        %v690 = vadd.f32 0.0, %v689
        %v691 = vpop.f32.mrb[0].mxu0
        %692 = vmatprep.mubr.f32.mxu0 0.0
        %693 = vmatmul.mubr.f32.gmra.mrb[0].mxu0 %v451
        %v694 = vpop.f32.mrb[0].mxu0
        %v695 = vadd.f32 0.0, %v694
        %v696 = vpop.f32.mrb[0].mxu0
        %697 = vmatprep.mubr.f32.mxu0 0.0
        %698 = vmatmul.mubr.f32.gmra.mrb[0].mxu0 %v454
        %v699 = vpop.f32.mrb[0].mxu0
        %v700 = vadd.f32 0.0, %v699
        %v701 = vpop.f32.mrb[0].mxu0
        %702 = vmatprep.mubr.f32.mxu0 0.0
        %703 = vmatmul.mubr.f32.gmra.mrb[0].mxu0 %v457
        %v704 = vpop.f32.mrb[0].mxu0
        %v705 = vadd.f32 0.0, %v704
        %v706 = vpop.f32.mrb[0].mxu0
        %707 = vmatprep.mubr.f32.mxu0 0.0
        %708 = vmatmul.mubr.f32.gmra.mrb[0].mxu0 %v460
        %v709 = vpop.f32.mrb[0].mxu0
        %v710 = vadd.f32 0.0, %v709
        %v711 = vpop.f32.mrb[0].mxu0
        %712 = vmatprep.mubr.f32.mxu0 0.0
        %713 = vmatmul.mubr.f32.gmra.mrb[0].mxu0 %v463
        %v714 = vpop.f32.mrb[0].mxu0
        %v715 = vadd.f32 0.0, %v714
        %v716 = vpop.f32.mrb[0].mxu0
        %717 = vmatprep.mubr.f32.mxu0 0.0
        %718 = vmatmul.mubr.f32.gmra.mrb[0].mxu0 %v466
        %v719 = vpop.f32.mrb[0].mxu0
        %v720 = vadd.f32 0.0, %v719
        %v721 = vpop.f32.mrb[0].mxu0
        %722 = vmatprep.mubr.f32.mxu0 0.0
        %723 = vmatmul.mubr.f32.gmra.mrb[0].mxu0 %v469
        %v724 = vpop.f32.mrb[0].mxu0
        %v725 = vadd.f32 0.0, %v724
        %v726 = vpop.f32.mrb[0].mxu0
        %727 = vmatprep.mubr.f32.mxu0 0.0
        %728 = vmatmul.mubr.f32.gmra.mrb[0].mxu0 %v472
        %v729 = vpop.f32.mrb[0].mxu0
        %v730 = vadd.f32 0.0, %v729
        %v731 = vpop.f32.mrb[0].mxu0
        %732 = vmatprep.mubr.f32.mxu0 0.0
        %733 = vmatmul.mubr.f32.gmra.mrb[0].mxu0 %v475
        %v734 = vpop.f32.mrb[0].mxu0
        %v735 = vadd.f32 0.0, %v734
        %v736 = vpop.f32.mrb[0].mxu0
        %737 = vmatprep.mubr.f32.mxu0 0.0
        %738 = vmatmul.mubr.f32.gmra.mrb[0].mxu0 %v478
        %v739 = vpop.f32.mrb[0].mxu0
        %v740 = vadd.f32 0.0, %v739
        %v741 = vpop.f32.mrb[0].mxu0
        %742 = vmatprep.mubr.f32.mxu0 0.0
        %743 = vmatmul.mubr.f32.gmra.mrb[0].mxu0 %v481
        %v744 = vpop.f32.mrb[0].mxu0
        %v745 = vadd.f32 0.0, %v744
        %v746 = vpop.f32.mrb[0].mxu0
        %747 = vmatprep.mubr.f32.mxu0 0.0
        %748 = vmatmul.mubr.f32.gmra.mrb[0].mxu0 %v484
        %v749 = vpop.f32.mrb[0].mxu0
        %v750 = vadd.f32 0.0, %v749
        %v751 = vpop.f32.mrb[0].mxu0
        %752 = vmatprep.mubr.f32.mxu0 0.0
        %753 = vmatmul.mubr.f32.gmra.mrb[0].mxu0 %v487
        %v754 = vpop.f32.mrb[0].mxu0
        %v755 = vadd.f32 0.0, %v754
        %v756 = vpop.f32.mrb[0].mxu0
        %757 = vmatprep.mubr.f32.mxu0 0.0
        %758 = vmatmul.mubr.f32.gmra.mrb[0].mxu0 %v490
        %v759 = vpop.f32.mrb[0].mxu0
        %v760 = vadd.f32 0.0, %v759
        %v761 = vpop.f32.mrb[0].mxu0
        %762 = vmatprep.mubr.f32.mxu0 0.0
        %763 = vmatmul.mubr.f32.gmra.mrb[0].mxu0 %v493
        %v764 = vpop.f32.mrb[0].mxu0
        %v765 = vadd.f32 0.0, %v764
        %v766 = vpop.f32.mrb[0].mxu0
        %767 = vdwg.mxu0
        %v768 = vpack.c.bf16 %v615, %v610
        %v769 = vpack.c.bf16 %v625, %v620
        %v770 = vpack.c.bf16 %v635, %v630
        %v771 = vpack.c.bf16 %v645, %v640
        %v772 = vpack.c.bf16 %v655, %v650
        %v773 = vpack.c.bf16 %v665, %v660
        %v774 = vpack.c.bf16 %v675, %v670
        %v775 = vpack.c.bf16 %v685, %v680
        %v776 = vpack.c.bf16 %v695, %v690
        %v777 = vpack.c.bf16 %v705, %v700
        %v778 = vpack.c.bf16 %v715, %v710
        %v779 = vpack.c.bf16 %v725, %v720
        %v780 = vpack.c.bf16 %v735, %v730
        %v781 = vpack.c.bf16 %v745, %v740
        %v782 = vpack.c.bf16 %v755, %v750
        %v783 = vpack.c.bf16 %v765, %v760
        %v800 = vunpack.c.l.b16 %v768
        %v801 = vunpack.c.h.b16 %v768
        %v802 = vunpack.c.l.b16 %v769
        %v803 = vunpack.c.h.b16 %v769
        %v804 = vunpack.c.l.b16 %v770
        %v805 = vunpack.c.h.b16 %v770
        %v806 = vunpack.c.l.b16 %v771
        %v807 = vunpack.c.h.b16 %v771
        %v808 = vunpack.c.l.b16 %v772
        %v809 = vunpack.c.h.b16 %v772
        %v810 = vunpack.c.l.b16 %v773
        %v811 = vunpack.c.h.b16 %v773
        %v812 = vunpack.c.l.b16 %v774
        %v813 = vunpack.c.h.b16 %v774
        %v814 = vunpack.c.l.b16 %v775
        %v815 = vunpack.c.h.b16 %v775
        %v816 = vunpack.c.l.b16 %v776
        %v817 = vunpack.c.h.b16 %v776
        %v818 = vunpack.c.l.b16 %v777
        %v819 = vunpack.c.h.b16 %v777
        %v820 = vunpack.c.l.b16 %v778
        %v821 = vunpack.c.h.b16 %v778
        %v822 = vunpack.c.l.b16 %v779
        %v823 = vunpack.c.h.b16 %v779
        %v824 = vunpack.c.l.b16 %v780
        %v825 = vunpack.c.h.b16 %v780
        %v826 = vunpack.c.l.b16 %v781
        %v827 = vunpack.c.h.b16 %v781
        %v828 = vunpack.c.l.b16 %v782
        %v829 = vunpack.c.h.b16 %v782
        %v830 = vunpack.c.l.b16 %v783
        %v831 = vunpack.c.h.b16 %v783
        %v832 = vpack.c.b16 %v800, %v800
        %v833 = vpack.c.b16 %v801, %v801
        %v834 = vpack.c.b16 %v802, %v802
        %v835 = vpack.c.b16 %v803, %v803
        %v836 = vpack.c.b16 %v804, %v804
        %v837 = vpack.c.b16 %v805, %v805
        %v838 = vpack.c.b16 %v806, %v806
        %v839 = vpack.c.b16 %v807, %v807
        %v840 = vpack.c.b16 %v808, %v808
        %v841 = vpack.c.b16 %v809, %v809
        %v842 = vpack.c.b16 %v810, %v810
        %v843 = vpack.c.b16 %v811, %v811
        %v844 = vpack.c.b16 %v812, %v812
        %v845 = vpack.c.b16 %v813, %v813
        %v846 = vpack.c.b16 %v814, %v814
        %v847 = vpack.c.b16 %v815, %v815
        %v848 = vpack.c.b16 %v816, %v816
        %v849 = vpack.c.b16 %v817, %v817
        %v850 = vpack.c.b16 %v818, %v818
        %v851 = vpack.c.b16 %v819, %v819
        %v852 = vpack.c.b16 %v820, %v820
        %v853 = vpack.c.b16 %v821, %v821
        %v854 = vpack.c.b16 %v822, %v822
        %v855 = vpack.c.b16 %v823, %v823
        %v856 = vpack.c.b16 %v824, %v824
        %v857 = vpack.c.b16 %v825, %v825
        %v858 = vpack.c.b16 %v826, %v826
        %v859 = vpack.c.b16 %v827, %v827
        %v860 = vpack.c.b16 %v828, %v828
        %v861 = vpack.c.b16 %v829, %v829
        %v862 = vpack.c.b16 %v830, %v830
        %v863 = vpack.c.b16 %v831, %v831
        %896 = vst [vmem:[%s243] sm:$0xf] %v832
        %897 = vst [vmem:[%s243 + $0x4] sm:$0xf] %v833
        %898 = vst [vmem:[%s243 + $0x8] sm:$0xf] %v834
        %899 = vst [vmem:[%s243 + $0xc] sm:$0xf] %v835
        %900 = vst [vmem:[%s243 + $0x10] sm:$0xf] %v836
        %901 = vst [vmem:[%s243 + $0x14] sm:$0xf] %v837
        %902 = vst [vmem:[%s243 + $0x18] sm:$0xf] %v838
        %903 = vst [vmem:[%s243 + $0x1c] sm:$0xf] %v839
        %904 = vst [vmem:[%s243 + $0x20] sm:$0xf] %v840
        %905 = vst [vmem:[%s243 + $0x24] sm:$0xf] %v841
        %906 = vst [vmem:[%s243 + $0x28] sm:$0xf] %v842
        %907 = vst [vmem:[%s243 + $0x2c] sm:$0xf] %v843
        %908 = vst [vmem:[%s243 + $0x30] sm:$0xf] %v844
        %909 = vst [vmem:[%s243 + $0x34] sm:$0xf] %v845
        %910 = vst [vmem:[%s243 + $0x38] sm:$0xf] %v846
        %911 = vst [vmem:[%s243 + $0x3c] sm:$0xf] %v847
        %912 = vst [vmem:[%s243 + $0x40] sm:$0xf] %v848
        %913 = vst [vmem:[%s243 + $0x44] sm:$0xf] %v849
        %914 = vst [vmem:[%s243 + $0x48] sm:$0xf] %v850
        %915 = vst [vmem:[%s243 + $0x4c] sm:$0xf] %v851
        %916 = vst [vmem:[%s243 + $0x50] sm:$0xf] %v852
        %917 = vst [vmem:[%s243 + $0x54] sm:$0xf] %v853
        %918 = vst [vmem:[%s243 + $0x58] sm:$0xf] %v854
        %919 = vst [vmem:[%s243 + $0x5c] sm:$0xf] %v855
        %920 = vst [vmem:[%s243 + $0x60] sm:$0xf] %v856
        %921 = vst [vmem:[%s243 + $0x64] sm:$0xf] %v857
        %922 = vst [vmem:[%s243 + $0x68] sm:$0xf] %v858
        %923 = vst [vmem:[%s243 + $0x6c] sm:$0xf] %v859
        %924 = vst [vmem:[%s243 + $0x70] sm:$0xf] %v860
        %925 = vst [vmem:[%s243 + $0x74] sm:$0xf] %v861
        %926 = vst [vmem:[%s243 + $0x78] sm:$0xf] %v862
        %927 = vst [vmem:[%s243 + $0x7c] sm:$0xf] %v863
        %v928 = vunpack.c.l.bf16 %v768
        %v929 = vunpack.c.h.bf16 %v768
        %v930 = vunpack.c.l.bf16 %v769
        %v931 = vunpack.c.h.bf16 %v769
        %v932 = vunpack.c.l.bf16 %v770
        %v933 = vunpack.c.h.bf16 %v770
        %v934 = vunpack.c.l.bf16 %v771
        %v935 = vunpack.c.h.bf16 %v771
        %v936 = vunpack.c.l.bf16 %v772
        %v937 = vunpack.c.h.bf16 %v772
        %v938 = vunpack.c.l.bf16 %v773
        %v939 = vunpack.c.h.bf16 %v773
        %v940 = vunpack.c.l.bf16 %v774
        %v941 = vunpack.c.h.bf16 %v774
        %v942 = vunpack.c.l.bf16 %v775
        %v943 = vunpack.c.h.bf16 %v775
        %v944 = vunpack.c.l.bf16 %v776
        %v945 = vunpack.c.h.bf16 %v776
        %v946 = vunpack.c.l.bf16 %v777
        %v947 = vunpack.c.h.bf16 %v777
        %v948 = vunpack.c.l.bf16 %v778
        %v949 = vunpack.c.h.bf16 %v778
        %v950 = vunpack.c.l.bf16 %v779
        %v951 = vunpack.c.h.bf16 %v779
        %v952 = vunpack.c.l.bf16 %v780
        %v953 = vunpack.c.h.bf16 %v780
        %v954 = vunpack.c.l.bf16 %v781
        %v955 = vunpack.c.h.bf16 %v781
        %v956 = vunpack.c.l.bf16 %v782
        %v957 = vunpack.c.h.bf16 %v782
        %v958 = vunpack.c.l.bf16 %v783
        %v959 = vunpack.c.h.bf16 %v783
        %960 = vadd.xlane.f32.xlu0 %v928
        %v961 = vpop.xlane.xlu0 %960
        %962 = vadd.xlane.f32.xlu0 %v929
        %v963 = vpop.xlane.xlu0 %962
        %964 = vadd.xlane.f32.xlu0 %v930
        %v965 = vpop.xlane.xlu0 %964
        %966 = vadd.xlane.f32.xlu0 %v931
        %v967 = vpop.xlane.xlu0 %966
        %968 = vadd.xlane.f32.xlu0 %v932
        %v969 = vpop.xlane.xlu0 %968
        %970 = vadd.xlane.f32.xlu0 %v933
        %v971 = vpop.xlane.xlu0 %970
        %972 = vadd.xlane.f32.xlu0 %v934
        %v973 = vpop.xlane.xlu0 %972
        %974 = vadd.xlane.f32.xlu0 %v935
        %v975 = vpop.xlane.xlu0 %974
        %976 = vadd.xlane.f32.xlu0 %v936
        %v977 = vpop.xlane.xlu0 %976
        %978 = vadd.xlane.f32.xlu0 %v937
        %v979 = vpop.xlane.xlu0 %978
        %980 = vadd.xlane.f32.xlu0 %v938
        %v981 = vpop.xlane.xlu0 %980
        %982 = vadd.xlane.f32.xlu0 %v939
        %v983 = vpop.xlane.xlu0 %982
        %984 = vadd.xlane.f32.xlu0 %v940
        %v985 = vpop.xlane.xlu0 %984
        %986 = vadd.xlane.f32.xlu0 %v941
        %v987 = vpop.xlane.xlu0 %986
        %988 = vadd.xlane.f32.xlu0 %v942
        %v989 = vpop.xlane.xlu0 %988
        %990 = vadd.xlane.f32.xlu0 %v943
        %v991 = vpop.xlane.xlu0 %990
        %992 = vadd.xlane.f32.xlu0 %v944
        %v993 = vpop.xlane.xlu0 %992
        %994 = vadd.xlane.f32.xlu0 %v945
        %v995 = vpop.xlane.xlu0 %994
        %996 = vadd.xlane.f32.xlu0 %v946
        %v997 = vpop.xlane.xlu0 %996
        %998 = vadd.xlane.f32.xlu0 %v947
        %v999 = vpop.xlane.xlu0 %998
        %1000 = vadd.xlane.f32.xlu0 %v948
        %v1001 = vpop.xlane.xlu0 %1000
        %1002 = vadd.xlane.f32.xlu0 %v949
        %v1003 = vpop.xlane.xlu0 %1002
        %1004 = vadd.xlane.f32.xlu0 %v950
        %v1005 = vpop.xlane.xlu0 %1004
        %1006 = vadd.xlane.f32.xlu0 %v951
        %v1007 = vpop.xlane.xlu0 %1006
        %1008 = vadd.xlane.f32.xlu0 %v952
        %v1009 = vpop.xlane.xlu0 %1008
        %1010 = vadd.xlane.f32.xlu0 %v953
        %v1011 = vpop.xlane.xlu0 %1010
        %1012 = vadd.xlane.f32.xlu0 %v954
        %v1013 = vpop.xlane.xlu0 %1012
        %1014 = vadd.xlane.f32.xlu0 %v955
        %v1015 = vpop.xlane.xlu0 %1014
        %1016 = vadd.xlane.f32.xlu0 %v956
        %v1017 = vpop.xlane.xlu0 %1016
        %1018 = vadd.xlane.f32.xlu0 %v957
        %v1019 = vpop.xlane.xlu0 %1018
        %1020 = vadd.xlane.f32.xlu0 %v958
        %v1021 = vpop.xlane.xlu0 %1020
        %1022 = vadd.xlane.f32.xlu0 %v959
        %v1023 = vpop.xlane.xlu0 %1022
        %v1024 = vmul.f32 %v928, %v928
        %v1025 = vmul.f32 %v929, %v929
        %v1026 = vmul.f32 %v930, %v930
        %v1027 = vmul.f32 %v931, %v931
        %v1028 = vmul.f32 %v932, %v932
        %v1029 = vmul.f32 %v933, %v933
        %v1030 = vmul.f32 %v934, %v934
        %v1031 = vmul.f32 %v935, %v935
        %v1032 = vmul.f32 %v936, %v936
        %v1033 = vmul.f32 %v937, %v937
        %v1034 = vmul.f32 %v938, %v938
        %v1035 = vmul.f32 %v939, %v939
        %v1036 = vmul.f32 %v940, %v940
        %v1037 = vmul.f32 %v941, %v941
        %v1038 = vmul.f32 %v942, %v942
        %v1039 = vmul.f32 %v943, %v943
        %v1040 = vmul.f32 %v944, %v944
        %v1041 = vmul.f32 %v945, %v945
        %v1042 = vmul.f32 %v946, %v946
        %v1043 = vmul.f32 %v947, %v947
        %v1044 = vmul.f32 %v948, %v948
        %v1045 = vmul.f32 %v949, %v949
        %v1046 = vmul.f32 %v950, %v950
        %v1047 = vmul.f32 %v951, %v951
        %v1048 = vmul.f32 %v952, %v952
        %v1049 = vmul.f32 %v953, %v953
        %v1050 = vmul.f32 %v954, %v954
        %v1051 = vmul.f32 %v955, %v955
        %v1052 = vmul.f32 %v956, %v956
        %v1053 = vmul.f32 %v957, %v957
        %v1054 = vmul.f32 %v958, %v958
        %v1055 = vmul.f32 %v959, %v959
        %1056 = vadd.xlane.f32.xlu0 %v1024
        %v1057 = vpop.xlane.xlu0 %1056
        %1058 = vadd.xlane.f32.xlu0 %v1025
        %v1059 = vpop.xlane.xlu0 %1058
        %1060 = vadd.xlane.f32.xlu0 %v1026
        %v1061 = vpop.xlane.xlu0 %1060
        %1062 = vadd.xlane.f32.xlu0 %v1027
        %v1063 = vpop.xlane.xlu0 %1062
        %1064 = vadd.xlane.f32.xlu0 %v1028
        %v1065 = vpop.xlane.xlu0 %1064
        %1066 = vadd.xlane.f32.xlu0 %v1029
        %v1067 = vpop.xlane.xlu0 %1066
        %1068 = vadd.xlane.f32.xlu0 %v1030
        %v1069 = vpop.xlane.xlu0 %1068
        %1070 = vadd.xlane.f32.xlu0 %v1031
        %v1071 = vpop.xlane.xlu0 %1070
        %1072 = vadd.xlane.f32.xlu0 %v1032
        %v1073 = vpop.xlane.xlu0 %1072
        %1074 = vadd.xlane.f32.xlu0 %v1033
        %v1075 = vpop.xlane.xlu0 %1074
        %1076 = vadd.xlane.f32.xlu0 %v1034
        %v1077 = vpop.xlane.xlu0 %1076
        %1078 = vadd.xlane.f32.xlu0 %v1035
        %v1079 = vpop.xlane.xlu0 %1078
        %1080 = vadd.xlane.f32.xlu0 %v1036
        %v1081 = vpop.xlane.xlu0 %1080
        %1082 = vadd.xlane.f32.xlu0 %v1037
        %v1083 = vpop.xlane.xlu0 %1082
        %1084 = vadd.xlane.f32.xlu0 %v1038
        %v1085 = vpop.xlane.xlu0 %1084
        %1086 = vadd.xlane.f32.xlu0 %v1039
        %v1087 = vpop.xlane.xlu0 %1086
        %1088 = vadd.xlane.f32.xlu0 %v1040
        %v1089 = vpop.xlane.xlu0 %1088
        %1090 = vadd.xlane.f32.xlu0 %v1041
        %v1091 = vpop.xlane.xlu0 %1090
        %1092 = vadd.xlane.f32.xlu0 %v1042
        %v1093 = vpop.xlane.xlu0 %1092
        %1094 = vadd.xlane.f32.xlu0 %v1043
        %v1095 = vpop.xlane.xlu0 %1094
        %1096 = vadd.xlane.f32.xlu0 %v1044
        %v1097 = vpop.xlane.xlu0 %1096
        %1098 = vadd.xlane.f32.xlu0 %v1045
        %v1099 = vpop.xlane.xlu0 %1098
        %1100 = vadd.xlane.f32.xlu0 %v1046
        %v1101 = vpop.xlane.xlu0 %1100
        %1102 = vadd.xlane.f32.xlu0 %v1047
        %v1103 = vpop.xlane.xlu0 %1102
        %1104 = vadd.xlane.f32.xlu0 %v1048
        %v1105 = vpop.xlane.xlu0 %1104
        %1106 = vadd.xlane.f32.xlu0 %v1049
        %v1107 = vpop.xlane.xlu0 %1106
        %1108 = vadd.xlane.f32.xlu0 %v1050
        %v1109 = vpop.xlane.xlu0 %1108
        %1110 = vadd.xlane.f32.xlu0 %v1051
        %v1111 = vpop.xlane.xlu0 %1110
        %1112 = vadd.xlane.f32.xlu0 %v1052
        %v1113 = vpop.xlane.xlu0 %1112
        %1114 = vadd.xlane.f32.xlu0 %v1053
        %v1115 = vpop.xlane.xlu0 %1114
        %1116 = vadd.xlane.f32.xlu0 %v1054
        %v1117 = vpop.xlane.xlu0 %1116
        %1118 = vadd.xlane.f32.xlu0 %v1055
        %v1119 = vpop.xlane.xlu0 %1118
        %vm1120 = vcmask 7168
        %v1121 = vsel %vm1120, %v961, %v1057
        %v1122 = vsel %vm1120, %v963, %v1059
        %v1123 = vsel %vm1120, %v965, %v1061
        %v1124 = vsel %vm1120, %v967, %v1063
        %v1125 = vsel %vm1120, %v969, %v1065
        %v1126 = vsel %vm1120, %v971, %v1067
        %v1127 = vsel %vm1120, %v973, %v1069
        %v1128 = vsel %vm1120, %v975, %v1071
        %v1129 = vsel %vm1120, %v977, %v1073
        %v1130 = vsel %vm1120, %v979, %v1075
        %v1131 = vsel %vm1120, %v981, %v1077
        %v1132 = vsel %vm1120, %v983, %v1079
        %v1133 = vsel %vm1120, %v985, %v1081
        %v1134 = vsel %vm1120, %v987, %v1083
        %v1135 = vsel %vm1120, %v989, %v1085
        %v1136 = vsel %vm1120, %v991, %v1087
        %v1137 = vsel %vm1120, %v993, %v1089
        %v1138 = vsel %vm1120, %v995, %v1091
        %v1139 = vsel %vm1120, %v997, %v1093
        %v1140 = vsel %vm1120, %v999, %v1095
        %v1141 = vsel %vm1120, %v1001, %v1097
        %v1142 = vsel %vm1120, %v1003, %v1099
        %v1143 = vsel %vm1120, %v1005, %v1101
        %v1144 = vsel %vm1120, %v1007, %v1103
        %v1145 = vsel %vm1120, %v1009, %v1105
        %v1146 = vsel %vm1120, %v1011, %v1107
        %v1147 = vsel %vm1120, %v1013, %v1109
        %v1148 = vsel %vm1120, %v1015, %v1111
        %v1149 = vsel %vm1120, %v1017, %v1113
        %v1150 = vsel %vm1120, %v1019, %v1115
        %v1151 = vsel %vm1120, %v1021, %v1117
        %v1152 = vsel %vm1120, %v1023, %v1119
        %vm1153 = vcmask 15360
        %1154 = vst.msk [vmem:[%s269] sm:$0xff] %vm1153, %v1121
        %1155 = vst.msk [vmem:[%s269 + $0x8] sm:$0xff] %vm1153, %v1122
        %1156 = vst.msk [vmem:[%s269 + $0x10] sm:$0xff] %vm1153, %v1123
        %1157 = vst.msk [vmem:[%s269 + $0x18] sm:$0xff] %vm1153, %v1124
        %1158 = vst.msk [vmem:[%s269 + $0x20] sm:$0xff] %vm1153, %v1125
        %1159 = vst.msk [vmem:[%s269 + $0x28] sm:$0xff] %vm1153, %v1126
        %1160 = vst.msk [vmem:[%s269 + $0x30] sm:$0xff] %vm1153, %v1127
        %1161 = vst.msk [vmem:[%s269 + $0x38] sm:$0xff] %vm1153, %v1128
        %1162 = vst.msk [vmem:[%s269 + $0x40] sm:$0xff] %vm1153, %v1129
        %1163 = vst.msk [vmem:[%s269 + $0x48] sm:$0xff] %vm1153, %v1130
        %1164 = vst.msk [vmem:[%s269 + $0x50] sm:$0xff] %vm1153, %v1131
        %1165 = vst.msk [vmem:[%s269 + $0x58] sm:$0xff] %vm1153, %v1132
        %1166 = vst.msk [vmem:[%s269 + $0x60] sm:$0xff] %vm1153, %v1133
        %1167 = vst.msk [vmem:[%s269 + $0x68] sm:$0xff] %vm1153, %v1134
        %1168 = vst.msk [vmem:[%s269 + $0x70] sm:$0xff] %vm1153, %v1135
        %1169 = vst.msk [vmem:[%s269 + $0x78] sm:$0xff] %vm1153, %v1136
        %1170 = vst.msk [vmem:[%s269 + $0x80] sm:$0xff] %vm1153, %v1137
        %1171 = vst.msk [vmem:[%s269 + $0x88] sm:$0xff] %vm1153, %v1138
        %1172 = vst.msk [vmem:[%s269 + $0x90] sm:$0xff] %vm1153, %v1139
        %1173 = vst.msk [vmem:[%s269 + $0x98] sm:$0xff] %vm1153, %v1140
        %1174 = vst.msk [vmem:[%s269 + $0xa0] sm:$0xff] %vm1153, %v1141
        %1175 = vst.msk [vmem:[%s269 + $0xa8] sm:$0xff] %vm1153, %v1142
        %1176 = vst.msk [vmem:[%s269 + $0xb0] sm:$0xff] %vm1153, %v1143
        %1177 = vst.msk [vmem:[%s269 + $0xb8] sm:$0xff] %vm1153, %v1144
        %1178 = vst.msk [vmem:[%s269 + $0xc0] sm:$0xff] %vm1153, %v1145
        %1179 = vst.msk [vmem:[%s269 + $0xc8] sm:$0xff] %vm1153, %v1146
        %1180 = vst.msk [vmem:[%s269 + $0xd0] sm:$0xff] %vm1153, %v1147
        %1181 = vst.msk [vmem:[%s269 + $0xd8] sm:$0xff] %vm1153, %v1148
        %1182 = vst.msk [vmem:[%s269 + $0xe0] sm:$0xff] %vm1153, %v1149
        %1183 = vst.msk [vmem:[%s269 + $0xe8] sm:$0xff] %vm1153, %v1150
        %1184 = vst.msk [vmem:[%s269 + $0xf0] sm:$0xff] %vm1153, %v1151
        %1185 = vst.msk [vmem:[%s269 + $0xf8] sm:$0xff] %vm1153, %v1152
        %s1186 = sand.u32 %s132, 1
        %s1187 = sand.u32 %s132, 1
        %s1188 = smul.addr %s1187, 128
        %s1189 = scalar_lea.vmem [#allocation2], %s1188
        %s1190 = smul.u32 %s21, 2
        %s1191 = sadd.s32 %s1190, %s22
        %p1192 = scmp.lt.s32.totalorder %s1191, 3
        %s1193 = scalar_select %p1192, %s1191, 3
        %s1194 = smul.addr %s1193, 32
        %s1195 = smul.addr %s1194, 8
        %s1196 = scalar_lea.vmem %s5, %s1195
        // Predicated region
        $region37: #{bottleneck_forward.6} parent=35 // pred_check
          %p1197 = pneg %p142
        $region38: #{bottleneck_forward.6} parent=35 // pred_check_branch
          %1199 = sbr.rel (%p1197) target = $region40
        $region39: #{bottleneck_forward.6} parent=35 // pred_region
          %s1200 = smul.addr %s21, 64
          %s1201 = sadd.s32 %s22, %s1200
          %s1202 = smul.addr %s1201, 4
          %s1203 = scalar_lea.vmem %s4, %s1202
          // Predicated region
          $region41: #{bottleneck_forward.6} parent=39 // pred_check
            _
          $region42: #{bottleneck_forward.6} parent=39 // pred_check_branch
            %1205 = sbr.rel (0) target = $region44
          $region43: #{bottleneck_forward.6} parent=39 // pred_region
            // Predicated region
            $region45: #{bottleneck_forward.6} parent=43 // pred_check
              _
            $region46: #{bottleneck_forward.6} parent=43 // pred_check_branch
              %1207 = sbr.rel target = $region48
            $region47: #{bottleneck_forward.6} parent=43 // pred_region
              // Predicated region
              $region60: #{bottleneck_forward.6} parent=47 // pred_check
                _
              $region61: #{bottleneck_forward.6} parent=47 // pred_check_branch
                %1284 = sbr.rel (0) target = $region63
              $region62: #{bottleneck_forward.6} parent=47 // pred_region
                loop: start=0, step=1, limit=1
                $region64: #{bottleneck_forward.6} parent=62 // loop_pre_header
                  _
                $region65: #{bottleneck_forward.6} parent=62 // loop_header
                  %s1286 = sphi 0, %s1290
                  %p1287 = scmp.ge.s32.totalorder %s1286, 1
                  %s1291 = sphi %s1189, %s1189
                  %s1292 = sphi %s1203, %s1203
                $region66: #{bottleneck_forward.6} parent=62 // loop_header_branch
                  %1289 = sbr.rel (%p1287) target = $region70
                $region67: #{bottleneck_forward.6} parent=62 // loop_body
                  _
                $region68: #{bottleneck_forward.6} parent=62 // loop_footer
                  %s1290 = sadd.s32 1, %s1286
                $region69: #{bottleneck_forward.6} parent=62 // loop_footer_branch
                  %1285 = sbr.rel target = $region65
                $region70: #{bottleneck_forward.6} parent=62 // loop_exit
                  _
                loop: start=0, step=1, limit=1
                $region71: #{bottleneck_forward.6} parent=62 // loop_pre_header
                  _
                $region72: #{bottleneck_forward.6} parent=62 // loop_header
                  %s1295 = sphi 0, %s1299
                  %p1296 = scmp.ge.s32.totalorder %s1295, 1
                  %s1300 = sphi %s1189, %s1189
                  %s1301 = sphi %s1203, %s1203
                $region73: #{bottleneck_forward.6} parent=62 // loop_header_branch
                  %1298 = sbr.rel (%p1296) target = $region77
                $region74: #{bottleneck_forward.6} parent=62 // loop_body
                  %v1302 = vld [vmem:[%s1300] sm:$0xf]
                  %1303 = vst [vmem:[%s1301] sm:$0xf] %v1302
                  %v1304 = vld [vmem:[%s1300 + $0x4] sm:$0xf]
                  %1305 = vst [vmem:[%s1301 + $0x8] sm:$0xf] %v1304
                  %v1306 = vld [vmem:[%s1300 + $0x8] sm:$0xf]
                  %1307 = vst [vmem:[%s1301 + $0x10] sm:$0xf] %v1306
                  %v1308 = vld [vmem:[%s1300 + $0xc] sm:$0xf]
                  %1309 = vst [vmem:[%s1301 + $0x18] sm:$0xf] %v1308
                  %v1310 = vld [vmem:[%s1300 + $0x10] sm:$0xf]
                  %1311 = vst [vmem:[%s1301 + $0x20] sm:$0xf] %v1310
                  %v1312 = vld [vmem:[%s1300 + $0x14] sm:$0xf]
                  %1313 = vst [vmem:[%s1301 + $0x28] sm:$0xf] %v1312
                  %v1314 = vld [vmem:[%s1300 + $0x18] sm:$0xf]
                  %1315 = vst [vmem:[%s1301 + $0x30] sm:$0xf] %v1314
                  %v1316 = vld [vmem:[%s1300 + $0x1c] sm:$0xf]
                  %1317 = vst [vmem:[%s1301 + $0x38] sm:$0xf] %v1316
                  %v1318 = vld [vmem:[%s1300 + $0x20] sm:$0xf]
                  %1319 = vst [vmem:[%s1301 + $0x40] sm:$0xf] %v1318
                  %v1320 = vld [vmem:[%s1300 + $0x24] sm:$0xf]
                  %1321 = vst [vmem:[%s1301 + $0x48] sm:$0xf] %v1320
                  %v1322 = vld [vmem:[%s1300 + $0x28] sm:$0xf]
                  %1323 = vst [vmem:[%s1301 + $0x50] sm:$0xf] %v1322
                  %v1324 = vld [vmem:[%s1300 + $0x2c] sm:$0xf]
                  %1325 = vst [vmem:[%s1301 + $0x58] sm:$0xf] %v1324
                  %v1326 = vld [vmem:[%s1300 + $0x30] sm:$0xf]
                  %1327 = vst [vmem:[%s1301 + $0x60] sm:$0xf] %v1326
                  %v1328 = vld [vmem:[%s1300 + $0x34] sm:$0xf]
                  %1329 = vst [vmem:[%s1301 + $0x68] sm:$0xf] %v1328
                  %v1330 = vld [vmem:[%s1300 + $0x38] sm:$0xf]
                  %1331 = vst [vmem:[%s1301 + $0x70] sm:$0xf] %v1330
                  %v1332 = vld [vmem:[%s1300 + $0x3c] sm:$0xf]
                  %1333 = vst [vmem:[%s1301 + $0x78] sm:$0xf] %v1332
                  %v1334 = vld [vmem:[%s1300 + $0x40] sm:$0xf]
                  %1335 = vst [vmem:[%s1301 + $0x80] sm:$0xf] %v1334
                  %v1336 = vld [vmem:[%s1300 + $0x44] sm:$0xf]
                  %1337 = vst [vmem:[%s1301 + $0x88] sm:$0xf] %v1336
                  %v1338 = vld [vmem:[%s1300 + $0x48] sm:$0xf]
                  %1339 = vst [vmem:[%s1301 + $0x90] sm:$0xf] %v1338
                  %v1340 = vld [vmem:[%s1300 + $0x4c] sm:$0xf]
                  %1341 = vst [vmem:[%s1301 + $0x98] sm:$0xf] %v1340
                  %v1342 = vld [vmem:[%s1300 + $0x50] sm:$0xf]
                  %1343 = vst [vmem:[%s1301 + $0xa0] sm:$0xf] %v1342
                  %v1344 = vld [vmem:[%s1300 + $0x54] sm:$0xf]
                  %1345 = vst [vmem:[%s1301 + $0xa8] sm:$0xf] %v1344
                  %v1346 = vld [vmem:[%s1300 + $0x58] sm:$0xf]
                  %1347 = vst [vmem:[%s1301 + $0xb0] sm:$0xf] %v1346
                  %v1348 = vld [vmem:[%s1300 + $0x5c] sm:$0xf]
                  %1349 = vst [vmem:[%s1301 + $0xb8] sm:$0xf] %v1348
                  %v1350 = vld [vmem:[%s1300 + $0x60] sm:$0xf]
                  %1351 = vst [vmem:[%s1301 + $0xc0] sm:$0xf] %v1350
                  %v1352 = vld [vmem:[%s1300 + $0x64] sm:$0xf]
                  %1353 = vst [vmem:[%s1301 + $0xc8] sm:$0xf] %v1352
                  %v1354 = vld [vmem:[%s1300 + $0x68] sm:$0xf]
                  %1355 = vst [vmem:[%s1301 + $0xd0] sm:$0xf] %v1354
                  %v1356 = vld [vmem:[%s1300 + $0x6c] sm:$0xf]
                  %1357 = vst [vmem:[%s1301 + $0xd8] sm:$0xf] %v1356
                  %v1358 = vld [vmem:[%s1300 + $0x70] sm:$0xf]
                  %1359 = vst [vmem:[%s1301 + $0xe0] sm:$0xf] %v1358
                  %v1360 = vld [vmem:[%s1300 + $0x74] sm:$0xf]
                  %1361 = vst [vmem:[%s1301 + $0xe8] sm:$0xf] %v1360
                  %v1362 = vld [vmem:[%s1300 + $0x78] sm:$0xf]
                  %1363 = vst [vmem:[%s1301 + $0xf0] sm:$0xf] %v1362
                  %v1364 = vld [vmem:[%s1300 + $0x7c] sm:$0xf]
                  %1365 = vst [vmem:[%s1301 + $0xf8] sm:$0xf] %v1364
                $region75: #{bottleneck_forward.6} parent=62 // loop_footer
                  %s1299 = sadd.s32 1, %s1295
                $region76: #{bottleneck_forward.6} parent=62 // loop_footer_branch
                  %1294 = sbr.rel target = $region72
                $region77: #{bottleneck_forward.6} parent=62 // loop_exit
                  _
              $region63: #{bottleneck_forward.6} parent=47 // pred_fallthru
                _
            $region48: #{bottleneck_forward.6} parent=43 // pred_fallthru
              _
            // Predicated region
            $region49: #{bottleneck_forward.6} parent=43 // pred_check
              _
            $region50: #{bottleneck_forward.6} parent=43 // pred_check_branch
              %1209 = sbr.rel (0) target = $region52
            $region51: #{bottleneck_forward.6} parent=43 // pred_region
              loop: start=0, step=1, limit=1
              $region53: #{bottleneck_forward.6} parent=51 // loop_pre_header
                _
              $region54: #{bottleneck_forward.6} parent=51 // loop_header
                %s1212 = sphi 0, %s1216
                %p1213 = scmp.ge.s32.totalorder %s1212, 1
                %s1217 = sphi %s1189, %s1189
                %s1218 = sphi %s1203, %s1203
              $region55: #{bottleneck_forward.6} parent=51 // loop_header_branch
                %1215 = sbr.rel (%p1213) target = $region59
              $region56: #{bottleneck_forward.6} parent=51 // loop_body
                %v1219 = vld [vmem:[%s1217] sm:$0xf]
                %1220 = vst [vmem:[%s1218] sm:$0xf] %v1219
                %v1221 = vld [vmem:[%s1217 + $0x4] sm:$0xf]
                %1222 = vst [vmem:[%s1218 + $0x8] sm:$0xf] %v1221
                %v1223 = vld [vmem:[%s1217 + $0x8] sm:$0xf]
                %1224 = vst [vmem:[%s1218 + $0x10] sm:$0xf] %v1223
                %v1225 = vld [vmem:[%s1217 + $0xc] sm:$0xf]
                %1226 = vst [vmem:[%s1218 + $0x18] sm:$0xf] %v1225
                %v1227 = vld [vmem:[%s1217 + $0x10] sm:$0xf]
                %1228 = vst [vmem:[%s1218 + $0x20] sm:$0xf] %v1227
                %v1229 = vld [vmem:[%s1217 + $0x14] sm:$0xf]
                %1230 = vst [vmem:[%s1218 + $0x28] sm:$0xf] %v1229
                %v1231 = vld [vmem:[%s1217 + $0x18] sm:$0xf]
                %1232 = vst [vmem:[%s1218 + $0x30] sm:$0xf] %v1231
                %v1233 = vld [vmem:[%s1217 + $0x1c] sm:$0xf]
                %1234 = vst [vmem:[%s1218 + $0x38] sm:$0xf] %v1233
                %v1235 = vld [vmem:[%s1217 + $0x20] sm:$0xf]
                %1236 = vst [vmem:[%s1218 + $0x40] sm:$0xf] %v1235
                %v1237 = vld [vmem:[%s1217 + $0x24] sm:$0xf]
                %1238 = vst [vmem:[%s1218 + $0x48] sm:$0xf] %v1237
                %v1239 = vld [vmem:[%s1217 + $0x28] sm:$0xf]
                %1240 = vst [vmem:[%s1218 + $0x50] sm:$0xf] %v1239
                %v1241 = vld [vmem:[%s1217 + $0x2c] sm:$0xf]
                %1242 = vst [vmem:[%s1218 + $0x58] sm:$0xf] %v1241
                %v1243 = vld [vmem:[%s1217 + $0x30] sm:$0xf]
                %1244 = vst [vmem:[%s1218 + $0x60] sm:$0xf] %v1243
                %v1245 = vld [vmem:[%s1217 + $0x34] sm:$0xf]
                %1246 = vst [vmem:[%s1218 + $0x68] sm:$0xf] %v1245
                %v1247 = vld [vmem:[%s1217 + $0x38] sm:$0xf]
                %1248 = vst [vmem:[%s1218 + $0x70] sm:$0xf] %v1247
                %v1249 = vld [vmem:[%s1217 + $0x3c] sm:$0xf]
                %1250 = vst [vmem:[%s1218 + $0x78] sm:$0xf] %v1249
                %v1251 = vld [vmem:[%s1217 + $0x40] sm:$0xf]
                %1252 = vst [vmem:[%s1218 + $0x80] sm:$0xf] %v1251
                %v1253 = vld [vmem:[%s1217 + $0x44] sm:$0xf]
                %1254 = vst [vmem:[%s1218 + $0x88] sm:$0xf] %v1253
                %v1255 = vld [vmem:[%s1217 + $0x48] sm:$0xf]
                %1256 = vst [vmem:[%s1218 + $0x90] sm:$0xf] %v1255
                %v1257 = vld [vmem:[%s1217 + $0x4c] sm:$0xf]
                %1258 = vst [vmem:[%s1218 + $0x98] sm:$0xf] %v1257
                %v1259 = vld [vmem:[%s1217 + $0x50] sm:$0xf]
                %1260 = vst [vmem:[%s1218 + $0xa0] sm:$0xf] %v1259
                %v1261 = vld [vmem:[%s1217 + $0x54] sm:$0xf]
                %1262 = vst [vmem:[%s1218 + $0xa8] sm:$0xf] %v1261
                %v1263 = vld [vmem:[%s1217 + $0x58] sm:$0xf]
                %1264 = vst [vmem:[%s1218 + $0xb0] sm:$0xf] %v1263
                %v1265 = vld [vmem:[%s1217 + $0x5c] sm:$0xf]
                %1266 = vst [vmem:[%s1218 + $0xb8] sm:$0xf] %v1265
                %v1267 = vld [vmem:[%s1217 + $0x60] sm:$0xf]
                %1268 = vst [vmem:[%s1218 + $0xc0] sm:$0xf] %v1267
                %v1269 = vld [vmem:[%s1217 + $0x64] sm:$0xf]
                %1270 = vst [vmem:[%s1218 + $0xc8] sm:$0xf] %v1269
                %v1271 = vld [vmem:[%s1217 + $0x68] sm:$0xf]
                %1272 = vst [vmem:[%s1218 + $0xd0] sm:$0xf] %v1271
                %v1273 = vld [vmem:[%s1217 + $0x6c] sm:$0xf]
                %1274 = vst [vmem:[%s1218 + $0xd8] sm:$0xf] %v1273
                %v1275 = vld [vmem:[%s1217 + $0x70] sm:$0xf]
                %1276 = vst [vmem:[%s1218 + $0xe0] sm:$0xf] %v1275
                %v1277 = vld [vmem:[%s1217 + $0x74] sm:$0xf]
                %1278 = vst [vmem:[%s1218 + $0xe8] sm:$0xf] %v1277
                %v1279 = vld [vmem:[%s1217 + $0x78] sm:$0xf]
                %1280 = vst [vmem:[%s1218 + $0xf0] sm:$0xf] %v1279
                %v1281 = vld [vmem:[%s1217 + $0x7c] sm:$0xf]
                %1282 = vst [vmem:[%s1218 + $0xf8] sm:$0xf] %v1281
              $region57: #{bottleneck_forward.6} parent=51 // loop_footer
                %s1216 = sadd.s32 1, %s1212
              $region58: #{bottleneck_forward.6} parent=51 // loop_footer_branch
                %1211 = sbr.rel target = $region54
              $region59: #{bottleneck_forward.6} parent=51 // loop_exit
                _
            $region52: #{bottleneck_forward.6} parent=43 // pred_fallthru
              _
          $region44: #{bottleneck_forward.6} parent=39 // pred_fallthru
            _
          %1366 = vnop
        $region40: #{bottleneck_forward.6} parent=35 // pred_fallthru
          _
        // Predicated region
        $region78: #{bottleneck_forward.6} parent=35 // pred_check
          %p1367 = pneg %p172
        $region79: #{bottleneck_forward.6} parent=35 // pred_check_branch
          %1369 = sbr.rel (%p1367) target = $region81
        $region80: #{bottleneck_forward.6} parent=35 // pred_region
          %s1370 = smul.u32 %s21, 2
          %s1371 = sadd.s32 %s1370, %s22
        $region81: #{bottleneck_forward.6} parent=35 // pred_fallthru
          _
      $region36: #{bottleneck_forward.6} parent=5 // pred_fallthru
        _
      %p1372 = scmp.le.s32.totalorder 2, %s12
      // Predicated region
      $region82: #{bottleneck_forward.6} parent=5 // pred_check
        %p1373 = pneg %p1372
      $region83: #{bottleneck_forward.6} parent=5 // pred_check_branch
        %1375 = sbr.rel (%p1373) target = $region85
      $region84: #{bottleneck_forward.6} parent=5 // pred_region
        %s1376 = ssub.s32 %s12, 2
        // Predicated region
        $region86: #{bottleneck_forward.6} parent=84 // pred_check
          %p1377 = pneg %p148
        $region87: #{bottleneck_forward.6} parent=84 // pred_check_branch
          %1379 = sbr.rel (%p1377) target = $region89
        $region88: #{bottleneck_forward.6} parent=84 // pred_region
          %s1380 = sand.u32 %s133, 1
          %s1381 = sand.u32 %s133, 1
          %s1382 = smul.addr %s1381, 128
          %s1383 = scalar_lea.vmem [#allocation2], %s1382
        $region89: #{bottleneck_forward.6} parent=84 // pred_fallthru
          _
        // Predicated region
        $region90: #{bottleneck_forward.6} parent=84 // pred_check
          %p1384 = pneg %p178
        $region91: #{bottleneck_forward.6} parent=84 // pred_check_branch
          %1386 = sbr.rel (%p1384) target = $region93
        $region92: #{bottleneck_forward.6} parent=84 // pred_region
          %s1387 = smul.u32 %s23, 2
          %s1388 = sadd.s32 %s1387, %s24
          %p1389 = scmp.lt.s32.totalorder %s1388, 3
          %s1390 = scalar_select %p1389, %s1388, 3
          %s1391 = smul.addr %s1390, 32
          %s1392 = smul.addr %s1391, 8
          %s1393 = scalar_lea.vmem %s5, %s1392
        $region93: #{bottleneck_forward.6} parent=84 // pred_fallthru
          _
      $region85: #{bottleneck_forward.6} parent=5 // pred_fallthru
        _
    $region6: #{bottleneck_forward.6} parent=1 // loop_footer
      %s16 = sadd.s32 1, %s12
    $region7: #{bottleneck_forward.6} parent=1 // loop_footer_branch
      %11 = sbr.rel target = $region3
    $region8: #{bottleneck_forward.6} parent=1 // loop_exit
      _

// kernel: bottleneck_forward.7
$region0: #{bottleneck_forward.7}
  #allocation0 [shape = 'u32[]', space=smem, size = 0x4, offset = 0x4, fixed_abs, tag = 'smem constant byte address 0x4 - core index']
  #allocation1 [shape = 'u32[144,128]{1,0:T(1,128)}', space=vmem, size = 0x12000, scoped, tag = 'internal scratch']
  %s0 = inlined_call_operand.vmem [shape: bf16[2,256,256], index: 0, kind: input, shape index: {}]
  %s1 = inlined_call_operand.vmem [shape: f32[2,256,256], index: 1, kind: input, shape index: {}]
  %s2 = inlined_call_operand.vmem [shape: f32[256,1], index: 2, kind: input, shape index: {}]
  %s3 = inlined_call_operand.vmem [shape: f32[256,1], index: 3, kind: input, shape index: {}]
  %s4 = inlined_call_operand.vmem [shape: f32[2,256,256], index: 4, kind: output, shape index: {}]
  %s5 = sld [smem:[#allocation0]]
  $region162: #{bottleneck_forward.7} parent=0
    _
  %s7 = ssub.s32 1, %s5
  %s8 = scalar_select 0, %s7, %s5
  $region1: #{bottleneck_forward.7} parent=0
    #allocation2 [shape = 'u8[131072]{0}', space=vmem, size = 0x20000, scoped, tag = 'input window, operand 0']
    #allocation3 [shape = 'u8[262144]{0}', space=vmem, size = 0x40000, scoped, tag = 'input window, operand 1']
    #allocation4 [shape = 'u8[262144]{0}', space=vmem, size = 0x40000, scoped, tag = 'output window, operand 0']
    loop: start=0, step=1, limit=6
    $region2: #{bottleneck_forward.7} parent=1 // loop_pre_header
      _
    $region3: #{bottleneck_forward.7} parent=1 // loop_header
      %s10 = sphi 0, %s14
      %p11 = scmp.ge.s32.totalorder %s10, 6
      %s17 = sphi 0, %s29
      %s18 = sphi 0, %s25
      %s19 = sphi 0, %s17
      %s20 = sphi 0, %s18
      %s21 = sphi 0, %s19
      %s22 = sphi 0, %s20
      %s34 = sphi 0, %s36
      %s37 = sphi 0, %s34
      %s38 = sphi 0, %s37
      %s54 = sphi 0, %s38
      %s62 = sphi 0, %s64
      %s65 = sphi 0, %s62
      %s66 = sphi 0, %s65
      %s82 = sphi 0, %s66
      %s86 = sphi 0, %s86
      %s88 = sphi 0, %s86
      %s89 = sphi 0, %s88
      %s103 = sphi 0, %s89
      %s107 = sphi 0, %s107
      %s109 = sphi 0, %s107
      %s110 = sphi 0, %s109
      %s124 = sphi 0, %s110
      %s132 = sphi 0, %s134
      %s135 = sphi 0, %s132
      %s136 = sphi 0, %s135
      %s152 = sphi 0, %s136
    $region4: #{bottleneck_forward.7} parent=1 // loop_header_branch
      %13 = sbr.rel (%p11) target = $region8
    $region5: #{bottleneck_forward.7} parent=1 // loop_body
      %s15 = ssub.s32 %s10, 1
      %s16 = ssub.s32 %s10, 2
      %s23 = sadd.s32 1, %s18
      %p24 = scmp.ge.s32.totalorder %s23, 2
      %s25 = scalar_select %p24, 0, %s23
      %s26 = sadd.s32 1, %s17
      %s27 = scalar_select %p24, %s26, %s17
      %p28 = scmp.ge.s32.totalorder %s27, 2
      %s29 = scalar_select %p28, 0, %s27
      %s30 = ssub.s32 %s17, %s29
      %s31 = ssub.s32 %s18, %s25
      %s32 = sor.u32 %s30, %s31
      %p33 = scmp.eq.s32.totalorder %s32, 0
      %s35 = sadd.s32 %s34, 1
      %s36 = scalar_select %p33, %s34, %s35
      %p39 = pneg %p33
      %p40 = scmp.eq.s32.totalorder %s10, 3
      %p41 = por %p39, %p40
      %p42 = scmp.ne.s32.totalorder %s34, %s37
      %p43 = scmp.eq.s32.totalorder %s10, 0
      %p44 = por %p42, %p43
      %p45 = scmp.ne.s32.totalorder %s34, %s37
      %p46 = scmp.eq.s32.totalorder %s15, 3
      %p47 = por %p45, %p46
      %p48 = scmp.ne.s32.totalorder %s37, %s38
      %p49 = scmp.eq.s32.totalorder %s15, 0
      %p50 = por %p48, %p49
      %p51 = scmp.ne.s32.totalorder %s37, %s38
      %p52 = scmp.eq.s32.totalorder %s16, 3
      %p53 = por %p51, %p52
      %p55 = scmp.ne.s32.totalorder %s38, %s54
      %p56 = scmp.eq.s32.totalorder %s16, 0
      %p57 = por %p55, %p56
      %s58 = ssub.s32 %s17, %s29
      %s59 = ssub.s32 %s18, %s25
      %s60 = sor.u32 %s58, %s59
      %p61 = scmp.eq.s32.totalorder %s60, 0
      %s63 = sadd.s32 %s62, 1
      %s64 = scalar_select %p61, %s62, %s63
      %p67 = pneg %p61
      %p68 = scmp.eq.s32.totalorder %s10, 3
      %p69 = por %p67, %p68
      %p70 = scmp.ne.s32.totalorder %s62, %s65
      %p71 = scmp.eq.s32.totalorder %s10, 0
      %p72 = por %p70, %p71
      %p73 = scmp.ne.s32.totalorder %s62, %s65
      %p74 = scmp.eq.s32.totalorder %s15, 3
      %p75 = por %p73, %p74
      %p76 = scmp.ne.s32.totalorder %s65, %s66
      %p77 = scmp.eq.s32.totalorder %s15, 0
      %p78 = por %p76, %p77
      %p79 = scmp.ne.s32.totalorder %s65, %s66
      %p80 = scmp.eq.s32.totalorder %s16, 3
      %p81 = por %p79, %p80
      %p83 = scmp.ne.s32.totalorder %s66, %s82
      %p84 = scmp.eq.s32.totalorder %s16, 0
      %p85 = por %p83, %p84
      %s87 = sadd.s32 %s86, 1
      %p90 = scmp.eq.s32.totalorder %s10, 3
      %p91 = scmp.ne.s32.totalorder %s86, %s88
      %p92 = scmp.eq.s32.totalorder %s10, 0
      %p93 = por %p91, %p92
      %p94 = scmp.ne.s32.totalorder %s86, %s88
      %p95 = scmp.eq.s32.totalorder %s15, 3
      %p96 = por %p94, %p95
      %p97 = scmp.ne.s32.totalorder %s88, %s89
      %p98 = scmp.eq.s32.totalorder %s15, 0
      %p99 = por %p97, %p98
      %p100 = scmp.ne.s32.totalorder %s88, %s89
      %p101 = scmp.eq.s32.totalorder %s16, 3
      %p102 = por %p100, %p101
      %p104 = scmp.ne.s32.totalorder %s89, %s103
      %p105 = scmp.eq.s32.totalorder %s16, 0
      %p106 = por %p104, %p105
      %s108 = sadd.s32 %s107, 1
      %p111 = scmp.eq.s32.totalorder %s10, 3
      %p112 = scmp.ne.s32.totalorder %s107, %s109
      %p113 = scmp.eq.s32.totalorder %s10, 0
      %p114 = por %p112, %p113
      %p115 = scmp.ne.s32.totalorder %s107, %s109
      %p116 = scmp.eq.s32.totalorder %s15, 3
      %p117 = por %p115, %p116
      %p118 = scmp.ne.s32.totalorder %s109, %s110
      %p119 = scmp.eq.s32.totalorder %s15, 0
      %p120 = por %p118, %p119
      %p121 = scmp.ne.s32.totalorder %s109, %s110
      %p122 = scmp.eq.s32.totalorder %s16, 3
      %p123 = por %p121, %p122
      %p125 = scmp.ne.s32.totalorder %s110, %s124
      %p126 = scmp.eq.s32.totalorder %s16, 0
      %p127 = por %p125, %p126
      %s128 = ssub.s32 %s17, %s29
      %s129 = ssub.s32 %s18, %s25
      %s130 = sor.u32 %s128, %s129
      %p131 = scmp.eq.s32.totalorder %s130, 0
      %s133 = sadd.s32 %s132, 1
      %s134 = scalar_select %p131, %s132, %s133
      %p137 = pneg %p131
      %p138 = scmp.eq.s32.totalorder %s10, 3
      %p139 = por %p137, %p138
      %p140 = scmp.ne.s32.totalorder %s132, %s135
      %p141 = scmp.eq.s32.totalorder %s10, 0
      %p142 = por %p140, %p141
      %p143 = scmp.ne.s32.totalorder %s132, %s135
      %p144 = scmp.eq.s32.totalorder %s15, 3
      %p145 = por %p143, %p144
      %p146 = scmp.ne.s32.totalorder %s135, %s136
      %p147 = scmp.eq.s32.totalorder %s15, 0
      %p148 = por %p146, %p147
      %p149 = scmp.ne.s32.totalorder %s135, %s136
      %p150 = scmp.eq.s32.totalorder %s16, 3
      %p151 = por %p149, %p150
      %p153 = scmp.ne.s32.totalorder %s136, %s152
      %p154 = scmp.eq.s32.totalorder %s16, 0
      %p155 = por %p153, %p154
      %p156 = scmp.le.s32.totalorder 1, %s10
      %p157 = scmp.lt.s32.totalorder %s10, 5
      %p158 = pnand %p156, %p157
      %p159 = pneg %p158
      // Predicated region
      $region9: #{bottleneck_forward.7} parent=5 // pred_check
        _
      $region10: #{bottleneck_forward.7} parent=5 // pred_check_branch
        %161 = sbr.rel (%p158) target = $region12
      $region11: #{bottleneck_forward.7} parent=5 // pred_region
        %s162 = ssub.s32 %s10, 1
        // Predicated region
        $region13: #{bottleneck_forward.7} parent=11 // pred_check
          %p163 = pneg %p99
        $region14: #{bottleneck_forward.7} parent=11 // pred_check_branch
          %165 = sbr.rel (%p163) target = $region16
        $region15: #{bottleneck_forward.7} parent=11 // pred_region
          _
        $region16: #{bottleneck_forward.7} parent=11 // pred_fallthru
          _
        // Predicated region
        $region17: #{bottleneck_forward.7} parent=11 // pred_check
          %p166 = pneg %p120
        $region18: #{bottleneck_forward.7} parent=11 // pred_check_branch
          %168 = sbr.rel (%p166) target = $region20
        $region19: #{bottleneck_forward.7} parent=11 // pred_region
          _
        $region20: #{bottleneck_forward.7} parent=11 // pred_fallthru
          _
      $region12: #{bottleneck_forward.7} parent=5 // pred_fallthru
        _
      %p169 = scmp.lt.s32.totalorder %s10, 4
      // Predicated region
      $region21: #{bottleneck_forward.7} parent=5 // pred_check
        %p170 = pneg %p169
      $region22: #{bottleneck_forward.7} parent=5 // pred_check_branch
        %172 = sbr.rel (%p170) target = $region24
      $region23: #{bottleneck_forward.7} parent=5 // pred_region
        // Predicated region
        $region25: #{bottleneck_forward.7} parent=23 // pred_check
          %p173 = pneg %p44
        $region26: #{bottleneck_forward.7} parent=23 // pred_check_branch
          %175 = sbr.rel (%p173) target = $region28
        $region27: #{bottleneck_forward.7} parent=23 // pred_region
          %s176 = sand.u32 %s34, 1
          %s177 = sand.u32 %s34, 1
          %s178 = smul.addr %s177, 128
          %s179 = scalar_lea.vmem [#allocation2], %s178
          %s180 = smul.addr %s17, 64
          %s181 = sadd.s32 %s18, %s180
          %s182 = smul.addr %s181, 4
          %s183 = scalar_lea.vmem %s0, %s182
          // Predicated region
          $region29: #{bottleneck_forward.7} parent=27 // pred_check
            _
          $region30: #{bottleneck_forward.7} parent=27 // pred_check_branch
            %185 = sbr.rel (0) target = $region32
          $region31: #{bottleneck_forward.7} parent=27 // pred_region
            // Predicated region
            $region33: #{bottleneck_forward.7} parent=31 // pred_check
              _
            $region34: #{bottleneck_forward.7} parent=31 // pred_check_branch
              %187 = sbr.rel target = $region36
            $region35: #{bottleneck_forward.7} parent=31 // pred_region
              // Predicated region
              $region48: #{bottleneck_forward.7} parent=35 // pred_check
                _
              $region49: #{bottleneck_forward.7} parent=35 // pred_check_branch
                %264 = sbr.rel (0) target = $region51
              $region50: #{bottleneck_forward.7} parent=35 // pred_region
                loop: start=0, step=1, limit=1
                $region52: #{bottleneck_forward.7} parent=50 // loop_pre_header
                  _
                $region53: #{bottleneck_forward.7} parent=50 // loop_header
                  %s266 = sphi 0, %s270
                  %p267 = scmp.ge.s32.totalorder %s266, 1
                  %s271 = sphi %s183, %s183
                  %s272 = sphi %s179, %s179
                $region54: #{bottleneck_forward.7} parent=50 // loop_header_branch
                  %269 = sbr.rel (%p267) target = $region58
                $region55: #{bottleneck_forward.7} parent=50 // loop_body
                  _
                $region56: #{bottleneck_forward.7} parent=50 // loop_footer
                  %s270 = sadd.s32 1, %s266
                $region57: #{bottleneck_forward.7} parent=50 // loop_footer_branch
                  %265 = sbr.rel target = $region53
                $region58: #{bottleneck_forward.7} parent=50 // loop_exit
                  _
                loop: start=0, step=1, limit=1
                $region59: #{bottleneck_forward.7} parent=50 // loop_pre_header
                  _
                $region60: #{bottleneck_forward.7} parent=50 // loop_header
                  %s275 = sphi 0, %s279
                  %p276 = scmp.ge.s32.totalorder %s275, 1
                  %s280 = sphi %s183, %s183
                  %s281 = sphi %s179, %s179
                $region61: #{bottleneck_forward.7} parent=50 // loop_header_branch
                  %278 = sbr.rel (%p276) target = $region65
                $region62: #{bottleneck_forward.7} parent=50 // loop_body
                  %v282 = vld [vmem:[%s280] sm:$0xf]
                  %283 = vst [vmem:[%s281] sm:$0xf] %v282
                  %v284 = vld [vmem:[%s280 + $0x8] sm:$0xf]
                  %285 = vst [vmem:[%s281 + $0x4] sm:$0xf] %v284
                  %v286 = vld [vmem:[%s280 + $0x10] sm:$0xf]
                  %287 = vst [vmem:[%s281 + $0x8] sm:$0xf] %v286
                  %v288 = vld [vmem:[%s280 + $0x18] sm:$0xf]
                  %289 = vst [vmem:[%s281 + $0xc] sm:$0xf] %v288
                  %v290 = vld [vmem:[%s280 + $0x20] sm:$0xf]
                  %291 = vst [vmem:[%s281 + $0x10] sm:$0xf] %v290
                  %v292 = vld [vmem:[%s280 + $0x28] sm:$0xf]
                  %293 = vst [vmem:[%s281 + $0x14] sm:$0xf] %v292
                  %v294 = vld [vmem:[%s280 + $0x30] sm:$0xf]
                  %295 = vst [vmem:[%s281 + $0x18] sm:$0xf] %v294
                  %v296 = vld [vmem:[%s280 + $0x38] sm:$0xf]
                  %297 = vst [vmem:[%s281 + $0x1c] sm:$0xf] %v296
                  %v298 = vld [vmem:[%s280 + $0x40] sm:$0xf]
                  %299 = vst [vmem:[%s281 + $0x20] sm:$0xf] %v298
                  %v300 = vld [vmem:[%s280 + $0x48] sm:$0xf]
                  %301 = vst [vmem:[%s281 + $0x24] sm:$0xf] %v300
                  %v302 = vld [vmem:[%s280 + $0x50] sm:$0xf]
                  %303 = vst [vmem:[%s281 + $0x28] sm:$0xf] %v302
                  %v304 = vld [vmem:[%s280 + $0x58] sm:$0xf]
                  %305 = vst [vmem:[%s281 + $0x2c] sm:$0xf] %v304
                  %v306 = vld [vmem:[%s280 + $0x60] sm:$0xf]
                  %307 = vst [vmem:[%s281 + $0x30] sm:$0xf] %v306
                  %v308 = vld [vmem:[%s280 + $0x68] sm:$0xf]
                  %309 = vst [vmem:[%s281 + $0x34] sm:$0xf] %v308
                  %v310 = vld [vmem:[%s280 + $0x70] sm:$0xf]
                  %311 = vst [vmem:[%s281 + $0x38] sm:$0xf] %v310
                  %v312 = vld [vmem:[%s280 + $0x78] sm:$0xf]
                  %313 = vst [vmem:[%s281 + $0x3c] sm:$0xf] %v312
                  %v314 = vld [vmem:[%s280 + $0x80] sm:$0xf]
                  %315 = vst [vmem:[%s281 + $0x40] sm:$0xf] %v314
                  %v316 = vld [vmem:[%s280 + $0x88] sm:$0xf]
                  %317 = vst [vmem:[%s281 + $0x44] sm:$0xf] %v316
                  %v318 = vld [vmem:[%s280 + $0x90] sm:$0xf]
                  %319 = vst [vmem:[%s281 + $0x48] sm:$0xf] %v318
                  %v320 = vld [vmem:[%s280 + $0x98] sm:$0xf]
                  %321 = vst [vmem:[%s281 + $0x4c] sm:$0xf] %v320
                  %v322 = vld [vmem:[%s280 + $0xa0] sm:$0xf]
                  %323 = vst [vmem:[%s281 + $0x50] sm:$0xf] %v322
                  %v324 = vld [vmem:[%s280 + $0xa8] sm:$0xf]
                  %325 = vst [vmem:[%s281 + $0x54] sm:$0xf] %v324
                  %v326 = vld [vmem:[%s280 + $0xb0] sm:$0xf]
                  %327 = vst [vmem:[%s281 + $0x58] sm:$0xf] %v326
                  %v328 = vld [vmem:[%s280 + $0xb8] sm:$0xf]
                  %329 = vst [vmem:[%s281 + $0x5c] sm:$0xf] %v328
                  %v330 = vld [vmem:[%s280 + $0xc0] sm:$0xf]
                  %331 = vst [vmem:[%s281 + $0x60] sm:$0xf] %v330
                  %v332 = vld [vmem:[%s280 + $0xc8] sm:$0xf]
                  %333 = vst [vmem:[%s281 + $0x64] sm:$0xf] %v332
                  %v334 = vld [vmem:[%s280 + $0xd0] sm:$0xf]
                  %335 = vst [vmem:[%s281 + $0x68] sm:$0xf] %v334
                  %v336 = vld [vmem:[%s280 + $0xd8] sm:$0xf]
                  %337 = vst [vmem:[%s281 + $0x6c] sm:$0xf] %v336
                  %v338 = vld [vmem:[%s280 + $0xe0] sm:$0xf]
                  %339 = vst [vmem:[%s281 + $0x70] sm:$0xf] %v338
                  %v340 = vld [vmem:[%s280 + $0xe8] sm:$0xf]
                  %341 = vst [vmem:[%s281 + $0x74] sm:$0xf] %v340
                  %v342 = vld [vmem:[%s280 + $0xf0] sm:$0xf]
                  %343 = vst [vmem:[%s281 + $0x78] sm:$0xf] %v342
                  %v344 = vld [vmem:[%s280 + $0xf8] sm:$0xf]
                  %345 = vst [vmem:[%s281 + $0x7c] sm:$0xf] %v344
                $region63: #{bottleneck_forward.7} parent=50 // loop_footer
                  %s279 = sadd.s32 1, %s275
                $region64: #{bottleneck_forward.7} parent=50 // loop_footer_branch
                  %274 = sbr.rel target = $region60
                $region65: #{bottleneck_forward.7} parent=50 // loop_exit
                  _
              $region51: #{bottleneck_forward.7} parent=35 // pred_fallthru
                _
            $region36: #{bottleneck_forward.7} parent=31 // pred_fallthru
              _
            // Predicated region
            $region37: #{bottleneck_forward.7} parent=31 // pred_check
              _
            $region38: #{bottleneck_forward.7} parent=31 // pred_check_branch
              %189 = sbr.rel (0) target = $region40
            $region39: #{bottleneck_forward.7} parent=31 // pred_region
              loop: start=0, step=1, limit=1
              $region41: #{bottleneck_forward.7} parent=39 // loop_pre_header
                _
              $region42: #{bottleneck_forward.7} parent=39 // loop_header
                %s192 = sphi 0, %s196
                %p193 = scmp.ge.s32.totalorder %s192, 1
                %s197 = sphi %s183, %s183
                %s198 = sphi %s179, %s179
              $region43: #{bottleneck_forward.7} parent=39 // loop_header_branch
                %195 = sbr.rel (%p193) target = $region47
              $region44: #{bottleneck_forward.7} parent=39 // loop_body
                %v199 = vld [vmem:[%s197] sm:$0xf]
                %200 = vst [vmem:[%s198] sm:$0xf] %v199
                %v201 = vld [vmem:[%s197 + $0x8] sm:$0xf]
                %202 = vst [vmem:[%s198 + $0x4] sm:$0xf] %v201
                %v203 = vld [vmem:[%s197 + $0x10] sm:$0xf]
                %204 = vst [vmem:[%s198 + $0x8] sm:$0xf] %v203
                %v205 = vld [vmem:[%s197 + $0x18] sm:$0xf]
                %206 = vst [vmem:[%s198 + $0xc] sm:$0xf] %v205
                %v207 = vld [vmem:[%s197 + $0x20] sm:$0xf]
                %208 = vst [vmem:[%s198 + $0x10] sm:$0xf] %v207
                %v209 = vld [vmem:[%s197 + $0x28] sm:$0xf]
                %210 = vst [vmem:[%s198 + $0x14] sm:$0xf] %v209
                %v211 = vld [vmem:[%s197 + $0x30] sm:$0xf]
                %212 = vst [vmem:[%s198 + $0x18] sm:$0xf] %v211
                %v213 = vld [vmem:[%s197 + $0x38] sm:$0xf]
                %214 = vst [vmem:[%s198 + $0x1c] sm:$0xf] %v213
                %v215 = vld [vmem:[%s197 + $0x40] sm:$0xf]
                %216 = vst [vmem:[%s198 + $0x20] sm:$0xf] %v215
                %v217 = vld [vmem:[%s197 + $0x48] sm:$0xf]
                %218 = vst [vmem:[%s198 + $0x24] sm:$0xf] %v217
                %v219 = vld [vmem:[%s197 + $0x50] sm:$0xf]
                %220 = vst [vmem:[%s198 + $0x28] sm:$0xf] %v219
                %v221 = vld [vmem:[%s197 + $0x58] sm:$0xf]
                %222 = vst [vmem:[%s198 + $0x2c] sm:$0xf] %v221
                %v223 = vld [vmem:[%s197 + $0x60] sm:$0xf]
                %224 = vst [vmem:[%s198 + $0x30] sm:$0xf] %v223
                %v225 = vld [vmem:[%s197 + $0x68] sm:$0xf]
                %226 = vst [vmem:[%s198 + $0x34] sm:$0xf] %v225
                %v227 = vld [vmem:[%s197 + $0x70] sm:$0xf]
                %228 = vst [vmem:[%s198 + $0x38] sm:$0xf] %v227
                %v229 = vld [vmem:[%s197 + $0x78] sm:$0xf]
                %230 = vst [vmem:[%s198 + $0x3c] sm:$0xf] %v229
                %v231 = vld [vmem:[%s197 + $0x80] sm:$0xf]
                %232 = vst [vmem:[%s198 + $0x40] sm:$0xf] %v231
                %v233 = vld [vmem:[%s197 + $0x88] sm:$0xf]
                %234 = vst [vmem:[%s198 + $0x44] sm:$0xf] %v233
                %v235 = vld [vmem:[%s197 + $0x90] sm:$0xf]
                %236 = vst [vmem:[%s198 + $0x48] sm:$0xf] %v235
                %v237 = vld [vmem:[%s197 + $0x98] sm:$0xf]
                %238 = vst [vmem:[%s198 + $0x4c] sm:$0xf] %v237
                %v239 = vld [vmem:[%s197 + $0xa0] sm:$0xf]
                %240 = vst [vmem:[%s198 + $0x50] sm:$0xf] %v239
                %v241 = vld [vmem:[%s197 + $0xa8] sm:$0xf]
                %242 = vst [vmem:[%s198 + $0x54] sm:$0xf] %v241
                %v243 = vld [vmem:[%s197 + $0xb0] sm:$0xf]
                %244 = vst [vmem:[%s198 + $0x58] sm:$0xf] %v243
                %v245 = vld [vmem:[%s197 + $0xb8] sm:$0xf]
                %246 = vst [vmem:[%s198 + $0x5c] sm:$0xf] %v245
                %v247 = vld [vmem:[%s197 + $0xc0] sm:$0xf]
                %248 = vst [vmem:[%s198 + $0x60] sm:$0xf] %v247
                %v249 = vld [vmem:[%s197 + $0xc8] sm:$0xf]
                %250 = vst [vmem:[%s198 + $0x64] sm:$0xf] %v249
                %v251 = vld [vmem:[%s197 + $0xd0] sm:$0xf]
                %252 = vst [vmem:[%s198 + $0x68] sm:$0xf] %v251
                %v253 = vld [vmem:[%s197 + $0xd8] sm:$0xf]
                %254 = vst [vmem:[%s198 + $0x6c] sm:$0xf] %v253
                %v255 = vld [vmem:[%s197 + $0xe0] sm:$0xf]
                %256 = vst [vmem:[%s198 + $0x70] sm:$0xf] %v255
                %v257 = vld [vmem:[%s197 + $0xe8] sm:$0xf]
                %258 = vst [vmem:[%s198 + $0x74] sm:$0xf] %v257
                %v259 = vld [vmem:[%s197 + $0xf0] sm:$0xf]
                %260 = vst [vmem:[%s198 + $0x78] sm:$0xf] %v259
                %v261 = vld [vmem:[%s197 + $0xf8] sm:$0xf]
                %262 = vst [vmem:[%s198 + $0x7c] sm:$0xf] %v261
              $region45: #{bottleneck_forward.7} parent=39 // loop_footer
                %s196 = sadd.s32 1, %s192
              $region46: #{bottleneck_forward.7} parent=39 // loop_footer_branch
                %191 = sbr.rel target = $region42
              $region47: #{bottleneck_forward.7} parent=39 // loop_exit
                _
            $region40: #{bottleneck_forward.7} parent=31 // pred_fallthru
              _
          $region32: #{bottleneck_forward.7} parent=27 // pred_fallthru
            _
          %346 = vnop
        $region28: #{bottleneck_forward.7} parent=23 // pred_fallthru
          _
        // Predicated region
        $region66: #{bottleneck_forward.7} parent=23 // pred_check
          %p347 = pneg %p72
        $region67: #{bottleneck_forward.7} parent=23 // pred_check_branch
          %349 = sbr.rel (%p347) target = $region69
        $region68: #{bottleneck_forward.7} parent=23 // pred_region
          %s350 = sand.u32 %s62, 1
          %s351 = sand.u32 %s62, 1
          %s352 = smul.addr %s351, 256
          %s353 = scalar_lea.vmem [#allocation3], %s352
          %s354 = smul.addr %s17, 64
          %s355 = sadd.s32 %s18, %s354
          %s356 = smul.addr %s355, 8
          %s357 = scalar_lea.vmem %s1, %s356
          // Predicated region
          $region70: #{bottleneck_forward.7} parent=68 // pred_check
            _
          $region71: #{bottleneck_forward.7} parent=68 // pred_check_branch
            %359 = sbr.rel (0) target = $region73
          $region72: #{bottleneck_forward.7} parent=68 // pred_region
            // Predicated region
            $region74: #{bottleneck_forward.7} parent=72 // pred_check
              _
            $region75: #{bottleneck_forward.7} parent=72 // pred_check_branch
              %361 = sbr.rel (0) target = $region77
            $region76: #{bottleneck_forward.7} parent=72 // pred_region
              // Predicated region
              $region89: #{bottleneck_forward.7} parent=76 // pred_check
                _
              $region90: #{bottleneck_forward.7} parent=76 // pred_check_branch
                %438 = sbr.rel (0) target = $region92
              $region91: #{bottleneck_forward.7} parent=76 // pred_region
                loop: start=0, step=1, limit=1
                $region93: #{bottleneck_forward.7} parent=91 // loop_pre_header
                  _
                $region94: #{bottleneck_forward.7} parent=91 // loop_header
                  %s440 = sphi 0, %s444
                  %p441 = scmp.ge.s32.totalorder %s440, 1
                  %s445 = sphi %s357, %s357
                  %s446 = sphi %s353, %s353
                $region95: #{bottleneck_forward.7} parent=91 // loop_header_branch
                  %443 = sbr.rel (%p441) target = $region99
                $region96: #{bottleneck_forward.7} parent=91 // loop_body
                  %v447 = vld [vmem:[%s445] sm:$0xff]
                  %448 = vst [vmem:[%s446] sm:$0xff] %v447
                  %v449 = vld [vmem:[%s445 + $0x10] sm:$0xff]
                  %450 = vst [vmem:[%s446 + $0x8] sm:$0xff] %v449
                  %v451 = vld [vmem:[%s445 + $0x20] sm:$0xff]
                  %452 = vst [vmem:[%s446 + $0x10] sm:$0xff] %v451
                  %v453 = vld [vmem:[%s445 + $0x30] sm:$0xff]
                  %454 = vst [vmem:[%s446 + $0x18] sm:$0xff] %v453
                  %v455 = vld [vmem:[%s445 + $0x40] sm:$0xff]
                  %456 = vst [vmem:[%s446 + $0x20] sm:$0xff] %v455
                  %v457 = vld [vmem:[%s445 + $0x50] sm:$0xff]
                  %458 = vst [vmem:[%s446 + $0x28] sm:$0xff] %v457
                  %v459 = vld [vmem:[%s445 + $0x60] sm:$0xff]
                  %460 = vst [vmem:[%s446 + $0x30] sm:$0xff] %v459
                  %v461 = vld [vmem:[%s445 + $0x70] sm:$0xff]
                  %462 = vst [vmem:[%s446 + $0x38] sm:$0xff] %v461
                  %v463 = vld [vmem:[%s445 + $0x80] sm:$0xff]
                  %464 = vst [vmem:[%s446 + $0x40] sm:$0xff] %v463
                  %v465 = vld [vmem:[%s445 + $0x90] sm:$0xff]
                  %466 = vst [vmem:[%s446 + $0x48] sm:$0xff] %v465
                  %v467 = vld [vmem:[%s445 + $0xa0] sm:$0xff]
                  %468 = vst [vmem:[%s446 + $0x50] sm:$0xff] %v467
                  %v469 = vld [vmem:[%s445 + $0xb0] sm:$0xff]
                  %470 = vst [vmem:[%s446 + $0x58] sm:$0xff] %v469
                  %v471 = vld [vmem:[%s445 + $0xc0] sm:$0xff]
                  %472 = vst [vmem:[%s446 + $0x60] sm:$0xff] %v471
                  %v473 = vld [vmem:[%s445 + $0xd0] sm:$0xff]
                  %474 = vst [vmem:[%s446 + $0x68] sm:$0xff] %v473
                  %v475 = vld [vmem:[%s445 + $0xe0] sm:$0xff]
                  %476 = vst [vmem:[%s446 + $0x70] sm:$0xff] %v475
                  %v477 = vld [vmem:[%s445 + $0xf0] sm:$0xff]
                  %478 = vst [vmem:[%s446 + $0x78] sm:$0xff] %v477
                  %v479 = vld [vmem:[%s445 + $0x100] sm:$0xff]
                  %480 = vst [vmem:[%s446 + $0x80] sm:$0xff] %v479
                  %v481 = vld [vmem:[%s445 + $0x110] sm:$0xff]
                  %482 = vst [vmem:[%s446 + $0x88] sm:$0xff] %v481
                  %v483 = vld [vmem:[%s445 + $0x120] sm:$0xff]
                  %484 = vst [vmem:[%s446 + $0x90] sm:$0xff] %v483
                  %v485 = vld [vmem:[%s445 + $0x130] sm:$0xff]
                  %486 = vst [vmem:[%s446 + $0x98] sm:$0xff] %v485
                  %v487 = vld [vmem:[%s445 + $0x140] sm:$0xff]
                  %488 = vst [vmem:[%s446 + $0xa0] sm:$0xff] %v487
                  %v489 = vld [vmem:[%s445 + $0x150] sm:$0xff]
                  %490 = vst [vmem:[%s446 + $0xa8] sm:$0xff] %v489
                  %v491 = vld [vmem:[%s445 + $0x160] sm:$0xff]
                  %492 = vst [vmem:[%s446 + $0xb0] sm:$0xff] %v491
                  %v493 = vld [vmem:[%s445 + $0x170] sm:$0xff]
                  %494 = vst [vmem:[%s446 + $0xb8] sm:$0xff] %v493
                  %v495 = vld [vmem:[%s445 + $0x180] sm:$0xff]
                  %496 = vst [vmem:[%s446 + $0xc0] sm:$0xff] %v495
                  %v497 = vld [vmem:[%s445 + $0x190] sm:$0xff]
                  %498 = vst [vmem:[%s446 + $0xc8] sm:$0xff] %v497
                  %v499 = vld [vmem:[%s445 + $0x1a0] sm:$0xff]
                  %500 = vst [vmem:[%s446 + $0xd0] sm:$0xff] %v499
                  %v501 = vld [vmem:[%s445 + $0x1b0] sm:$0xff]
                  %502 = vst [vmem:[%s446 + $0xd8] sm:$0xff] %v501
                  %v503 = vld [vmem:[%s445 + $0x1c0] sm:$0xff]
                  %504 = vst [vmem:[%s446 + $0xe0] sm:$0xff] %v503
                  %v505 = vld [vmem:[%s445 + $0x1d0] sm:$0xff]
                  %506 = vst [vmem:[%s446 + $0xe8] sm:$0xff] %v505
                  %v507 = vld [vmem:[%s445 + $0x1e0] sm:$0xff]
                  %508 = vst [vmem:[%s446 + $0xf0] sm:$0xff] %v507
                  %v509 = vld [vmem:[%s445 + $0x1f0] sm:$0xff]
                  %510 = vst [vmem:[%s446 + $0xf8] sm:$0xff] %v509
                $region97: #{bottleneck_forward.7} parent=91 // loop_footer
                  %s444 = sadd.s32 1, %s440
                $region98: #{bottleneck_forward.7} parent=91 // loop_footer_branch
                  %439 = sbr.rel target = $region94
                $region99: #{bottleneck_forward.7} parent=91 // loop_exit
                  _
              $region92: #{bottleneck_forward.7} parent=76 // pred_fallthru
                _
              // Predicated region
              $region100: #{bottleneck_forward.7} parent=76 // pred_check
                _
              $region101: #{bottleneck_forward.7} parent=76 // pred_check_branch
                %512 = sbr.rel target = $region103
              $region102: #{bottleneck_forward.7} parent=76 // pred_region
                _
              $region103: #{bottleneck_forward.7} parent=76 // pred_fallthru
                _
            $region77: #{bottleneck_forward.7} parent=72 // pred_fallthru
              _
            // Predicated region
            $region78: #{bottleneck_forward.7} parent=72 // pred_check
              _
            $region79: #{bottleneck_forward.7} parent=72 // pred_check_branch
              %363 = sbr.rel target = $region81
            $region80: #{bottleneck_forward.7} parent=72 // pred_region
              loop: start=0, step=1, limit=1
              $region82: #{bottleneck_forward.7} parent=80 // loop_pre_header
                _
              $region83: #{bottleneck_forward.7} parent=80 // loop_header
                %s366 = sphi 0, %s370
                %p367 = scmp.ge.s32.totalorder %s366, 1
                %s371 = sphi %s357, %s357
                %s372 = sphi %s353, %s353
              $region84: #{bottleneck_forward.7} parent=80 // loop_header_branch
                %369 = sbr.rel (%p367) target = $region88
              $region85: #{bottleneck_forward.7} parent=80 // loop_body
                %v373 = vld [vmem:[%s371] sm:$0xff]
                %374 = vst [vmem:[%s372] sm:$0xff] %v373
                %v375 = vld [vmem:[%s371 + $0x10] sm:$0xff]
                %376 = vst [vmem:[%s372 + $0x8] sm:$0xff] %v375
                %v377 = vld [vmem:[%s371 + $0x20] sm:$0xff]
                %378 = vst [vmem:[%s372 + $0x10] sm:$0xff] %v377
                %v379 = vld [vmem:[%s371 + $0x30] sm:$0xff]
                %380 = vst [vmem:[%s372 + $0x18] sm:$0xff] %v379
                %v381 = vld [vmem:[%s371 + $0x40] sm:$0xff]
                %382 = vst [vmem:[%s372 + $0x20] sm:$0xff] %v381
                %v383 = vld [vmem:[%s371 + $0x50] sm:$0xff]
                %384 = vst [vmem:[%s372 + $0x28] sm:$0xff] %v383
                %v385 = vld [vmem:[%s371 + $0x60] sm:$0xff]
                %386 = vst [vmem:[%s372 + $0x30] sm:$0xff] %v385
                %v387 = vld [vmem:[%s371 + $0x70] sm:$0xff]
                %388 = vst [vmem:[%s372 + $0x38] sm:$0xff] %v387
                %v389 = vld [vmem:[%s371 + $0x80] sm:$0xff]
                %390 = vst [vmem:[%s372 + $0x40] sm:$0xff] %v389
                %v391 = vld [vmem:[%s371 + $0x90] sm:$0xff]
                %392 = vst [vmem:[%s372 + $0x48] sm:$0xff] %v391
                %v393 = vld [vmem:[%s371 + $0xa0] sm:$0xff]
                %394 = vst [vmem:[%s372 + $0x50] sm:$0xff] %v393
                %v395 = vld [vmem:[%s371 + $0xb0] sm:$0xff]
                %396 = vst [vmem:[%s372 + $0x58] sm:$0xff] %v395
                %v397 = vld [vmem:[%s371 + $0xc0] sm:$0xff]
                %398 = vst [vmem:[%s372 + $0x60] sm:$0xff] %v397
                %v399 = vld [vmem:[%s371 + $0xd0] sm:$0xff]
                %400 = vst [vmem:[%s372 + $0x68] sm:$0xff] %v399
                %v401 = vld [vmem:[%s371 + $0xe0] sm:$0xff]
                %402 = vst [vmem:[%s372 + $0x70] sm:$0xff] %v401
                %v403 = vld [vmem:[%s371 + $0xf0] sm:$0xff]
                %404 = vst [vmem:[%s372 + $0x78] sm:$0xff] %v403
                %v405 = vld [vmem:[%s371 + $0x100] sm:$0xff]
                %406 = vst [vmem:[%s372 + $0x80] sm:$0xff] %v405
                %v407 = vld [vmem:[%s371 + $0x110] sm:$0xff]
                %408 = vst [vmem:[%s372 + $0x88] sm:$0xff] %v407
                %v409 = vld [vmem:[%s371 + $0x120] sm:$0xff]
                %410 = vst [vmem:[%s372 + $0x90] sm:$0xff] %v409
                %v411 = vld [vmem:[%s371 + $0x130] sm:$0xff]
                %412 = vst [vmem:[%s372 + $0x98] sm:$0xff] %v411
                %v413 = vld [vmem:[%s371 + $0x140] sm:$0xff]
                %414 = vst [vmem:[%s372 + $0xa0] sm:$0xff] %v413
                %v415 = vld [vmem:[%s371 + $0x150] sm:$0xff]
                %416 = vst [vmem:[%s372 + $0xa8] sm:$0xff] %v415
                %v417 = vld [vmem:[%s371 + $0x160] sm:$0xff]
                %418 = vst [vmem:[%s372 + $0xb0] sm:$0xff] %v417
                %v419 = vld [vmem:[%s371 + $0x170] sm:$0xff]
                %420 = vst [vmem:[%s372 + $0xb8] sm:$0xff] %v419
                %v421 = vld [vmem:[%s371 + $0x180] sm:$0xff]
                %422 = vst [vmem:[%s372 + $0xc0] sm:$0xff] %v421
                %v423 = vld [vmem:[%s371 + $0x190] sm:$0xff]
                %424 = vst [vmem:[%s372 + $0xc8] sm:$0xff] %v423
                %v425 = vld [vmem:[%s371 + $0x1a0] sm:$0xff]
                %426 = vst [vmem:[%s372 + $0xd0] sm:$0xff] %v425
                %v427 = vld [vmem:[%s371 + $0x1b0] sm:$0xff]
                %428 = vst [vmem:[%s372 + $0xd8] sm:$0xff] %v427
                %v429 = vld [vmem:[%s371 + $0x1c0] sm:$0xff]
                %430 = vst [vmem:[%s372 + $0xe0] sm:$0xff] %v429
                %v431 = vld [vmem:[%s371 + $0x1d0] sm:$0xff]
                %432 = vst [vmem:[%s372 + $0xe8] sm:$0xff] %v431
                %v433 = vld [vmem:[%s371 + $0x1e0] sm:$0xff]
                %434 = vst [vmem:[%s372 + $0xf0] sm:$0xff] %v433
                %v435 = vld [vmem:[%s371 + $0x1f0] sm:$0xff]
                %436 = vst [vmem:[%s372 + $0xf8] sm:$0xff] %v435
              $region86: #{bottleneck_forward.7} parent=80 // loop_footer
                %s370 = sadd.s32 1, %s366
              $region87: #{bottleneck_forward.7} parent=80 // loop_footer_branch
                %365 = sbr.rel target = $region83
              $region88: #{bottleneck_forward.7} parent=80 // loop_exit
                _
            $region81: #{bottleneck_forward.7} parent=72 // pred_fallthru
              _
          $region73: #{bottleneck_forward.7} parent=68 // pred_fallthru
            _
          %513 = vnop
        $region69: #{bottleneck_forward.7} parent=23 // pred_fallthru
          _
      $region24: #{bottleneck_forward.7} parent=5 // pred_fallthru
        _
      %p514 = scmp.le.s32.totalorder 1, %s10
      %p515 = scmp.lt.s32.totalorder %s10, 5
      %p516 = pnand %p514, %p515
      %p517 = pneg %p516
      // Predicated region
      $region104: #{bottleneck_forward.7} parent=5 // pred_check
        _
      $region105: #{bottleneck_forward.7} parent=5 // pred_check_branch
        %519 = sbr.rel (%p516) target = $region107
      $region106: #{bottleneck_forward.7} parent=5 // pred_region
        %s520 = ssub.s32 %s10, 1
        %s521 = sand.u32 %s37, 1
        %s522 = sand.u32 %s37, 1
        %s523 = smul.addr %s522, 128
        %s524 = scalar_lea.vmem [#allocation2], %s523
        // Predicated region
        $region108: #{bottleneck_forward.7} parent=106 // pred_check
          %p525 = pneg %p50
        $region109: #{bottleneck_forward.7} parent=106 // pred_check_branch
          %527 = sbr.rel (%p525) target = $region111
        $region110: #{bottleneck_forward.7} parent=106 // pred_region
          _
        $region111: #{bottleneck_forward.7} parent=106 // pred_fallthru
          _
        %s528 = sand.u32 %s65, 1
        %s529 = sand.u32 %s65, 1
        %s530 = smul.addr %s529, 256
        %s531 = scalar_lea.vmem [#allocation3], %s530
        // Predicated region
        $region112: #{bottleneck_forward.7} parent=106 // pred_check
          %p532 = pneg %p78
        $region113: #{bottleneck_forward.7} parent=106 // pred_check_branch
          %534 = sbr.rel (%p532) target = $region115
        $region114: #{bottleneck_forward.7} parent=106 // pred_region
          _
        $region115: #{bottleneck_forward.7} parent=106 // pred_fallthru
          _
        %s535 = sand.u32 %s37, 1
        %s536 = sand.u32 %s37, 1
        %s537 = smul.addr %s536, 128
        %s538 = scalar_lea.vmem [#allocation2], %s537
        %p539 = pneg %p50
        %p540 = pneg %p47
        %s541 = sand.u32 %s65, 1
        %s542 = sand.u32 %s65, 1
        %s543 = smul.addr %s542, 256
        %s544 = scalar_lea.vmem [#allocation3], %s543
        %p545 = pneg %p78
        %p546 = pneg %p75
        %p547 = pneg %p99
        %p548 = pneg %p96
        %p549 = pneg %p120
        %p550 = pneg %p117
        %p551 = pneg %p148
        %p552 = pneg %p145
        %s553 = sand.u32 %s135, 1
        %s554 = sand.u32 %s135, 1
        %s555 = smul.addr %s554, 256
        %s556 = scalar_lea.vmem [#allocation4], %s555
        %v557 = vld [vmem:[%s524] sm:$0xf]
        %v558 = vld [vmem:[%s524 + $0x4] sm:$0xf]
        %v559 = vld [vmem:[%s524 + $0x8] sm:$0xf]
        %v560 = vld [vmem:[%s524 + $0xc] sm:$0xf]
        %v561 = vld [vmem:[%s524 + $0x10] sm:$0xf]
        %v562 = vld [vmem:[%s524 + $0x14] sm:$0xf]
        %v563 = vld [vmem:[%s524 + $0x18] sm:$0xf]
        %v564 = vld [vmem:[%s524 + $0x1c] sm:$0xf]
        %v565 = vld [vmem:[%s524 + $0x20] sm:$0xf]
        %v566 = vld [vmem:[%s524 + $0x24] sm:$0xf]
        %v567 = vld [vmem:[%s524 + $0x28] sm:$0xf]
        %v568 = vld [vmem:[%s524 + $0x2c] sm:$0xf]
        %v569 = vld [vmem:[%s524 + $0x30] sm:$0xf]
        %v570 = vld [vmem:[%s524 + $0x34] sm:$0xf]
        %v571 = vld [vmem:[%s524 + $0x38] sm:$0xf]
        %v572 = vld [vmem:[%s524 + $0x3c] sm:$0xf]
        %v573 = vld [vmem:[%s524 + $0x40] sm:$0xf]
        %v574 = vld [vmem:[%s524 + $0x44] sm:$0xf]
        %v575 = vld [vmem:[%s524 + $0x48] sm:$0xf]
        %v576 = vld [vmem:[%s524 + $0x4c] sm:$0xf]
        %v577 = vld [vmem:[%s524 + $0x50] sm:$0xf]
        %v578 = vld [vmem:[%s524 + $0x54] sm:$0xf]
        %v579 = vld [vmem:[%s524 + $0x58] sm:$0xf]
        %v580 = vld [vmem:[%s524 + $0x5c] sm:$0xf]
        %v581 = vld [vmem:[%s524 + $0x60] sm:$0xf]
        %v582 = vld [vmem:[%s524 + $0x64] sm:$0xf]
        %v583 = vld [vmem:[%s524 + $0x68] sm:$0xf]
        %v584 = vld [vmem:[%s524 + $0x6c] sm:$0xf]
        %v585 = vld [vmem:[%s524 + $0x70] sm:$0xf]
        %v586 = vld [vmem:[%s524 + $0x74] sm:$0xf]
        %v587 = vld [vmem:[%s524 + $0x78] sm:$0xf]
        %v588 = vld [vmem:[%s524 + $0x7c] sm:$0xf]
        %v589 = vunpack.c.l.bf16 %v557
        %v590 = vunpack.c.l.bf16 %v558
        %v591 = vunpack.c.l.bf16 %v559
        %v592 = vunpack.c.l.bf16 %v560
        %v593 = vunpack.c.l.bf16 %v561
        %v594 = vunpack.c.l.bf16 %v562
        %v595 = vunpack.c.l.bf16 %v563
        %v596 = vunpack.c.l.bf16 %v564
        %v597 = vunpack.c.l.bf16 %v565
        %v598 = vunpack.c.l.bf16 %v566
        %v599 = vunpack.c.l.bf16 %v567
        %v600 = vunpack.c.l.bf16 %v568
        %v601 = vunpack.c.l.bf16 %v569
        %v602 = vunpack.c.l.bf16 %v570
        %v603 = vunpack.c.l.bf16 %v571
        %v604 = vunpack.c.l.bf16 %v572
        %v605 = vunpack.c.l.bf16 %v573
        %v606 = vunpack.c.l.bf16 %v574
        %v607 = vunpack.c.l.bf16 %v575
        %v608 = vunpack.c.l.bf16 %v576
        %v609 = vunpack.c.l.bf16 %v577
        %v610 = vunpack.c.l.bf16 %v578
        %v611 = vunpack.c.l.bf16 %v579
        %v612 = vunpack.c.l.bf16 %v580
        %v613 = vunpack.c.l.bf16 %v581
        %v614 = vunpack.c.l.bf16 %v582
        %v615 = vunpack.c.l.bf16 %v583
        %v616 = vunpack.c.l.bf16 %v584
        %v617 = vunpack.c.l.bf16 %v585
        %v618 = vunpack.c.l.bf16 %v586
        %v619 = vunpack.c.l.bf16 %v587
        %v620 = vunpack.c.l.bf16 %v588
        %v621 = vld [vmem:[%s2] sm:$0xff]
        %v622 = vld [vmem:[%s2 + $0x8] sm:$0xff]
        %v623 = vld [vmem:[%s2 + $0x10] sm:$0xff]
        %v624 = vld [vmem:[%s2 + $0x18] sm:$0xff]
        %v625 = vld [vmem:[%s2 + $0x20] sm:$0xff]
        %v626 = vld [vmem:[%s2 + $0x28] sm:$0xff]
        %v627 = vld [vmem:[%s2 + $0x30] sm:$0xff]
        %v628 = vld [vmem:[%s2 + $0x38] sm:$0xff]
        %v629 = vld [vmem:[%s2 + $0x40] sm:$0xff]
        %v630 = vld [vmem:[%s2 + $0x48] sm:$0xff]
        %v631 = vld [vmem:[%s2 + $0x50] sm:$0xff]
        %v632 = vld [vmem:[%s2 + $0x58] sm:$0xff]
        %v633 = vld [vmem:[%s2 + $0x60] sm:$0xff]
        %v634 = vld [vmem:[%s2 + $0x68] sm:$0xff]
        %v635 = vld [vmem:[%s2 + $0x70] sm:$0xff]
        %v636 = vld [vmem:[%s2 + $0x78] sm:$0xff]
        %v637 = vld [vmem:[%s2 + $0x80] sm:$0xff]
        %v638 = vld [vmem:[%s2 + $0x88] sm:$0xff]
        %v639 = vld [vmem:[%s2 + $0x90] sm:$0xff]
        %v640 = vld [vmem:[%s2 + $0x98] sm:$0xff]
        %v641 = vld [vmem:[%s2 + $0xa0] sm:$0xff]
        %v642 = vld [vmem:[%s2 + $0xa8] sm:$0xff]
        %v643 = vld [vmem:[%s2 + $0xb0] sm:$0xff]
        %v644 = vld [vmem:[%s2 + $0xb8] sm:$0xff]
        %v645 = vld [vmem:[%s2 + $0xc0] sm:$0xff]
        %v646 = vld [vmem:[%s2 + $0xc8] sm:$0xff]
        %v647 = vld [vmem:[%s2 + $0xd0] sm:$0xff]
        %v648 = vld [vmem:[%s2 + $0xd8] sm:$0xff]
        %v649 = vld [vmem:[%s2 + $0xe0] sm:$0xff]
        %v650 = vld [vmem:[%s2 + $0xe8] sm:$0xff]
        %v651 = vld [vmem:[%s2 + $0xf0] sm:$0xff]
        %v652 = vld [vmem:[%s2 + $0xf8] sm:$0xff]
        %654 = vset.pattern.permute.xlu0 0
        %655 = vperm.xlu0 %654, %v621
        %v656 = vpop.permute.xlu0 %655
        %659 = vset.pattern.permute.xlu0 0
        %660 = vperm.xlu0 %659, %v622
        %v661 = vpop.permute.xlu0 %660
        %664 = vset.pattern.permute.xlu0 0
        %665 = vperm.xlu0 %664, %v623
        %v666 = vpop.permute.xlu0 %665
        %669 = vset.pattern.permute.xlu0 0
        %670 = vperm.xlu0 %669, %v624
        %v671 = vpop.permute.xlu0 %670
        %674 = vset.pattern.permute.xlu0 0
        %675 = vperm.xlu0 %674, %v625
        %v676 = vpop.permute.xlu0 %675
        %679 = vset.pattern.permute.xlu0 0
        %680 = vperm.xlu0 %679, %v626
        %v681 = vpop.permute.xlu0 %680
        %684 = vset.pattern.permute.xlu0 0
        %685 = vperm.xlu0 %684, %v627
        %v686 = vpop.permute.xlu0 %685
        %689 = vset.pattern.permute.xlu0 0
        %690 = vperm.xlu0 %689, %v628
        %v691 = vpop.permute.xlu0 %690
        %694 = vset.pattern.permute.xlu0 0
        %695 = vperm.xlu0 %694, %v629
        %v696 = vpop.permute.xlu0 %695
        %699 = vset.pattern.permute.xlu0 0
        %700 = vperm.xlu0 %699, %v630
        %v701 = vpop.permute.xlu0 %700
        %704 = vset.pattern.permute.xlu0 0
        %705 = vperm.xlu0 %704, %v631
        %v706 = vpop.permute.xlu0 %705
        %709 = vset.pattern.permute.xlu0 0
        %710 = vperm.xlu0 %709, %v632
        %v711 = vpop.permute.xlu0 %710
        %714 = vset.pattern.permute.xlu0 0
        %715 = vperm.xlu0 %714, %v633
        %v716 = vpop.permute.xlu0 %715
        %719 = vset.pattern.permute.xlu0 0
        %720 = vperm.xlu0 %719, %v634
        %v721 = vpop.permute.xlu0 %720
        %724 = vset.pattern.permute.xlu0 0
        %725 = vperm.xlu0 %724, %v635
        %v726 = vpop.permute.xlu0 %725
        %729 = vset.pattern.permute.xlu0 0
        %730 = vperm.xlu0 %729, %v636
        %v731 = vpop.permute.xlu0 %730
        %734 = vset.pattern.permute.xlu0 0
        %735 = vperm.xlu0 %734, %v637
        %v736 = vpop.permute.xlu0 %735
        %739 = vset.pattern.permute.xlu0 0
        %740 = vperm.xlu0 %739, %v638
        %v741 = vpop.permute.xlu0 %740
        %744 = vset.pattern.permute.xlu0 0
        %745 = vperm.xlu0 %744, %v639
        %v746 = vpop.permute.xlu0 %745
        %749 = vset.pattern.permute.xlu0 0
        %750 = vperm.xlu0 %749, %v640
        %v751 = vpop.permute.xlu0 %750
        %754 = vset.pattern.permute.xlu0 0
        %755 = vperm.xlu0 %754, %v641
        %v756 = vpop.permute.xlu0 %755
        %759 = vset.pattern.permute.xlu0 0
        %760 = vperm.xlu0 %759, %v642
        %v761 = vpop.permute.xlu0 %760
        %764 = vset.pattern.permute.xlu0 0
        %765 = vperm.xlu0 %764, %v643
        %v766 = vpop.permute.xlu0 %765
        %769 = vset.pattern.permute.xlu0 0
        %770 = vperm.xlu0 %769, %v644
        %v771 = vpop.permute.xlu0 %770
        %774 = vset.pattern.permute.xlu0 0
        %775 = vperm.xlu0 %774, %v645
        %v776 = vpop.permute.xlu0 %775
        %779 = vset.pattern.permute.xlu0 0
        %780 = vperm.xlu0 %779, %v646
        %v781 = vpop.permute.xlu0 %780
        %784 = vset.pattern.permute.xlu0 0
        %785 = vperm.xlu0 %784, %v647
        %v786 = vpop.permute.xlu0 %785
        %789 = vset.pattern.permute.xlu0 0
        %790 = vperm.xlu0 %789, %v648
        %v791 = vpop.permute.xlu0 %790
        %794 = vset.pattern.permute.xlu0 0
        %795 = vperm.xlu0 %794, %v649
        %v796 = vpop.permute.xlu0 %795
        %799 = vset.pattern.permute.xlu0 0
        %800 = vperm.xlu0 %799, %v650
        %v801 = vpop.permute.xlu0 %800
        %804 = vset.pattern.permute.xlu0 0
        %805 = vperm.xlu0 %804, %v651
        %v806 = vpop.permute.xlu0 %805
        %809 = vset.pattern.permute.xlu0 0
        %810 = vperm.xlu0 %809, %v652
        %v811 = vpop.permute.xlu0 %810
        %v813 = vmul.f32 %v589, %v656
        %v814 = vmul.f32 %v590, %v661
        %v815 = vmul.f32 %v591, %v666
        %v816 = vmul.f32 %v592, %v671
        %v817 = vmul.f32 %v593, %v676
        %v818 = vmul.f32 %v594, %v681
        %v819 = vmul.f32 %v595, %v686
        %v820 = vmul.f32 %v596, %v691
        %v821 = vmul.f32 %v597, %v696
        %v822 = vmul.f32 %v598, %v701
        %v823 = vmul.f32 %v599, %v706
        %v824 = vmul.f32 %v600, %v711
        %v825 = vmul.f32 %v601, %v716
        %v826 = vmul.f32 %v602, %v721
        %v827 = vmul.f32 %v603, %v726
        %v828 = vmul.f32 %v604, %v731
        %v829 = vmul.f32 %v605, %v736
        %v830 = vmul.f32 %v606, %v741
        %v831 = vmul.f32 %v607, %v746
        %v832 = vmul.f32 %v608, %v751
        %v833 = vmul.f32 %v609, %v756
        %v834 = vmul.f32 %v610, %v761
        %v835 = vmul.f32 %v611, %v766
        %v836 = vmul.f32 %v612, %v771
        %v837 = vmul.f32 %v613, %v776
        %v838 = vmul.f32 %v614, %v781
        %v839 = vmul.f32 %v615, %v786
        %v840 = vmul.f32 %v616, %v791
        %v841 = vmul.f32 %v617, %v796
        %v842 = vmul.f32 %v618, %v801
        %v843 = vmul.f32 %v619, %v806
        %v844 = vmul.f32 %v620, %v811
        %v845 = vld [vmem:[%s3] sm:$0xff]
        %v846 = vld [vmem:[%s3 + $0x8] sm:$0xff]
        %v847 = vld [vmem:[%s3 + $0x10] sm:$0xff]
        %v848 = vld [vmem:[%s3 + $0x18] sm:$0xff]
        %v849 = vld [vmem:[%s3 + $0x20] sm:$0xff]
        %v850 = vld [vmem:[%s3 + $0x28] sm:$0xff]
        %v851 = vld [vmem:[%s3 + $0x30] sm:$0xff]
        %v852 = vld [vmem:[%s3 + $0x38] sm:$0xff]
        %v853 = vld [vmem:[%s3 + $0x40] sm:$0xff]
        %v854 = vld [vmem:[%s3 + $0x48] sm:$0xff]
        %v855 = vld [vmem:[%s3 + $0x50] sm:$0xff]
        %v856 = vld [vmem:[%s3 + $0x58] sm:$0xff]
        %v857 = vld [vmem:[%s3 + $0x60] sm:$0xff]
        %v858 = vld [vmem:[%s3 + $0x68] sm:$0xff]
        %v859 = vld [vmem:[%s3 + $0x70] sm:$0xff]
        %v860 = vld [vmem:[%s3 + $0x78] sm:$0xff]
        %v861 = vld [vmem:[%s3 + $0x80] sm:$0xff]
        %v862 = vld [vmem:[%s3 + $0x88] sm:$0xff]
        %v863 = vld [vmem:[%s3 + $0x90] sm:$0xff]
        %v864 = vld [vmem:[%s3 + $0x98] sm:$0xff]
        %v865 = vld [vmem:[%s3 + $0xa0] sm:$0xff]
        %v866 = vld [vmem:[%s3 + $0xa8] sm:$0xff]
        %v867 = vld [vmem:[%s3 + $0xb0] sm:$0xff]
        %v868 = vld [vmem:[%s3 + $0xb8] sm:$0xff]
        %v869 = vld [vmem:[%s3 + $0xc0] sm:$0xff]
        %v870 = vld [vmem:[%s3 + $0xc8] sm:$0xff]
        %v871 = vld [vmem:[%s3 + $0xd0] sm:$0xff]
        %v872 = vld [vmem:[%s3 + $0xd8] sm:$0xff]
        %v873 = vld [vmem:[%s3 + $0xe0] sm:$0xff]
        %v874 = vld [vmem:[%s3 + $0xe8] sm:$0xff]
        %v875 = vld [vmem:[%s3 + $0xf0] sm:$0xff]
        %v876 = vld [vmem:[%s3 + $0xf8] sm:$0xff]
        %878 = vset.pattern.permute.xlu0 0
        %879 = vperm.xlu0 %878, %v845
        %v880 = vpop.permute.xlu0 %879
        %883 = vset.pattern.permute.xlu0 0
        %884 = vperm.xlu0 %883, %v846
        %v885 = vpop.permute.xlu0 %884
        %888 = vset.pattern.permute.xlu0 0
        %889 = vperm.xlu0 %888, %v847
        %v890 = vpop.permute.xlu0 %889
        %893 = vset.pattern.permute.xlu0 0
        %894 = vperm.xlu0 %893, %v848
        %v895 = vpop.permute.xlu0 %894
        %898 = vset.pattern.permute.xlu0 0
        %899 = vperm.xlu0 %898, %v849
        %v900 = vpop.permute.xlu0 %899
        %903 = vset.pattern.permute.xlu0 0
        %904 = vperm.xlu0 %903, %v850
        %v905 = vpop.permute.xlu0 %904
        %908 = vset.pattern.permute.xlu0 0
        %909 = vperm.xlu0 %908, %v851
        %v910 = vpop.permute.xlu0 %909
        %913 = vset.pattern.permute.xlu0 0
        %914 = vperm.xlu0 %913, %v852
        %v915 = vpop.permute.xlu0 %914
        %918 = vset.pattern.permute.xlu0 0
        %919 = vperm.xlu0 %918, %v853
        %v920 = vpop.permute.xlu0 %919
        %923 = vset.pattern.permute.xlu0 0
        %924 = vperm.xlu0 %923, %v854
        %v925 = vpop.permute.xlu0 %924
        %928 = vset.pattern.permute.xlu0 0
        %929 = vperm.xlu0 %928, %v855
        %v930 = vpop.permute.xlu0 %929
        %933 = vset.pattern.permute.xlu0 0
        %934 = vperm.xlu0 %933, %v856
        %v935 = vpop.permute.xlu0 %934
        %938 = vset.pattern.permute.xlu0 0
        %939 = vperm.xlu0 %938, %v857
        %v940 = vpop.permute.xlu0 %939
        %943 = vset.pattern.permute.xlu0 0
        %944 = vperm.xlu0 %943, %v858
        %v945 = vpop.permute.xlu0 %944
        %948 = vset.pattern.permute.xlu0 0
        %949 = vperm.xlu0 %948, %v859
        %v950 = vpop.permute.xlu0 %949
        %953 = vset.pattern.permute.xlu0 0
        %954 = vperm.xlu0 %953, %v860
        %v955 = vpop.permute.xlu0 %954
        %958 = vset.pattern.permute.xlu0 0
        %959 = vperm.xlu0 %958, %v861
        %v960 = vpop.permute.xlu0 %959
        %963 = vset.pattern.permute.xlu0 0
        %964 = vperm.xlu0 %963, %v862
        %v965 = vpop.permute.xlu0 %964
        %968 = vset.pattern.permute.xlu0 0
        %969 = vperm.xlu0 %968, %v863
        %v970 = vpop.permute.xlu0 %969
        %973 = vset.pattern.permute.xlu0 0
        %974 = vperm.xlu0 %973, %v864
        %v975 = vpop.permute.xlu0 %974
        %978 = vset.pattern.permute.xlu0 0
        %979 = vperm.xlu0 %978, %v865
        %v980 = vpop.permute.xlu0 %979
        %983 = vset.pattern.permute.xlu0 0
        %984 = vperm.xlu0 %983, %v866
        %v985 = vpop.permute.xlu0 %984
        %988 = vset.pattern.permute.xlu0 0
        %989 = vperm.xlu0 %988, %v867
        %v990 = vpop.permute.xlu0 %989
        %993 = vset.pattern.permute.xlu0 0
        %994 = vperm.xlu0 %993, %v868
        %v995 = vpop.permute.xlu0 %994
        %998 = vset.pattern.permute.xlu0 0
        %999 = vperm.xlu0 %998, %v869
        %v1000 = vpop.permute.xlu0 %999
        %1003 = vset.pattern.permute.xlu0 0
        %1004 = vperm.xlu0 %1003, %v870
        %v1005 = vpop.permute.xlu0 %1004
        %1008 = vset.pattern.permute.xlu0 0
        %1009 = vperm.xlu0 %1008, %v871
        %v1010 = vpop.permute.xlu0 %1009
        %1013 = vset.pattern.permute.xlu0 0
        %1014 = vperm.xlu0 %1013, %v872
        %v1015 = vpop.permute.xlu0 %1014
        %1018 = vset.pattern.permute.xlu0 0
        %1019 = vperm.xlu0 %1018, %v873
        %v1020 = vpop.permute.xlu0 %1019
        %1023 = vset.pattern.permute.xlu0 0
        %1024 = vperm.xlu0 %1023, %v874
        %v1025 = vpop.permute.xlu0 %1024
        %1028 = vset.pattern.permute.xlu0 0
        %1029 = vperm.xlu0 %1028, %v875
        %v1030 = vpop.permute.xlu0 %1029
        %1033 = vset.pattern.permute.xlu0 0
        %1034 = vperm.xlu0 %1033, %v876
        %v1035 = vpop.permute.xlu0 %1034
        %v1037 = vadd.f32 %v813, %v880
        %v1038 = vadd.f32 %v814, %v885
        %v1039 = vadd.f32 %v815, %v890
        %v1040 = vadd.f32 %v816, %v895
        %v1041 = vadd.f32 %v817, %v900
        %v1042 = vadd.f32 %v818, %v905
        %v1043 = vadd.f32 %v819, %v910
        %v1044 = vadd.f32 %v820, %v915
        %v1045 = vadd.f32 %v821, %v920
        %v1046 = vadd.f32 %v822, %v925
        %v1047 = vadd.f32 %v823, %v930
        %v1048 = vadd.f32 %v824, %v935
        %v1049 = vadd.f32 %v825, %v940
        %v1050 = vadd.f32 %v826, %v945
        %v1051 = vadd.f32 %v827, %v950
        %v1052 = vadd.f32 %v828, %v955
        %v1053 = vadd.f32 %v829, %v960
        %v1054 = vadd.f32 %v830, %v965
        %v1055 = vadd.f32 %v831, %v970
        %v1056 = vadd.f32 %v832, %v975
        %v1057 = vadd.f32 %v833, %v980
        %v1058 = vadd.f32 %v834, %v985
        %v1059 = vadd.f32 %v835, %v990
        %v1060 = vadd.f32 %v836, %v995
        %v1061 = vadd.f32 %v837, %v1000
        %v1062 = vadd.f32 %v838, %v1005
        %v1063 = vadd.f32 %v839, %v1010
        %v1064 = vadd.f32 %v840, %v1015
        %v1065 = vadd.f32 %v841, %v1020
        %v1066 = vadd.f32 %v842, %v1025
        %v1067 = vadd.f32 %v843, %v1030
        %v1068 = vadd.f32 %v844, %v1035
        %v1069 = vld [vmem:[%s531] sm:$0xff]
        %v1070 = vld [vmem:[%s531 + $0x8] sm:$0xff]
        %v1071 = vld [vmem:[%s531 + $0x10] sm:$0xff]
        %v1072 = vld [vmem:[%s531 + $0x18] sm:$0xff]
        %v1073 = vld [vmem:[%s531 + $0x20] sm:$0xff]
        %v1074 = vld [vmem:[%s531 + $0x28] sm:$0xff]
        %v1075 = vld [vmem:[%s531 + $0x30] sm:$0xff]
        %v1076 = vld [vmem:[%s531 + $0x38] sm:$0xff]
        %v1077 = vld [vmem:[%s531 + $0x40] sm:$0xff]
        %v1078 = vld [vmem:[%s531 + $0x48] sm:$0xff]
        %v1079 = vld [vmem:[%s531 + $0x50] sm:$0xff]
        %v1080 = vld [vmem:[%s531 + $0x58] sm:$0xff]
        %v1081 = vld [vmem:[%s531 + $0x60] sm:$0xff]
        %v1082 = vld [vmem:[%s531 + $0x68] sm:$0xff]
        %v1083 = vld [vmem:[%s531 + $0x70] sm:$0xff]
        %v1084 = vld [vmem:[%s531 + $0x78] sm:$0xff]
        %v1085 = vld [vmem:[%s531 + $0x80] sm:$0xff]
        %v1086 = vld [vmem:[%s531 + $0x88] sm:$0xff]
        %v1087 = vld [vmem:[%s531 + $0x90] sm:$0xff]
        %v1088 = vld [vmem:[%s531 + $0x98] sm:$0xff]
        %v1089 = vld [vmem:[%s531 + $0xa0] sm:$0xff]
        %v1090 = vld [vmem:[%s531 + $0xa8] sm:$0xff]
        %v1091 = vld [vmem:[%s531 + $0xb0] sm:$0xff]
        %v1092 = vld [vmem:[%s531 + $0xb8] sm:$0xff]
        %v1093 = vld [vmem:[%s531 + $0xc0] sm:$0xff]
        %v1094 = vld [vmem:[%s531 + $0xc8] sm:$0xff]
        %v1095 = vld [vmem:[%s531 + $0xd0] sm:$0xff]
        %v1096 = vld [vmem:[%s531 + $0xd8] sm:$0xff]
        %v1097 = vld [vmem:[%s531 + $0xe0] sm:$0xff]
        %v1098 = vld [vmem:[%s531 + $0xe8] sm:$0xff]
        %v1099 = vld [vmem:[%s531 + $0xf0] sm:$0xff]
        %v1100 = vld [vmem:[%s531 + $0xf8] sm:$0xff]
        %v1101 = vadd.f32 %v1037, %v1069
        %v1102 = vadd.f32 %v1038, %v1070
        %v1103 = vadd.f32 %v1039, %v1071
        %v1104 = vadd.f32 %v1040, %v1072
        %v1105 = vadd.f32 %v1041, %v1073
        %v1106 = vadd.f32 %v1042, %v1074
        %v1107 = vadd.f32 %v1043, %v1075
        %v1108 = vadd.f32 %v1044, %v1076
        %v1109 = vadd.f32 %v1045, %v1077
        %v1110 = vadd.f32 %v1046, %v1078
        %v1111 = vadd.f32 %v1047, %v1079
        %v1112 = vadd.f32 %v1048, %v1080
        %v1113 = vadd.f32 %v1049, %v1081
        %v1114 = vadd.f32 %v1050, %v1082
        %v1115 = vadd.f32 %v1051, %v1083
        %v1116 = vadd.f32 %v1052, %v1084
        %v1117 = vadd.f32 %v1053, %v1085
        %v1118 = vadd.f32 %v1054, %v1086
        %v1119 = vadd.f32 %v1055, %v1087
        %v1120 = vadd.f32 %v1056, %v1088
        %v1121 = vadd.f32 %v1057, %v1089
        %v1122 = vadd.f32 %v1058, %v1090
        %v1123 = vadd.f32 %v1059, %v1091
        %v1124 = vadd.f32 %v1060, %v1092
        %v1125 = vadd.f32 %v1061, %v1093
        %v1126 = vadd.f32 %v1062, %v1094
        %v1127 = vadd.f32 %v1063, %v1095
        %v1128 = vadd.f32 %v1064, %v1096
        %v1129 = vadd.f32 %v1065, %v1097
        %v1130 = vadd.f32 %v1066, %v1098
        %v1131 = vadd.f32 %v1067, %v1099
        %v1132 = vadd.f32 %v1068, %v1100
        %v1133 = vmax.f32 %v1101, 0.0
        %v1134 = vmax.f32 %v1102, 0.0
        %v1135 = vmax.f32 %v1103, 0.0
        %v1136 = vmax.f32 %v1104, 0.0
        %v1137 = vmax.f32 %v1105, 0.0
        %v1138 = vmax.f32 %v1106, 0.0
        %v1139 = vmax.f32 %v1107, 0.0
        %v1140 = vmax.f32 %v1108, 0.0
        %v1141 = vmax.f32 %v1109, 0.0
        %v1142 = vmax.f32 %v1110, 0.0
        %v1143 = vmax.f32 %v1111, 0.0
        %v1144 = vmax.f32 %v1112, 0.0
        %v1145 = vmax.f32 %v1113, 0.0
        %v1146 = vmax.f32 %v1114, 0.0
        %v1147 = vmax.f32 %v1115, 0.0
        %v1148 = vmax.f32 %v1116, 0.0
        %v1149 = vmax.f32 %v1117, 0.0
        %v1150 = vmax.f32 %v1118, 0.0
        %v1151 = vmax.f32 %v1119, 0.0
        %v1152 = vmax.f32 %v1120, 0.0
        %v1153 = vmax.f32 %v1121, 0.0
        %v1154 = vmax.f32 %v1122, 0.0
        %v1155 = vmax.f32 %v1123, 0.0
        %v1156 = vmax.f32 %v1124, 0.0
        %v1157 = vmax.f32 %v1125, 0.0
        %v1158 = vmax.f32 %v1126, 0.0
        %v1159 = vmax.f32 %v1127, 0.0
        %v1160 = vmax.f32 %v1128, 0.0
        %v1161 = vmax.f32 %v1129, 0.0
        %v1162 = vmax.f32 %v1130, 0.0
        %v1163 = vmax.f32 %v1131, 0.0
        %v1164 = vmax.f32 %v1132, 0.0
        %1165 = vst [vmem:[%s556] sm:$0xff] %v1133
        %1166 = vst [vmem:[%s556 + $0x8] sm:$0xff] %v1134
        %1167 = vst [vmem:[%s556 + $0x10] sm:$0xff] %v1135
        %1168 = vst [vmem:[%s556 + $0x18] sm:$0xff] %v1136
        %1169 = vst [vmem:[%s556 + $0x20] sm:$0xff] %v1137
        %1170 = vst [vmem:[%s556 + $0x28] sm:$0xff] %v1138
        %1171 = vst [vmem:[%s556 + $0x30] sm:$0xff] %v1139
        %1172 = vst [vmem:[%s556 + $0x38] sm:$0xff] %v1140
        %1173 = vst [vmem:[%s556 + $0x40] sm:$0xff] %v1141
        %1174 = vst [vmem:[%s556 + $0x48] sm:$0xff] %v1142
        %1175 = vst [vmem:[%s556 + $0x50] sm:$0xff] %v1143
        %1176 = vst [vmem:[%s556 + $0x58] sm:$0xff] %v1144
        %1177 = vst [vmem:[%s556 + $0x60] sm:$0xff] %v1145
        %1178 = vst [vmem:[%s556 + $0x68] sm:$0xff] %v1146
        %1179 = vst [vmem:[%s556 + $0x70] sm:$0xff] %v1147
        %1180 = vst [vmem:[%s556 + $0x78] sm:$0xff] %v1148
        %1181 = vst [vmem:[%s556 + $0x80] sm:$0xff] %v1149
        %1182 = vst [vmem:[%s556 + $0x88] sm:$0xff] %v1150
        %1183 = vst [vmem:[%s556 + $0x90] sm:$0xff] %v1151
        %1184 = vst [vmem:[%s556 + $0x98] sm:$0xff] %v1152
        %1185 = vst [vmem:[%s556 + $0xa0] sm:$0xff] %v1153
        %1186 = vst [vmem:[%s556 + $0xa8] sm:$0xff] %v1154
        %1187 = vst [vmem:[%s556 + $0xb0] sm:$0xff] %v1155
        %1188 = vst [vmem:[%s556 + $0xb8] sm:$0xff] %v1156
        %1189 = vst [vmem:[%s556 + $0xc0] sm:$0xff] %v1157
        %1190 = vst [vmem:[%s556 + $0xc8] sm:$0xff] %v1158
        %1191 = vst [vmem:[%s556 + $0xd0] sm:$0xff] %v1159
        %1192 = vst [vmem:[%s556 + $0xd8] sm:$0xff] %v1160
        %1193 = vst [vmem:[%s556 + $0xe0] sm:$0xff] %v1161
        %1194 = vst [vmem:[%s556 + $0xe8] sm:$0xff] %v1162
        %1195 = vst [vmem:[%s556 + $0xf0] sm:$0xff] %v1163
        %1196 = vst [vmem:[%s556 + $0xf8] sm:$0xff] %v1164
        %s1197 = sand.u32 %s135, 1
        %s1198 = sand.u32 %s135, 1
        %s1199 = smul.addr %s1198, 256
        %s1200 = scalar_lea.vmem [#allocation4], %s1199
        // Predicated region
        $region116: #{bottleneck_forward.7} parent=106 // pred_check
          %p1201 = pneg %p145
        $region117: #{bottleneck_forward.7} parent=106 // pred_check_branch
          %1203 = sbr.rel (%p1201) target = $region119
        $region118: #{bottleneck_forward.7} parent=106 // pred_region
          %s1204 = smul.addr %s19, 64
          %s1205 = sadd.s32 %s20, %s1204
          %s1206 = smul.addr %s1205, 8
          %s1207 = scalar_lea.vmem %s4, %s1206
          // Predicated region
          $region120: #{bottleneck_forward.7} parent=118 // pred_check
            _
          $region121: #{bottleneck_forward.7} parent=118 // pred_check_branch
            %1209 = sbr.rel (0) target = $region123
          $region122: #{bottleneck_forward.7} parent=118 // pred_region
            // Predicated region
            $region124: #{bottleneck_forward.7} parent=122 // pred_check
              _
            $region125: #{bottleneck_forward.7} parent=122 // pred_check_branch
              %1211 = sbr.rel (0) target = $region127
            $region126: #{bottleneck_forward.7} parent=122 // pred_region
              // Predicated region
              $region139: #{bottleneck_forward.7} parent=126 // pred_check
                _
              $region140: #{bottleneck_forward.7} parent=126 // pred_check_branch
                %1288 = sbr.rel (0) target = $region142
              $region141: #{bottleneck_forward.7} parent=126 // pred_region
                loop: start=0, step=1, limit=1
                $region143: #{bottleneck_forward.7} parent=141 // loop_pre_header
                  _
                $region144: #{bottleneck_forward.7} parent=141 // loop_header
                  %s1290 = sphi 0, %s1294
                  %p1291 = scmp.ge.s32.totalorder %s1290, 1
                  %s1295 = sphi %s1200, %s1200
                  %s1296 = sphi %s1207, %s1207
                $region145: #{bottleneck_forward.7} parent=141 // loop_header_branch
                  %1293 = sbr.rel (%p1291) target = $region149
                $region146: #{bottleneck_forward.7} parent=141 // loop_body
                  %v1297 = vld [vmem:[%s1295] sm:$0xff]
                  %1298 = vst [vmem:[%s1296] sm:$0xff] %v1297
                  %v1299 = vld [vmem:[%s1295 + $0x8] sm:$0xff]
                  %1300 = vst [vmem:[%s1296 + $0x10] sm:$0xff] %v1299
                  %v1301 = vld [vmem:[%s1295 + $0x10] sm:$0xff]
                  %1302 = vst [vmem:[%s1296 + $0x20] sm:$0xff] %v1301
                  %v1303 = vld [vmem:[%s1295 + $0x18] sm:$0xff]
                  %1304 = vst [vmem:[%s1296 + $0x30] sm:$0xff] %v1303
                  %v1305 = vld [vmem:[%s1295 + $0x20] sm:$0xff]
                  %1306 = vst [vmem:[%s1296 + $0x40] sm:$0xff] %v1305
                  %v1307 = vld [vmem:[%s1295 + $0x28] sm:$0xff]
                  %1308 = vst [vmem:[%s1296 + $0x50] sm:$0xff] %v1307
                  %v1309 = vld [vmem:[%s1295 + $0x30] sm:$0xff]
                  %1310 = vst [vmem:[%s1296 + $0x60] sm:$0xff] %v1309
                  %v1311 = vld [vmem:[%s1295 + $0x38] sm:$0xff]
                  %1312 = vst [vmem:[%s1296 + $0x70] sm:$0xff] %v1311
                  %v1313 = vld [vmem:[%s1295 + $0x40] sm:$0xff]
                  %1314 = vst [vmem:[%s1296 + $0x80] sm:$0xff] %v1313
                  %v1315 = vld [vmem:[%s1295 + $0x48] sm:$0xff]
                  %1316 = vst [vmem:[%s1296 + $0x90] sm:$0xff] %v1315
                  %v1317 = vld [vmem:[%s1295 + $0x50] sm:$0xff]
                  %1318 = vst [vmem:[%s1296 + $0xa0] sm:$0xff] %v1317
                  %v1319 = vld [vmem:[%s1295 + $0x58] sm:$0xff]
                  %1320 = vst [vmem:[%s1296 + $0xb0] sm:$0xff] %v1319
                  %v1321 = vld [vmem:[%s1295 + $0x60] sm:$0xff]
                  %1322 = vst [vmem:[%s1296 + $0xc0] sm:$0xff] %v1321
                  %v1323 = vld [vmem:[%s1295 + $0x68] sm:$0xff]
                  %1324 = vst [vmem:[%s1296 + $0xd0] sm:$0xff] %v1323
                  %v1325 = vld [vmem:[%s1295 + $0x70] sm:$0xff]
                  %1326 = vst [vmem:[%s1296 + $0xe0] sm:$0xff] %v1325
                  %v1327 = vld [vmem:[%s1295 + $0x78] sm:$0xff]
                  %1328 = vst [vmem:[%s1296 + $0xf0] sm:$0xff] %v1327
                  %v1329 = vld [vmem:[%s1295 + $0x80] sm:$0xff]
                  %1330 = vst [vmem:[%s1296 + $0x100] sm:$0xff] %v1329
                  %v1331 = vld [vmem:[%s1295 + $0x88] sm:$0xff]
                  %1332 = vst [vmem:[%s1296 + $0x110] sm:$0xff] %v1331
                  %v1333 = vld [vmem:[%s1295 + $0x90] sm:$0xff]
                  %1334 = vst [vmem:[%s1296 + $0x120] sm:$0xff] %v1333
                  %v1335 = vld [vmem:[%s1295 + $0x98] sm:$0xff]
                  %1336 = vst [vmem:[%s1296 + $0x130] sm:$0xff] %v1335
                  %v1337 = vld [vmem:[%s1295 + $0xa0] sm:$0xff]
                  %1338 = vst [vmem:[%s1296 + $0x140] sm:$0xff] %v1337
                  %v1339 = vld [vmem:[%s1295 + $0xa8] sm:$0xff]
                  %1340 = vst [vmem:[%s1296 + $0x150] sm:$0xff] %v1339
                  %v1341 = vld [vmem:[%s1295 + $0xb0] sm:$0xff]
                  %1342 = vst [vmem:[%s1296 + $0x160] sm:$0xff] %v1341
                  %v1343 = vld [vmem:[%s1295 + $0xb8] sm:$0xff]
                  %1344 = vst [vmem:[%s1296 + $0x170] sm:$0xff] %v1343
                  %v1345 = vld [vmem:[%s1295 + $0xc0] sm:$0xff]
                  %1346 = vst [vmem:[%s1296 + $0x180] sm:$0xff] %v1345
                  %v1347 = vld [vmem:[%s1295 + $0xc8] sm:$0xff]
                  %1348 = vst [vmem:[%s1296 + $0x190] sm:$0xff] %v1347
                  %v1349 = vld [vmem:[%s1295 + $0xd0] sm:$0xff]
                  %1350 = vst [vmem:[%s1296 + $0x1a0] sm:$0xff] %v1349
                  %v1351 = vld [vmem:[%s1295 + $0xd8] sm:$0xff]
                  %1352 = vst [vmem:[%s1296 + $0x1b0] sm:$0xff] %v1351
                  %v1353 = vld [vmem:[%s1295 + $0xe0] sm:$0xff]
                  %1354 = vst [vmem:[%s1296 + $0x1c0] sm:$0xff] %v1353
                  %v1355 = vld [vmem:[%s1295 + $0xe8] sm:$0xff]
                  %1356 = vst [vmem:[%s1296 + $0x1d0] sm:$0xff] %v1355
                  %v1357 = vld [vmem:[%s1295 + $0xf0] sm:$0xff]
                  %1358 = vst [vmem:[%s1296 + $0x1e0] sm:$0xff] %v1357
                  %v1359 = vld [vmem:[%s1295 + $0xf8] sm:$0xff]
                  %1360 = vst [vmem:[%s1296 + $0x1f0] sm:$0xff] %v1359
                $region147: #{bottleneck_forward.7} parent=141 // loop_footer
                  %s1294 = sadd.s32 1, %s1290
                $region148: #{bottleneck_forward.7} parent=141 // loop_footer_branch
                  %1289 = sbr.rel target = $region144
                $region149: #{bottleneck_forward.7} parent=141 // loop_exit
                  _
              $region142: #{bottleneck_forward.7} parent=126 // pred_fallthru
                _
              // Predicated region
              $region150: #{bottleneck_forward.7} parent=126 // pred_check
                _
              $region151: #{bottleneck_forward.7} parent=126 // pred_check_branch
                %1362 = sbr.rel target = $region153
              $region152: #{bottleneck_forward.7} parent=126 // pred_region
                _
              $region153: #{bottleneck_forward.7} parent=126 // pred_fallthru
                _
            $region127: #{bottleneck_forward.7} parent=122 // pred_fallthru
              _
            // Predicated region
            $region128: #{bottleneck_forward.7} parent=122 // pred_check
              _
            $region129: #{bottleneck_forward.7} parent=122 // pred_check_branch
              %1213 = sbr.rel target = $region131
            $region130: #{bottleneck_forward.7} parent=122 // pred_region
              loop: start=0, step=1, limit=1
              $region132: #{bottleneck_forward.7} parent=130 // loop_pre_header
                _
              $region133: #{bottleneck_forward.7} parent=130 // loop_header
                %s1216 = sphi 0, %s1220
                %p1217 = scmp.ge.s32.totalorder %s1216, 1
                %s1221 = sphi %s1200, %s1200
                %s1222 = sphi %s1207, %s1207
              $region134: #{bottleneck_forward.7} parent=130 // loop_header_branch
                %1219 = sbr.rel (%p1217) target = $region138
              $region135: #{bottleneck_forward.7} parent=130 // loop_body
                %v1223 = vld [vmem:[%s1221] sm:$0xff]
                %1224 = vst [vmem:[%s1222] sm:$0xff] %v1223
                %v1225 = vld [vmem:[%s1221 + $0x8] sm:$0xff]
                %1226 = vst [vmem:[%s1222 + $0x10] sm:$0xff] %v1225
                %v1227 = vld [vmem:[%s1221 + $0x10] sm:$0xff]
                %1228 = vst [vmem:[%s1222 + $0x20] sm:$0xff] %v1227
                %v1229 = vld [vmem:[%s1221 + $0x18] sm:$0xff]
                %1230 = vst [vmem:[%s1222 + $0x30] sm:$0xff] %v1229
                %v1231 = vld [vmem:[%s1221 + $0x20] sm:$0xff]
                %1232 = vst [vmem:[%s1222 + $0x40] sm:$0xff] %v1231
                %v1233 = vld [vmem:[%s1221 + $0x28] sm:$0xff]
                %1234 = vst [vmem:[%s1222 + $0x50] sm:$0xff] %v1233
                %v1235 = vld [vmem:[%s1221 + $0x30] sm:$0xff]
                %1236 = vst [vmem:[%s1222 + $0x60] sm:$0xff] %v1235
                %v1237 = vld [vmem:[%s1221 + $0x38] sm:$0xff]
                %1238 = vst [vmem:[%s1222 + $0x70] sm:$0xff] %v1237
                %v1239 = vld [vmem:[%s1221 + $0x40] sm:$0xff]
                %1240 = vst [vmem:[%s1222 + $0x80] sm:$0xff] %v1239
                %v1241 = vld [vmem:[%s1221 + $0x48] sm:$0xff]
                %1242 = vst [vmem:[%s1222 + $0x90] sm:$0xff] %v1241
                %v1243 = vld [vmem:[%s1221 + $0x50] sm:$0xff]
                %1244 = vst [vmem:[%s1222 + $0xa0] sm:$0xff] %v1243
                %v1245 = vld [vmem:[%s1221 + $0x58] sm:$0xff]
                %1246 = vst [vmem:[%s1222 + $0xb0] sm:$0xff] %v1245
                %v1247 = vld [vmem:[%s1221 + $0x60] sm:$0xff]
                %1248 = vst [vmem:[%s1222 + $0xc0] sm:$0xff] %v1247
                %v1249 = vld [vmem:[%s1221 + $0x68] sm:$0xff]
                %1250 = vst [vmem:[%s1222 + $0xd0] sm:$0xff] %v1249
                %v1251 = vld [vmem:[%s1221 + $0x70] sm:$0xff]
                %1252 = vst [vmem:[%s1222 + $0xe0] sm:$0xff] %v1251
                %v1253 = vld [vmem:[%s1221 + $0x78] sm:$0xff]
                %1254 = vst [vmem:[%s1222 + $0xf0] sm:$0xff] %v1253
                %v1255 = vld [vmem:[%s1221 + $0x80] sm:$0xff]
                %1256 = vst [vmem:[%s1222 + $0x100] sm:$0xff] %v1255
                %v1257 = vld [vmem:[%s1221 + $0x88] sm:$0xff]
                %1258 = vst [vmem:[%s1222 + $0x110] sm:$0xff] %v1257
                %v1259 = vld [vmem:[%s1221 + $0x90] sm:$0xff]
                %1260 = vst [vmem:[%s1222 + $0x120] sm:$0xff] %v1259
                %v1261 = vld [vmem:[%s1221 + $0x98] sm:$0xff]
                %1262 = vst [vmem:[%s1222 + $0x130] sm:$0xff] %v1261
                %v1263 = vld [vmem:[%s1221 + $0xa0] sm:$0xff]
                %1264 = vst [vmem:[%s1222 + $0x140] sm:$0xff] %v1263
                %v1265 = vld [vmem:[%s1221 + $0xa8] sm:$0xff]
                %1266 = vst [vmem:[%s1222 + $0x150] sm:$0xff] %v1265
                %v1267 = vld [vmem:[%s1221 + $0xb0] sm:$0xff]
                %1268 = vst [vmem:[%s1222 + $0x160] sm:$0xff] %v1267
                %v1269 = vld [vmem:[%s1221 + $0xb8] sm:$0xff]
                %1270 = vst [vmem:[%s1222 + $0x170] sm:$0xff] %v1269
                %v1271 = vld [vmem:[%s1221 + $0xc0] sm:$0xff]
                %1272 = vst [vmem:[%s1222 + $0x180] sm:$0xff] %v1271
                %v1273 = vld [vmem:[%s1221 + $0xc8] sm:$0xff]
                %1274 = vst [vmem:[%s1222 + $0x190] sm:$0xff] %v1273
                %v1275 = vld [vmem:[%s1221 + $0xd0] sm:$0xff]
                %1276 = vst [vmem:[%s1222 + $0x1a0] sm:$0xff] %v1275
                %v1277 = vld [vmem:[%s1221 + $0xd8] sm:$0xff]
                %1278 = vst [vmem:[%s1222 + $0x1b0] sm:$0xff] %v1277
                %v1279 = vld [vmem:[%s1221 + $0xe0] sm:$0xff]
                %1280 = vst [vmem:[%s1222 + $0x1c0] sm:$0xff] %v1279
                %v1281 = vld [vmem:[%s1221 + $0xe8] sm:$0xff]
                %1282 = vst [vmem:[%s1222 + $0x1d0] sm:$0xff] %v1281
                %v1283 = vld [vmem:[%s1221 + $0xf0] sm:$0xff]
                %1284 = vst [vmem:[%s1222 + $0x1e0] sm:$0xff] %v1283
                %v1285 = vld [vmem:[%s1221 + $0xf8] sm:$0xff]
                %1286 = vst [vmem:[%s1222 + $0x1f0] sm:$0xff] %v1285
              $region136: #{bottleneck_forward.7} parent=130 // loop_footer
                %s1220 = sadd.s32 1, %s1216
              $region137: #{bottleneck_forward.7} parent=130 // loop_footer_branch
                %1215 = sbr.rel target = $region133
              $region138: #{bottleneck_forward.7} parent=130 // loop_exit
                _
            $region131: #{bottleneck_forward.7} parent=122 // pred_fallthru
              _
          $region123: #{bottleneck_forward.7} parent=118 // pred_fallthru
            _
          %1363 = vnop
        $region119: #{bottleneck_forward.7} parent=106 // pred_fallthru
          _
      $region107: #{bottleneck_forward.7} parent=5 // pred_fallthru
        _
      %p1364 = scmp.le.s32.totalorder 2, %s10
      // Predicated region
      $region154: #{bottleneck_forward.7} parent=5 // pred_check
        %p1365 = pneg %p1364
      $region155: #{bottleneck_forward.7} parent=5 // pred_check_branch
        %1367 = sbr.rel (%p1365) target = $region157
      $region156: #{bottleneck_forward.7} parent=5 // pred_region
        %s1368 = ssub.s32 %s10, 2
        // Predicated region
        $region158: #{bottleneck_forward.7} parent=156 // pred_check
          %p1369 = pneg %p151
        $region159: #{bottleneck_forward.7} parent=156 // pred_check_branch
          %1371 = sbr.rel (%p1369) target = $region161
        $region160: #{bottleneck_forward.7} parent=156 // pred_region
          %s1372 = sand.u32 %s136, 1
          %s1373 = sand.u32 %s136, 1
          %s1374 = smul.addr %s1373, 256
          %s1375 = scalar_lea.vmem [#allocation4], %s1374
        $region161: #{bottleneck_forward.7} parent=156 // pred_fallthru
          _
      $region157: #{bottleneck_forward.7} parent=5 // pred_fallthru
        _
    $region6: #{bottleneck_forward.7} parent=1 // loop_footer
      %s14 = sadd.s32 1, %s10
    $region7: #{bottleneck_forward.7} parent=1 // loop_footer_branch
      %9 = sbr.rel target = $region3
    $region8: #{bottleneck_forward.7} parent=1 // loop_exit
      _

// kernel: bottleneck_forward.5
$region0: #{bottleneck_forward.5}
  #allocation0 [shape = 'u32[]', space=smem, size = 0x4, offset = 0x4, fixed_abs, tag = 'smem constant byte address 0x4 - core index']
  #allocation1 [shape = 'u32[144,128]{1,0:T(1,128)}', space=vmem, size = 0x12000, scoped, tag = 'internal scratch']
  #allocation2 [shape = 'f32[18,18,64]{2,1,0:T(8,128)}', space=vmem, size = 0x36000, scoped, tag = 'scratch operand']
  %s0 = inlined_call_operand.vmem [shape: bf16[2,16,16,64], index: 0, kind: input, shape index: {}]
  %s1 = inlined_call_operand.vmem [shape: f32[1,64], index: 1, kind: input, shape index: {}]
  %s2 = inlined_call_operand.vmem [shape: f32[1,64], index: 2, kind: input, shape index: {}]
  %s3 = inlined_call_operand.vmem [shape: f32[3,3,64,64], index: 3, kind: input, shape index: {}]
  %s4 = inlined_call_operand.vmem [shape: bf16[2,16,16,64], index: 4, kind: output, shape index: {0}]
  %s5 = inlined_call_operand.vmem [shape: f32[2,2,64], index: 5, kind: output, shape index: {1}]
  %6 = xla_tuple %s4, %s5
  %s7 = sld [smem:[#allocation0]]
  $region57: #{bottleneck_forward.5} parent=0
    _
  %s9 = ssub.s32 1, %s7
  %s10 = scalar_select 0, %s9, %s7
  loop: start=0, step=1, limit=4
  $region2: #{bottleneck_forward.5} parent=0 // loop_pre_header
    _
  $region3: #{bottleneck_forward.5} parent=0 // loop_header
    %s12 = sphi 0, %s16
    %p13 = scmp.ge.s32.totalorder %s12, 4
    %s22 = sphi 0, %s24
    %s25 = sphi 0, %s22
    %s26 = sphi 0, %s25
    %s42 = sphi 0, %s26
    %s46 = sphi 0, %s46
    %s48 = sphi 0, %s46
    %s49 = sphi 0, %s48
    %s63 = sphi 0, %s49
    %s67 = sphi 0, %s67
    %s69 = sphi 0, %s67
    %s70 = sphi 0, %s69
    %s84 = sphi 0, %s70
    %s88 = sphi 0, %s88
    %s90 = sphi 0, %s88
    %s91 = sphi 0, %s90
    %s105 = sphi 0, %s91
    %s111 = sphi 0, %s113
    %s114 = sphi 0, %s111
    %s115 = sphi 0, %s114
    %s131 = sphi 0, %s115
    %s137 = sphi 0, %s139
    %s140 = sphi 0, %s137
    %s141 = sphi 0, %s140
    %s157 = sphi 0, %s141
  $region4: #{bottleneck_forward.5} parent=0 // loop_header_branch
    %15 = sbr.rel (%p13) target = $region8
  $region5: #{bottleneck_forward.5} parent=0 // loop_body
    %s17 = ssub.s32 %s12, 1
    %s18 = ssub.s32 %s12, 2
    %s19 = sadd.s32 %s12, 1
    %s20 = ssub.s32 %s12, %s19
    %p21 = scmp.eq.s32.totalorder %s20, 0
    %s23 = sadd.s32 %s22, 1
    %s24 = scalar_select %p21, %s22, %s23
    %p27 = pneg %p21
    %p28 = scmp.eq.s32.totalorder %s12, 1
    %p29 = por %p27, %p28
    %p30 = scmp.ne.s32.totalorder %s22, %s25
    %p31 = scmp.eq.s32.totalorder %s12, 0
    %p32 = por %p30, %p31
    %p33 = scmp.ne.s32.totalorder %s22, %s25
    %p34 = scmp.eq.s32.totalorder %s17, 1
    %p35 = por %p33, %p34
    %p36 = scmp.ne.s32.totalorder %s25, %s26
    %p37 = scmp.eq.s32.totalorder %s17, 0
    %p38 = por %p36, %p37
    %p39 = scmp.ne.s32.totalorder %s25, %s26
    %p40 = scmp.eq.s32.totalorder %s18, 1
    %p41 = por %p39, %p40
    %p43 = scmp.ne.s32.totalorder %s26, %s42
    %p44 = scmp.eq.s32.totalorder %s18, 0
    %p45 = por %p43, %p44
    %s47 = sadd.s32 %s46, 1
    %p50 = scmp.eq.s32.totalorder %s12, 1
    %p51 = scmp.ne.s32.totalorder %s46, %s48
    %p52 = scmp.eq.s32.totalorder %s12, 0
    %p53 = por %p51, %p52
    %p54 = scmp.ne.s32.totalorder %s46, %s48
    %p55 = scmp.eq.s32.totalorder %s17, 1
    %p56 = por %p54, %p55
    %p57 = scmp.ne.s32.totalorder %s48, %s49
    %p58 = scmp.eq.s32.totalorder %s17, 0
    %p59 = por %p57, %p58
    %p60 = scmp.ne.s32.totalorder %s48, %s49
    %p61 = scmp.eq.s32.totalorder %s18, 1
    %p62 = por %p60, %p61
    %p64 = scmp.ne.s32.totalorder %s49, %s63
    %p65 = scmp.eq.s32.totalorder %s18, 0
    %p66 = por %p64, %p65
    %s68 = sadd.s32 %s67, 1
    %p71 = scmp.eq.s32.totalorder %s12, 1
    %p72 = scmp.ne.s32.totalorder %s67, %s69
    %p73 = scmp.eq.s32.totalorder %s12, 0
    %p74 = por %p72, %p73
    %p75 = scmp.ne.s32.totalorder %s67, %s69
    %p76 = scmp.eq.s32.totalorder %s17, 1
    %p77 = por %p75, %p76
    %p78 = scmp.ne.s32.totalorder %s69, %s70
    %p79 = scmp.eq.s32.totalorder %s17, 0
    %p80 = por %p78, %p79
    %p81 = scmp.ne.s32.totalorder %s69, %s70
    %p82 = scmp.eq.s32.totalorder %s18, 1
    %p83 = por %p81, %p82
    %p85 = scmp.ne.s32.totalorder %s70, %s84
    %p86 = scmp.eq.s32.totalorder %s18, 0
    %p87 = por %p85, %p86
    %s89 = sadd.s32 %s88, 1
    %p92 = scmp.eq.s32.totalorder %s12, 1
    %p93 = scmp.ne.s32.totalorder %s88, %s90
    %p94 = scmp.eq.s32.totalorder %s12, 0
    %p95 = por %p93, %p94
    %p96 = scmp.ne.s32.totalorder %s88, %s90
    %p97 = scmp.eq.s32.totalorder %s17, 1
    %p98 = por %p96, %p97
    %p99 = scmp.ne.s32.totalorder %s90, %s91
    %p100 = scmp.eq.s32.totalorder %s17, 0
    %p101 = por %p99, %p100
    %p102 = scmp.ne.s32.totalorder %s90, %s91
    %p103 = scmp.eq.s32.totalorder %s18, 1
    %p104 = por %p102, %p103
    %p106 = scmp.ne.s32.totalorder %s91, %s105
    %p107 = scmp.eq.s32.totalorder %s18, 0
    %p108 = por %p106, %p107
    %s109 = ssub.s32 %s12, %s19
    %p110 = scmp.eq.s32.totalorder %s109, 0
    %s112 = sadd.s32 %s111, 1
    %s113 = scalar_select %p110, %s111, %s112
    %p116 = pneg %p110
    %p117 = scmp.eq.s32.totalorder %s12, 1
    %p118 = por %p116, %p117
    %p119 = scmp.ne.s32.totalorder %s111, %s114
    %p120 = scmp.eq.s32.totalorder %s12, 0
    %p121 = por %p119, %p120
    %p122 = scmp.ne.s32.totalorder %s111, %s114
    %p123 = scmp.eq.s32.totalorder %s17, 1
    %p124 = por %p122, %p123
    %p125 = scmp.ne.s32.totalorder %s114, %s115
    %p126 = scmp.eq.s32.totalorder %s17, 0
    %p127 = por %p125, %p126
    %p128 = scmp.ne.s32.totalorder %s114, %s115
    %p129 = scmp.eq.s32.totalorder %s18, 1
    %p130 = por %p128, %p129
    %p132 = scmp.ne.s32.totalorder %s115, %s131
    %p133 = scmp.eq.s32.totalorder %s18, 0
    %p134 = por %p132, %p133
    %s135 = ssub.s32 %s12, %s19
    %p136 = scmp.eq.s32.totalorder %s135, 0
    %s138 = sadd.s32 %s137, 1
    %s139 = scalar_select %p136, %s137, %s138
    %p142 = pneg %p136
    %p143 = scmp.eq.s32.totalorder %s12, 1
    %p144 = por %p142, %p143
    %p145 = scmp.ne.s32.totalorder %s137, %s140
    %p146 = scmp.eq.s32.totalorder %s12, 0
    %p147 = por %p145, %p146
    %p148 = scmp.ne.s32.totalorder %s137, %s140
    %p149 = scmp.eq.s32.totalorder %s17, 1
    %p150 = por %p148, %p149
    %p151 = scmp.ne.s32.totalorder %s140, %s141
    %p152 = scmp.eq.s32.totalorder %s17, 0
    %p153 = por %p151, %p152
    %p154 = scmp.ne.s32.totalorder %s140, %s141
    %p155 = scmp.eq.s32.totalorder %s18, 1
    %p156 = por %p154, %p155
    %p158 = scmp.ne.s32.totalorder %s141, %s157
    %p159 = scmp.eq.s32.totalorder %s18, 0
    %p160 = por %p158, %p159
    %p161 = scmp.le.s32.totalorder 1, %s12
    %p162 = scmp.lt.s32.totalorder %s12, 3
    %p163 = pnand %p161, %p162
    %p164 = pneg %p163
    // Predicated region
    $region9: #{bottleneck_forward.5} parent=5 // pred_check
      _
    $region10: #{bottleneck_forward.5} parent=5 // pred_check_branch
      %166 = sbr.rel (%p163) target = $region12
    $region11: #{bottleneck_forward.5} parent=5 // pred_region
      %s167 = ssub.s32 %s12, 1
      // Predicated region
      $region13: #{bottleneck_forward.5} parent=11 // pred_check
        %p168 = pneg %p59
      $region14: #{bottleneck_forward.5} parent=11 // pred_check_branch
        %170 = sbr.rel (%p168) target = $region16
      $region15: #{bottleneck_forward.5} parent=11 // pred_region
        _
      $region16: #{bottleneck_forward.5} parent=11 // pred_fallthru
        _
      // Predicated region
      $region17: #{bottleneck_forward.5} parent=11 // pred_check
        %p171 = pneg %p80
      $region18: #{bottleneck_forward.5} parent=11 // pred_check_branch
        %173 = sbr.rel (%p171) target = $region20
      $region19: #{bottleneck_forward.5} parent=11 // pred_region
        _
      $region20: #{bottleneck_forward.5} parent=11 // pred_fallthru
        _
      // Predicated region
      $region21: #{bottleneck_forward.5} parent=11 // pred_check
        %p174 = pneg %p101
      $region22: #{bottleneck_forward.5} parent=11 // pred_check_branch
        %176 = sbr.rel (%p174) target = $region24
      $region23: #{bottleneck_forward.5} parent=11 // pred_region
        _
      $region24: #{bottleneck_forward.5} parent=11 // pred_fallthru
        _
    $region12: #{bottleneck_forward.5} parent=5 // pred_fallthru
      _
    %p177 = scmp.lt.s32.totalorder %s12, 2
    // Predicated region
    $region25: #{bottleneck_forward.5} parent=5 // pred_check
      %p178 = pneg %p177
    $region26: #{bottleneck_forward.5} parent=5 // pred_check_branch
      %180 = sbr.rel (%p178) target = $region28
    $region27: #{bottleneck_forward.5} parent=5 // pred_region
      // Predicated region
      $region29: #{bottleneck_forward.5} parent=27 // pred_check
        %p181 = pneg %p32
      $region30: #{bottleneck_forward.5} parent=27 // pred_check_branch
        %183 = sbr.rel (%p181) target = $region32
      $region31: #{bottleneck_forward.5} parent=27 // pred_region
        %p184 = scmp.lt.s32.totalorder %s12, 1
        %s185 = scalar_select %p184, %s12, 1
        %s186 = smul.addr %s185, 32
        %s187 = smul.addr %s186, 4
        %s188 = scalar_lea.vmem %s0, %s187
      $region32: #{bottleneck_forward.5} parent=27 // pred_fallthru
        _
    $region28: #{bottleneck_forward.5} parent=5 // pred_fallthru
      _
    %p189 = scmp.le.s32.totalorder 1, %s12
    %p190 = scmp.lt.s32.totalorder %s12, 3
    %p191 = pnand %p189, %p190
    %p192 = pneg %p191
    // Predicated region
    $region33: #{bottleneck_forward.5} parent=5 // pred_check
      _
    $region34: #{bottleneck_forward.5} parent=5 // pred_check_branch
      %194 = sbr.rel (%p191) target = $region36
    $region35: #{bottleneck_forward.5} parent=5 // pred_region
      %s195 = ssub.s32 %s12, 1
      %p196 = scmp.lt.s32.totalorder %s17, 1
      %s197 = scalar_select %p196, %s17, 1
      %s198 = smul.addr %s197, 32
      %s199 = smul.addr %s198, 4
      %s200 = scalar_lea.vmem %s0, %s199
      %p201 = pneg %p38
      %p202 = pneg %p35
      %p203 = pneg %p59
      %p204 = pneg %p56
      %p205 = pneg %p80
      %p206 = pneg %p77
      %p207 = pneg %p101
      %p208 = pneg %p98
      %p209 = pneg %p127
      %p210 = pneg %p124
      %p211 = scmp.lt.s32.totalorder %s17, 1
      %s212 = scalar_select %p211, %s17, 1
      %s213 = smul.addr %s212, 32
      %s214 = smul.addr %s213, 4
      %s215 = scalar_lea.vmem %s4, %s214
      %p216 = pneg %p153
      %p217 = pneg %p150
      %p218 = scmp.lt.s32.totalorder %s17, 1
      %s219 = scalar_select %p218, %s17, 1
      %s220 = smul.addr %s219, 2
      %s221 = scalar_lea.vmem %s5, %s220
      %p222 = scmp.lt.s32.totalorder %s17, 1
      %s223 = scalar_select %p222, %s17, 1
      %s224 = smul.addr %s223, 32
      %s225 = smul.addr %s224, 4
      %s226 = scalar_lea.vmem %s0, %s225
      %p227 = scmp.lt.s32.totalorder %s17, 1
      %s228 = scalar_select %p227, %s17, 1
      %s229 = smul.addr %s228, 32
      %s230 = smul.addr %s229, 4
      %s231 = scalar_lea.vmem %s4, %s230
      %p232 = scmp.lt.s32.totalorder %s17, 1
      %s233 = scalar_select %p232, %s17, 1
      %s234 = smul.addr %s233, 2
      %s235 = scalar_lea.vmem %s5, %s234
      %v236 = vld [vmem:[%s226] sm:$0xf]
      %v237 = vld [vmem:[%s226 + $0x4] sm:$0xf]
      %v238 = vld [vmem:[%s226 + $0x8] sm:$0xf]
      %v239 = vld [vmem:[%s226 + $0xc] sm:$0xf]
      %v240 = vld [vmem:[%s226 + $0x10] sm:$0xf]
      %v241 = vld [vmem:[%s226 + $0x14] sm:$0xf]
      %v242 = vld [vmem:[%s226 + $0x18] sm:$0xf]
      %v243 = vld [vmem:[%s226 + $0x1c] sm:$0xf]
      %v244 = vld [vmem:[%s226 + $0x20] sm:$0xf]
      %v245 = vld [vmem:[%s226 + $0x24] sm:$0xf]
      %v246 = vld [vmem:[%s226 + $0x28] sm:$0xf]
      %v247 = vld [vmem:[%s226 + $0x2c] sm:$0xf]
      %v248 = vld [vmem:[%s226 + $0x30] sm:$0xf]
      %v249 = vld [vmem:[%s226 + $0x34] sm:$0xf]
      %v250 = vld [vmem:[%s226 + $0x38] sm:$0xf]
      %v251 = vld [vmem:[%s226 + $0x3c] sm:$0xf]
      %v252 = vld [vmem:[%s226 + $0x40] sm:$0xf]
      %v253 = vld [vmem:[%s226 + $0x44] sm:$0xf]
      %v254 = vld [vmem:[%s226 + $0x48] sm:$0xf]
      %v255 = vld [vmem:[%s226 + $0x4c] sm:$0xf]
      %v256 = vld [vmem:[%s226 + $0x50] sm:$0xf]
      %v257 = vld [vmem:[%s226 + $0x54] sm:$0xf]
      %v258 = vld [vmem:[%s226 + $0x58] sm:$0xf]
      %v259 = vld [vmem:[%s226 + $0x5c] sm:$0xf]
      %v260 = vld [vmem:[%s226 + $0x60] sm:$0xf]
      %v261 = vld [vmem:[%s226 + $0x64] sm:$0xf]
      %v262 = vld [vmem:[%s226 + $0x68] sm:$0xf]
      %v263 = vld [vmem:[%s226 + $0x6c] sm:$0xf]
      %v264 = vld [vmem:[%s226 + $0x70] sm:$0xf]
      %v265 = vld [vmem:[%s226 + $0x74] sm:$0xf]
      %v266 = vld [vmem:[%s226 + $0x78] sm:$0xf]
      %v267 = vld [vmem:[%s226 + $0x7c] sm:$0xf]
      %v268 = vunpack.c.l.bf16 %v236
      %v269 = vunpack.c.l.bf16 %v237
      %v270 = vunpack.c.l.bf16 %v238
      %v271 = vunpack.c.l.bf16 %v239
      %v272 = vunpack.c.l.bf16 %v240
      %v273 = vunpack.c.l.bf16 %v241
      %v274 = vunpack.c.l.bf16 %v242
      %v275 = vunpack.c.l.bf16 %v243
      %v276 = vunpack.c.l.bf16 %v244
      %v277 = vunpack.c.l.bf16 %v245
      %v278 = vunpack.c.l.bf16 %v246
      %v279 = vunpack.c.l.bf16 %v247
      %v280 = vunpack.c.l.bf16 %v248
      %v281 = vunpack.c.l.bf16 %v249
      %v282 = vunpack.c.l.bf16 %v250
      %v283 = vunpack.c.l.bf16 %v251
      %v284 = vunpack.c.l.bf16 %v252
      %v285 = vunpack.c.l.bf16 %v253
      %v286 = vunpack.c.l.bf16 %v254
      %v287 = vunpack.c.l.bf16 %v255
      %v288 = vunpack.c.l.bf16 %v256
      %v289 = vunpack.c.l.bf16 %v257
      %v290 = vunpack.c.l.bf16 %v258
      %v291 = vunpack.c.l.bf16 %v259
      %v292 = vunpack.c.l.bf16 %v260
      %v293 = vunpack.c.l.bf16 %v261
      %v294 = vunpack.c.l.bf16 %v262
      %v295 = vunpack.c.l.bf16 %v263
      %v296 = vunpack.c.l.bf16 %v264
      %v297 = vunpack.c.l.bf16 %v265
      %v298 = vunpack.c.l.bf16 %v266
      %v299 = vunpack.c.l.bf16 %v267
      %v300 = vld [vmem:[%s1] sm:$0x1]
      %v302 = vlaneseq
      %v303 = vshrl.u32 %v302, 7
      %v304 = vsub.s32 0, %v303
      %v305 = vrot.slane %v300, %v304
      %v307 = vmul.f32 %v268, %v305
      %v308 = vmul.f32 %v269, %v305
      %v309 = vmul.f32 %v270, %v305
      %v310 = vmul.f32 %v271, %v305
      %v311 = vmul.f32 %v272, %v305
      %v312 = vmul.f32 %v273, %v305
      %v313 = vmul.f32 %v274, %v305
      %v314 = vmul.f32 %v275, %v305
      %v315 = vmul.f32 %v276, %v305
      %v316 = vmul.f32 %v277, %v305
      %v317 = vmul.f32 %v278, %v305
      %v318 = vmul.f32 %v279, %v305
      %v319 = vmul.f32 %v280, %v305
      %v320 = vmul.f32 %v281, %v305
      %v321 = vmul.f32 %v282, %v305
      %v322 = vmul.f32 %v283, %v305
      %v323 = vmul.f32 %v284, %v305
      %v324 = vmul.f32 %v285, %v305
      %v325 = vmul.f32 %v286, %v305
      %v326 = vmul.f32 %v287, %v305
      %v327 = vmul.f32 %v288, %v305
      %v328 = vmul.f32 %v289, %v305
      %v329 = vmul.f32 %v290, %v305
      %v330 = vmul.f32 %v291, %v305
      %v331 = vmul.f32 %v292, %v305
      %v332 = vmul.f32 %v293, %v305
      %v333 = vmul.f32 %v294, %v305
      %v334 = vmul.f32 %v295, %v305
      %v335 = vmul.f32 %v296, %v305
      %v336 = vmul.f32 %v297, %v305
      %v337 = vmul.f32 %v298, %v305
      %v338 = vmul.f32 %v299, %v305
      %v339 = vld [vmem:[%s2] sm:$0x1]
      %v341 = vlaneseq
      %v342 = vshrl.u32 %v341, 7
      %v343 = vsub.s32 0, %v342
      %v344 = vrot.slane %v339, %v343
      %v346 = vadd.f32 %v307, %v344
      %v347 = vadd.f32 %v308, %v344
      %v348 = vadd.f32 %v309, %v344
      %v349 = vadd.f32 %v310, %v344
      %v350 = vadd.f32 %v311, %v344
      %v351 = vadd.f32 %v312, %v344
      %v352 = vadd.f32 %v313, %v344
      %v353 = vadd.f32 %v314, %v344
      %v354 = vadd.f32 %v315, %v344
      %v355 = vadd.f32 %v316, %v344
      %v356 = vadd.f32 %v317, %v344
      %v357 = vadd.f32 %v318, %v344
      %v358 = vadd.f32 %v319, %v344
      %v359 = vadd.f32 %v320, %v344
      %v360 = vadd.f32 %v321, %v344
      %v361 = vadd.f32 %v322, %v344
      %v362 = vadd.f32 %v323, %v344
      %v363 = vadd.f32 %v324, %v344
      %v364 = vadd.f32 %v325, %v344
      %v365 = vadd.f32 %v326, %v344
      %v366 = vadd.f32 %v327, %v344
      %v367 = vadd.f32 %v328, %v344
      %v368 = vadd.f32 %v329, %v344
      %v369 = vadd.f32 %v330, %v344
      %v370 = vadd.f32 %v331, %v344
      %v371 = vadd.f32 %v332, %v344
      %v372 = vadd.f32 %v333, %v344
      %v373 = vadd.f32 %v334, %v344
      %v374 = vadd.f32 %v335, %v344
      %v375 = vadd.f32 %v336, %v344
      %v376 = vadd.f32 %v337, %v344
      %v377 = vadd.f32 %v338, %v344
      %v378 = vmax.f32 %v346, 0.0
      %v379 = vmax.f32 %v347, 0.0
      %v380 = vmax.f32 %v348, 0.0
      %v381 = vmax.f32 %v349, 0.0
      %v382 = vmax.f32 %v350, 0.0
      %v383 = vmax.f32 %v351, 0.0
      %v384 = vmax.f32 %v352, 0.0
      %v385 = vmax.f32 %v353, 0.0
      %v386 = vmax.f32 %v354, 0.0
      %v387 = vmax.f32 %v355, 0.0
      %v388 = vmax.f32 %v356, 0.0
      %v389 = vmax.f32 %v357, 0.0
      %v390 = vmax.f32 %v358, 0.0
      %v391 = vmax.f32 %v359, 0.0
      %v392 = vmax.f32 %v360, 0.0
      %v393 = vmax.f32 %v361, 0.0
      %v394 = vmax.f32 %v362, 0.0
      %v395 = vmax.f32 %v363, 0.0
      %v396 = vmax.f32 %v364, 0.0
      %v397 = vmax.f32 %v365, 0.0
      %v398 = vmax.f32 %v366, 0.0
      %v399 = vmax.f32 %v367, 0.0
      %v400 = vmax.f32 %v368, 0.0
      %v401 = vmax.f32 %v369, 0.0
      %v402 = vmax.f32 %v370, 0.0
      %v403 = vmax.f32 %v371, 0.0
      %v404 = vmax.f32 %v372, 0.0
      %v405 = vmax.f32 %v373, 0.0
      %v406 = vmax.f32 %v374, 0.0
      %v407 = vmax.f32 %v375, 0.0
      %v408 = vmax.f32 %v376, 0.0
      %v409 = vmax.f32 %v377, 0.0
      %vm410 = vcmask 523264
      %411 = vst.msk [vmem:[#allocation2] sm:$0xff] %vm410, 0.0
      %412 = vst.msk [vmem:[#allocation2 + $0x8] sm:$0xff] %vm410, 0.0
      %vm413 = vcmask 517120
      %414 = vst.msk [vmem:[#allocation2 + $0x10] sm:$0x3] %vm413, 0.0
      %s415 = scalar_lea.vmem [#allocation2], 408
      %416 = vst.msk [vmem:[%s415] sm:$0xff] %vm410, 0.0
      %417 = vst.msk [vmem:[%s415 + $0x8] sm:$0xff] %vm410, 0.0
      %418 = vst.msk [vmem:[%s415 + $0x10] sm:$0x3] %vm413, 0.0
      %s419 = scalar_lea.vmem [#allocation2], 24
      %vm420 = vcmask 516096
      %421 = vst.msk [vmem:[%s419] sm:$0x1] %vm420, 0.0
      %422 = vst.msk [vmem:[%s419 + $0x18] sm:$0x1] %vm420, 0.0
      %423 = vst.msk [vmem:[%s419 + $0x30] sm:$0x1] %vm420, 0.0
      %424 = vst.msk [vmem:[%s419 + $0x48] sm:$0x1] %vm420, 0.0
      %425 = vst.msk [vmem:[%s419 + $0x60] sm:$0x1] %vm420, 0.0
      %426 = vst.msk [vmem:[%s419 + $0x78] sm:$0x1] %vm420, 0.0
      %427 = vst.msk [vmem:[%s419 + $0x90] sm:$0x1] %vm420, 0.0
      %428 = vst.msk [vmem:[%s419 + $0xa8] sm:$0x1] %vm420, 0.0
      %429 = vst.msk [vmem:[%s419 + $0xc0] sm:$0x1] %vm420, 0.0
      %430 = vst.msk [vmem:[%s419 + $0xd8] sm:$0x1] %vm420, 0.0
      %431 = vst.msk [vmem:[%s419 + $0xf0] sm:$0x1] %vm420, 0.0
      %432 = vst.msk [vmem:[%s419 + $0x108] sm:$0x1] %vm420, 0.0
      %433 = vst.msk [vmem:[%s419 + $0x120] sm:$0x1] %vm420, 0.0
      %434 = vst.msk [vmem:[%s419 + $0x138] sm:$0x1] %vm420, 0.0
      %435 = vst.msk [vmem:[%s419 + $0x150] sm:$0x1] %vm420, 0.0
      %436 = vst.msk [vmem:[%s419 + $0x168] sm:$0x1] %vm420, 0.0
      %437 = vst.msk [vmem:[%s419 + $0x11] sm:$0x1] %vm420, 0.0
      %438 = vst.msk [vmem:[%s419 + $0x29] sm:$0x1] %vm420, 0.0
      %439 = vst.msk [vmem:[%s419 + $0x41] sm:$0x1] %vm420, 0.0
      %440 = vst.msk [vmem:[%s419 + $0x59] sm:$0x1] %vm420, 0.0
      %441 = vst.msk [vmem:[%s419 + $0x71] sm:$0x1] %vm420, 0.0
      %442 = vst.msk [vmem:[%s419 + $0x89] sm:$0x1] %vm420, 0.0
      %443 = vst.msk [vmem:[%s419 + $0xa1] sm:$0x1] %vm420, 0.0
      %444 = vst.msk [vmem:[%s419 + $0xb9] sm:$0x1] %vm420, 0.0
      %445 = vst.msk [vmem:[%s419 + $0xd1] sm:$0x1] %vm420, 0.0
      %446 = vst.msk [vmem:[%s419 + $0xe9] sm:$0x1] %vm420, 0.0
      %447 = vst.msk [vmem:[%s419 + $0x101] sm:$0x1] %vm420, 0.0
      %448 = vst.msk [vmem:[%s419 + $0x119] sm:$0x1] %vm420, 0.0
      %449 = vst.msk [vmem:[%s419 + $0x131] sm:$0x1] %vm420, 0.0
      %450 = vst.msk [vmem:[%s419 + $0x149] sm:$0x1] %vm420, 0.0
      %451 = vst.msk [vmem:[%s419 + $0x161] sm:$0x1] %vm420, 0.0
      %452 = vst.msk [vmem:[%s419 + $0x179] sm:$0x1] %vm420, 0.0
      %453 = vst.msk [vmem:[%s419 + $0x1] sm:$0xff] %vm410, %v378
      %454 = vst.msk [vmem:[%s419 + $0x9] sm:$0xff] %vm410, %v379
      %455 = vst.msk [vmem:[%s419 + $0x19] sm:$0xff] %vm410, %v380
      %456 = vst.msk [vmem:[%s419 + $0x21] sm:$0xff] %vm410, %v381
      %457 = vst.msk [vmem:[%s419 + $0x31] sm:$0xff] %vm410, %v382
      %458 = vst.msk [vmem:[%s419 + $0x39] sm:$0xff] %vm410, %v383
      %459 = vst.msk [vmem:[%s419 + $0x49] sm:$0xff] %vm410, %v384
      %460 = vst.msk [vmem:[%s419 + $0x51] sm:$0xff] %vm410, %v385
      %461 = vst.msk [vmem:[%s419 + $0x61] sm:$0xff] %vm410, %v386
      %462 = vst.msk [vmem:[%s419 + $0x69] sm:$0xff] %vm410, %v387
      %463 = vst.msk [vmem:[%s419 + $0x79] sm:$0xff] %vm410, %v388
      %464 = vst.msk [vmem:[%s419 + $0x81] sm:$0xff] %vm410, %v389
      %465 = vst.msk [vmem:[%s419 + $0x91] sm:$0xff] %vm410, %v390
      %466 = vst.msk [vmem:[%s419 + $0x99] sm:$0xff] %vm410, %v391
      %467 = vst.msk [vmem:[%s419 + $0xa9] sm:$0xff] %vm410, %v392
      %468 = vst.msk [vmem:[%s419 + $0xb1] sm:$0xff] %vm410, %v393
      %469 = vst.msk [vmem:[%s419 + $0xc1] sm:$0xff] %vm410, %v394
      %470 = vst.msk [vmem:[%s419 + $0xc9] sm:$0xff] %vm410, %v395
      %471 = vst.msk [vmem:[%s419 + $0xd9] sm:$0xff] %vm410, %v396
      %472 = vst.msk [vmem:[%s419 + $0xe1] sm:$0xff] %vm410, %v397
      %473 = vst.msk [vmem:[%s419 + $0xf1] sm:$0xff] %vm410, %v398
      %474 = vst.msk [vmem:[%s419 + $0xf9] sm:$0xff] %vm410, %v399
      %475 = vst.msk [vmem:[%s419 + $0x109] sm:$0xff] %vm410, %v400
      %476 = vst.msk [vmem:[%s419 + $0x111] sm:$0xff] %vm410, %v401
      %477 = vst.msk [vmem:[%s419 + $0x121] sm:$0xff] %vm410, %v402
      %478 = vst.msk [vmem:[%s419 + $0x129] sm:$0xff] %vm410, %v403
      %479 = vst.msk [vmem:[%s419 + $0x139] sm:$0xff] %vm410, %v404
      %480 = vst.msk [vmem:[%s419 + $0x141] sm:$0xff] %vm410, %v405
      %481 = vst.msk [vmem:[%s419 + $0x151] sm:$0xff] %vm410, %v406
      %482 = vst.msk [vmem:[%s419 + $0x159] sm:$0xff] %vm410, %v407
      %483 = vst.msk [vmem:[%s419 + $0x169] sm:$0xff] %vm410, %v408
      %484 = vst.msk [vmem:[%s419 + $0x171] sm:$0xff] %vm410, %v409
      %v485 = vld [vmem:[#allocation2] sm:$0xff]
      %v486 = vld [vmem:[#allocation2 + $0x8] sm:$0xff]
      %v487 = vld [vmem:[#allocation2 + $0x18] sm:$0xff]
      %v488 = vld [vmem:[#allocation2 + $0x20] sm:$0xff]
      %v489 = vld [vmem:[#allocation2 + $0x30] sm:$0xff]
      %v490 = vld [vmem:[#allocation2 + $0x38] sm:$0xff]
      %v491 = vld [vmem:[#allocation2 + $0x48] sm:$0xff]
      %v492 = vld [vmem:[#allocation2 + $0x50] sm:$0xff]
      %v493 = vld [vmem:[#allocation2 + $0x60] sm:$0xff]
      %v494 = vld [vmem:[#allocation2 + $0x68] sm:$0xff]
      %v495 = vld [vmem:[#allocation2 + $0x78] sm:$0xff]
      %v496 = vld [vmem:[#allocation2 + $0x80] sm:$0xff]
      %v497 = vld [vmem:[#allocation2 + $0x90] sm:$0xff]
      %v498 = vld [vmem:[#allocation2 + $0x98] sm:$0xff]
      %v499 = vld [vmem:[#allocation2 + $0xa8] sm:$0xff]
      %v500 = vld [vmem:[#allocation2 + $0xb0] sm:$0xff]
      %v501 = vld [vmem:[#allocation2 + $0xc0] sm:$0xff]
      %v502 = vld [vmem:[#allocation2 + $0xc8] sm:$0xff]
      %v503 = vld [vmem:[#allocation2 + $0xd8] sm:$0xff]
      %v504 = vld [vmem:[#allocation2 + $0xe0] sm:$0xff]
      %v505 = vld [vmem:[#allocation2 + $0xf0] sm:$0xff]
      %v506 = vld [vmem:[#allocation2 + $0xf8] sm:$0xff]
      %v507 = vld [vmem:[#allocation2 + $0x108] sm:$0xff]
      %v508 = vld [vmem:[#allocation2 + $0x110] sm:$0xff]
      %v509 = vld [vmem:[#allocation2 + $0x120] sm:$0xff]
      %v510 = vld [vmem:[#allocation2 + $0x128] sm:$0xff]
      %v511 = vld [vmem:[#allocation2 + $0x138] sm:$0xff]
      %v512 = vld [vmem:[#allocation2 + $0x140] sm:$0xff]
      %v513 = vld [vmem:[#allocation2 + $0x150] sm:$0xff]
      %v514 = vld [vmem:[#allocation2 + $0x158] sm:$0xff]
      %v515 = vld [vmem:[#allocation2 + $0x168] sm:$0xff]
      %v516 = vld [vmem:[#allocation2 + $0x170] sm:$0xff]
      %v517 = vld [vmem:[%s3] sm:$0xff]
      %v518 = vld [vmem:[%s3 + $0x8] sm:$0xff]
      %v519 = vld [vmem:[%s3 + $0x10] sm:$0xff]
      %v520 = vld [vmem:[%s3 + $0x18] sm:$0xff]
      %v521 = vld [vmem:[%s3 + $0x20] sm:$0xff]
      %v522 = vld [vmem:[%s3 + $0x28] sm:$0xff]
      %v523 = vld [vmem:[%s3 + $0x30] sm:$0xff]
      %v524 = vld [vmem:[%s3 + $0x38] sm:$0xff]
      %v525 = vld [vmem:[#allocation2 + $0x1] sm:$0xff]
      %v526 = vld [vmem:[#allocation2 + $0x9] sm:$0xff]
      %v527 = vld [vmem:[#allocation2 + $0x19] sm:$0xff]
      %v528 = vld [vmem:[#allocation2 + $0x21] sm:$0xff]
      %v529 = vld [vmem:[#allocation2 + $0x31] sm:$0xff]
      %v530 = vld [vmem:[#allocation2 + $0x39] sm:$0xff]
      %v531 = vld [vmem:[#allocation2 + $0x49] sm:$0xff]
      %v532 = vld [vmem:[#allocation2 + $0x51] sm:$0xff]
      %v533 = vld [vmem:[#allocation2 + $0x61] sm:$0xff]
      %v534 = vld [vmem:[#allocation2 + $0x69] sm:$0xff]
      %v535 = vld [vmem:[#allocation2 + $0x79] sm:$0xff]
      %v536 = vld [vmem:[#allocation2 + $0x81] sm:$0xff]
      %v537 = vld [vmem:[#allocation2 + $0x91] sm:$0xff]
      %v538 = vld [vmem:[#allocation2 + $0x99] sm:$0xff]
      %v539 = vld [vmem:[#allocation2 + $0xa9] sm:$0xff]
      %v540 = vld [vmem:[#allocation2 + $0xb1] sm:$0xff]
      %v541 = vld [vmem:[#allocation2 + $0xc1] sm:$0xff]
      %v542 = vld [vmem:[#allocation2 + $0xc9] sm:$0xff]
      %v543 = vld [vmem:[#allocation2 + $0xd9] sm:$0xff]
      %v544 = vld [vmem:[#allocation2 + $0xe1] sm:$0xff]
      %v545 = vld [vmem:[#allocation2 + $0xf1] sm:$0xff]
      %v546 = vld [vmem:[#allocation2 + $0xf9] sm:$0xff]
      %v547 = vld [vmem:[#allocation2 + $0x109] sm:$0xff]
      %v548 = vld [vmem:[#allocation2 + $0x111] sm:$0xff]
      %v549 = vld [vmem:[#allocation2 + $0x121] sm:$0xff]
      %v550 = vld [vmem:[#allocation2 + $0x129] sm:$0xff]
      %v551 = vld [vmem:[#allocation2 + $0x139] sm:$0xff]
      %v552 = vld [vmem:[#allocation2 + $0x141] sm:$0xff]
      %v553 = vld [vmem:[#allocation2 + $0x151] sm:$0xff]
      %v554 = vld [vmem:[#allocation2 + $0x159] sm:$0xff]
      %v555 = vld [vmem:[#allocation2 + $0x169] sm:$0xff]
      %v556 = vld [vmem:[#allocation2 + $0x171] sm:$0xff]
      %s557 = scalar_lea.vmem %s3, 64
      %v558 = vld [vmem:[%s557] sm:$0xff]
      %v559 = vld [vmem:[%s557 + $0x8] sm:$0xff]
      %v560 = vld [vmem:[%s557 + $0x10] sm:$0xff]
      %v561 = vld [vmem:[%s557 + $0x18] sm:$0xff]
      %v562 = vld [vmem:[%s557 + $0x20] sm:$0xff]
      %v563 = vld [vmem:[%s557 + $0x28] sm:$0xff]
      %v564 = vld [vmem:[%s557 + $0x30] sm:$0xff]
      %v565 = vld [vmem:[%s557 + $0x38] sm:$0xff]
      %v567 = vsel %vm410, %v525, 0
      %v570 = vsel %vm410, %v526, 0
      %v573 = vsel %vm410, %v527, 0
      %v576 = vsel %vm410, %v528, 0
      %v579 = vsel %vm410, %v529, 0
      %v582 = vsel %vm410, %v530, 0
      %v585 = vsel %vm410, %v531, 0
      %v588 = vsel %vm410, %v532, 0
      %v591 = vsel %vm410, %v533, 0
      %v594 = vsel %vm410, %v534, 0
      %v597 = vsel %vm410, %v535, 0
      %v600 = vsel %vm410, %v536, 0
      %v603 = vsel %vm410, %v537, 0
      %v606 = vsel %vm410, %v538, 0
      %v609 = vsel %vm410, %v539, 0
      %v612 = vsel %vm410, %v540, 0
      %v615 = vsel %vm410, %v541, 0
      %v618 = vsel %vm410, %v542, 0
      %v621 = vsel %vm410, %v543, 0
      %v624 = vsel %vm410, %v544, 0
      %v627 = vsel %vm410, %v545, 0
      %v630 = vsel %vm410, %v546, 0
      %v633 = vsel %vm410, %v547, 0
      %v636 = vsel %vm410, %v548, 0
      %v639 = vsel %vm410, %v549, 0
      %v642 = vsel %vm410, %v550, 0
      %v645 = vsel %vm410, %v551, 0
      %v648 = vsel %vm410, %v552, 0
      %v651 = vsel %vm410, %v553, 0
      %v654 = vsel %vm410, %v554, 0
      %v657 = vsel %vm410, %v555, 0
      %v660 = vsel %vm410, %v556, 0
      %662 = vmatprep.subr.mxu0 0.0
      %663 = vmatpush1.msra.mxu0 %v558
      %664 = vmatprep.subr.mxu0 0.0
      %665 = vmatpush1.msra.mxu0 %v559
      %666 = vmatprep.subr.mxu0 0.0
      %667 = vmatpush1.msra.mxu0 %v560
      %668 = vmatprep.subr.mxu0 0.0
      %669 = vmatpush1.msra.mxu0 %v561
      %670 = vmatprep.subr.mxu0 0.0
      %671 = vmatpush1.msra.mxu0 %v562
      %672 = vmatprep.subr.mxu0 0.0
      %673 = vmatpush1.msra.mxu0 %v563
      %674 = vmatprep.subr.mxu0 0.0
      %675 = vmatpush1.msra.mxu0 %v564
      %676 = vmatprep.subr.mxu0 0.0
      %677 = vmatpush1.msra.mxu0 %v565
      %678 = vmatprep.subr.mxu0 0.0
      %679 = vmatpush1.msra.mxu0 0.0
      %680 = vmatprep.subr.mxu0 0.0
      %681 = vmatpush1.msra.mxu0 0.0
      %682 = vmatprep.subr.mxu0 0.0
      %683 = vmatpush1.msra.mxu0 0.0
      %684 = vmatprep.subr.mxu0 0.0
      %685 = vmatpush1.msra.mxu0 0.0
      %686 = vmatprep.subr.mxu0 0.0
      %687 = vmatpush1.msra.mxu0 0.0
      %688 = vmatprep.subr.mxu0 0.0
      %689 = vmatpush1.msra.mxu0 0.0
      %690 = vmatprep.subr.mxu0 0.0
      %691 = vmatpush1.msra.mxu0 0.0
      %692 = vmatprep.subr.mxu0 0.0
      %693 = vmatpush1.msra.mxu0 0.0
      %694 = vmatprep.subr.mxu0 0.0
      %695 = vmatpush1.msra.mxu0 0.0
      %696 = vmatprep.subr.mxu0 0.0
      %697 = vmatpush1.msra.mxu0 0.0
      %698 = vmatprep.subr.mxu0 0.0
      %699 = vmatpush1.msra.mxu0 0.0
      %700 = vmatprep.subr.mxu0 0.0
      %701 = vmatpush1.msra.mxu0 0.0
      %702 = vmatprep.subr.mxu0 0.0
      %703 = vmatpush1.msra.mxu0 0.0
      %704 = vmatprep.subr.mxu0 0.0
      %705 = vmatpush1.msra.mxu0 0.0
      %706 = vmatprep.subr.mxu0 0.0
      %707 = vmatpush1.msra.mxu0 0.0
      %708 = vmatprep.subr.mxu0 0.0
      %709 = vmatpush1.msra.mxu0 0.0
      %710 = vmatprep.subr.mxu0 0.0
      %711 = vmatpush1.msra.mxu0 0.0
      %712 = vmatprep.subr.mxu0 0.0
      %713 = vmatpush1.msra.mxu0 0.0
      %714 = vmatprep.subr.mxu0 0.0
      %715 = vmatpush1.msra.mxu0 0.0
      %716 = vmatprep.subr.mxu0 0.0
      %717 = vmatpush1.msra.mxu0 0.0
      %718 = vmatprep.subr.mxu0 0.0
      %719 = vmatpush1.msra.mxu0 0.0
      %720 = vmatprep.subr.mxu0 0.0
      %721 = vmatpush1.msra.mxu0 0.0
      %722 = vmatprep.subr.mxu0 0.0
      %723 = vmatpush1.msra.mxu0 0.0
      %724 = vmatprep.subr.mxu0 0.0
      %725 = vmatpush1.msra.mxu0 0.0
      %726 = vmatprep.mubr.f32.mxu0 0.0
      %727 = vmatmul.mubr.f32.gmra.mrb[0].mxu0 %v567
      %v728 = vpop.f32.mrb[0].mxu0
      %v729 = vadd.f32 0.0, %v728
      %v730 = vpop.f32.mrb[0].mxu0
      %731 = vmatprep.mubr.f32.mxu0 0.0
      %732 = vmatmul.mubr.f32.gmra.mrb[0].mxu0 %v570
      %v733 = vpop.f32.mrb[0].mxu0
      %v734 = vadd.f32 0.0, %v733
      %v735 = vpop.f32.mrb[0].mxu0
      %736 = vmatprep.mubr.f32.mxu0 0.0
      %737 = vmatmul.mubr.f32.gmra.mrb[0].mxu0 %v573
      %v738 = vpop.f32.mrb[0].mxu0
      %v739 = vadd.f32 0.0, %v738
      %v740 = vpop.f32.mrb[0].mxu0
      %741 = vmatprep.mubr.f32.mxu0 0.0
      %742 = vmatmul.mubr.f32.gmra.mrb[0].mxu0 %v576
      %v743 = vpop.f32.mrb[0].mxu0
      %v744 = vadd.f32 0.0, %v743
      %v745 = vpop.f32.mrb[0].mxu0
      %746 = vmatprep.mubr.f32.mxu0 0.0
      %747 = vmatmul.mubr.f32.gmra.mrb[0].mxu0 %v579
      %v748 = vpop.f32.mrb[0].mxu0
      %v749 = vadd.f32 0.0, %v748
      %v750 = vpop.f32.mrb[0].mxu0
      %751 = vmatprep.mubr.f32.mxu0 0.0
      %752 = vmatmul.mubr.f32.gmra.mrb[0].mxu0 %v582
      %v753 = vpop.f32.mrb[0].mxu0
      %v754 = vadd.f32 0.0, %v753
      %v755 = vpop.f32.mrb[0].mxu0
      %756 = vmatprep.mubr.f32.mxu0 0.0
      %757 = vmatmul.mubr.f32.gmra.mrb[0].mxu0 %v585
      %v758 = vpop.f32.mrb[0].mxu0
      %v759 = vadd.f32 0.0, %v758
      %v760 = vpop.f32.mrb[0].mxu0
      %761 = vmatprep.mubr.f32.mxu0 0.0
      %762 = vmatmul.mubr.f32.gmra.mrb[0].mxu0 %v588
      %v763 = vpop.f32.mrb[0].mxu0
      %v764 = vadd.f32 0.0, %v763
      %v765 = vpop.f32.mrb[0].mxu0
      %766 = vmatprep.mubr.f32.mxu0 0.0
      %767 = vmatmul.mubr.f32.gmra.mrb[0].mxu0 %v591
      %v768 = vpop.f32.mrb[0].mxu0
      %v769 = vadd.f32 0.0, %v768
      %v770 = vpop.f32.mrb[0].mxu0
      %771 = vmatprep.mubr.f32.mxu0 0.0
      %772 = vmatmul.mubr.f32.gmra.mrb[0].mxu0 %v594
      %v773 = vpop.f32.mrb[0].mxu0
      %v774 = vadd.f32 0.0, %v773
      %v775 = vpop.f32.mrb[0].mxu0
      %776 = vmatprep.mubr.f32.mxu0 0.0
      %777 = vmatmul.mubr.f32.gmra.mrb[0].mxu0 %v597
      %v778 = vpop.f32.mrb[0].mxu0
      %v779 = vadd.f32 0.0, %v778
      %v780 = vpop.f32.mrb[0].mxu0
      %781 = vmatprep.mubr.f32.mxu0 0.0
      %782 = vmatmul.mubr.f32.gmra.mrb[0].mxu0 %v600
      %v783 = vpop.f32.mrb[0].mxu0
      %v784 = vadd.f32 0.0, %v783
      %v785 = vpop.f32.mrb[0].mxu0
      %786 = vmatprep.mubr.f32.mxu0 0.0
      %787 = vmatmul.mubr.f32.gmra.mrb[0].mxu0 %v603
      %v788 = vpop.f32.mrb[0].mxu0
      %v789 = vadd.f32 0.0, %v788
      %v790 = vpop.f32.mrb[0].mxu0
      %791 = vmatprep.mubr.f32.mxu0 0.0
      %792 = vmatmul.mubr.f32.gmra.mrb[0].mxu0 %v606
      %v793 = vpop.f32.mrb[0].mxu0
      %v794 = vadd.f32 0.0, %v793
      %v795 = vpop.f32.mrb[0].mxu0
      %796 = vmatprep.mubr.f32.mxu0 0.0
      %797 = vmatmul.mubr.f32.gmra.mrb[0].mxu0 %v609
      %v798 = vpop.f32.mrb[0].mxu0
      %v799 = vadd.f32 0.0, %v798
      %v800 = vpop.f32.mrb[0].mxu0
      %801 = vmatprep.mubr.f32.mxu0 0.0
      %802 = vmatmul.mubr.f32.gmra.mrb[0].mxu0 %v612
      %v803 = vpop.f32.mrb[0].mxu0
      %v804 = vadd.f32 0.0, %v803
      %v805 = vpop.f32.mrb[0].mxu0
      %806 = vmatprep.mubr.f32.mxu0 0.0
      %807 = vmatmul.mubr.f32.gmra.mrb[0].mxu0 %v615
      %v808 = vpop.f32.mrb[0].mxu0
      %v809 = vadd.f32 0.0, %v808
      %v810 = vpop.f32.mrb[0].mxu0
      %811 = vmatprep.mubr.f32.mxu0 0.0
      %812 = vmatmul.mubr.f32.gmra.mrb[0].mxu0 %v618
      %v813 = vpop.f32.mrb[0].mxu0
      %v814 = vadd.f32 0.0, %v813
      %v815 = vpop.f32.mrb[0].mxu0
      %816 = vmatprep.mubr.f32.mxu0 0.0
      %817 = vmatmul.mubr.f32.gmra.mrb[0].mxu0 %v621
      %v818 = vpop.f32.mrb[0].mxu0
      %v819 = vadd.f32 0.0, %v818
      %v820 = vpop.f32.mrb[0].mxu0
      %821 = vmatprep.mubr.f32.mxu0 0.0
      %822 = vmatmul.mubr.f32.gmra.mrb[0].mxu0 %v624
      %v823 = vpop.f32.mrb[0].mxu0
      %v824 = vadd.f32 0.0, %v823
      %v825 = vpop.f32.mrb[0].mxu0
      %826 = vmatprep.mubr.f32.mxu0 0.0
      %827 = vmatmul.mubr.f32.gmra.mrb[0].mxu0 %v627
      %v828 = vpop.f32.mrb[0].mxu0
      %v829 = vadd.f32 0.0, %v828
      %v830 = vpop.f32.mrb[0].mxu0
      %831 = vmatprep.mubr.f32.mxu0 0.0
      %832 = vmatmul.mubr.f32.gmra.mrb[0].mxu0 %v630
      %v833 = vpop.f32.mrb[0].mxu0
      %v834 = vadd.f32 0.0, %v833
      %v835 = vpop.f32.mrb[0].mxu0
      %836 = vmatprep.mubr.f32.mxu0 0.0
      %837 = vmatmul.mubr.f32.gmra.mrb[0].mxu0 %v633
      %v838 = vpop.f32.mrb[0].mxu0
      %v839 = vadd.f32 0.0, %v838
      %v840 = vpop.f32.mrb[0].mxu0
      %841 = vmatprep.mubr.f32.mxu0 0.0
      %842 = vmatmul.mubr.f32.gmra.mrb[0].mxu0 %v636
      %v843 = vpop.f32.mrb[0].mxu0
      %v844 = vadd.f32 0.0, %v843
      %v845 = vpop.f32.mrb[0].mxu0
      %846 = vmatprep.mubr.f32.mxu0 0.0
      %847 = vmatmul.mubr.f32.gmra.mrb[0].mxu0 %v639
      %v848 = vpop.f32.mrb[0].mxu0
      %v849 = vadd.f32 0.0, %v848
      %v850 = vpop.f32.mrb[0].mxu0
      %851 = vmatprep.mubr.f32.mxu0 0.0
      %852 = vmatmul.mubr.f32.gmra.mrb[0].mxu0 %v642
      %v853 = vpop.f32.mrb[0].mxu0
      %v854 = vadd.f32 0.0, %v853
      %v855 = vpop.f32.mrb[0].mxu0
      %856 = vmatprep.mubr.f32.mxu0 0.0
      %857 = vmatmul.mubr.f32.gmra.mrb[0].mxu0 %v645
      %v858 = vpop.f32.mrb[0].mxu0
      %v859 = vadd.f32 0.0, %v858
      %v860 = vpop.f32.mrb[0].mxu0
      %861 = vmatprep.mubr.f32.mxu0 0.0
      %862 = vmatmul.mubr.f32.gmra.mrb[0].mxu0 %v648
      %v863 = vpop.f32.mrb[0].mxu0
      %v864 = vadd.f32 0.0, %v863
      %v865 = vpop.f32.mrb[0].mxu0
      %866 = vmatprep.mubr.f32.mxu0 0.0
      %867 = vmatmul.mubr.f32.gmra.mrb[0].mxu0 %v651
      %v868 = vpop.f32.mrb[0].mxu0
      %v869 = vadd.f32 0.0, %v868
      %v870 = vpop.f32.mrb[0].mxu0
      %871 = vmatprep.mubr.f32.mxu0 0.0
      %872 = vmatmul.mubr.f32.gmra.mrb[0].mxu0 %v654
      %v873 = vpop.f32.mrb[0].mxu0
      %v874 = vadd.f32 0.0, %v873
      %v875 = vpop.f32.mrb[0].mxu0
      %876 = vmatprep.mubr.f32.mxu0 0.0
      %877 = vmatmul.mubr.f32.gmra.mrb[0].mxu0 %v657
      %v878 = vpop.f32.mrb[0].mxu0
      %v879 = vadd.f32 0.0, %v878
      %v880 = vpop.f32.mrb[0].mxu0
      %881 = vmatprep.mubr.f32.mxu0 0.0
      %882 = vmatmul.mubr.f32.gmra.mrb[0].mxu0 %v660
      %v883 = vpop.f32.mrb[0].mxu0
      %v884 = vadd.f32 0.0, %v883
      %v885 = vpop.f32.mrb[0].mxu0
      %886 = vdwg.mxu0
      %v888 = vsel %vm410, %v485, 0
      %v891 = vsel %vm410, %v486, 0
      %v894 = vsel %vm410, %v487, 0
      %v897 = vsel %vm410, %v488, 0
      %v900 = vsel %vm410, %v489, 0
      %v903 = vsel %vm410, %v490, 0
      %v906 = vsel %vm410, %v491, 0
      %v909 = vsel %vm410, %v492, 0
      %v912 = vsel %vm410, %v493, 0
      %v915 = vsel %vm410, %v494, 0
      %v918 = vsel %vm410, %v495, 0
      %v921 = vsel %vm410, %v496, 0
      %v924 = vsel %vm410, %v497, 0
      %v927 = vsel %vm410, %v498, 0
      %v930 = vsel %vm410, %v499, 0
      %v933 = vsel %vm410, %v500, 0
      %v936 = vsel %vm410, %v501, 0
      %v939 = vsel %vm410, %v502, 0
      %v942 = vsel %vm410, %v503, 0
      %v945 = vsel %vm410, %v504, 0
      %v948 = vsel %vm410, %v505, 0
      %v951 = vsel %vm410, %v506, 0
      %v954 = vsel %vm410, %v507, 0
      %v957 = vsel %vm410, %v508, 0
      %v960 = vsel %vm410, %v509, 0
      %v963 = vsel %vm410, %v510, 0
      %v966 = vsel %vm410, %v511, 0
      %v969 = vsel %vm410, %v512, 0
      %v972 = vsel %vm410, %v513, 0
      %v975 = vsel %vm410, %v514, 0
      %v978 = vsel %vm410, %v515, 0
      %v981 = vsel %vm410, %v516, 0
      %983 = vmatprep.subr.mxu0 0.0
      %984 = vmatpush1.msra.mxu0 %v517
      %985 = vmatprep.subr.mxu0 0.0
      %986 = vmatpush1.msra.mxu0 %v518
      %987 = vmatprep.subr.mxu0 0.0
      %988 = vmatpush1.msra.mxu0 %v519
      %989 = vmatprep.subr.mxu0 0.0
      %990 = vmatpush1.msra.mxu0 %v520
      %991 = vmatprep.subr.mxu0 0.0
      %992 = vmatpush1.msra.mxu0 %v521
      %993 = vmatprep.subr.mxu0 0.0
      %994 = vmatpush1.msra.mxu0 %v522
      %995 = vmatprep.subr.mxu0 0.0
      %996 = vmatpush1.msra.mxu0 %v523
      %997 = vmatprep.subr.mxu0 0.0
      %998 = vmatpush1.msra.mxu0 %v524
      %999 = vmatprep.subr.mxu0 0.0
      %1000 = vmatpush1.msra.mxu0 0.0
      %1001 = vmatprep.subr.mxu0 0.0
      %1002 = vmatpush1.msra.mxu0 0.0
      %1003 = vmatprep.subr.mxu0 0.0
      %1004 = vmatpush1.msra.mxu0 0.0
      %1005 = vmatprep.subr.mxu0 0.0
      %1006 = vmatpush1.msra.mxu0 0.0
      %1007 = vmatprep.subr.mxu0 0.0
      %1008 = vmatpush1.msra.mxu0 0.0
      %1009 = vmatprep.subr.mxu0 0.0
      %1010 = vmatpush1.msra.mxu0 0.0
      %1011 = vmatprep.subr.mxu0 0.0
      %1012 = vmatpush1.msra.mxu0 0.0
      %1013 = vmatprep.subr.mxu0 0.0
      %1014 = vmatpush1.msra.mxu0 0.0
      %1015 = vmatprep.subr.mxu0 0.0
      %1016 = vmatpush1.msra.mxu0 0.0
      %1017 = vmatprep.subr.mxu0 0.0
      %1018 = vmatpush1.msra.mxu0 0.0
      %1019 = vmatprep.subr.mxu0 0.0
      %1020 = vmatpush1.msra.mxu0 0.0
      %1021 = vmatprep.subr.mxu0 0.0
      %1022 = vmatpush1.msra.mxu0 0.0
      %1023 = vmatprep.subr.mxu0 0.0
      %1024 = vmatpush1.msra.mxu0 0.0
      %1025 = vmatprep.subr.mxu0 0.0
      %1026 = vmatpush1.msra.mxu0 0.0
      %1027 = vmatprep.subr.mxu0 0.0
      %1028 = vmatpush1.msra.mxu0 0.0
      %1029 = vmatprep.subr.mxu0 0.0
      %1030 = vmatpush1.msra.mxu0 0.0
      %1031 = vmatprep.subr.mxu0 0.0
      %1032 = vmatpush1.msra.mxu0 0.0
      %1033 = vmatprep.subr.mxu0 0.0
      %1034 = vmatpush1.msra.mxu0 0.0
      %1035 = vmatprep.subr.mxu0 0.0
      %1036 = vmatpush1.msra.mxu0 0.0
      %1037 = vmatprep.subr.mxu0 0.0
      %1038 = vmatpush1.msra.mxu0 0.0
      %1039 = vmatprep.subr.mxu0 0.0
      %1040 = vmatpush1.msra.mxu0 0.0
      %1041 = vmatprep.subr.mxu0 0.0
      %1042 = vmatpush1.msra.mxu0 0.0
      %1043 = vmatprep.subr.mxu0 0.0
      %1044 = vmatpush1.msra.mxu0 0.0
      %1045 = vmatprep.subr.mxu0 0.0
      %1046 = vmatpush1.msra.mxu0 0.0
      %1047 = vmatprep.mubr.f32.mxu0 0.0
      %1048 = vmatmul.mubr.f32.gmra.mrb[0].mxu0 %v888
      %v1049 = vpop.f32.mrb[0].mxu0
      %v1050 = vadd.f32 %v729, %v1049
      %v1051 = vpop.f32.mrb[0].mxu0
      %1052 = vmatprep.mubr.f32.mxu0 0.0
      %1053 = vmatmul.mubr.f32.gmra.mrb[0].mxu0 %v891
      %v1054 = vpop.f32.mrb[0].mxu0
      %v1055 = vadd.f32 %v734, %v1054
      %v1056 = vpop.f32.mrb[0].mxu0
      %1057 = vmatprep.mubr.f32.mxu0 0.0
      %1058 = vmatmul.mubr.f32.gmra.mrb[0].mxu0 %v894
      %v1059 = vpop.f32.mrb[0].mxu0
      %v1060 = vadd.f32 %v739, %v1059
      %v1061 = vpop.f32.mrb[0].mxu0
      %1062 = vmatprep.mubr.f32.mxu0 0.0
      %1063 = vmatmul.mubr.f32.gmra.mrb[0].mxu0 %v897
      %v1064 = vpop.f32.mrb[0].mxu0
      %v1065 = vadd.f32 %v744, %v1064
      %v1066 = vpop.f32.mrb[0].mxu0
      %1067 = vmatprep.mubr.f32.mxu0 0.0
      %1068 = vmatmul.mubr.f32.gmra.mrb[0].mxu0 %v900
      %v1069 = vpop.f32.mrb[0].mxu0
      %v1070 = vadd.f32 %v749, %v1069
      %v1071 = vpop.f32.mrb[0].mxu0
      %1072 = vmatprep.mubr.f32.mxu0 0.0
      %1073 = vmatmul.mubr.f32.gmra.mrb[0].mxu0 %v903
      %v1074 = vpop.f32.mrb[0].mxu0
      %v1075 = vadd.f32 %v754, %v1074
      %v1076 = vpop.f32.mrb[0].mxu0
      %1077 = vmatprep.mubr.f32.mxu0 0.0
      %1078 = vmatmul.mubr.f32.gmra.mrb[0].mxu0 %v906
      %v1079 = vpop.f32.mrb[0].mxu0
      %v1080 = vadd.f32 %v759, %v1079
      %v1081 = vpop.f32.mrb[0].mxu0
      %1082 = vmatprep.mubr.f32.mxu0 0.0
      %1083 = vmatmul.mubr.f32.gmra.mrb[0].mxu0 %v909
      %v1084 = vpop.f32.mrb[0].mxu0
      %v1085 = vadd.f32 %v764, %v1084
      %v1086 = vpop.f32.mrb[0].mxu0
      %1087 = vmatprep.mubr.f32.mxu0 0.0
      %1088 = vmatmul.mubr.f32.gmra.mrb[0].mxu0 %v912
      %v1089 = vpop.f32.mrb[0].mxu0
      %v1090 = vadd.f32 %v769, %v1089
      %v1091 = vpop.f32.mrb[0].mxu0
      %1092 = vmatprep.mubr.f32.mxu0 0.0
      %1093 = vmatmul.mubr.f32.gmra.mrb[0].mxu0 %v915
      %v1094 = vpop.f32.mrb[0].mxu0
      %v1095 = vadd.f32 %v774, %v1094
      %v1096 = vpop.f32.mrb[0].mxu0
      %1097 = vmatprep.mubr.f32.mxu0 0.0
      %1098 = vmatmul.mubr.f32.gmra.mrb[0].mxu0 %v918
      %v1099 = vpop.f32.mrb[0].mxu0
      %v1100 = vadd.f32 %v779, %v1099
      %v1101 = vpop.f32.mrb[0].mxu0
      %1102 = vmatprep.mubr.f32.mxu0 0.0
      %1103 = vmatmul.mubr.f32.gmra.mrb[0].mxu0 %v921
      %v1104 = vpop.f32.mrb[0].mxu0
      %v1105 = vadd.f32 %v784, %v1104
      %v1106 = vpop.f32.mrb[0].mxu0
      %1107 = vmatprep.mubr.f32.mxu0 0.0
      %1108 = vmatmul.mubr.f32.gmra.mrb[0].mxu0 %v924
      %v1109 = vpop.f32.mrb[0].mxu0
      %v1110 = vadd.f32 %v789, %v1109
      %v1111 = vpop.f32.mrb[0].mxu0
      %1112 = vmatprep.mubr.f32.mxu0 0.0
      %1113 = vmatmul.mubr.f32.gmra.mrb[0].mxu0 %v927
      %v1114 = vpop.f32.mrb[0].mxu0
      %v1115 = vadd.f32 %v794, %v1114
      %v1116 = vpop.f32.mrb[0].mxu0
      %1117 = vmatprep.mubr.f32.mxu0 0.0
      %1118 = vmatmul.mubr.f32.gmra.mrb[0].mxu0 %v930
      %v1119 = vpop.f32.mrb[0].mxu0
      %v1120 = vadd.f32 %v799, %v1119
      %v1121 = vpop.f32.mrb[0].mxu0
      %1122 = vmatprep.mubr.f32.mxu0 0.0
      %1123 = vmatmul.mubr.f32.gmra.mrb[0].mxu0 %v933
      %v1124 = vpop.f32.mrb[0].mxu0
      %v1125 = vadd.f32 %v804, %v1124
      %v1126 = vpop.f32.mrb[0].mxu0
      %1127 = vmatprep.mubr.f32.mxu0 0.0
      %1128 = vmatmul.mubr.f32.gmra.mrb[0].mxu0 %v936
      %v1129 = vpop.f32.mrb[0].mxu0
      %v1130 = vadd.f32 %v809, %v1129
      %v1131 = vpop.f32.mrb[0].mxu0
      %1132 = vmatprep.mubr.f32.mxu0 0.0
      %1133 = vmatmul.mubr.f32.gmra.mrb[0].mxu0 %v939
      %v1134 = vpop.f32.mrb[0].mxu0
      %v1135 = vadd.f32 %v814, %v1134
      %v1136 = vpop.f32.mrb[0].mxu0
      %1137 = vmatprep.mubr.f32.mxu0 0.0
      %1138 = vmatmul.mubr.f32.gmra.mrb[0].mxu0 %v942
      %v1139 = vpop.f32.mrb[0].mxu0
      %v1140 = vadd.f32 %v819, %v1139
      %v1141 = vpop.f32.mrb[0].mxu0
      %1142 = vmatprep.mubr.f32.mxu0 0.0
      %1143 = vmatmul.mubr.f32.gmra.mrb[0].mxu0 %v945
      %v1144 = vpop.f32.mrb[0].mxu0
      %v1145 = vadd.f32 %v824, %v1144
      %v1146 = vpop.f32.mrb[0].mxu0
      %1147 = vmatprep.mubr.f32.mxu0 0.0
      %1148 = vmatmul.mubr.f32.gmra.mrb[0].mxu0 %v948
      %v1149 = vpop.f32.mrb[0].mxu0
      %v1150 = vadd.f32 %v829, %v1149
      %v1151 = vpop.f32.mrb[0].mxu0
      %1152 = vmatprep.mubr.f32.mxu0 0.0
      %1153 = vmatmul.mubr.f32.gmra.mrb[0].mxu0 %v951
      %v1154 = vpop.f32.mrb[0].mxu0
      %v1155 = vadd.f32 %v834, %v1154
      %v1156 = vpop.f32.mrb[0].mxu0
      %1157 = vmatprep.mubr.f32.mxu0 0.0
      %1158 = vmatmul.mubr.f32.gmra.mrb[0].mxu0 %v954
      %v1159 = vpop.f32.mrb[0].mxu0
      %v1160 = vadd.f32 %v839, %v1159
      %v1161 = vpop.f32.mrb[0].mxu0
      %1162 = vmatprep.mubr.f32.mxu0 0.0
      %1163 = vmatmul.mubr.f32.gmra.mrb[0].mxu0 %v957
      %v1164 = vpop.f32.mrb[0].mxu0
      %v1165 = vadd.f32 %v844, %v1164
      %v1166 = vpop.f32.mrb[0].mxu0
      %1167 = vmatprep.mubr.f32.mxu0 0.0
      %1168 = vmatmul.mubr.f32.gmra.mrb[0].mxu0 %v960
      %v1169 = vpop.f32.mrb[0].mxu0
      %v1170 = vadd.f32 %v849, %v1169
      %v1171 = vpop.f32.mrb[0].mxu0
      %1172 = vmatprep.mubr.f32.mxu0 0.0
      %1173 = vmatmul.mubr.f32.gmra.mrb[0].mxu0 %v963
      %v1174 = vpop.f32.mrb[0].mxu0
      %v1175 = vadd.f32 %v854, %v1174
      %v1176 = vpop.f32.mrb[0].mxu0
      %1177 = vmatprep.mubr.f32.mxu0 0.0
      %1178 = vmatmul.mubr.f32.gmra.mrb[0].mxu0 %v966
      %v1179 = vpop.f32.mrb[0].mxu0
      %v1180 = vadd.f32 %v859, %v1179
      %v1181 = vpop.f32.mrb[0].mxu0
      %1182 = vmatprep.mubr.f32.mxu0 0.0
      %1183 = vmatmul.mubr.f32.gmra.mrb[0].mxu0 %v969
      %v1184 = vpop.f32.mrb[0].mxu0
      %v1185 = vadd.f32 %v864, %v1184
      %v1186 = vpop.f32.mrb[0].mxu0
      %1187 = vmatprep.mubr.f32.mxu0 0.0
      %1188 = vmatmul.mubr.f32.gmra.mrb[0].mxu0 %v972
      %v1189 = vpop.f32.mrb[0].mxu0
      %v1190 = vadd.f32 %v869, %v1189
      %v1191 = vpop.f32.mrb[0].mxu0
      %1192 = vmatprep.mubr.f32.mxu0 0.0
      %1193 = vmatmul.mubr.f32.gmra.mrb[0].mxu0 %v975
      %v1194 = vpop.f32.mrb[0].mxu0
      %v1195 = vadd.f32 %v874, %v1194
      %v1196 = vpop.f32.mrb[0].mxu0
      %1197 = vmatprep.mubr.f32.mxu0 0.0
      %1198 = vmatmul.mubr.f32.gmra.mrb[0].mxu0 %v978
      %v1199 = vpop.f32.mrb[0].mxu0
      %v1200 = vadd.f32 %v879, %v1199
      %v1201 = vpop.f32.mrb[0].mxu0
      %1202 = vmatprep.mubr.f32.mxu0 0.0
      %1203 = vmatmul.mubr.f32.gmra.mrb[0].mxu0 %v981
      %v1204 = vpop.f32.mrb[0].mxu0
      %v1205 = vadd.f32 %v884, %v1204
      %v1206 = vpop.f32.mrb[0].mxu0
      %1207 = vdwg.mxu0
      %v1208 = vld [vmem:[#allocation2 + $0x2] sm:$0xff]
      %v1209 = vld [vmem:[#allocation2 + $0xa] sm:$0xff]
      %v1210 = vld [vmem:[#allocation2 + $0x1a] sm:$0xff]
      %v1211 = vld [vmem:[#allocation2 + $0x22] sm:$0xff]
      %v1212 = vld [vmem:[#allocation2 + $0x32] sm:$0xff]
      %v1213 = vld [vmem:[#allocation2 + $0x3a] sm:$0xff]
      %v1214 = vld [vmem:[#allocation2 + $0x4a] sm:$0xff]
      %v1215 = vld [vmem:[#allocation2 + $0x52] sm:$0xff]
      %v1216 = vld [vmem:[#allocation2 + $0x62] sm:$0xff]
      %v1217 = vld [vmem:[#allocation2 + $0x6a] sm:$0xff]
      %v1218 = vld [vmem:[#allocation2 + $0x7a] sm:$0xff]
      %v1219 = vld [vmem:[#allocation2 + $0x82] sm:$0xff]
      %v1220 = vld [vmem:[#allocation2 + $0x92] sm:$0xff]
      %v1221 = vld [vmem:[#allocation2 + $0x9a] sm:$0xff]
      %v1222 = vld [vmem:[#allocation2 + $0xaa] sm:$0xff]
      %v1223 = vld [vmem:[#allocation2 + $0xb2] sm:$0xff]
      %v1224 = vld [vmem:[#allocation2 + $0xc2] sm:$0xff]
      %v1225 = vld [vmem:[#allocation2 + $0xca] sm:$0xff]
      %v1226 = vld [vmem:[#allocation2 + $0xda] sm:$0xff]
      %v1227 = vld [vmem:[#allocation2 + $0xe2] sm:$0xff]
      %v1228 = vld [vmem:[#allocation2 + $0xf2] sm:$0xff]
      %v1229 = vld [vmem:[#allocation2 + $0xfa] sm:$0xff]
      %v1230 = vld [vmem:[#allocation2 + $0x10a] sm:$0xff]
      %v1231 = vld [vmem:[#allocation2 + $0x112] sm:$0xff]
      %v1232 = vld [vmem:[#allocation2 + $0x122] sm:$0xff]
      %v1233 = vld [vmem:[#allocation2 + $0x12a] sm:$0xff]
      %v1234 = vld [vmem:[#allocation2 + $0x13a] sm:$0xff]
      %v1235 = vld [vmem:[#allocation2 + $0x142] sm:$0xff]
      %v1236 = vld [vmem:[#allocation2 + $0x152] sm:$0xff]
      %v1237 = vld [vmem:[#allocation2 + $0x15a] sm:$0xff]
      %v1238 = vld [vmem:[#allocation2 + $0x16a] sm:$0xff]
      %v1239 = vld [vmem:[#allocation2 + $0x172] sm:$0xff]
      %s1240 = scalar_lea.vmem %s3, 128
      %v1241 = vld [vmem:[%s1240] sm:$0xff]
      %v1242 = vld [vmem:[%s1240 + $0x8] sm:$0xff]
      %v1243 = vld [vmem:[%s1240 + $0x10] sm:$0xff]
      %v1244 = vld [vmem:[%s1240 + $0x18] sm:$0xff]
      %v1245 = vld [vmem:[%s1240 + $0x20] sm:$0xff]
      %v1246 = vld [vmem:[%s1240 + $0x28] sm:$0xff]
      %v1247 = vld [vmem:[%s1240 + $0x30] sm:$0xff]
      %v1248 = vld [vmem:[%s1240 + $0x38] sm:$0xff]
      %v1250 = vsel %vm410, %v1208, 0
      %v1253 = vsel %vm410, %v1209, 0
      %v1256 = vsel %vm410, %v1210, 0
      %v1259 = vsel %vm410, %v1211, 0
      %v1262 = vsel %vm410, %v1212, 0
      %v1265 = vsel %vm410, %v1213, 0
      %v1268 = vsel %vm410, %v1214, 0
      %v1271 = vsel %vm410, %v1215, 0
      %v1274 = vsel %vm410, %v1216, 0
      %v1277 = vsel %vm410, %v1217, 0
      %v1280 = vsel %vm410, %v1218, 0
      %v1283 = vsel %vm410, %v1219, 0
      %v1286 = vsel %vm410, %v1220, 0
      %v1289 = vsel %vm410, %v1221, 0
      %v1292 = vsel %vm410, %v1222, 0
      %v1295 = vsel %vm410, %v1223, 0
      %v1298 = vsel %vm410, %v1224, 0
      %v1301 = vsel %vm410, %v1225, 0
      %v1304 = vsel %vm410, %v1226, 0
      %v1307 = vsel %vm410, %v1227, 0
      %v1310 = vsel %vm410, %v1228, 0
      %v1313 = vsel %vm410, %v1229, 0
      %v1316 = vsel %vm410, %v1230, 0
      %v1319 = vsel %vm410, %v1231, 0
      %v1322 = vsel %vm410, %v1232, 0
      %v1325 = vsel %vm410, %v1233, 0
      %v1328 = vsel %vm410, %v1234, 0
      %v1331 = vsel %vm410, %v1235, 0
      %v1334 = vsel %vm410, %v1236, 0
      %v1337 = vsel %vm410, %v1237, 0
      %v1340 = vsel %vm410, %v1238, 0
      %v1343 = vsel %vm410, %v1239, 0
      %1345 = vmatprep.subr.mxu0 0.0
      %1346 = vmatpush1.msra.mxu0 %v1241
      %1347 = vmatprep.subr.mxu0 0.0
      %1348 = vmatpush1.msra.mxu0 %v1242
      %1349 = vmatprep.subr.mxu0 0.0
      %1350 = vmatpush1.msra.mxu0 %v1243
      %1351 = vmatprep.subr.mxu0 0.0
      %1352 = vmatpush1.msra.mxu0 %v1244
      %1353 = vmatprep.subr.mxu0 0.0
      %1354 = vmatpush1.msra.mxu0 %v1245
      %1355 = vmatprep.subr.mxu0 0.0
      %1356 = vmatpush1.msra.mxu0 %v1246
      %1357 = vmatprep.subr.mxu0 0.0
      %1358 = vmatpush1.msra.mxu0 %v1247
      %1359 = vmatprep.subr.mxu0 0.0
      %1360 = vmatpush1.msra.mxu0 %v1248
      %1361 = vmatprep.subr.mxu0 0.0
      %1362 = vmatpush1.msra.mxu0 0.0
      %1363 = vmatprep.subr.mxu0 0.0
      %1364 = vmatpush1.msra.mxu0 0.0
      %1365 = vmatprep.subr.mxu0 0.0
      %1366 = vmatpush1.msra.mxu0 0.0
      %1367 = vmatprep.subr.mxu0 0.0
      %1368 = vmatpush1.msra.mxu0 0.0
      %1369 = vmatprep.subr.mxu0 0.0
      %1370 = vmatpush1.msra.mxu0 0.0
      %1371 = vmatprep.subr.mxu0 0.0
      %1372 = vmatpush1.msra.mxu0 0.0
      %1373 = vmatprep.subr.mxu0 0.0
      %1374 = vmatpush1.msra.mxu0 0.0
      %1375 = vmatprep.subr.mxu0 0.0
      %1376 = vmatpush1.msra.mxu0 0.0
      %1377 = vmatprep.subr.mxu0 0.0
      %1378 = vmatpush1.msra.mxu0 0.0
      %1379 = vmatprep.subr.mxu0 0.0
      %1380 = vmatpush1.msra.mxu0 0.0
      %1381 = vmatprep.subr.mxu0 0.0
      %1382 = vmatpush1.msra.mxu0 0.0
      %1383 = vmatprep.subr.mxu0 0.0
      %1384 = vmatpush1.msra.mxu0 0.0
      %1385 = vmatprep.subr.mxu0 0.0
      %1386 = vmatpush1.msra.mxu0 0.0
      %1387 = vmatprep.subr.mxu0 0.0
      %1388 = vmatpush1.msra.mxu0 0.0
      %1389 = vmatprep.subr.mxu0 0.0
      %1390 = vmatpush1.msra.mxu0 0.0
      %1391 = vmatprep.subr.mxu0 0.0
      %1392 = vmatpush1.msra.mxu0 0.0
      %1393 = vmatprep.subr.mxu0 0.0
      %1394 = vmatpush1.msra.mxu0 0.0
      %1395 = vmatprep.subr.mxu0 0.0
      %1396 = vmatpush1.msra.mxu0 0.0
      %1397 = vmatprep.subr.mxu0 0.0
      %1398 = vmatpush1.msra.mxu0 0.0
      %1399 = vmatprep.subr.mxu0 0.0
      %1400 = vmatpush1.msra.mxu0 0.0
      %1401 = vmatprep.subr.mxu0 0.0
      %1402 = vmatpush1.msra.mxu0 0.0
      %1403 = vmatprep.subr.mxu0 0.0
      %1404 = vmatpush1.msra.mxu0 0.0
      %1405 = vmatprep.subr.mxu0 0.0
      %1406 = vmatpush1.msra.mxu0 0.0
      %1407 = vmatprep.subr.mxu0 0.0
      %1408 = vmatpush1.msra.mxu0 0.0
      %1409 = vmatprep.mubr.f32.mxu0 0.0
      %1410 = vmatmul.mubr.f32.gmra.mrb[0].mxu0 %v1250
      %v1411 = vpop.f32.mrb[0].mxu0
      %v1412 = vadd.f32 0.0, %v1411
      %v1413 = vpop.f32.mrb[0].mxu0
      %1414 = vmatprep.mubr.f32.mxu0 0.0
      %1415 = vmatmul.mubr.f32.gmra.mrb[0].mxu0 %v1253
      %v1416 = vpop.f32.mrb[0].mxu0
      %v1417 = vadd.f32 0.0, %v1416
      %v1418 = vpop.f32.mrb[0].mxu0
      %1419 = vmatprep.mubr.f32.mxu0 0.0
      %1420 = vmatmul.mubr.f32.gmra.mrb[0].mxu0 %v1256
      %v1421 = vpop.f32.mrb[0].mxu0
      %v1422 = vadd.f32 0.0, %v1421
      %v1423 = vpop.f32.mrb[0].mxu0
      %1424 = vmatprep.mubr.f32.mxu0 0.0
      %1425 = vmatmul.mubr.f32.gmra.mrb[0].mxu0 %v1259
      %v1426 = vpop.f32.mrb[0].mxu0
      %v1427 = vadd.f32 0.0, %v1426
      %v1428 = vpop.f32.mrb[0].mxu0
      %1429 = vmatprep.mubr.f32.mxu0 0.0
      %1430 = vmatmul.mubr.f32.gmra.mrb[0].mxu0 %v1262
      %v1431 = vpop.f32.mrb[0].mxu0
      %v1432 = vadd.f32 0.0, %v1431
      %v1433 = vpop.f32.mrb[0].mxu0
      %1434 = vmatprep.mubr.f32.mxu0 0.0
      %1435 = vmatmul.mubr.f32.gmra.mrb[0].mxu0 %v1265
      %v1436 = vpop.f32.mrb[0].mxu0
      %v1437 = vadd.f32 0.0, %v1436
      %v1438 = vpop.f32.mrb[0].mxu0
      %1439 = vmatprep.mubr.f32.mxu0 0.0
      %1440 = vmatmul.mubr.f32.gmra.mrb[0].mxu0 %v1268
      %v1441 = vpop.f32.mrb[0].mxu0
      %v1442 = vadd.f32 0.0, %v1441
      %v1443 = vpop.f32.mrb[0].mxu0
      %1444 = vmatprep.mubr.f32.mxu0 0.0
      %1445 = vmatmul.mubr.f32.gmra.mrb[0].mxu0 %v1271
      %v1446 = vpop.f32.mrb[0].mxu0
      %v1447 = vadd.f32 0.0, %v1446
      %v1448 = vpop.f32.mrb[0].mxu0
      %1449 = vmatprep.mubr.f32.mxu0 0.0
      %1450 = vmatmul.mubr.f32.gmra.mrb[0].mxu0 %v1274
      %v1451 = vpop.f32.mrb[0].mxu0
      %v1452 = vadd.f32 0.0, %v1451
      %v1453 = vpop.f32.mrb[0].mxu0
      %1454 = vmatprep.mubr.f32.mxu0 0.0
      %1455 = vmatmul.mubr.f32.gmra.mrb[0].mxu0 %v1277
      %v1456 = vpop.f32.mrb[0].mxu0
      %v1457 = vadd.f32 0.0, %v1456
      %v1458 = vpop.f32.mrb[0].mxu0
      %1459 = vmatprep.mubr.f32.mxu0 0.0
      %1460 = vmatmul.mubr.f32.gmra.mrb[0].mxu0 %v1280
      %v1461 = vpop.f32.mrb[0].mxu0
      %v1462 = vadd.f32 0.0, %v1461
      %v1463 = vpop.f32.mrb[0].mxu0
      %1464 = vmatprep.mubr.f32.mxu0 0.0
      %1465 = vmatmul.mubr.f32.gmra.mrb[0].mxu0 %v1283
      %v1466 = vpop.f32.mrb[0].mxu0
      %v1467 = vadd.f32 0.0, %v1466
      %v1468 = vpop.f32.mrb[0].mxu0
      %1469 = vmatprep.mubr.f32.mxu0 0.0
      %1470 = vmatmul.mubr.f32.gmra.mrb[0].mxu0 %v1286
      %v1471 = vpop.f32.mrb[0].mxu0
      %v1472 = vadd.f32 0.0, %v1471
      %v1473 = vpop.f32.mrb[0].mxu0
      %1474 = vmatprep.mubr.f32.mxu0 0.0
      %1475 = vmatmul.mubr.f32.gmra.mrb[0].mxu0 %v1289
      %v1476 = vpop.f32.mrb[0].mxu0
      %v1477 = vadd.f32 0.0, %v1476
      %v1478 = vpop.f32.mrb[0].mxu0
      %1479 = vmatprep.mubr.f32.mxu0 0.0
      %1480 = vmatmul.mubr.f32.gmra.mrb[0].mxu0 %v1292
      %v1481 = vpop.f32.mrb[0].mxu0
      %v1482 = vadd.f32 0.0, %v1481
      %v1483 = vpop.f32.mrb[0].mxu0
      %1484 = vmatprep.mubr.f32.mxu0 0.0
      %1485 = vmatmul.mubr.f32.gmra.mrb[0].mxu0 %v1295
      %v1486 = vpop.f32.mrb[0].mxu0
      %v1487 = vadd.f32 0.0, %v1486
      %v1488 = vpop.f32.mrb[0].mxu0
      %1489 = vmatprep.mubr.f32.mxu0 0.0
      %1490 = vmatmul.mubr.f32.gmra.mrb[0].mxu0 %v1298
      %v1491 = vpop.f32.mrb[0].mxu0
      %v1492 = vadd.f32 0.0, %v1491
      %v1493 = vpop.f32.mrb[0].mxu0
      %1494 = vmatprep.mubr.f32.mxu0 0.0
      %1495 = vmatmul.mubr.f32.gmra.mrb[0].mxu0 %v1301
      %v1496 = vpop.f32.mrb[0].mxu0
      %v1497 = vadd.f32 0.0, %v1496
      %v1498 = vpop.f32.mrb[0].mxu0
      %1499 = vmatprep.mubr.f32.mxu0 0.0
      %1500 = vmatmul.mubr.f32.gmra.mrb[0].mxu0 %v1304
      %v1501 = vpop.f32.mrb[0].mxu0
      %v1502 = vadd.f32 0.0, %v1501
      %v1503 = vpop.f32.mrb[0].mxu0
      %1504 = vmatprep.mubr.f32.mxu0 0.0
      %1505 = vmatmul.mubr.f32.gmra.mrb[0].mxu0 %v1307
      %v1506 = vpop.f32.mrb[0].mxu0
      %v1507 = vadd.f32 0.0, %v1506
      %v1508 = vpop.f32.mrb[0].mxu0
      %1509 = vmatprep.mubr.f32.mxu0 0.0
      %1510 = vmatmul.mubr.f32.gmra.mrb[0].mxu0 %v1310
      %v1511 = vpop.f32.mrb[0].mxu0
      %v1512 = vadd.f32 0.0, %v1511
      %v1513 = vpop.f32.mrb[0].mxu0
      %1514 = vmatprep.mubr.f32.mxu0 0.0
      %1515 = vmatmul.mubr.f32.gmra.mrb[0].mxu0 %v1313
      %v1516 = vpop.f32.mrb[0].mxu0
      %v1517 = vadd.f32 0.0, %v1516
      %v1518 = vpop.f32.mrb[0].mxu0
      %1519 = vmatprep.mubr.f32.mxu0 0.0
      %1520 = vmatmul.mubr.f32.gmra.mrb[0].mxu0 %v1316
      %v1521 = vpop.f32.mrb[0].mxu0
      %v1522 = vadd.f32 0.0, %v1521
      %v1523 = vpop.f32.mrb[0].mxu0
      %1524 = vmatprep.mubr.f32.mxu0 0.0
      %1525 = vmatmul.mubr.f32.gmra.mrb[0].mxu0 %v1319
      %v1526 = vpop.f32.mrb[0].mxu0
      %v1527 = vadd.f32 0.0, %v1526
      %v1528 = vpop.f32.mrb[0].mxu0
      %1529 = vmatprep.mubr.f32.mxu0 0.0
      %1530 = vmatmul.mubr.f32.gmra.mrb[0].mxu0 %v1322
      %v1531 = vpop.f32.mrb[0].mxu0
      %v1532 = vadd.f32 0.0, %v1531
      %v1533 = vpop.f32.mrb[0].mxu0
      %1534 = vmatprep.mubr.f32.mxu0 0.0
      %1535 = vmatmul.mubr.f32.gmra.mrb[0].mxu0 %v1325
      %v1536 = vpop.f32.mrb[0].mxu0
      %v1537 = vadd.f32 0.0, %v1536
      %v1538 = vpop.f32.mrb[0].mxu0
      %1539 = vmatprep.mubr.f32.mxu0 0.0
      %1540 = vmatmul.mubr.f32.gmra.mrb[0].mxu0 %v1328
      %v1541 = vpop.f32.mrb[0].mxu0
      %v1542 = vadd.f32 0.0, %v1541
      %v1543 = vpop.f32.mrb[0].mxu0
      %1544 = vmatprep.mubr.f32.mxu0 0.0
      %1545 = vmatmul.mubr.f32.gmra.mrb[0].mxu0 %v1331
      %v1546 = vpop.f32.mrb[0].mxu0
      %v1547 = vadd.f32 0.0, %v1546
      %v1548 = vpop.f32.mrb[0].mxu0
      %1549 = vmatprep.mubr.f32.mxu0 0.0
      %1550 = vmatmul.mubr.f32.gmra.mrb[0].mxu0 %v1334
      %v1551 = vpop.f32.mrb[0].mxu0
      %v1552 = vadd.f32 0.0, %v1551
      %v1553 = vpop.f32.mrb[0].mxu0
      %1554 = vmatprep.mubr.f32.mxu0 0.0
      %1555 = vmatmul.mubr.f32.gmra.mrb[0].mxu0 %v1337
      %v1556 = vpop.f32.mrb[0].mxu0
      %v1557 = vadd.f32 0.0, %v1556
      %v1558 = vpop.f32.mrb[0].mxu0
      %1559 = vmatprep.mubr.f32.mxu0 0.0
      %1560 = vmatmul.mubr.f32.gmra.mrb[0].mxu0 %v1340
      %v1561 = vpop.f32.mrb[0].mxu0
      %v1562 = vadd.f32 0.0, %v1561
      %v1563 = vpop.f32.mrb[0].mxu0
      %1564 = vmatprep.mubr.f32.mxu0 0.0
      %1565 = vmatmul.mubr.f32.gmra.mrb[0].mxu0 %v1343
      %v1566 = vpop.f32.mrb[0].mxu0
      %v1567 = vadd.f32 0.0, %v1566
      %v1568 = vpop.f32.mrb[0].mxu0
      %1569 = vdwg.mxu0
      %v1570 = vadd.f32 %v1050, %v1412
      %v1571 = vadd.f32 %v1055, %v1417
      %v1572 = vadd.f32 %v1060, %v1422
      %v1573 = vadd.f32 %v1065, %v1427
      %v1574 = vadd.f32 %v1070, %v1432
      %v1575 = vadd.f32 %v1075, %v1437
      %v1576 = vadd.f32 %v1080, %v1442
      %v1577 = vadd.f32 %v1085, %v1447
      %v1578 = vadd.f32 %v1090, %v1452
      %v1579 = vadd.f32 %v1095, %v1457
      %v1580 = vadd.f32 %v1100, %v1462
      %v1581 = vadd.f32 %v1105, %v1467
      %v1582 = vadd.f32 %v1110, %v1472
      %v1583 = vadd.f32 %v1115, %v1477
      %v1584 = vadd.f32 %v1120, %v1482
      %v1585 = vadd.f32 %v1125, %v1487
      %v1586 = vadd.f32 %v1130, %v1492
      %v1587 = vadd.f32 %v1135, %v1497
      %v1588 = vadd.f32 %v1140, %v1502
      %v1589 = vadd.f32 %v1145, %v1507
      %v1590 = vadd.f32 %v1150, %v1512
      %v1591 = vadd.f32 %v1155, %v1517
      %v1592 = vadd.f32 %v1160, %v1522
      %v1593 = vadd.f32 %v1165, %v1527
      %v1594 = vadd.f32 %v1170, %v1532
      %v1595 = vadd.f32 %v1175, %v1537
      %v1596 = vadd.f32 %v1180, %v1542
      %v1597 = vadd.f32 %v1185, %v1547
      %v1598 = vadd.f32 %v1190, %v1552
      %v1599 = vadd.f32 %v1195, %v1557
      %v1600 = vadd.f32 %v1200, %v1562
      %v1601 = vadd.f32 %v1205, %v1567
      %v1602 = vld [vmem:[%s419] sm:$0xff]
      %v1603 = vld [vmem:[%s419 + $0x8] sm:$0xff]
      %v1604 = vld [vmem:[%s419 + $0x18] sm:$0xff]
      %v1605 = vld [vmem:[%s419 + $0x20] sm:$0xff]
      %v1606 = vld [vmem:[%s419 + $0x30] sm:$0xff]
      %v1607 = vld [vmem:[%s419 + $0x38] sm:$0xff]
      %v1608 = vld [vmem:[%s419 + $0x48] sm:$0xff]
      %v1609 = vld [vmem:[%s419 + $0x50] sm:$0xff]
      %v1610 = vld [vmem:[%s419 + $0x60] sm:$0xff]
      %v1611 = vld [vmem:[%s419 + $0x68] sm:$0xff]
      %v1612 = vld [vmem:[%s419 + $0x78] sm:$0xff]
      %v1613 = vld [vmem:[%s419 + $0x80] sm:$0xff]
      %v1614 = vld [vmem:[%s419 + $0x90] sm:$0xff]
      %v1615 = vld [vmem:[%s419 + $0x98] sm:$0xff]
      %v1616 = vld [vmem:[%s419 + $0xa8] sm:$0xff]
      %v1617 = vld [vmem:[%s419 + $0xb0] sm:$0xff]
      %v1618 = vld [vmem:[%s419 + $0xc0] sm:$0xff]
      %v1619 = vld [vmem:[%s419 + $0xc8] sm:$0xff]
      %v1620 = vld [vmem:[%s419 + $0xd8] sm:$0xff]
      %v1621 = vld [vmem:[%s419 + $0xe0] sm:$0xff]
      %v1622 = vld [vmem:[%s419 + $0xf0] sm:$0xff]
      %v1623 = vld [vmem:[%s419 + $0xf8] sm:$0xff]
      %v1624 = vld [vmem:[%s419 + $0x108] sm:$0xff]
      %v1625 = vld [vmem:[%s419 + $0x110] sm:$0xff]
      %v1626 = vld [vmem:[%s419 + $0x120] sm:$0xff]
      %v1627 = vld [vmem:[%s419 + $0x128] sm:$0xff]
      %v1628 = vld [vmem:[%s419 + $0x138] sm:$0xff]
      %v1629 = vld [vmem:[%s419 + $0x140] sm:$0xff]
      %v1630 = vld [vmem:[%s419 + $0x150] sm:$0xff]
      %v1631 = vld [vmem:[%s419 + $0x158] sm:$0xff]
      %v1632 = vld [vmem:[%s419 + $0x168] sm:$0xff]
      %v1633 = vld [vmem:[%s419 + $0x170] sm:$0xff]
      %s1634 = scalar_lea.vmem %s3, 192
      %v1635 = vld [vmem:[%s1634] sm:$0xff]
      %v1636 = vld [vmem:[%s1634 + $0x8] sm:$0xff]
      %v1637 = vld [vmem:[%s1634 + $0x10] sm:$0xff]
      %v1638 = vld [vmem:[%s1634 + $0x18] sm:$0xff]
      %v1639 = vld [vmem:[%s1634 + $0x20] sm:$0xff]
      %v1640 = vld [vmem:[%s1634 + $0x28] sm:$0xff]
      %v1641 = vld [vmem:[%s1634 + $0x30] sm:$0xff]
      %v1642 = vld [vmem:[%s1634 + $0x38] sm:$0xff]
      %v1644 = vsel %vm410, %v1602, 0
      %v1647 = vsel %vm410, %v1603, 0
      %v1650 = vsel %vm410, %v1604, 0
      %v1653 = vsel %vm410, %v1605, 0
      %v1656 = vsel %vm410, %v1606, 0
      %v1659 = vsel %vm410, %v1607, 0
      %v1662 = vsel %vm410, %v1608, 0
      %v1665 = vsel %vm410, %v1609, 0
      %v1668 = vsel %vm410, %v1610, 0
      %v1671 = vsel %vm410, %v1611, 0
      %v1674 = vsel %vm410, %v1612, 0
      %v1677 = vsel %vm410, %v1613, 0
      %v1680 = vsel %vm410, %v1614, 0
      %v1683 = vsel %vm410, %v1615, 0
      %v1686 = vsel %vm410, %v1616, 0
      %v1689 = vsel %vm410, %v1617, 0
      %v1692 = vsel %vm410, %v1618, 0
      %v1695 = vsel %vm410, %v1619, 0
      %v1698 = vsel %vm410, %v1620, 0
      %v1701 = vsel %vm410, %v1621, 0
      %v1704 = vsel %vm410, %v1622, 0
      %v1707 = vsel %vm410, %v1623, 0
      %v1710 = vsel %vm410, %v1624, 0
      %v1713 = vsel %vm410, %v1625, 0
      %v1716 = vsel %vm410, %v1626, 0
      %v1719 = vsel %vm410, %v1627, 0
      %v1722 = vsel %vm410, %v1628, 0
      %v1725 = vsel %vm410, %v1629, 0
      %v1728 = vsel %vm410, %v1630, 0
      %v1731 = vsel %vm410, %v1631, 0
      %v1734 = vsel %vm410, %v1632, 0
      %v1737 = vsel %vm410, %v1633, 0
      %1739 = vmatprep.subr.mxu0 0.0
      %1740 = vmatpush1.msra.mxu0 %v1635
      %1741 = vmatprep.subr.mxu0 0.0
      %1742 = vmatpush1.msra.mxu0 %v1636
      %1743 = vmatprep.subr.mxu0 0.0
      %1744 = vmatpush1.msra.mxu0 %v1637
      %1745 = vmatprep.subr.mxu0 0.0
      %1746 = vmatpush1.msra.mxu0 %v1638
      %1747 = vmatprep.subr.mxu0 0.0
      %1748 = vmatpush1.msra.mxu0 %v1639
      %1749 = vmatprep.subr.mxu0 0.0
      %1750 = vmatpush1.msra.mxu0 %v1640
      %1751 = vmatprep.subr.mxu0 0.0
      %1752 = vmatpush1.msra.mxu0 %v1641
      %1753 = vmatprep.subr.mxu0 0.0
      %1754 = vmatpush1.msra.mxu0 %v1642
      %1755 = vmatprep.subr.mxu0 0.0
      %1756 = vmatpush1.msra.mxu0 0.0
      %1757 = vmatprep.subr.mxu0 0.0
      %1758 = vmatpush1.msra.mxu0 0.0
      %1759 = vmatprep.subr.mxu0 0.0
      %1760 = vmatpush1.msra.mxu0 0.0
      %1761 = vmatprep.subr.mxu0 0.0
      %1762 = vmatpush1.msra.mxu0 0.0
      %1763 = vmatprep.subr.mxu0 0.0
      %1764 = vmatpush1.msra.mxu0 0.0
      %1765 = vmatprep.subr.mxu0 0.0
      %1766 = vmatpush1.msra.mxu0 0.0
      %1767 = vmatprep.subr.mxu0 0.0
      %1768 = vmatpush1.msra.mxu0 0.0
      %1769 = vmatprep.subr.mxu0 0.0
      %1770 = vmatpush1.msra.mxu0 0.0
      %1771 = vmatprep.subr.mxu0 0.0
      %1772 = vmatpush1.msra.mxu0 0.0
      %1773 = vmatprep.subr.mxu0 0.0
      %1774 = vmatpush1.msra.mxu0 0.0
      %1775 = vmatprep.subr.mxu0 0.0
      %1776 = vmatpush1.msra.mxu0 0.0
      %1777 = vmatprep.subr.mxu0 0.0
      %1778 = vmatpush1.msra.mxu0 0.0
      %1779 = vmatprep.subr.mxu0 0.0
      %1780 = vmatpush1.msra.mxu0 0.0
      %1781 = vmatprep.subr.mxu0 0.0
      %1782 = vmatpush1.msra.mxu0 0.0
      %1783 = vmatprep.subr.mxu0 0.0
      %1784 = vmatpush1.msra.mxu0 0.0
      %1785 = vmatprep.subr.mxu0 0.0
      %1786 = vmatpush1.msra.mxu0 0.0
      %1787 = vmatprep.subr.mxu0 0.0
      %1788 = vmatpush1.msra.mxu0 0.0
      %1789 = vmatprep.subr.mxu0 0.0
      %1790 = vmatpush1.msra.mxu0 0.0
      %1791 = vmatprep.subr.mxu0 0.0
      %1792 = vmatpush1.msra.mxu0 0.0
      %1793 = vmatprep.subr.mxu0 0.0
      %1794 = vmatpush1.msra.mxu0 0.0
      %1795 = vmatprep.subr.mxu0 0.0
      %1796 = vmatpush1.msra.mxu0 0.0
      %1797 = vmatprep.subr.mxu0 0.0
      %1798 = vmatpush1.msra.mxu0 0.0
      %1799 = vmatprep.subr.mxu0 0.0
      %1800 = vmatpush1.msra.mxu0 0.0
      %1801 = vmatprep.subr.mxu0 0.0
      %1802 = vmatpush1.msra.mxu0 0.0
      %1803 = vmatprep.mubr.f32.mxu0 0.0
      %1804 = vmatmul.mubr.f32.gmra.mrb[0].mxu0 %v1644
      %v1805 = vpop.f32.mrb[0].mxu0
      %v1806 = vadd.f32 0.0, %v1805
      %v1807 = vpop.f32.mrb[0].mxu0
      %1808 = vmatprep.mubr.f32.mxu0 0.0
      %1809 = vmatmul.mubr.f32.gmra.mrb[0].mxu0 %v1647
      %v1810 = vpop.f32.mrb[0].mxu0
      %v1811 = vadd.f32 0.0, %v1810
      %v1812 = vpop.f32.mrb[0].mxu0
      %1813 = vmatprep.mubr.f32.mxu0 0.0
      %1814 = vmatmul.mubr.f32.gmra.mrb[0].mxu0 %v1650
      %v1815 = vpop.f32.mrb[0].mxu0
      %v1816 = vadd.f32 0.0, %v1815
      %v1817 = vpop.f32.mrb[0].mxu0
      %1818 = vmatprep.mubr.f32.mxu0 0.0
      %1819 = vmatmul.mubr.f32.gmra.mrb[0].mxu0 %v1653
      %v1820 = vpop.f32.mrb[0].mxu0
      %v1821 = vadd.f32 0.0, %v1820
      %v1822 = vpop.f32.mrb[0].mxu0
      %1823 = vmatprep.mubr.f32.mxu0 0.0
      %1824 = vmatmul.mubr.f32.gmra.mrb[0].mxu0 %v1656
      %v1825 = vpop.f32.mrb[0].mxu0
      %v1826 = vadd.f32 0.0, %v1825
      %v1827 = vpop.f32.mrb[0].mxu0
      %1828 = vmatprep.mubr.f32.mxu0 0.0
      %1829 = vmatmul.mubr.f32.gmra.mrb[0].mxu0 %v1659
      %v1830 = vpop.f32.mrb[0].mxu0
      %v1831 = vadd.f32 0.0, %v1830
      %v1832 = vpop.f32.mrb[0].mxu0
      %1833 = vmatprep.mubr.f32.mxu0 0.0
      %1834 = vmatmul.mubr.f32.gmra.mrb[0].mxu0 %v1662
      %v1835 = vpop.f32.mrb[0].mxu0
      %v1836 = vadd.f32 0.0, %v1835
      %v1837 = vpop.f32.mrb[0].mxu0
      %1838 = vmatprep.mubr.f32.mxu0 0.0
      %1839 = vmatmul.mubr.f32.gmra.mrb[0].mxu0 %v1665
      %v1840 = vpop.f32.mrb[0].mxu0
      %v1841 = vadd.f32 0.0, %v1840
      %v1842 = vpop.f32.mrb[0].mxu0
      %1843 = vmatprep.mubr.f32.mxu0 0.0
      %1844 = vmatmul.mubr.f32.gmra.mrb[0].mxu0 %v1668
      %v1845 = vpop.f32.mrb[0].mxu0
      %v1846 = vadd.f32 0.0, %v1845
      %v1847 = vpop.f32.mrb[0].mxu0
      %1848 = vmatprep.mubr.f32.mxu0 0.0
      %1849 = vmatmul.mubr.f32.gmra.mrb[0].mxu0 %v1671
      %v1850 = vpop.f32.mrb[0].mxu0
      %v1851 = vadd.f32 0.0, %v1850
      %v1852 = vpop.f32.mrb[0].mxu0
      %1853 = vmatprep.mubr.f32.mxu0 0.0
      %1854 = vmatmul.mubr.f32.gmra.mrb[0].mxu0 %v1674
      %v1855 = vpop.f32.mrb[0].mxu0
      %v1856 = vadd.f32 0.0, %v1855
      %v1857 = vpop.f32.mrb[0].mxu0
      %1858 = vmatprep.mubr.f32.mxu0 0.0
      %1859 = vmatmul.mubr.f32.gmra.mrb[0].mxu0 %v1677
      %v1860 = vpop.f32.mrb[0].mxu0
      %v1861 = vadd.f32 0.0, %v1860
      %v1862 = vpop.f32.mrb[0].mxu0
      %1863 = vmatprep.mubr.f32.mxu0 0.0
      %1864 = vmatmul.mubr.f32.gmra.mrb[0].mxu0 %v1680
      %v1865 = vpop.f32.mrb[0].mxu0
      %v1866 = vadd.f32 0.0, %v1865
      %v1867 = vpop.f32.mrb[0].mxu0
      %1868 = vmatprep.mubr.f32.mxu0 0.0
      %1869 = vmatmul.mubr.f32.gmra.mrb[0].mxu0 %v1683
      %v1870 = vpop.f32.mrb[0].mxu0
      %v1871 = vadd.f32 0.0, %v1870
      %v1872 = vpop.f32.mrb[0].mxu0
      %1873 = vmatprep.mubr.f32.mxu0 0.0
      %1874 = vmatmul.mubr.f32.gmra.mrb[0].mxu0 %v1686
      %v1875 = vpop.f32.mrb[0].mxu0
      %v1876 = vadd.f32 0.0, %v1875
      %v1877 = vpop.f32.mrb[0].mxu0
      %1878 = vmatprep.mubr.f32.mxu0 0.0
      %1879 = vmatmul.mubr.f32.gmra.mrb[0].mxu0 %v1689
      %v1880 = vpop.f32.mrb[0].mxu0
      %v1881 = vadd.f32 0.0, %v1880
      %v1882 = vpop.f32.mrb[0].mxu0
      %1883 = vmatprep.mubr.f32.mxu0 0.0
      %1884 = vmatmul.mubr.f32.gmra.mrb[0].mxu0 %v1692
      %v1885 = vpop.f32.mrb[0].mxu0
      %v1886 = vadd.f32 0.0, %v1885
      %v1887 = vpop.f32.mrb[0].mxu0
      %1888 = vmatprep.mubr.f32.mxu0 0.0
      %1889 = vmatmul.mubr.f32.gmra.mrb[0].mxu0 %v1695
      %v1890 = vpop.f32.mrb[0].mxu0
      %v1891 = vadd.f32 0.0, %v1890
      %v1892 = vpop.f32.mrb[0].mxu0
      %1893 = vmatprep.mubr.f32.mxu0 0.0
      %1894 = vmatmul.mubr.f32.gmra.mrb[0].mxu0 %v1698
      %v1895 = vpop.f32.mrb[0].mxu0
      %v1896 = vadd.f32 0.0, %v1895
      %v1897 = vpop.f32.mrb[0].mxu0
      %1898 = vmatprep.mubr.f32.mxu0 0.0
      %1899 = vmatmul.mubr.f32.gmra.mrb[0].mxu0 %v1701
      %v1900 = vpop.f32.mrb[0].mxu0
      %v1901 = vadd.f32 0.0, %v1900
      %v1902 = vpop.f32.mrb[0].mxu0
      %1903 = vmatprep.mubr.f32.mxu0 0.0
      %1904 = vmatmul.mubr.f32.gmra.mrb[0].mxu0 %v1704
      %v1905 = vpop.f32.mrb[0].mxu0
      %v1906 = vadd.f32 0.0, %v1905
      %v1907 = vpop.f32.mrb[0].mxu0
      %1908 = vmatprep.mubr.f32.mxu0 0.0
      %1909 = vmatmul.mubr.f32.gmra.mrb[0].mxu0 %v1707
      %v1910 = vpop.f32.mrb[0].mxu0
      %v1911 = vadd.f32 0.0, %v1910
      %v1912 = vpop.f32.mrb[0].mxu0
      %1913 = vmatprep.mubr.f32.mxu0 0.0
      %1914 = vmatmul.mubr.f32.gmra.mrb[0].mxu0 %v1710
      %v1915 = vpop.f32.mrb[0].mxu0
      %v1916 = vadd.f32 0.0, %v1915
      %v1917 = vpop.f32.mrb[0].mxu0
      %1918 = vmatprep.mubr.f32.mxu0 0.0
      %1919 = vmatmul.mubr.f32.gmra.mrb[0].mxu0 %v1713
      %v1920 = vpop.f32.mrb[0].mxu0
      %v1921 = vadd.f32 0.0, %v1920
      %v1922 = vpop.f32.mrb[0].mxu0
      %1923 = vmatprep.mubr.f32.mxu0 0.0
      %1924 = vmatmul.mubr.f32.gmra.mrb[0].mxu0 %v1716
      %v1925 = vpop.f32.mrb[0].mxu0
      %v1926 = vadd.f32 0.0, %v1925
      %v1927 = vpop.f32.mrb[0].mxu0
      %1928 = vmatprep.mubr.f32.mxu0 0.0
      %1929 = vmatmul.mubr.f32.gmra.mrb[0].mxu0 %v1719
      %v1930 = vpop.f32.mrb[0].mxu0
      %v1931 = vadd.f32 0.0, %v1930
      %v1932 = vpop.f32.mrb[0].mxu0
      %1933 = vmatprep.mubr.f32.mxu0 0.0
      %1934 = vmatmul.mubr.f32.gmra.mrb[0].mxu0 %v1722
      %v1935 = vpop.f32.mrb[0].mxu0
      %v1936 = vadd.f32 0.0, %v1935
      %v1937 = vpop.f32.mrb[0].mxu0
      %1938 = vmatprep.mubr.f32.mxu0 0.0
      %1939 = vmatmul.mubr.f32.gmra.mrb[0].mxu0 %v1725
      %v1940 = vpop.f32.mrb[0].mxu0
      %v1941 = vadd.f32 0.0, %v1940
      %v1942 = vpop.f32.mrb[0].mxu0
      %1943 = vmatprep.mubr.f32.mxu0 0.0
      %1944 = vmatmul.mubr.f32.gmra.mrb[0].mxu0 %v1728
      %v1945 = vpop.f32.mrb[0].mxu0
      %v1946 = vadd.f32 0.0, %v1945
      %v1947 = vpop.f32.mrb[0].mxu0
      %1948 = vmatprep.mubr.f32.mxu0 0.0
      %1949 = vmatmul.mubr.f32.gmra.mrb[0].mxu0 %v1731
      %v1950 = vpop.f32.mrb[0].mxu0
      %v1951 = vadd.f32 0.0, %v1950
      %v1952 = vpop.f32.mrb[0].mxu0
      %1953 = vmatprep.mubr.f32.mxu0 0.0
      %1954 = vmatmul.mubr.f32.gmra.mrb[0].mxu0 %v1734
      %v1955 = vpop.f32.mrb[0].mxu0
      %v1956 = vadd.f32 0.0, %v1955
      %v1957 = vpop.f32.mrb[0].mxu0
      %1958 = vmatprep.mubr.f32.mxu0 0.0
      %1959 = vmatmul.mubr.f32.gmra.mrb[0].mxu0 %v1737
      %v1960 = vpop.f32.mrb[0].mxu0
      %v1961 = vadd.f32 0.0, %v1960
      %v1962 = vpop.f32.mrb[0].mxu0
      %1963 = vdwg.mxu0
      %v1964 = vadd.f32 %v1570, %v1806
      %v1965 = vadd.f32 %v1571, %v1811
      %v1966 = vadd.f32 %v1572, %v1816
      %v1967 = vadd.f32 %v1573, %v1821
      %v1968 = vadd.f32 %v1574, %v1826
      %v1969 = vadd.f32 %v1575, %v1831
      %v1970 = vadd.f32 %v1576, %v1836
      %v1971 = vadd.f32 %v1577, %v1841
      %v1972 = vadd.f32 %v1578, %v1846
      %v1973 = vadd.f32 %v1579, %v1851
      %v1974 = vadd.f32 %v1580, %v1856
      %v1975 = vadd.f32 %v1581, %v1861
      %v1976 = vadd.f32 %v1582, %v1866
      %v1977 = vadd.f32 %v1583, %v1871
      %v1978 = vadd.f32 %v1584, %v1876
      %v1979 = vadd.f32 %v1585, %v1881
      %v1980 = vadd.f32 %v1586, %v1886
      %v1981 = vadd.f32 %v1587, %v1891
      %v1982 = vadd.f32 %v1588, %v1896
      %v1983 = vadd.f32 %v1589, %v1901
      %v1984 = vadd.f32 %v1590, %v1906
      %v1985 = vadd.f32 %v1591, %v1911
      %v1986 = vadd.f32 %v1592, %v1916
      %v1987 = vadd.f32 %v1593, %v1921
      %v1988 = vadd.f32 %v1594, %v1926
      %v1989 = vadd.f32 %v1595, %v1931
      %v1990 = vadd.f32 %v1596, %v1936
      %v1991 = vadd.f32 %v1597, %v1941
      %v1992 = vadd.f32 %v1598, %v1946
      %v1993 = vadd.f32 %v1599, %v1951
      %v1994 = vadd.f32 %v1600, %v1956
      %v1995 = vadd.f32 %v1601, %v1961
      %v1996 = vld [vmem:[%s419 + $0x1] sm:$0xff]
      %v1997 = vld [vmem:[%s419 + $0x9] sm:$0xff]
      %v1998 = vld [vmem:[%s419 + $0x19] sm:$0xff]
      %v1999 = vld [vmem:[%s419 + $0x21] sm:$0xff]
      %v2000 = vld [vmem:[%s419 + $0x31] sm:$0xff]
      %v2001 = vld [vmem:[%s419 + $0x39] sm:$0xff]
      %v2002 = vld [vmem:[%s419 + $0x49] sm:$0xff]
      %v2003 = vld [vmem:[%s419 + $0x51] sm:$0xff]
      %v2004 = vld [vmem:[%s419 + $0x61] sm:$0xff]
      %v2005 = vld [vmem:[%s419 + $0x69] sm:$0xff]
      %v2006 = vld [vmem:[%s419 + $0x79] sm:$0xff]
      %v2007 = vld [vmem:[%s419 + $0x81] sm:$0xff]
      %v2008 = vld [vmem:[%s419 + $0x91] sm:$0xff]
      %v2009 = vld [vmem:[%s419 + $0x99] sm:$0xff]
      %v2010 = vld [vmem:[%s419 + $0xa9] sm:$0xff]
      %v2011 = vld [vmem:[%s419 + $0xb1] sm:$0xff]
      %v2012 = vld [vmem:[%s419 + $0xc1] sm:$0xff]
      %v2013 = vld [vmem:[%s419 + $0xc9] sm:$0xff]
      %v2014 = vld [vmem:[%s419 + $0xd9] sm:$0xff]
      %v2015 = vld [vmem:[%s419 + $0xe1] sm:$0xff]
      %v2016 = vld [vmem:[%s419 + $0xf1] sm:$0xff]
      %v2017 = vld [vmem:[%s419 + $0xf9] sm:$0xff]
      %v2018 = vld [vmem:[%s419 + $0x109] sm:$0xff]
      %v2019 = vld [vmem:[%s419 + $0x111] sm:$0xff]
      %v2020 = vld [vmem:[%s419 + $0x121] sm:$0xff]
      %v2021 = vld [vmem:[%s419 + $0x129] sm:$0xff]
      %v2022 = vld [vmem:[%s419 + $0x139] sm:$0xff]
      %v2023 = vld [vmem:[%s419 + $0x141] sm:$0xff]
      %v2024 = vld [vmem:[%s419 + $0x151] sm:$0xff]
      %v2025 = vld [vmem:[%s419 + $0x159] sm:$0xff]
      %v2026 = vld [vmem:[%s419 + $0x169] sm:$0xff]
      %v2027 = vld [vmem:[%s419 + $0x171] sm:$0xff]
      %s2028 = scalar_lea.vmem %s3, 256
      %v2029 = vld [vmem:[%s2028] sm:$0xff]
      %v2030 = vld [vmem:[%s2028 + $0x8] sm:$0xff]
      %v2031 = vld [vmem:[%s2028 + $0x10] sm:$0xff]
      %v2032 = vld [vmem:[%s2028 + $0x18] sm:$0xff]
      %v2033 = vld [vmem:[%s2028 + $0x20] sm:$0xff]
      %v2034 = vld [vmem:[%s2028 + $0x28] sm:$0xff]
      %v2035 = vld [vmem:[%s2028 + $0x30] sm:$0xff]
      %v2036 = vld [vmem:[%s2028 + $0x38] sm:$0xff]
      %v2038 = vsel %vm410, %v1996, 0
      %v2041 = vsel %vm410, %v1997, 0
      %v2044 = vsel %vm410, %v1998, 0
      %v2047 = vsel %vm410, %v1999, 0
      %v2050 = vsel %vm410, %v2000, 0
      %v2053 = vsel %vm410, %v2001, 0
      %v2056 = vsel %vm410, %v2002, 0
      %v2059 = vsel %vm410, %v2003, 0
      %v2062 = vsel %vm410, %v2004, 0
      %v2065 = vsel %vm410, %v2005, 0
      %v2068 = vsel %vm410, %v2006, 0
      %v2071 = vsel %vm410, %v2007, 0
      %v2074 = vsel %vm410, %v2008, 0
      %v2077 = vsel %vm410, %v2009, 0
      %v2080 = vsel %vm410, %v2010, 0
      %v2083 = vsel %vm410, %v2011, 0
      %v2086 = vsel %vm410, %v2012, 0
      %v2089 = vsel %vm410, %v2013, 0
      %v2092 = vsel %vm410, %v2014, 0
      %v2095 = vsel %vm410, %v2015, 0
      %v2098 = vsel %vm410, %v2016, 0
      %v2101 = vsel %vm410, %v2017, 0
      %v2104 = vsel %vm410, %v2018, 0
      %v2107 = vsel %vm410, %v2019, 0
      %v2110 = vsel %vm410, %v2020, 0
      %v2113 = vsel %vm410, %v2021, 0
      %v2116 = vsel %vm410, %v2022, 0
      %v2119 = vsel %vm410, %v2023, 0
      %v2122 = vsel %vm410, %v2024, 0
      %v2125 = vsel %vm410, %v2025, 0
      %v2128 = vsel %vm410, %v2026, 0
      %v2131 = vsel %vm410, %v2027, 0
      %2133 = vmatprep.subr.mxu0 0.0
      %2134 = vmatpush1.msra.mxu0 %v2029
      %2135 = vmatprep.subr.mxu0 0.0
      %2136 = vmatpush1.msra.mxu0 %v2030
      %2137 = vmatprep.subr.mxu0 0.0
      %2138 = vmatpush1.msra.mxu0 %v2031
      %2139 = vmatprep.subr.mxu0 0.0
      %2140 = vmatpush1.msra.mxu0 %v2032
      %2141 = vmatprep.subr.mxu0 0.0
      %2142 = vmatpush1.msra.mxu0 %v2033
      %2143 = vmatprep.subr.mxu0 0.0
      %2144 = vmatpush1.msra.mxu0 %v2034
      %2145 = vmatprep.subr.mxu0 0.0
      %2146 = vmatpush1.msra.mxu0 %v2035
      %2147 = vmatprep.subr.mxu0 0.0
      %2148 = vmatpush1.msra.mxu0 %v2036
      %2149 = vmatprep.subr.mxu0 0.0
      %2150 = vmatpush1.msra.mxu0 0.0
      %2151 = vmatprep.subr.mxu0 0.0
      %2152 = vmatpush1.msra.mxu0 0.0
      %2153 = vmatprep.subr.mxu0 0.0
      %2154 = vmatpush1.msra.mxu0 0.0
      %2155 = vmatprep.subr.mxu0 0.0
      %2156 = vmatpush1.msra.mxu0 0.0
      %2157 = vmatprep.subr.mxu0 0.0
      %2158 = vmatpush1.msra.mxu0 0.0
      %2159 = vmatprep.subr.mxu0 0.0
      %2160 = vmatpush1.msra.mxu0 0.0
      %2161 = vmatprep.subr.mxu0 0.0
      %2162 = vmatpush1.msra.mxu0 0.0
      %2163 = vmatprep.subr.mxu0 0.0
      %2164 = vmatpush1.msra.mxu0 0.0
      %2165 = vmatprep.subr.mxu0 0.0
      %2166 = vmatpush1.msra.mxu0 0.0
      %2167 = vmatprep.subr.mxu0 0.0
      %2168 = vmatpush1.msra.mxu0 0.0
      %2169 = vmatprep.subr.mxu0 0.0
      %2170 = vmatpush1.msra.mxu0 0.0
      %2171 = vmatprep.subr.mxu0 0.0
      %2172 = vmatpush1.msra.mxu0 0.0
      %2173 = vmatprep.subr.mxu0 0.0
      %2174 = vmatpush1.msra.mxu0 0.0
      %2175 = vmatprep.subr.mxu0 0.0
      %2176 = vmatpush1.msra.mxu0 0.0
      %2177 = vmatprep.subr.mxu0 0.0
      %2178 = vmatpush1.msra.mxu0 0.0
      %2179 = vmatprep.subr.mxu0 0.0
      %2180 = vmatpush1.msra.mxu0 0.0
      %2181 = vmatprep.subr.mxu0 0.0
      %2182 = vmatpush1.msra.mxu0 0.0
      %2183 = vmatprep.subr.mxu0 0.0
      %2184 = vmatpush1.msra.mxu0 0.0
      %2185 = vmatprep.subr.mxu0 0.0
      %2186 = vmatpush1.msra.mxu0 0.0
      %2187 = vmatprep.subr.mxu0 0.0
      %2188 = vmatpush1.msra.mxu0 0.0
      %2189 = vmatprep.subr.mxu0 0.0
      %2190 = vmatpush1.msra.mxu0 0.0
      %2191 = vmatprep.subr.mxu0 0.0
      %2192 = vmatpush1.msra.mxu0 0.0
      %2193 = vmatprep.subr.mxu0 0.0
      %2194 = vmatpush1.msra.mxu0 0.0
      %2195 = vmatprep.subr.mxu0 0.0
      %2196 = vmatpush1.msra.mxu0 0.0
      %2197 = vmatprep.mubr.f32.mxu0 0.0
      %2198 = vmatmul.mubr.f32.gmra.mrb[0].mxu0 %v2038
      %v2199 = vpop.f32.mrb[0].mxu0
      %v2200 = vadd.f32 0.0, %v2199
      %v2201 = vpop.f32.mrb[0].mxu0
      %2202 = vmatprep.mubr.f32.mxu0 0.0
      %2203 = vmatmul.mubr.f32.gmra.mrb[0].mxu0 %v2041
      %v2204 = vpop.f32.mrb[0].mxu0
      %v2205 = vadd.f32 0.0, %v2204
      %v2206 = vpop.f32.mrb[0].mxu0
      %2207 = vmatprep.mubr.f32.mxu0 0.0
      %2208 = vmatmul.mubr.f32.gmra.mrb[0].mxu0 %v2044
      %v2209 = vpop.f32.mrb[0].mxu0
      %v2210 = vadd.f32 0.0, %v2209
      %v2211 = vpop.f32.mrb[0].mxu0
      %2212 = vmatprep.mubr.f32.mxu0 0.0
      %2213 = vmatmul.mubr.f32.gmra.mrb[0].mxu0 %v2047
      %v2214 = vpop.f32.mrb[0].mxu0
      %v2215 = vadd.f32 0.0, %v2214
      %v2216 = vpop.f32.mrb[0].mxu0
      %2217 = vmatprep.mubr.f32.mxu0 0.0
      %2218 = vmatmul.mubr.f32.gmra.mrb[0].mxu0 %v2050
      %v2219 = vpop.f32.mrb[0].mxu0
      %v2220 = vadd.f32 0.0, %v2219
      %v2221 = vpop.f32.mrb[0].mxu0
      %2222 = vmatprep.mubr.f32.mxu0 0.0
      %2223 = vmatmul.mubr.f32.gmra.mrb[0].mxu0 %v2053
      %v2224 = vpop.f32.mrb[0].mxu0
      %v2225 = vadd.f32 0.0, %v2224
      %v2226 = vpop.f32.mrb[0].mxu0
      %2227 = vmatprep.mubr.f32.mxu0 0.0
      %2228 = vmatmul.mubr.f32.gmra.mrb[0].mxu0 %v2056
      %v2229 = vpop.f32.mrb[0].mxu0
      %v2230 = vadd.f32 0.0, %v2229
      %v2231 = vpop.f32.mrb[0].mxu0
      %2232 = vmatprep.mubr.f32.mxu0 0.0
      %2233 = vmatmul.mubr.f32.gmra.mrb[0].mxu0 %v2059
      %v2234 = vpop.f32.mrb[0].mxu0
      %v2235 = vadd.f32 0.0, %v2234
      %v2236 = vpop.f32.mrb[0].mxu0
      %2237 = vmatprep.mubr.f32.mxu0 0.0
      %2238 = vmatmul.mubr.f32.gmra.mrb[0].mxu0 %v2062
      %v2239 = vpop.f32.mrb[0].mxu0
      %v2240 = vadd.f32 0.0, %v2239
      %v2241 = vpop.f32.mrb[0].mxu0
      %2242 = vmatprep.mubr.f32.mxu0 0.0
      %2243 = vmatmul.mubr.f32.gmra.mrb[0].mxu0 %v2065
      %v2244 = vpop.f32.mrb[0].mxu0
      %v2245 = vadd.f32 0.0, %v2244
      %v2246 = vpop.f32.mrb[0].mxu0
      %2247 = vmatprep.mubr.f32.mxu0 0.0
      %2248 = vmatmul.mubr.f32.gmra.mrb[0].mxu0 %v2068
      %v2249 = vpop.f32.mrb[0].mxu0
      %v2250 = vadd.f32 0.0, %v2249
      %v2251 = vpop.f32.mrb[0].mxu0
      %2252 = vmatprep.mubr.f32.mxu0 0.0
      %2253 = vmatmul.mubr.f32.gmra.mrb[0].mxu0 %v2071
      %v2254 = vpop.f32.mrb[0].mxu0
      %v2255 = vadd.f32 0.0, %v2254
      %v2256 = vpop.f32.mrb[0].mxu0
      %2257 = vmatprep.mubr.f32.mxu0 0.0
      %2258 = vmatmul.mubr.f32.gmra.mrb[0].mxu0 %v2074
      %v2259 = vpop.f32.mrb[0].mxu0
      %v2260 = vadd.f32 0.0, %v2259
      %v2261 = vpop.f32.mrb[0].mxu0
      %2262 = vmatprep.mubr.f32.mxu0 0.0
      %2263 = vmatmul.mubr.f32.gmra.mrb[0].mxu0 %v2077
      %v2264 = vpop.f32.mrb[0].mxu0
      %v2265 = vadd.f32 0.0, %v2264
      %v2266 = vpop.f32.mrb[0].mxu0
      %2267 = vmatprep.mubr.f32.mxu0 0.0
      %2268 = vmatmul.mubr.f32.gmra.mrb[0].mxu0 %v2080
      %v2269 = vpop.f32.mrb[0].mxu0
      %v2270 = vadd.f32 0.0, %v2269
      %v2271 = vpop.f32.mrb[0].mxu0
      %2272 = vmatprep.mubr.f32.mxu0 0.0
      %2273 = vmatmul.mubr.f32.gmra.mrb[0].mxu0 %v2083
      %v2274 = vpop.f32.mrb[0].mxu0
      %v2275 = vadd.f32 0.0, %v2274
      %v2276 = vpop.f32.mrb[0].mxu0
      %2277 = vmatprep.mubr.f32.mxu0 0.0
      %2278 = vmatmul.mubr.f32.gmra.mrb[0].mxu0 %v2086
      %v2279 = vpop.f32.mrb[0].mxu0
      %v2280 = vadd.f32 0.0, %v2279
      %v2281 = vpop.f32.mrb[0].mxu0
      %2282 = vmatprep.mubr.f32.mxu0 0.0
      %2283 = vmatmul.mubr.f32.gmra.mrb[0].mxu0 %v2089
      %v2284 = vpop.f32.mrb[0].mxu0
      %v2285 = vadd.f32 0.0, %v2284
      %v2286 = vpop.f32.mrb[0].mxu0
      %2287 = vmatprep.mubr.f32.mxu0 0.0
      %2288 = vmatmul.mubr.f32.gmra.mrb[0].mxu0 %v2092
      %v2289 = vpop.f32.mrb[0].mxu0
      %v2290 = vadd.f32 0.0, %v2289
      %v2291 = vpop.f32.mrb[0].mxu0
      %2292 = vmatprep.mubr.f32.mxu0 0.0
      %2293 = vmatmul.mubr.f32.gmra.mrb[0].mxu0 %v2095
      %v2294 = vpop.f32.mrb[0].mxu0
      %v2295 = vadd.f32 0.0, %v2294
      %v2296 = vpop.f32.mrb[0].mxu0
      %2297 = vmatprep.mubr.f32.mxu0 0.0
      %2298 = vmatmul.mubr.f32.gmra.mrb[0].mxu0 %v2098
      %v2299 = vpop.f32.mrb[0].mxu0
      %v2300 = vadd.f32 0.0, %v2299
      %v2301 = vpop.f32.mrb[0].mxu0
      %2302 = vmatprep.mubr.f32.mxu0 0.0
      %2303 = vmatmul.mubr.f32.gmra.mrb[0].mxu0 %v2101
      %v2304 = vpop.f32.mrb[0].mxu0
      %v2305 = vadd.f32 0.0, %v2304
      %v2306 = vpop.f32.mrb[0].mxu0
      %2307 = vmatprep.mubr.f32.mxu0 0.0
      %2308 = vmatmul.mubr.f32.gmra.mrb[0].mxu0 %v2104
      %v2309 = vpop.f32.mrb[0].mxu0
      %v2310 = vadd.f32 0.0, %v2309
      %v2311 = vpop.f32.mrb[0].mxu0
      %2312 = vmatprep.mubr.f32.mxu0 0.0
      %2313 = vmatmul.mubr.f32.gmra.mrb[0].mxu0 %v2107
      %v2314 = vpop.f32.mrb[0].mxu0
      %v2315 = vadd.f32 0.0, %v2314
      %v2316 = vpop.f32.mrb[0].mxu0
      %2317 = vmatprep.mubr.f32.mxu0 0.0
      %2318 = vmatmul.mubr.f32.gmra.mrb[0].mxu0 %v2110
      %v2319 = vpop.f32.mrb[0].mxu0
      %v2320 = vadd.f32 0.0, %v2319
      %v2321 = vpop.f32.mrb[0].mxu0
      %2322 = vmatprep.mubr.f32.mxu0 0.0
      %2323 = vmatmul.mubr.f32.gmra.mrb[0].mxu0 %v2113
      %v2324 = vpop.f32.mrb[0].mxu0
      %v2325 = vadd.f32 0.0, %v2324
      %v2326 = vpop.f32.mrb[0].mxu0
      %2327 = vmatprep.mubr.f32.mxu0 0.0
      %2328 = vmatmul.mubr.f32.gmra.mrb[0].mxu0 %v2116
      %v2329 = vpop.f32.mrb[0].mxu0
      %v2330 = vadd.f32 0.0, %v2329
      %v2331 = vpop.f32.mrb[0].mxu0
      %2332 = vmatprep.mubr.f32.mxu0 0.0
      %2333 = vmatmul.mubr.f32.gmra.mrb[0].mxu0 %v2119
      %v2334 = vpop.f32.mrb[0].mxu0
      %v2335 = vadd.f32 0.0, %v2334
      %v2336 = vpop.f32.mrb[0].mxu0
      %2337 = vmatprep.mubr.f32.mxu0 0.0
      %2338 = vmatmul.mubr.f32.gmra.mrb[0].mxu0 %v2122
      %v2339 = vpop.f32.mrb[0].mxu0
      %v2340 = vadd.f32 0.0, %v2339
      %v2341 = vpop.f32.mrb[0].mxu0
      %2342 = vmatprep.mubr.f32.mxu0 0.0
      %2343 = vmatmul.mubr.f32.gmra.mrb[0].mxu0 %v2125
      %v2344 = vpop.f32.mrb[0].mxu0
      %v2345 = vadd.f32 0.0, %v2344
      %v2346 = vpop.f32.mrb[0].mxu0
      %2347 = vmatprep.mubr.f32.mxu0 0.0
      %2348 = vmatmul.mubr.f32.gmra.mrb[0].mxu0 %v2128
      %v2349 = vpop.f32.mrb[0].mxu0
      %v2350 = vadd.f32 0.0, %v2349
      %v2351 = vpop.f32.mrb[0].mxu0
      %2352 = vmatprep.mubr.f32.mxu0 0.0
      %2353 = vmatmul.mubr.f32.gmra.mrb[0].mxu0 %v2131
      %v2354 = vpop.f32.mrb[0].mxu0
      %v2355 = vadd.f32 0.0, %v2354
      %v2356 = vpop.f32.mrb[0].mxu0
      %2357 = vdwg.mxu0
      %v2358 = vadd.f32 %v1964, %v2200
      %v2359 = vadd.f32 %v1965, %v2205
      %v2360 = vadd.f32 %v1966, %v2210
      %v2361 = vadd.f32 %v1967, %v2215
      %v2362 = vadd.f32 %v1968, %v2220
      %v2363 = vadd.f32 %v1969, %v2225
      %v2364 = vadd.f32 %v1970, %v2230
      %v2365 = vadd.f32 %v1971, %v2235
      %v2366 = vadd.f32 %v1972, %v2240
      %v2367 = vadd.f32 %v1973, %v2245
      %v2368 = vadd.f32 %v1974, %v2250
      %v2369 = vadd.f32 %v1975, %v2255
      %v2370 = vadd.f32 %v1976, %v2260
      %v2371 = vadd.f32 %v1977, %v2265
      %v2372 = vadd.f32 %v1978, %v2270
      %v2373 = vadd.f32 %v1979, %v2275
      %v2374 = vadd.f32 %v1980, %v2280
      %v2375 = vadd.f32 %v1981, %v2285
      %v2376 = vadd.f32 %v1982, %v2290
      %v2377 = vadd.f32 %v1983, %v2295
      %v2378 = vadd.f32 %v1984, %v2300
      %v2379 = vadd.f32 %v1985, %v2305
      %v2380 = vadd.f32 %v1986, %v2310
      %v2381 = vadd.f32 %v1987, %v2315
      %v2382 = vadd.f32 %v1988, %v2320
      %v2383 = vadd.f32 %v1989, %v2325
      %v2384 = vadd.f32 %v1990, %v2330
      %v2385 = vadd.f32 %v1991, %v2335
      %v2386 = vadd.f32 %v1992, %v2340
      %v2387 = vadd.f32 %v1993, %v2345
      %v2388 = vadd.f32 %v1994, %v2350
      %v2389 = vadd.f32 %v1995, %v2355
      %v2390 = vld [vmem:[%s419 + $0x2] sm:$0xff]
      %v2391 = vld [vmem:[%s419 + $0xa] sm:$0xff]
      %v2392 = vld [vmem:[%s419 + $0x1a] sm:$0xff]
      %v2393 = vld [vmem:[%s419 + $0x22] sm:$0xff]
      %v2394 = vld [vmem:[%s419 + $0x32] sm:$0xff]
      %v2395 = vld [vmem:[%s419 + $0x3a] sm:$0xff]
      %v2396 = vld [vmem:[%s419 + $0x4a] sm:$0xff]
      %v2397 = vld [vmem:[%s419 + $0x52] sm:$0xff]
      %v2398 = vld [vmem:[%s419 + $0x62] sm:$0xff]
      %v2399 = vld [vmem:[%s419 + $0x6a] sm:$0xff]
      %v2400 = vld [vmem:[%s419 + $0x7a] sm:$0xff]
      %v2401 = vld [vmem:[%s419 + $0x82] sm:$0xff]
      %v2402 = vld [vmem:[%s419 + $0x92] sm:$0xff]
      %v2403 = vld [vmem:[%s419 + $0x9a] sm:$0xff]
      %v2404 = vld [vmem:[%s419 + $0xaa] sm:$0xff]
      %v2405 = vld [vmem:[%s419 + $0xb2] sm:$0xff]
      %v2406 = vld [vmem:[%s419 + $0xc2] sm:$0xff]
      %v2407 = vld [vmem:[%s419 + $0xca] sm:$0xff]
      %v2408 = vld [vmem:[%s419 + $0xda] sm:$0xff]
      %v2409 = vld [vmem:[%s419 + $0xe2] sm:$0xff]
      %v2410 = vld [vmem:[%s419 + $0xf2] sm:$0xff]
      %v2411 = vld [vmem:[%s419 + $0xfa] sm:$0xff]
      %v2412 = vld [vmem:[%s419 + $0x10a] sm:$0xff]
      %v2413 = vld [vmem:[%s419 + $0x112] sm:$0xff]
      %v2414 = vld [vmem:[%s419 + $0x122] sm:$0xff]
      %v2415 = vld [vmem:[%s419 + $0x12a] sm:$0xff]
      %v2416 = vld [vmem:[%s419 + $0x13a] sm:$0xff]
      %v2417 = vld [vmem:[%s419 + $0x142] sm:$0xff]
      %v2418 = vld [vmem:[%s419 + $0x152] sm:$0xff]
      %v2419 = vld [vmem:[%s419 + $0x15a] sm:$0xff]
      %v2420 = vld [vmem:[%s419 + $0x16a] sm:$0xff]
      %v2421 = vld [vmem:[%s419 + $0x172] sm:$0xff]
      %s2422 = scalar_lea.vmem %s3, 320
      %v2423 = vld [vmem:[%s2422] sm:$0xff]
      %v2424 = vld [vmem:[%s2422 + $0x8] sm:$0xff]
      %v2425 = vld [vmem:[%s2422 + $0x10] sm:$0xff]
      %v2426 = vld [vmem:[%s2422 + $0x18] sm:$0xff]
      %v2427 = vld [vmem:[%s2422 + $0x20] sm:$0xff]
      %v2428 = vld [vmem:[%s2422 + $0x28] sm:$0xff]
      %v2429 = vld [vmem:[%s2422 + $0x30] sm:$0xff]
      %v2430 = vld [vmem:[%s2422 + $0x38] sm:$0xff]
      %v2432 = vsel %vm410, %v2390, 0
      %v2435 = vsel %vm410, %v2391, 0
      %v2438 = vsel %vm410, %v2392, 0
      %v2441 = vsel %vm410, %v2393, 0
      %v2444 = vsel %vm410, %v2394, 0
      %v2447 = vsel %vm410, %v2395, 0
      %v2450 = vsel %vm410, %v2396, 0
      %v2453 = vsel %vm410, %v2397, 0
      %v2456 = vsel %vm410, %v2398, 0
      %v2459 = vsel %vm410, %v2399, 0
      %v2462 = vsel %vm410, %v2400, 0
      %v2465 = vsel %vm410, %v2401, 0
      %v2468 = vsel %vm410, %v2402, 0
      %v2471 = vsel %vm410, %v2403, 0
      %v2474 = vsel %vm410, %v2404, 0
      %v2477 = vsel %vm410, %v2405, 0
      %v2480 = vsel %vm410, %v2406, 0
      %v2483 = vsel %vm410, %v2407, 0
      %v2486 = vsel %vm410, %v2408, 0
      %v2489 = vsel %vm410, %v2409, 0
      %v2492 = vsel %vm410, %v2410, 0
      %v2495 = vsel %vm410, %v2411, 0
      %v2498 = vsel %vm410, %v2412, 0
      %v2501 = vsel %vm410, %v2413, 0
      %v2504 = vsel %vm410, %v2414, 0
      %v2507 = vsel %vm410, %v2415, 0
      %v2510 = vsel %vm410, %v2416, 0
      %v2513 = vsel %vm410, %v2417, 0
      %v2516 = vsel %vm410, %v2418, 0
      %v2519 = vsel %vm410, %v2419, 0
      %v2522 = vsel %vm410, %v2420, 0
      %v2525 = vsel %vm410, %v2421, 0
      %2527 = vmatprep.subr.mxu0 0.0
      %2528 = vmatpush1.msra.mxu0 %v2423
      %2529 = vmatprep.subr.mxu0 0.0
      %2530 = vmatpush1.msra.mxu0 %v2424
      %2531 = vmatprep.subr.mxu0 0.0
      %2532 = vmatpush1.msra.mxu0 %v2425
      %2533 = vmatprep.subr.mxu0 0.0
      %2534 = vmatpush1.msra.mxu0 %v2426
      %2535 = vmatprep.subr.mxu0 0.0
      %2536 = vmatpush1.msra.mxu0 %v2427
      %2537 = vmatprep.subr.mxu0 0.0
      %2538 = vmatpush1.msra.mxu0 %v2428
      %2539 = vmatprep.subr.mxu0 0.0
      %2540 = vmatpush1.msra.mxu0 %v2429
      %2541 = vmatprep.subr.mxu0 0.0
      %2542 = vmatpush1.msra.mxu0 %v2430
      %2543 = vmatprep.subr.mxu0 0.0
      %2544 = vmatpush1.msra.mxu0 0.0
      %2545 = vmatprep.subr.mxu0 0.0
      %2546 = vmatpush1.msra.mxu0 0.0
      %2547 = vmatprep.subr.mxu0 0.0
      %2548 = vmatpush1.msra.mxu0 0.0
      %2549 = vmatprep.subr.mxu0 0.0
      %2550 = vmatpush1.msra.mxu0 0.0
      %2551 = vmatprep.subr.mxu0 0.0
      %2552 = vmatpush1.msra.mxu0 0.0
      %2553 = vmatprep.subr.mxu0 0.0
      %2554 = vmatpush1.msra.mxu0 0.0
      %2555 = vmatprep.subr.mxu0 0.0
      %2556 = vmatpush1.msra.mxu0 0.0
      %2557 = vmatprep.subr.mxu0 0.0
      %2558 = vmatpush1.msra.mxu0 0.0
      %2559 = vmatprep.subr.mxu0 0.0
      %2560 = vmatpush1.msra.mxu0 0.0
      %2561 = vmatprep.subr.mxu0 0.0
      %2562 = vmatpush1.msra.mxu0 0.0
      %2563 = vmatprep.subr.mxu0 0.0
      %2564 = vmatpush1.msra.mxu0 0.0
      %2565 = vmatprep.subr.mxu0 0.0
      %2566 = vmatpush1.msra.mxu0 0.0
      %2567 = vmatprep.subr.mxu0 0.0
      %2568 = vmatpush1.msra.mxu0 0.0
      %2569 = vmatprep.subr.mxu0 0.0
      %2570 = vmatpush1.msra.mxu0 0.0
      %2571 = vmatprep.subr.mxu0 0.0
      %2572 = vmatpush1.msra.mxu0 0.0
      %2573 = vmatprep.subr.mxu0 0.0
      %2574 = vmatpush1.msra.mxu0 0.0
      %2575 = vmatprep.subr.mxu0 0.0
      %2576 = vmatpush1.msra.mxu0 0.0
      %2577 = vmatprep.subr.mxu0 0.0
      %2578 = vmatpush1.msra.mxu0 0.0
      %2579 = vmatprep.subr.mxu0 0.0
      %2580 = vmatpush1.msra.mxu0 0.0
      %2581 = vmatprep.subr.mxu0 0.0
      %2582 = vmatpush1.msra.mxu0 0.0
      %2583 = vmatprep.subr.mxu0 0.0
      %2584 = vmatpush1.msra.mxu0 0.0
      %2585 = vmatprep.subr.mxu0 0.0
      %2586 = vmatpush1.msra.mxu0 0.0
      %2587 = vmatprep.subr.mxu0 0.0
      %2588 = vmatpush1.msra.mxu0 0.0
      %2589 = vmatprep.subr.mxu0 0.0
      %2590 = vmatpush1.msra.mxu0 0.0
      %2591 = vmatprep.mubr.f32.mxu0 0.0
      %2592 = vmatmul.mubr.f32.gmra.mrb[0].mxu0 %v2432
      %v2593 = vpop.f32.mrb[0].mxu0
      %v2594 = vadd.f32 0.0, %v2593
      %v2595 = vpop.f32.mrb[0].mxu0
      %2596 = vmatprep.mubr.f32.mxu0 0.0
      %2597 = vmatmul.mubr.f32.gmra.mrb[0].mxu0 %v2435
      %v2598 = vpop.f32.mrb[0].mxu0
      %v2599 = vadd.f32 0.0, %v2598
      %v2600 = vpop.f32.mrb[0].mxu0
      %2601 = vmatprep.mubr.f32.mxu0 0.0
      %2602 = vmatmul.mubr.f32.gmra.mrb[0].mxu0 %v2438
      %v2603 = vpop.f32.mrb[0].mxu0
      %v2604 = vadd.f32 0.0, %v2603
      %v2605 = vpop.f32.mrb[0].mxu0
      %2606 = vmatprep.mubr.f32.mxu0 0.0
      %2607 = vmatmul.mubr.f32.gmra.mrb[0].mxu0 %v2441
      %v2608 = vpop.f32.mrb[0].mxu0
      %v2609 = vadd.f32 0.0, %v2608
      %v2610 = vpop.f32.mrb[0].mxu0
      %2611 = vmatprep.mubr.f32.mxu0 0.0
      %2612 = vmatmul.mubr.f32.gmra.mrb[0].mxu0 %v2444
      %v2613 = vpop.f32.mrb[0].mxu0
      %v2614 = vadd.f32 0.0, %v2613
      %v2615 = vpop.f32.mrb[0].mxu0
      %2616 = vmatprep.mubr.f32.mxu0 0.0
      %2617 = vmatmul.mubr.f32.gmra.mrb[0].mxu0 %v2447
      %v2618 = vpop.f32.mrb[0].mxu0
      %v2619 = vadd.f32 0.0, %v2618
      %v2620 = vpop.f32.mrb[0].mxu0
      %2621 = vmatprep.mubr.f32.mxu0 0.0
      %2622 = vmatmul.mubr.f32.gmra.mrb[0].mxu0 %v2450
      %v2623 = vpop.f32.mrb[0].mxu0
      %v2624 = vadd.f32 0.0, %v2623
      %v2625 = vpop.f32.mrb[0].mxu0
      %2626 = vmatprep.mubr.f32.mxu0 0.0
      %2627 = vmatmul.mubr.f32.gmra.mrb[0].mxu0 %v2453
      %v2628 = vpop.f32.mrb[0].mxu0
      %v2629 = vadd.f32 0.0, %v2628
      %v2630 = vpop.f32.mrb[0].mxu0
      %2631 = vmatprep.mubr.f32.mxu0 0.0
      %2632 = vmatmul.mubr.f32.gmra.mrb[0].mxu0 %v2456
      %v2633 = vpop.f32.mrb[0].mxu0
      %v2634 = vadd.f32 0.0, %v2633
      %v2635 = vpop.f32.mrb[0].mxu0
      %2636 = vmatprep.mubr.f32.mxu0 0.0
      %2637 = vmatmul.mubr.f32.gmra.mrb[0].mxu0 %v2459
      %v2638 = vpop.f32.mrb[0].mxu0
      %v2639 = vadd.f32 0.0, %v2638
      %v2640 = vpop.f32.mrb[0].mxu0
      %2641 = vmatprep.mubr.f32.mxu0 0.0
      %2642 = vmatmul.mubr.f32.gmra.mrb[0].mxu0 %v2462
      %v2643 = vpop.f32.mrb[0].mxu0
      %v2644 = vadd.f32 0.0, %v2643
      %v2645 = vpop.f32.mrb[0].mxu0
      %2646 = vmatprep.mubr.f32.mxu0 0.0
      %2647 = vmatmul.mubr.f32.gmra.mrb[0].mxu0 %v2465
      %v2648 = vpop.f32.mrb[0].mxu0
      %v2649 = vadd.f32 0.0, %v2648
      %v2650 = vpop.f32.mrb[0].mxu0
      %2651 = vmatprep.mubr.f32.mxu0 0.0
      %2652 = vmatmul.mubr.f32.gmra.mrb[0].mxu0 %v2468
      %v2653 = vpop.f32.mrb[0].mxu0
      %v2654 = vadd.f32 0.0, %v2653
      %v2655 = vpop.f32.mrb[0].mxu0
      %2656 = vmatprep.mubr.f32.mxu0 0.0
      %2657 = vmatmul.mubr.f32.gmra.mrb[0].mxu0 %v2471
      %v2658 = vpop.f32.mrb[0].mxu0
      %v2659 = vadd.f32 0.0, %v2658
      %v2660 = vpop.f32.mrb[0].mxu0
      %2661 = vmatprep.mubr.f32.mxu0 0.0
      %2662 = vmatmul.mubr.f32.gmra.mrb[0].mxu0 %v2474
      %v2663 = vpop.f32.mrb[0].mxu0
      %v2664 = vadd.f32 0.0, %v2663
      %v2665 = vpop.f32.mrb[0].mxu0
      %2666 = vmatprep.mubr.f32.mxu0 0.0
      %2667 = vmatmul.mubr.f32.gmra.mrb[0].mxu0 %v2477
      %v2668 = vpop.f32.mrb[0].mxu0
      %v2669 = vadd.f32 0.0, %v2668
      %v2670 = vpop.f32.mrb[0].mxu0
      %2671 = vmatprep.mubr.f32.mxu0 0.0
      %2672 = vmatmul.mubr.f32.gmra.mrb[0].mxu0 %v2480
      %v2673 = vpop.f32.mrb[0].mxu0
      %v2674 = vadd.f32 0.0, %v2673
      %v2675 = vpop.f32.mrb[0].mxu0
      %2676 = vmatprep.mubr.f32.mxu0 0.0
      %2677 = vmatmul.mubr.f32.gmra.mrb[0].mxu0 %v2483
      %v2678 = vpop.f32.mrb[0].mxu0
      %v2679 = vadd.f32 0.0, %v2678
      %v2680 = vpop.f32.mrb[0].mxu0
      %2681 = vmatprep.mubr.f32.mxu0 0.0
      %2682 = vmatmul.mubr.f32.gmra.mrb[0].mxu0 %v2486
      %v2683 = vpop.f32.mrb[0].mxu0
      %v2684 = vadd.f32 0.0, %v2683
      %v2685 = vpop.f32.mrb[0].mxu0
      %2686 = vmatprep.mubr.f32.mxu0 0.0
      %2687 = vmatmul.mubr.f32.gmra.mrb[0].mxu0 %v2489
      %v2688 = vpop.f32.mrb[0].mxu0
      %v2689 = vadd.f32 0.0, %v2688
      %v2690 = vpop.f32.mrb[0].mxu0
      %2691 = vmatprep.mubr.f32.mxu0 0.0
      %2692 = vmatmul.mubr.f32.gmra.mrb[0].mxu0 %v2492
      %v2693 = vpop.f32.mrb[0].mxu0
      %v2694 = vadd.f32 0.0, %v2693
      %v2695 = vpop.f32.mrb[0].mxu0
      %2696 = vmatprep.mubr.f32.mxu0 0.0
      %2697 = vmatmul.mubr.f32.gmra.mrb[0].mxu0 %v2495
      %v2698 = vpop.f32.mrb[0].mxu0
      %v2699 = vadd.f32 0.0, %v2698
      %v2700 = vpop.f32.mrb[0].mxu0
      %2701 = vmatprep.mubr.f32.mxu0 0.0
      %2702 = vmatmul.mubr.f32.gmra.mrb[0].mxu0 %v2498
      %v2703 = vpop.f32.mrb[0].mxu0
      %v2704 = vadd.f32 0.0, %v2703
      %v2705 = vpop.f32.mrb[0].mxu0
      %2706 = vmatprep.mubr.f32.mxu0 0.0
      %2707 = vmatmul.mubr.f32.gmra.mrb[0].mxu0 %v2501
      %v2708 = vpop.f32.mrb[0].mxu0
      %v2709 = vadd.f32 0.0, %v2708
      %v2710 = vpop.f32.mrb[0].mxu0
      %2711 = vmatprep.mubr.f32.mxu0 0.0
      %2712 = vmatmul.mubr.f32.gmra.mrb[0].mxu0 %v2504
      %v2713 = vpop.f32.mrb[0].mxu0
      %v2714 = vadd.f32 0.0, %v2713
      %v2715 = vpop.f32.mrb[0].mxu0
      %2716 = vmatprep.mubr.f32.mxu0 0.0
      %2717 = vmatmul.mubr.f32.gmra.mrb[0].mxu0 %v2507
      %v2718 = vpop.f32.mrb[0].mxu0
      %v2719 = vadd.f32 0.0, %v2718
      %v2720 = vpop.f32.mrb[0].mxu0
      %2721 = vmatprep.mubr.f32.mxu0 0.0
      %2722 = vmatmul.mubr.f32.gmra.mrb[0].mxu0 %v2510
      %v2723 = vpop.f32.mrb[0].mxu0
      %v2724 = vadd.f32 0.0, %v2723
      %v2725 = vpop.f32.mrb[0].mxu0
      %2726 = vmatprep.mubr.f32.mxu0 0.0
      %2727 = vmatmul.mubr.f32.gmra.mrb[0].mxu0 %v2513
      %v2728 = vpop.f32.mrb[0].mxu0
      %v2729 = vadd.f32 0.0, %v2728
      %v2730 = vpop.f32.mrb[0].mxu0
      %2731 = vmatprep.mubr.f32.mxu0 0.0
      %2732 = vmatmul.mubr.f32.gmra.mrb[0].mxu0 %v2516
      %v2733 = vpop.f32.mrb[0].mxu0
      %v2734 = vadd.f32 0.0, %v2733
      %v2735 = vpop.f32.mrb[0].mxu0
      %2736 = vmatprep.mubr.f32.mxu0 0.0
      %2737 = vmatmul.mubr.f32.gmra.mrb[0].mxu0 %v2519
      %v2738 = vpop.f32.mrb[0].mxu0
      %v2739 = vadd.f32 0.0, %v2738
      %v2740 = vpop.f32.mrb[0].mxu0
      %2741 = vmatprep.mubr.f32.mxu0 0.0
      %2742 = vmatmul.mubr.f32.gmra.mrb[0].mxu0 %v2522
      %v2743 = vpop.f32.mrb[0].mxu0
      %v2744 = vadd.f32 0.0, %v2743
      %v2745 = vpop.f32.mrb[0].mxu0
      %2746 = vmatprep.mubr.f32.mxu0 0.0
      %2747 = vmatmul.mubr.f32.gmra.mrb[0].mxu0 %v2525
      %v2748 = vpop.f32.mrb[0].mxu0
      %v2749 = vadd.f32 0.0, %v2748
      %v2750 = vpop.f32.mrb[0].mxu0
      %2751 = vdwg.mxu0
      %v2752 = vadd.f32 %v2358, %v2594
      %v2753 = vadd.f32 %v2359, %v2599
      %v2754 = vadd.f32 %v2360, %v2604
      %v2755 = vadd.f32 %v2361, %v2609
      %v2756 = vadd.f32 %v2362, %v2614
      %v2757 = vadd.f32 %v2363, %v2619
      %v2758 = vadd.f32 %v2364, %v2624
      %v2759 = vadd.f32 %v2365, %v2629
      %v2760 = vadd.f32 %v2366, %v2634
      %v2761 = vadd.f32 %v2367, %v2639
      %v2762 = vadd.f32 %v2368, %v2644
      %v2763 = vadd.f32 %v2369, %v2649
      %v2764 = vadd.f32 %v2370, %v2654
      %v2765 = vadd.f32 %v2371, %v2659
      %v2766 = vadd.f32 %v2372, %v2664
      %v2767 = vadd.f32 %v2373, %v2669
      %v2768 = vadd.f32 %v2374, %v2674
      %v2769 = vadd.f32 %v2375, %v2679
      %v2770 = vadd.f32 %v2376, %v2684
      %v2771 = vadd.f32 %v2377, %v2689
      %v2772 = vadd.f32 %v2378, %v2694
      %v2773 = vadd.f32 %v2379, %v2699
      %v2774 = vadd.f32 %v2380, %v2704
      %v2775 = vadd.f32 %v2381, %v2709
      %v2776 = vadd.f32 %v2382, %v2714
      %v2777 = vadd.f32 %v2383, %v2719
      %v2778 = vadd.f32 %v2384, %v2724
      %v2779 = vadd.f32 %v2385, %v2729
      %v2780 = vadd.f32 %v2386, %v2734
      %v2781 = vadd.f32 %v2387, %v2739
      %v2782 = vadd.f32 %v2388, %v2744
      %v2783 = vadd.f32 %v2389, %v2749
      %s2784 = scalar_lea.vmem [#allocation2], 48
      %v2785 = vld [vmem:[%s2784] sm:$0xff]
      %v2786 = vld [vmem:[%s2784 + $0x8] sm:$0xff]
      %v2787 = vld [vmem:[%s2784 + $0x18] sm:$0xff]
      %v2788 = vld [vmem:[%s2784 + $0x20] sm:$0xff]
      %v2789 = vld [vmem:[%s2784 + $0x30] sm:$0xff]
      %v2790 = vld [vmem:[%s2784 + $0x38] sm:$0xff]
      %v2791 = vld [vmem:[%s2784 + $0x48] sm:$0xff]
      %v2792 = vld [vmem:[%s2784 + $0x50] sm:$0xff]
      %v2793 = vld [vmem:[%s2784 + $0x60] sm:$0xff]
      %v2794 = vld [vmem:[%s2784 + $0x68] sm:$0xff]
      %v2795 = vld [vmem:[%s2784 + $0x78] sm:$0xff]
      %v2796 = vld [vmem:[%s2784 + $0x80] sm:$0xff]
      %v2797 = vld [vmem:[%s2784 + $0x90] sm:$0xff]
      %v2798 = vld [vmem:[%s2784 + $0x98] sm:$0xff]
      %v2799 = vld [vmem:[%s2784 + $0xa8] sm:$0xff]
      %v2800 = vld [vmem:[%s2784 + $0xb0] sm:$0xff]
      %v2801 = vld [vmem:[%s2784 + $0xc0] sm:$0xff]
      %v2802 = vld [vmem:[%s2784 + $0xc8] sm:$0xff]
      %v2803 = vld [vmem:[%s2784 + $0xd8] sm:$0xff]
      %v2804 = vld [vmem:[%s2784 + $0xe0] sm:$0xff]
      %v2805 = vld [vmem:[%s2784 + $0xf0] sm:$0xff]
      %v2806 = vld [vmem:[%s2784 + $0xf8] sm:$0xff]
      %v2807 = vld [vmem:[%s2784 + $0x108] sm:$0xff]
      %v2808 = vld [vmem:[%s2784 + $0x110] sm:$0xff]
      %v2809 = vld [vmem:[%s2784 + $0x120] sm:$0xff]
      %v2810 = vld [vmem:[%s2784 + $0x128] sm:$0xff]
      %v2811 = vld [vmem:[%s2784 + $0x138] sm:$0xff]
      %v2812 = vld [vmem:[%s2784 + $0x140] sm:$0xff]
      %v2813 = vld [vmem:[%s2784 + $0x150] sm:$0xff]
      %v2814 = vld [vmem:[%s2784 + $0x158] sm:$0xff]
      %v2815 = vld [vmem:[%s2784 + $0x168] sm:$0xff]
      %v2816 = vld [vmem:[%s2784 + $0x170] sm:$0xff]
      %s2817 = scalar_lea.vmem %s3, 384
      %v2818 = vld [vmem:[%s2817] sm:$0xff]
      %v2819 = vld [vmem:[%s2817 + $0x8] sm:$0xff]
      %v2820 = vld [vmem:[%s2817 + $0x10] sm:$0xff]
      %v2821 = vld [vmem:[%s2817 + $0x18] sm:$0xff]
      %v2822 = vld [vmem:[%s2817 + $0x20] sm:$0xff]
      %v2823 = vld [vmem:[%s2817 + $0x28] sm:$0xff]
      %v2824 = vld [vmem:[%s2817 + $0x30] sm:$0xff]
      %v2825 = vld [vmem:[%s2817 + $0x38] sm:$0xff]
      %v2827 = vsel %vm410, %v2785, 0
      %v2830 = vsel %vm410, %v2786, 0
      %v2833 = vsel %vm410, %v2787, 0
      %v2836 = vsel %vm410, %v2788, 0
      %v2839 = vsel %vm410, %v2789, 0
      %v2842 = vsel %vm410, %v2790, 0
      %v2845 = vsel %vm410, %v2791, 0
      %v2848 = vsel %vm410, %v2792, 0
      %v2851 = vsel %vm410, %v2793, 0
      %v2854 = vsel %vm410, %v2794, 0
      %v2857 = vsel %vm410, %v2795, 0
      %v2860 = vsel %vm410, %v2796, 0
      %v2863 = vsel %vm410, %v2797, 0
      %v2866 = vsel %vm410, %v2798, 0
      %v2869 = vsel %vm410, %v2799, 0
      %v2872 = vsel %vm410, %v2800, 0
      %v2875 = vsel %vm410, %v2801, 0
      %v2878 = vsel %vm410, %v2802, 0
      %v2881 = vsel %vm410, %v2803, 0
      %v2884 = vsel %vm410, %v2804, 0
      %v2887 = vsel %vm410, %v2805, 0
      %v2890 = vsel %vm410, %v2806, 0
      %v2893 = vsel %vm410, %v2807, 0
      %v2896 = vsel %vm410, %v2808, 0
      %v2899 = vsel %vm410, %v2809, 0
      %v2902 = vsel %vm410, %v2810, 0
      %v2905 = vsel %vm410, %v2811, 0
      %v2908 = vsel %vm410, %v2812, 0
      %v2911 = vsel %vm410, %v2813, 0
      %v2914 = vsel %vm410, %v2814, 0
      %v2917 = vsel %vm410, %v2815, 0
      %v2920 = vsel %vm410, %v2816, 0
      %2922 = vmatprep.subr.mxu0 0.0
      %2923 = vmatpush1.msra.mxu0 %v2818
      %2924 = vmatprep.subr.mxu0 0.0
      %2925 = vmatpush1.msra.mxu0 %v2819
      %2926 = vmatprep.subr.mxu0 0.0
      %2927 = vmatpush1.msra.mxu0 %v2820
      %2928 = vmatprep.subr.mxu0 0.0
      %2929 = vmatpush1.msra.mxu0 %v2821
      %2930 = vmatprep.subr.mxu0 0.0
      %2931 = vmatpush1.msra.mxu0 %v2822
      %2932 = vmatprep.subr.mxu0 0.0
      %2933 = vmatpush1.msra.mxu0 %v2823
      %2934 = vmatprep.subr.mxu0 0.0
      %2935 = vmatpush1.msra.mxu0 %v2824
      %2936 = vmatprep.subr.mxu0 0.0
      %2937 = vmatpush1.msra.mxu0 %v2825
      %2938 = vmatprep.subr.mxu0 0.0
      %2939 = vmatpush1.msra.mxu0 0.0
      %2940 = vmatprep.subr.mxu0 0.0
      %2941 = vmatpush1.msra.mxu0 0.0
      %2942 = vmatprep.subr.mxu0 0.0
      %2943 = vmatpush1.msra.mxu0 0.0
      %2944 = vmatprep.subr.mxu0 0.0
      %2945 = vmatpush1.msra.mxu0 0.0
      %2946 = vmatprep.subr.mxu0 0.0
      %2947 = vmatpush1.msra.mxu0 0.0
      %2948 = vmatprep.subr.mxu0 0.0
      %2949 = vmatpush1.msra.mxu0 0.0
      %2950 = vmatprep.subr.mxu0 0.0
      %2951 = vmatpush1.msra.mxu0 0.0
      %2952 = vmatprep.subr.mxu0 0.0
      %2953 = vmatpush1.msra.mxu0 0.0
      %2954 = vmatprep.subr.mxu0 0.0
      %2955 = vmatpush1.msra.mxu0 0.0
      %2956 = vmatprep.subr.mxu0 0.0
      %2957 = vmatpush1.msra.mxu0 0.0
      %2958 = vmatprep.subr.mxu0 0.0
      %2959 = vmatpush1.msra.mxu0 0.0
      %2960 = vmatprep.subr.mxu0 0.0
      %2961 = vmatpush1.msra.mxu0 0.0
      %2962 = vmatprep.subr.mxu0 0.0
      %2963 = vmatpush1.msra.mxu0 0.0
      %2964 = vmatprep.subr.mxu0 0.0
      %2965 = vmatpush1.msra.mxu0 0.0
      %2966 = vmatprep.subr.mxu0 0.0
      %2967 = vmatpush1.msra.mxu0 0.0
      %2968 = vmatprep.subr.mxu0 0.0
      %2969 = vmatpush1.msra.mxu0 0.0
      %2970 = vmatprep.subr.mxu0 0.0
      %2971 = vmatpush1.msra.mxu0 0.0
      %2972 = vmatprep.subr.mxu0 0.0
      %2973 = vmatpush1.msra.mxu0 0.0
      %2974 = vmatprep.subr.mxu0 0.0
      %2975 = vmatpush1.msra.mxu0 0.0
      %2976 = vmatprep.subr.mxu0 0.0
      %2977 = vmatpush1.msra.mxu0 0.0
      %2978 = vmatprep.subr.mxu0 0.0
      %2979 = vmatpush1.msra.mxu0 0.0
      %2980 = vmatprep.subr.mxu0 0.0
      %2981 = vmatpush1.msra.mxu0 0.0
      %2982 = vmatprep.subr.mxu0 0.0
      %2983 = vmatpush1.msra.mxu0 0.0
      %2984 = vmatprep.subr.mxu0 0.0
      %2985 = vmatpush1.msra.mxu0 0.0
      %2986 = vmatprep.mubr.f32.mxu0 0.0
      %2987 = vmatmul.mubr.f32.gmra.mrb[0].mxu0 %v2827
      %v2988 = vpop.f32.mrb[0].mxu0
      %v2989 = vadd.f32 0.0, %v2988
      %v2990 = vpop.f32.mrb[0].mxu0
      %2991 = vmatprep.mubr.f32.mxu0 0.0
      %2992 = vmatmul.mubr.f32.gmra.mrb[0].mxu0 %v2830
      %v2993 = vpop.f32.mrb[0].mxu0
      %v2994 = vadd.f32 0.0, %v2993
      %v2995 = vpop.f32.mrb[0].mxu0
      %2996 = vmatprep.mubr.f32.mxu0 0.0
      %2997 = vmatmul.mubr.f32.gmra.mrb[0].mxu0 %v2833
      %v2998 = vpop.f32.mrb[0].mxu0
      %v2999 = vadd.f32 0.0, %v2998
      %v3000 = vpop.f32.mrb[0].mxu0
      %3001 = vmatprep.mubr.f32.mxu0 0.0
      %3002 = vmatmul.mubr.f32.gmra.mrb[0].mxu0 %v2836
      %v3003 = vpop.f32.mrb[0].mxu0
      %v3004 = vadd.f32 0.0, %v3003
      %v3005 = vpop.f32.mrb[0].mxu0
      %3006 = vmatprep.mubr.f32.mxu0 0.0
      %3007 = vmatmul.mubr.f32.gmra.mrb[0].mxu0 %v2839
      %v3008 = vpop.f32.mrb[0].mxu0
      %v3009 = vadd.f32 0.0, %v3008
      %v3010 = vpop.f32.mrb[0].mxu0
      %3011 = vmatprep.mubr.f32.mxu0 0.0
      %3012 = vmatmul.mubr.f32.gmra.mrb[0].mxu0 %v2842
      %v3013 = vpop.f32.mrb[0].mxu0
      %v3014 = vadd.f32 0.0, %v3013
      %v3015 = vpop.f32.mrb[0].mxu0
      %3016 = vmatprep.mubr.f32.mxu0 0.0
      %3017 = vmatmul.mubr.f32.gmra.mrb[0].mxu0 %v2845
      %v3018 = vpop.f32.mrb[0].mxu0
      %v3019 = vadd.f32 0.0, %v3018
      %v3020 = vpop.f32.mrb[0].mxu0
      %3021 = vmatprep.mubr.f32.mxu0 0.0
      %3022 = vmatmul.mubr.f32.gmra.mrb[0].mxu0 %v2848
      %v3023 = vpop.f32.mrb[0].mxu0
      %v3024 = vadd.f32 0.0, %v3023
      %v3025 = vpop.f32.mrb[0].mxu0
      %3026 = vmatprep.mubr.f32.mxu0 0.0
      %3027 = vmatmul.mubr.f32.gmra.mrb[0].mxu0 %v2851
      %v3028 = vpop.f32.mrb[0].mxu0
      %v3029 = vadd.f32 0.0, %v3028
      %v3030 = vpop.f32.mrb[0].mxu0
      %3031 = vmatprep.mubr.f32.mxu0 0.0
      %3032 = vmatmul.mubr.f32.gmra.mrb[0].mxu0 %v2854
      %v3033 = vpop.f32.mrb[0].mxu0
      %v3034 = vadd.f32 0.0, %v3033
      %v3035 = vpop.f32.mrb[0].mxu0
      %3036 = vmatprep.mubr.f32.mxu0 0.0
      %3037 = vmatmul.mubr.f32.gmra.mrb[0].mxu0 %v2857
      %v3038 = vpop.f32.mrb[0].mxu0
      %v3039 = vadd.f32 0.0, %v3038
      %v3040 = vpop.f32.mrb[0].mxu0
      %3041 = vmatprep.mubr.f32.mxu0 0.0
      %3042 = vmatmul.mubr.f32.gmra.mrb[0].mxu0 %v2860
      %v3043 = vpop.f32.mrb[0].mxu0
      %v3044 = vadd.f32 0.0, %v3043
      %v3045 = vpop.f32.mrb[0].mxu0
      %3046 = vmatprep.mubr.f32.mxu0 0.0
      %3047 = vmatmul.mubr.f32.gmra.mrb[0].mxu0 %v2863
      %v3048 = vpop.f32.mrb[0].mxu0
      %v3049 = vadd.f32 0.0, %v3048
      %v3050 = vpop.f32.mrb[0].mxu0
      %3051 = vmatprep.mubr.f32.mxu0 0.0
      %3052 = vmatmul.mubr.f32.gmra.mrb[0].mxu0 %v2866
      %v3053 = vpop.f32.mrb[0].mxu0
      %v3054 = vadd.f32 0.0, %v3053
      %v3055 = vpop.f32.mrb[0].mxu0
      %3056 = vmatprep.mubr.f32.mxu0 0.0
      %3057 = vmatmul.mubr.f32.gmra.mrb[0].mxu0 %v2869
      %v3058 = vpop.f32.mrb[0].mxu0
      %v3059 = vadd.f32 0.0, %v3058
      %v3060 = vpop.f32.mrb[0].mxu0
      %3061 = vmatprep.mubr.f32.mxu0 0.0
      %3062 = vmatmul.mubr.f32.gmra.mrb[0].mxu0 %v2872
      %v3063 = vpop.f32.mrb[0].mxu0
      %v3064 = vadd.f32 0.0, %v3063
      %v3065 = vpop.f32.mrb[0].mxu0
      %3066 = vmatprep.mubr.f32.mxu0 0.0
      %3067 = vmatmul.mubr.f32.gmra.mrb[0].mxu0 %v2875
      %v3068 = vpop.f32.mrb[0].mxu0
      %v3069 = vadd.f32 0.0, %v3068
      %v3070 = vpop.f32.mrb[0].mxu0
      %3071 = vmatprep.mubr.f32.mxu0 0.0
      %3072 = vmatmul.mubr.f32.gmra.mrb[0].mxu0 %v2878
      %v3073 = vpop.f32.mrb[0].mxu0
      %v3074 = vadd.f32 0.0, %v3073
      %v3075 = vpop.f32.mrb[0].mxu0
      %3076 = vmatprep.mubr.f32.mxu0 0.0
      %3077 = vmatmul.mubr.f32.gmra.mrb[0].mxu0 %v2881
      %v3078 = vpop.f32.mrb[0].mxu0
      %v3079 = vadd.f32 0.0, %v3078
      %v3080 = vpop.f32.mrb[0].mxu0
      %3081 = vmatprep.mubr.f32.mxu0 0.0
      %3082 = vmatmul.mubr.f32.gmra.mrb[0].mxu0 %v2884
      %v3083 = vpop.f32.mrb[0].mxu0
      %v3084 = vadd.f32 0.0, %v3083
      %v3085 = vpop.f32.mrb[0].mxu0
      %3086 = vmatprep.mubr.f32.mxu0 0.0
      %3087 = vmatmul.mubr.f32.gmra.mrb[0].mxu0 %v2887
      %v3088 = vpop.f32.mrb[0].mxu0
      %v3089 = vadd.f32 0.0, %v3088
      %v3090 = vpop.f32.mrb[0].mxu0
      %3091 = vmatprep.mubr.f32.mxu0 0.0
      %3092 = vmatmul.mubr.f32.gmra.mrb[0].mxu0 %v2890
      %v3093 = vpop.f32.mrb[0].mxu0
      %v3094 = vadd.f32 0.0, %v3093
      %v3095 = vpop.f32.mrb[0].mxu0
      %3096 = vmatprep.mubr.f32.mxu0 0.0
      %3097 = vmatmul.mubr.f32.gmra.mrb[0].mxu0 %v2893
      %v3098 = vpop.f32.mrb[0].mxu0
      %v3099 = vadd.f32 0.0, %v3098
      %v3100 = vpop.f32.mrb[0].mxu0
      %3101 = vmatprep.mubr.f32.mxu0 0.0
      %3102 = vmatmul.mubr.f32.gmra.mrb[0].mxu0 %v2896
      %v3103 = vpop.f32.mrb[0].mxu0
      %v3104 = vadd.f32 0.0, %v3103
      %v3105 = vpop.f32.mrb[0].mxu0
      %3106 = vmatprep.mubr.f32.mxu0 0.0
      %3107 = vmatmul.mubr.f32.gmra.mrb[0].mxu0 %v2899
      %v3108 = vpop.f32.mrb[0].mxu0
      %v3109 = vadd.f32 0.0, %v3108
      %v3110 = vpop.f32.mrb[0].mxu0
      %3111 = vmatprep.mubr.f32.mxu0 0.0
      %3112 = vmatmul.mubr.f32.gmra.mrb[0].mxu0 %v2902
      %v3113 = vpop.f32.mrb[0].mxu0
      %v3114 = vadd.f32 0.0, %v3113
      %v3115 = vpop.f32.mrb[0].mxu0
      %3116 = vmatprep.mubr.f32.mxu0 0.0
      %3117 = vmatmul.mubr.f32.gmra.mrb[0].mxu0 %v2905
      %v3118 = vpop.f32.mrb[0].mxu0
      %v3119 = vadd.f32 0.0, %v3118
      %v3120 = vpop.f32.mrb[0].mxu0
      %3121 = vmatprep.mubr.f32.mxu0 0.0
      %3122 = vmatmul.mubr.f32.gmra.mrb[0].mxu0 %v2908
      %v3123 = vpop.f32.mrb[0].mxu0
      %v3124 = vadd.f32 0.0, %v3123
      %v3125 = vpop.f32.mrb[0].mxu0
      %3126 = vmatprep.mubr.f32.mxu0 0.0
      %3127 = vmatmul.mubr.f32.gmra.mrb[0].mxu0 %v2911
      %v3128 = vpop.f32.mrb[0].mxu0
      %v3129 = vadd.f32 0.0, %v3128
      %v3130 = vpop.f32.mrb[0].mxu0
      %3131 = vmatprep.mubr.f32.mxu0 0.0
      %3132 = vmatmul.mubr.f32.gmra.mrb[0].mxu0 %v2914
      %v3133 = vpop.f32.mrb[0].mxu0
      %v3134 = vadd.f32 0.0, %v3133
      %v3135 = vpop.f32.mrb[0].mxu0
      %3136 = vmatprep.mubr.f32.mxu0 0.0
      %3137 = vmatmul.mubr.f32.gmra.mrb[0].mxu0 %v2917
      %v3138 = vpop.f32.mrb[0].mxu0
      %v3139 = vadd.f32 0.0, %v3138
      %v3140 = vpop.f32.mrb[0].mxu0
      %3141 = vmatprep.mubr.f32.mxu0 0.0
      %3142 = vmatmul.mubr.f32.gmra.mrb[0].mxu0 %v2920
      %v3143 = vpop.f32.mrb[0].mxu0
      %v3144 = vadd.f32 0.0, %v3143
      %v3145 = vpop.f32.mrb[0].mxu0
      %3146 = vdwg.mxu0
      %v3147 = vadd.f32 %v2752, %v2989
      %v3148 = vadd.f32 %v2753, %v2994
      %v3149 = vadd.f32 %v2754, %v2999
      %v3150 = vadd.f32 %v2755, %v3004
      %v3151 = vadd.f32 %v2756, %v3009
      %v3152 = vadd.f32 %v2757, %v3014
      %v3153 = vadd.f32 %v2758, %v3019
      %v3154 = vadd.f32 %v2759, %v3024
      %v3155 = vadd.f32 %v2760, %v3029
      %v3156 = vadd.f32 %v2761, %v3034
      %v3157 = vadd.f32 %v2762, %v3039
      %v3158 = vadd.f32 %v2763, %v3044
      %v3159 = vadd.f32 %v2764, %v3049
      %v3160 = vadd.f32 %v2765, %v3054
      %v3161 = vadd.f32 %v2766, %v3059
      %v3162 = vadd.f32 %v2767, %v3064
      %v3163 = vadd.f32 %v2768, %v3069
      %v3164 = vadd.f32 %v2769, %v3074
      %v3165 = vadd.f32 %v2770, %v3079
      %v3166 = vadd.f32 %v2771, %v3084
      %v3167 = vadd.f32 %v2772, %v3089
      %v3168 = vadd.f32 %v2773, %v3094
      %v3169 = vadd.f32 %v2774, %v3099
      %v3170 = vadd.f32 %v2775, %v3104
      %v3171 = vadd.f32 %v2776, %v3109
      %v3172 = vadd.f32 %v2777, %v3114
      %v3173 = vadd.f32 %v2778, %v3119
      %v3174 = vadd.f32 %v2779, %v3124
      %v3175 = vadd.f32 %v2780, %v3129
      %v3176 = vadd.f32 %v2781, %v3134
      %v3177 = vadd.f32 %v2782, %v3139
      %v3178 = vadd.f32 %v2783, %v3144
      %v3179 = vld [vmem:[%s2784 + $0x1] sm:$0xff]
      %v3180 = vld [vmem:[%s2784 + $0x9] sm:$0xff]
      %v3181 = vld [vmem:[%s2784 + $0x19] sm:$0xff]
      %v3182 = vld [vmem:[%s2784 + $0x21] sm:$0xff]
      %v3183 = vld [vmem:[%s2784 + $0x31] sm:$0xff]
      %v3184 = vld [vmem:[%s2784 + $0x39] sm:$0xff]
      %v3185 = vld [vmem:[%s2784 + $0x49] sm:$0xff]
      %v3186 = vld [vmem:[%s2784 + $0x51] sm:$0xff]
      %v3187 = vld [vmem:[%s2784 + $0x61] sm:$0xff]
      %v3188 = vld [vmem:[%s2784 + $0x69] sm:$0xff]
      %v3189 = vld [vmem:[%s2784 + $0x79] sm:$0xff]
      %v3190 = vld [vmem:[%s2784 + $0x81] sm:$0xff]
      %v3191 = vld [vmem:[%s2784 + $0x91] sm:$0xff]
      %v3192 = vld [vmem:[%s2784 + $0x99] sm:$0xff]
      %v3193 = vld [vmem:[%s2784 + $0xa9] sm:$0xff]
      %v3194 = vld [vmem:[%s2784 + $0xb1] sm:$0xff]
      %v3195 = vld [vmem:[%s2784 + $0xc1] sm:$0xff]
      %v3196 = vld [vmem:[%s2784 + $0xc9] sm:$0xff]
      %v3197 = vld [vmem:[%s2784 + $0xd9] sm:$0xff]
      %v3198 = vld [vmem:[%s2784 + $0xe1] sm:$0xff]
      %v3199 = vld [vmem:[%s2784 + $0xf1] sm:$0xff]
      %v3200 = vld [vmem:[%s2784 + $0xf9] sm:$0xff]
      %v3201 = vld [vmem:[%s2784 + $0x109] sm:$0xff]
      %v3202 = vld [vmem:[%s2784 + $0x111] sm:$0xff]
      %v3203 = vld [vmem:[%s2784 + $0x121] sm:$0xff]
      %v3204 = vld [vmem:[%s2784 + $0x129] sm:$0xff]
      %v3205 = vld [vmem:[%s2784 + $0x139] sm:$0xff]
      %v3206 = vld [vmem:[%s2784 + $0x141] sm:$0xff]
      %v3207 = vld [vmem:[%s2784 + $0x151] sm:$0xff]
      %v3208 = vld [vmem:[%s2784 + $0x159] sm:$0xff]
      %v3209 = vld [vmem:[%s2784 + $0x169] sm:$0xff]
      %v3210 = vld [vmem:[%s2784 + $0x171] sm:$0xff]
      %s3211 = scalar_lea.vmem %s3, 448
      %v3212 = vld [vmem:[%s3211] sm:$0xff]
      %v3213 = vld [vmem:[%s3211 + $0x8] sm:$0xff]
      %v3214 = vld [vmem:[%s3211 + $0x10] sm:$0xff]
      %v3215 = vld [vmem:[%s3211 + $0x18] sm:$0xff]
      %v3216 = vld [vmem:[%s3211 + $0x20] sm:$0xff]
      %v3217 = vld [vmem:[%s3211 + $0x28] sm:$0xff]
      %v3218 = vld [vmem:[%s3211 + $0x30] sm:$0xff]
      %v3219 = vld [vmem:[%s3211 + $0x38] sm:$0xff]
      %v3221 = vsel %vm410, %v3179, 0
      %v3224 = vsel %vm410, %v3180, 0
      %v3227 = vsel %vm410, %v3181, 0
      %v3230 = vsel %vm410, %v3182, 0
      %v3233 = vsel %vm410, %v3183, 0
      %v3236 = vsel %vm410, %v3184, 0
      %v3239 = vsel %vm410, %v3185, 0
      %v3242 = vsel %vm410, %v3186, 0
      %v3245 = vsel %vm410, %v3187, 0
      %v3248 = vsel %vm410, %v3188, 0
      %v3251 = vsel %vm410, %v3189, 0
      %v3254 = vsel %vm410, %v3190, 0
      %v3257 = vsel %vm410, %v3191, 0
      %v3260 = vsel %vm410, %v3192, 0
      %v3263 = vsel %vm410, %v3193, 0
      %v3266 = vsel %vm410, %v3194, 0
      %v3269 = vsel %vm410, %v3195, 0
      %v3272 = vsel %vm410, %v3196, 0
      %v3275 = vsel %vm410, %v3197, 0
      %v3278 = vsel %vm410, %v3198, 0
      %v3281 = vsel %vm410, %v3199, 0
      %v3284 = vsel %vm410, %v3200, 0
      %v3287 = vsel %vm410, %v3201, 0
      %v3290 = vsel %vm410, %v3202, 0
      %v3293 = vsel %vm410, %v3203, 0
      %v3296 = vsel %vm410, %v3204, 0
      %v3299 = vsel %vm410, %v3205, 0
      %v3302 = vsel %vm410, %v3206, 0
      %v3305 = vsel %vm410, %v3207, 0
      %v3308 = vsel %vm410, %v3208, 0
      %v3311 = vsel %vm410, %v3209, 0
      %v3314 = vsel %vm410, %v3210, 0
      %3316 = vmatprep.subr.mxu0 0.0
      %3317 = vmatpush1.msra.mxu0 %v3212
      %3318 = vmatprep.subr.mxu0 0.0
      %3319 = vmatpush1.msra.mxu0 %v3213
      %3320 = vmatprep.subr.mxu0 0.0
      %3321 = vmatpush1.msra.mxu0 %v3214
      %3322 = vmatprep.subr.mxu0 0.0
      %3323 = vmatpush1.msra.mxu0 %v3215
      %3324 = vmatprep.subr.mxu0 0.0
      %3325 = vmatpush1.msra.mxu0 %v3216
      %3326 = vmatprep.subr.mxu0 0.0
      %3327 = vmatpush1.msra.mxu0 %v3217
      %3328 = vmatprep.subr.mxu0 0.0
      %3329 = vmatpush1.msra.mxu0 %v3218
      %3330 = vmatprep.subr.mxu0 0.0
      %3331 = vmatpush1.msra.mxu0 %v3219
      %3332 = vmatprep.subr.mxu0 0.0
      %3333 = vmatpush1.msra.mxu0 0.0
      %3334 = vmatprep.subr.mxu0 0.0
      %3335 = vmatpush1.msra.mxu0 0.0
      %3336 = vmatprep.subr.mxu0 0.0
      %3337 = vmatpush1.msra.mxu0 0.0
      %3338 = vmatprep.subr.mxu0 0.0
      %3339 = vmatpush1.msra.mxu0 0.0
      %3340 = vmatprep.subr.mxu0 0.0
      %3341 = vmatpush1.msra.mxu0 0.0
      %3342 = vmatprep.subr.mxu0 0.0
      %3343 = vmatpush1.msra.mxu0 0.0
      %3344 = vmatprep.subr.mxu0 0.0
      %3345 = vmatpush1.msra.mxu0 0.0
      %3346 = vmatprep.subr.mxu0 0.0
      %3347 = vmatpush1.msra.mxu0 0.0
      %3348 = vmatprep.subr.mxu0 0.0
      %3349 = vmatpush1.msra.mxu0 0.0
      %3350 = vmatprep.subr.mxu0 0.0
      %3351 = vmatpush1.msra.mxu0 0.0
      %3352 = vmatprep.subr.mxu0 0.0
      %3353 = vmatpush1.msra.mxu0 0.0
      %3354 = vmatprep.subr.mxu0 0.0
      %3355 = vmatpush1.msra.mxu0 0.0
      %3356 = vmatprep.subr.mxu0 0.0
      %3357 = vmatpush1.msra.mxu0 0.0
      %3358 = vmatprep.subr.mxu0 0.0
      %3359 = vmatpush1.msra.mxu0 0.0
      %3360 = vmatprep.subr.mxu0 0.0
      %3361 = vmatpush1.msra.mxu0 0.0
      %3362 = vmatprep.subr.mxu0 0.0
      %3363 = vmatpush1.msra.mxu0 0.0
      %3364 = vmatprep.subr.mxu0 0.0
      %3365 = vmatpush1.msra.mxu0 0.0
      %3366 = vmatprep.subr.mxu0 0.0
      %3367 = vmatpush1.msra.mxu0 0.0
      %3368 = vmatprep.subr.mxu0 0.0
      %3369 = vmatpush1.msra.mxu0 0.0
      %3370 = vmatprep.subr.mxu0 0.0
      %3371 = vmatpush1.msra.mxu0 0.0
      %3372 = vmatprep.subr.mxu0 0.0
      %3373 = vmatpush1.msra.mxu0 0.0
      %3374 = vmatprep.subr.mxu0 0.0
      %3375 = vmatpush1.msra.mxu0 0.0
      %3376 = vmatprep.subr.mxu0 0.0
      %3377 = vmatpush1.msra.mxu0 0.0
      %3378 = vmatprep.subr.mxu0 0.0
      %3379 = vmatpush1.msra.mxu0 0.0
      %3380 = vmatprep.mubr.f32.mxu0 0.0
      %3381 = vmatmul.mubr.f32.gmra.mrb[0].mxu0 %v3221
      %v3382 = vpop.f32.mrb[0].mxu0
      %v3383 = vadd.f32 0.0, %v3382
      %v3384 = vpop.f32.mrb[0].mxu0
      %3385 = vmatprep.mubr.f32.mxu0 0.0
      %3386 = vmatmul.mubr.f32.gmra.mrb[0].mxu0 %v3224
      %v3387 = vpop.f32.mrb[0].mxu0
      %v3388 = vadd.f32 0.0, %v3387
      %v3389 = vpop.f32.mrb[0].mxu0
      %3390 = vmatprep.mubr.f32.mxu0 0.0
      %3391 = vmatmul.mubr.f32.gmra.mrb[0].mxu0 %v3227
      %v3392 = vpop.f32.mrb[0].mxu0
      %v3393 = vadd.f32 0.0, %v3392
      %v3394 = vpop.f32.mrb[0].mxu0
      %3395 = vmatprep.mubr.f32.mxu0 0.0
      %3396 = vmatmul.mubr.f32.gmra.mrb[0].mxu0 %v3230
      %v3397 = vpop.f32.mrb[0].mxu0
      %v3398 = vadd.f32 0.0, %v3397
      %v3399 = vpop.f32.mrb[0].mxu0
      %3400 = vmatprep.mubr.f32.mxu0 0.0
      %3401 = vmatmul.mubr.f32.gmra.mrb[0].mxu0 %v3233
      %v3402 = vpop.f32.mrb[0].mxu0
      %v3403 = vadd.f32 0.0, %v3402
      %v3404 = vpop.f32.mrb[0].mxu0
      %3405 = vmatprep.mubr.f32.mxu0 0.0
      %3406 = vmatmul.mubr.f32.gmra.mrb[0].mxu0 %v3236
      %v3407 = vpop.f32.mrb[0].mxu0
      %v3408 = vadd.f32 0.0, %v3407
      %v3409 = vpop.f32.mrb[0].mxu0
      %3410 = vmatprep.mubr.f32.mxu0 0.0
      %3411 = vmatmul.mubr.f32.gmra.mrb[0].mxu0 %v3239
      %v3412 = vpop.f32.mrb[0].mxu0
      %v3413 = vadd.f32 0.0, %v3412
      %v3414 = vpop.f32.mrb[0].mxu0
      %3415 = vmatprep.mubr.f32.mxu0 0.0
      %3416 = vmatmul.mubr.f32.gmra.mrb[0].mxu0 %v3242
      %v3417 = vpop.f32.mrb[0].mxu0
      %v3418 = vadd.f32 0.0, %v3417
      %v3419 = vpop.f32.mrb[0].mxu0
      %3420 = vmatprep.mubr.f32.mxu0 0.0
      %3421 = vmatmul.mubr.f32.gmra.mrb[0].mxu0 %v3245
      %v3422 = vpop.f32.mrb[0].mxu0
      %v3423 = vadd.f32 0.0, %v3422
      %v3424 = vpop.f32.mrb[0].mxu0
      %3425 = vmatprep.mubr.f32.mxu0 0.0
      %3426 = vmatmul.mubr.f32.gmra.mrb[0].mxu0 %v3248
      %v3427 = vpop.f32.mrb[0].mxu0
      %v3428 = vadd.f32 0.0, %v3427
      %v3429 = vpop.f32.mrb[0].mxu0
      %3430 = vmatprep.mubr.f32.mxu0 0.0
      %3431 = vmatmul.mubr.f32.gmra.mrb[0].mxu0 %v3251
      %v3432 = vpop.f32.mrb[0].mxu0
      %v3433 = vadd.f32 0.0, %v3432
      %v3434 = vpop.f32.mrb[0].mxu0
      %3435 = vmatprep.mubr.f32.mxu0 0.0
      %3436 = vmatmul.mubr.f32.gmra.mrb[0].mxu0 %v3254
      %v3437 = vpop.f32.mrb[0].mxu0
      %v3438 = vadd.f32 0.0, %v3437
      %v3439 = vpop.f32.mrb[0].mxu0
      %3440 = vmatprep.mubr.f32.mxu0 0.0
      %3441 = vmatmul.mubr.f32.gmra.mrb[0].mxu0 %v3257
      %v3442 = vpop.f32.mrb[0].mxu0
      %v3443 = vadd.f32 0.0, %v3442
      %v3444 = vpop.f32.mrb[0].mxu0
      %3445 = vmatprep.mubr.f32.mxu0 0.0
      %3446 = vmatmul.mubr.f32.gmra.mrb[0].mxu0 %v3260
      %v3447 = vpop.f32.mrb[0].mxu0
      %v3448 = vadd.f32 0.0, %v3447
      %v3449 = vpop.f32.mrb[0].mxu0
      %3450 = vmatprep.mubr.f32.mxu0 0.0
      %3451 = vmatmul.mubr.f32.gmra.mrb[0].mxu0 %v3263
      %v3452 = vpop.f32.mrb[0].mxu0
      %v3453 = vadd.f32 0.0, %v3452
      %v3454 = vpop.f32.mrb[0].mxu0
      %3455 = vmatprep.mubr.f32.mxu0 0.0
      %3456 = vmatmul.mubr.f32.gmra.mrb[0].mxu0 %v3266
      %v3457 = vpop.f32.mrb[0].mxu0
      %v3458 = vadd.f32 0.0, %v3457
      %v3459 = vpop.f32.mrb[0].mxu0
      %3460 = vmatprep.mubr.f32.mxu0 0.0
      %3461 = vmatmul.mubr.f32.gmra.mrb[0].mxu0 %v3269
      %v3462 = vpop.f32.mrb[0].mxu0
      %v3463 = vadd.f32 0.0, %v3462
      %v3464 = vpop.f32.mrb[0].mxu0
      %3465 = vmatprep.mubr.f32.mxu0 0.0
      %3466 = vmatmul.mubr.f32.gmra.mrb[0].mxu0 %v3272
      %v3467 = vpop.f32.mrb[0].mxu0
      %v3468 = vadd.f32 0.0, %v3467
      %v3469 = vpop.f32.mrb[0].mxu0
      %3470 = vmatprep.mubr.f32.mxu0 0.0
      %3471 = vmatmul.mubr.f32.gmra.mrb[0].mxu0 %v3275
      %v3472 = vpop.f32.mrb[0].mxu0
      %v3473 = vadd.f32 0.0, %v3472
      %v3474 = vpop.f32.mrb[0].mxu0
      %3475 = vmatprep.mubr.f32.mxu0 0.0
      %3476 = vmatmul.mubr.f32.gmra.mrb[0].mxu0 %v3278
      %v3477 = vpop.f32.mrb[0].mxu0
      %v3478 = vadd.f32 0.0, %v3477
      %v3479 = vpop.f32.mrb[0].mxu0
      %3480 = vmatprep.mubr.f32.mxu0 0.0
      %3481 = vmatmul.mubr.f32.gmra.mrb[0].mxu0 %v3281
      %v3482 = vpop.f32.mrb[0].mxu0
      %v3483 = vadd.f32 0.0, %v3482
      %v3484 = vpop.f32.mrb[0].mxu0
      %3485 = vmatprep.mubr.f32.mxu0 0.0
      %3486 = vmatmul.mubr.f32.gmra.mrb[0].mxu0 %v3284
      %v3487 = vpop.f32.mrb[0].mxu0
      %v3488 = vadd.f32 0.0, %v3487
      %v3489 = vpop.f32.mrb[0].mxu0
      %3490 = vmatprep.mubr.f32.mxu0 0.0
      %3491 = vmatmul.mubr.f32.gmra.mrb[0].mxu0 %v3287
      %v3492 = vpop.f32.mrb[0].mxu0
      %v3493 = vadd.f32 0.0, %v3492
      %v3494 = vpop.f32.mrb[0].mxu0
      %3495 = vmatprep.mubr.f32.mxu0 0.0
      %3496 = vmatmul.mubr.f32.gmra.mrb[0].mxu0 %v3290
      %v3497 = vpop.f32.mrb[0].mxu0
      %v3498 = vadd.f32 0.0, %v3497
      %v3499 = vpop.f32.mrb[0].mxu0
      %3500 = vmatprep.mubr.f32.mxu0 0.0
      %3501 = vmatmul.mubr.f32.gmra.mrb[0].mxu0 %v3293
      %v3502 = vpop.f32.mrb[0].mxu0
      %v3503 = vadd.f32 0.0, %v3502
      %v3504 = vpop.f32.mrb[0].mxu0
      %3505 = vmatprep.mubr.f32.mxu0 0.0
      %3506 = vmatmul.mubr.f32.gmra.mrb[0].mxu0 %v3296
      %v3507 = vpop.f32.mrb[0].mxu0
      %v3508 = vadd.f32 0.0, %v3507
      %v3509 = vpop.f32.mrb[0].mxu0
      %3510 = vmatprep.mubr.f32.mxu0 0.0
      %3511 = vmatmul.mubr.f32.gmra.mrb[0].mxu0 %v3299
      %v3512 = vpop.f32.mrb[0].mxu0
      %v3513 = vadd.f32 0.0, %v3512
      %v3514 = vpop.f32.mrb[0].mxu0
      %3515 = vmatprep.mubr.f32.mxu0 0.0
      %3516 = vmatmul.mubr.f32.gmra.mrb[0].mxu0 %v3302
      %v3517 = vpop.f32.mrb[0].mxu0
      %v3518 = vadd.f32 0.0, %v3517
      %v3519 = vpop.f32.mrb[0].mxu0
      %3520 = vmatprep.mubr.f32.mxu0 0.0
      %3521 = vmatmul.mubr.f32.gmra.mrb[0].mxu0 %v3305
      %v3522 = vpop.f32.mrb[0].mxu0
      %v3523 = vadd.f32 0.0, %v3522
      %v3524 = vpop.f32.mrb[0].mxu0
      %3525 = vmatprep.mubr.f32.mxu0 0.0
      %3526 = vmatmul.mubr.f32.gmra.mrb[0].mxu0 %v3308
      %v3527 = vpop.f32.mrb[0].mxu0
      %v3528 = vadd.f32 0.0, %v3527
      %v3529 = vpop.f32.mrb[0].mxu0
      %3530 = vmatprep.mubr.f32.mxu0 0.0
      %3531 = vmatmul.mubr.f32.gmra.mrb[0].mxu0 %v3311
      %v3532 = vpop.f32.mrb[0].mxu0
      %v3533 = vadd.f32 0.0, %v3532
      %v3534 = vpop.f32.mrb[0].mxu0
      %3535 = vmatprep.mubr.f32.mxu0 0.0
      %3536 = vmatmul.mubr.f32.gmra.mrb[0].mxu0 %v3314
      %v3537 = vpop.f32.mrb[0].mxu0
      %v3538 = vadd.f32 0.0, %v3537
      %v3539 = vpop.f32.mrb[0].mxu0
      %3540 = vdwg.mxu0
      %v3541 = vadd.f32 %v3147, %v3383
      %v3542 = vadd.f32 %v3148, %v3388
      %v3543 = vadd.f32 %v3149, %v3393
      %v3544 = vadd.f32 %v3150, %v3398
      %v3545 = vadd.f32 %v3151, %v3403
      %v3546 = vadd.f32 %v3152, %v3408
      %v3547 = vadd.f32 %v3153, %v3413
      %v3548 = vadd.f32 %v3154, %v3418
      %v3549 = vadd.f32 %v3155, %v3423
      %v3550 = vadd.f32 %v3156, %v3428
      %v3551 = vadd.f32 %v3157, %v3433
      %v3552 = vadd.f32 %v3158, %v3438
      %v3553 = vadd.f32 %v3159, %v3443
      %v3554 = vadd.f32 %v3160, %v3448
      %v3555 = vadd.f32 %v3161, %v3453
      %v3556 = vadd.f32 %v3162, %v3458
      %v3557 = vadd.f32 %v3163, %v3463
      %v3558 = vadd.f32 %v3164, %v3468
      %v3559 = vadd.f32 %v3165, %v3473
      %v3560 = vadd.f32 %v3166, %v3478
      %v3561 = vadd.f32 %v3167, %v3483
      %v3562 = vadd.f32 %v3168, %v3488
      %v3563 = vadd.f32 %v3169, %v3493
      %v3564 = vadd.f32 %v3170, %v3498
      %v3565 = vadd.f32 %v3171, %v3503
      %v3566 = vadd.f32 %v3172, %v3508
      %v3567 = vadd.f32 %v3173, %v3513
      %v3568 = vadd.f32 %v3174, %v3518
      %v3569 = vadd.f32 %v3175, %v3523
      %v3570 = vadd.f32 %v3176, %v3528
      %v3571 = vadd.f32 %v3177, %v3533
      %v3572 = vadd.f32 %v3178, %v3538
      %v3573 = vld [vmem:[%s2784 + $0x2] sm:$0xff]
      %v3574 = vld [vmem:[%s2784 + $0xa] sm:$0xff]
      %v3575 = vld [vmem:[%s2784 + $0x1a] sm:$0xff]
      %v3576 = vld [vmem:[%s2784 + $0x22] sm:$0xff]
      %v3577 = vld [vmem:[%s2784 + $0x32] sm:$0xff]
      %v3578 = vld [vmem:[%s2784 + $0x3a] sm:$0xff]
      %v3579 = vld [vmem:[%s2784 + $0x4a] sm:$0xff]
      %v3580 = vld [vmem:[%s2784 + $0x52] sm:$0xff]
      %v3581 = vld [vmem:[%s2784 + $0x62] sm:$0xff]
      %v3582 = vld [vmem:[%s2784 + $0x6a] sm:$0xff]
      %v3583 = vld [vmem:[%s2784 + $0x7a] sm:$0xff]
      %v3584 = vld [vmem:[%s2784 + $0x82] sm:$0xff]
      %v3585 = vld [vmem:[%s2784 + $0x92] sm:$0xff]
      %v3586 = vld [vmem:[%s2784 + $0x9a] sm:$0xff]
      %v3587 = vld [vmem:[%s2784 + $0xaa] sm:$0xff]
      %v3588 = vld [vmem:[%s2784 + $0xb2] sm:$0xff]
      %v3589 = vld [vmem:[%s2784 + $0xc2] sm:$0xff]
      %v3590 = vld [vmem:[%s2784 + $0xca] sm:$0xff]
      %v3591 = vld [vmem:[%s2784 + $0xda] sm:$0xff]
      %v3592 = vld [vmem:[%s2784 + $0xe2] sm:$0xff]
      %v3593 = vld [vmem:[%s2784 + $0xf2] sm:$0xff]
      %v3594 = vld [vmem:[%s2784 + $0xfa] sm:$0xff]
      %v3595 = vld [vmem:[%s2784 + $0x10a] sm:$0xff]
      %v3596 = vld [vmem:[%s2784 + $0x112] sm:$0xff]
      %v3597 = vld [vmem:[%s2784 + $0x122] sm:$0xff]
      %v3598 = vld [vmem:[%s2784 + $0x12a] sm:$0xff]
      %v3599 = vld [vmem:[%s2784 + $0x13a] sm:$0xff]
      %v3600 = vld [vmem:[%s2784 + $0x142] sm:$0xff]
      %v3601 = vld [vmem:[%s2784 + $0x152] sm:$0xff]
      %v3602 = vld [vmem:[%s2784 + $0x15a] sm:$0xff]
      %v3603 = vld [vmem:[%s2784 + $0x16a] sm:$0xff]
      %v3604 = vld [vmem:[%s2784 + $0x172] sm:$0xff]
      %s3605 = scalar_lea.vmem %s3, 512
      %v3606 = vld [vmem:[%s3605] sm:$0xff]
      %v3607 = vld [vmem:[%s3605 + $0x8] sm:$0xff]
      %v3608 = vld [vmem:[%s3605 + $0x10] sm:$0xff]
      %v3609 = vld [vmem:[%s3605 + $0x18] sm:$0xff]
      %v3610 = vld [vmem:[%s3605 + $0x20] sm:$0xff]
      %v3611 = vld [vmem:[%s3605 + $0x28] sm:$0xff]
      %v3612 = vld [vmem:[%s3605 + $0x30] sm:$0xff]
      %v3613 = vld [vmem:[%s3605 + $0x38] sm:$0xff]
      %v3615 = vsel %vm410, %v3573, 0
      %v3618 = vsel %vm410, %v3574, 0
      %v3621 = vsel %vm410, %v3575, 0
      %v3624 = vsel %vm410, %v3576, 0
      %v3627 = vsel %vm410, %v3577, 0
      %v3630 = vsel %vm410, %v3578, 0
      %v3633 = vsel %vm410, %v3579, 0
      %v3636 = vsel %vm410, %v3580, 0
      %v3639 = vsel %vm410, %v3581, 0
      %v3642 = vsel %vm410, %v3582, 0
      %v3645 = vsel %vm410, %v3583, 0
      %v3648 = vsel %vm410, %v3584, 0
      %v3651 = vsel %vm410, %v3585, 0
      %v3654 = vsel %vm410, %v3586, 0
      %v3657 = vsel %vm410, %v3587, 0
      %v3660 = vsel %vm410, %v3588, 0
      %v3663 = vsel %vm410, %v3589, 0
      %v3666 = vsel %vm410, %v3590, 0
      %v3669 = vsel %vm410, %v3591, 0
      %v3672 = vsel %vm410, %v3592, 0
      %v3675 = vsel %vm410, %v3593, 0
      %v3678 = vsel %vm410, %v3594, 0
      %v3681 = vsel %vm410, %v3595, 0
      %v3684 = vsel %vm410, %v3596, 0
      %v3687 = vsel %vm410, %v3597, 0
      %v3690 = vsel %vm410, %v3598, 0
      %v3693 = vsel %vm410, %v3599, 0
      %v3696 = vsel %vm410, %v3600, 0
      %v3699 = vsel %vm410, %v3601, 0
      %v3702 = vsel %vm410, %v3602, 0
      %v3705 = vsel %vm410, %v3603, 0
      %v3708 = vsel %vm410, %v3604, 0
      %3710 = vmatprep.subr.mxu0 0.0
      %3711 = vmatpush1.msra.mxu0 %v3606
      %3712 = vmatprep.subr.mxu0 0.0
      %3713 = vmatpush1.msra.mxu0 %v3607
      %3714 = vmatprep.subr.mxu0 0.0
      %3715 = vmatpush1.msra.mxu0 %v3608
      %3716 = vmatprep.subr.mxu0 0.0
      %3717 = vmatpush1.msra.mxu0 %v3609
      %3718 = vmatprep.subr.mxu0 0.0
      %3719 = vmatpush1.msra.mxu0 %v3610
      %3720 = vmatprep.subr.mxu0 0.0
      %3721 = vmatpush1.msra.mxu0 %v3611
      %3722 = vmatprep.subr.mxu0 0.0
      %3723 = vmatpush1.msra.mxu0 %v3612
      %3724 = vmatprep.subr.mxu0 0.0
      %3725 = vmatpush1.msra.mxu0 %v3613
      %3726 = vmatprep.subr.mxu0 0.0
      %3727 = vmatpush1.msra.mxu0 0.0
      %3728 = vmatprep.subr.mxu0 0.0
      %3729 = vmatpush1.msra.mxu0 0.0
      %3730 = vmatprep.subr.mxu0 0.0
      %3731 = vmatpush1.msra.mxu0 0.0
      %3732 = vmatprep.subr.mxu0 0.0
      %3733 = vmatpush1.msra.mxu0 0.0
      %3734 = vmatprep.subr.mxu0 0.0
      %3735 = vmatpush1.msra.mxu0 0.0
      %3736 = vmatprep.subr.mxu0 0.0
      %3737 = vmatpush1.msra.mxu0 0.0
      %3738 = vmatprep.subr.mxu0 0.0
      %3739 = vmatpush1.msra.mxu0 0.0
      %3740 = vmatprep.subr.mxu0 0.0
      %3741 = vmatpush1.msra.mxu0 0.0
      %3742 = vmatprep.subr.mxu0 0.0
      %3743 = vmatpush1.msra.mxu0 0.0
      %3744 = vmatprep.subr.mxu0 0.0
      %3745 = vmatpush1.msra.mxu0 0.0
      %3746 = vmatprep.subr.mxu0 0.0
      %3747 = vmatpush1.msra.mxu0 0.0
      %3748 = vmatprep.subr.mxu0 0.0
      %3749 = vmatpush1.msra.mxu0 0.0
      %3750 = vmatprep.subr.mxu0 0.0
      %3751 = vmatpush1.msra.mxu0 0.0
      %3752 = vmatprep.subr.mxu0 0.0
      %3753 = vmatpush1.msra.mxu0 0.0
      %3754 = vmatprep.subr.mxu0 0.0
      %3755 = vmatpush1.msra.mxu0 0.0
      %3756 = vmatprep.subr.mxu0 0.0
      %3757 = vmatpush1.msra.mxu0 0.0
      %3758 = vmatprep.subr.mxu0 0.0
      %3759 = vmatpush1.msra.mxu0 0.0
      %3760 = vmatprep.subr.mxu0 0.0
      %3761 = vmatpush1.msra.mxu0 0.0
      %3762 = vmatprep.subr.mxu0 0.0
      %3763 = vmatpush1.msra.mxu0 0.0
      %3764 = vmatprep.subr.mxu0 0.0
      %3765 = vmatpush1.msra.mxu0 0.0
      %3766 = vmatprep.subr.mxu0 0.0
      %3767 = vmatpush1.msra.mxu0 0.0
      %3768 = vmatprep.subr.mxu0 0.0
      %3769 = vmatpush1.msra.mxu0 0.0
      %3770 = vmatprep.subr.mxu0 0.0
      %3771 = vmatpush1.msra.mxu0 0.0
      %3772 = vmatprep.subr.mxu0 0.0
      %3773 = vmatpush1.msra.mxu0 0.0
      %3774 = vmatprep.mubr.f32.mxu0 0.0
      %3775 = vmatmul.mubr.f32.gmra.mrb[0].mxu0 %v3615
      %v3776 = vpop.f32.mrb[0].mxu0
      %v3777 = vadd.f32 0.0, %v3776
      %v3778 = vpop.f32.mrb[0].mxu0
      %3779 = vmatprep.mubr.f32.mxu0 0.0
      %3780 = vmatmul.mubr.f32.gmra.mrb[0].mxu0 %v3618
      %v3781 = vpop.f32.mrb[0].mxu0
      %v3782 = vadd.f32 0.0, %v3781
      %v3783 = vpop.f32.mrb[0].mxu0
      %3784 = vmatprep.mubr.f32.mxu0 0.0
      %3785 = vmatmul.mubr.f32.gmra.mrb[0].mxu0 %v3621
      %v3786 = vpop.f32.mrb[0].mxu0
      %v3787 = vadd.f32 0.0, %v3786
      %v3788 = vpop.f32.mrb[0].mxu0
      %3789 = vmatprep.mubr.f32.mxu0 0.0
      %3790 = vmatmul.mubr.f32.gmra.mrb[0].mxu0 %v3624
      %v3791 = vpop.f32.mrb[0].mxu0
      %v3792 = vadd.f32 0.0, %v3791
      %v3793 = vpop.f32.mrb[0].mxu0
      %3794 = vmatprep.mubr.f32.mxu0 0.0
      %3795 = vmatmul.mubr.f32.gmra.mrb[0].mxu0 %v3627
      %v3796 = vpop.f32.mrb[0].mxu0
      %v3797 = vadd.f32 0.0, %v3796
      %v3798 = vpop.f32.mrb[0].mxu0
      %3799 = vmatprep.mubr.f32.mxu0 0.0
      %3800 = vmatmul.mubr.f32.gmra.mrb[0].mxu0 %v3630
      %v3801 = vpop.f32.mrb[0].mxu0
      %v3802 = vadd.f32 0.0, %v3801
      %v3803 = vpop.f32.mrb[0].mxu0
      %3804 = vmatprep.mubr.f32.mxu0 0.0
      %3805 = vmatmul.mubr.f32.gmra.mrb[0].mxu0 %v3633
      %v3806 = vpop.f32.mrb[0].mxu0
      %v3807 = vadd.f32 0.0, %v3806
      %v3808 = vpop.f32.mrb[0].mxu0
      %3809 = vmatprep.mubr.f32.mxu0 0.0
      %3810 = vmatmul.mubr.f32.gmra.mrb[0].mxu0 %v3636
      %v3811 = vpop.f32.mrb[0].mxu0
      %v3812 = vadd.f32 0.0, %v3811
      %v3813 = vpop.f32.mrb[0].mxu0
      %3814 = vmatprep.mubr.f32.mxu0 0.0
      %3815 = vmatmul.mubr.f32.gmra.mrb[0].mxu0 %v3639
      %v3816 = vpop.f32.mrb[0].mxu0
      %v3817 = vadd.f32 0.0, %v3816
      %v3818 = vpop.f32.mrb[0].mxu0
      %3819 = vmatprep.mubr.f32.mxu0 0.0
      %3820 = vmatmul.mubr.f32.gmra.mrb[0].mxu0 %v3642
      %v3821 = vpop.f32.mrb[0].mxu0
      %v3822 = vadd.f32 0.0, %v3821
      %v3823 = vpop.f32.mrb[0].mxu0
      %3824 = vmatprep.mubr.f32.mxu0 0.0
      %3825 = vmatmul.mubr.f32.gmra.mrb[0].mxu0 %v3645
      %v3826 = vpop.f32.mrb[0].mxu0
      %v3827 = vadd.f32 0.0, %v3826
      %v3828 = vpop.f32.mrb[0].mxu0
      %3829 = vmatprep.mubr.f32.mxu0 0.0
      %3830 = vmatmul.mubr.f32.gmra.mrb[0].mxu0 %v3648
      %v3831 = vpop.f32.mrb[0].mxu0
      %v3832 = vadd.f32 0.0, %v3831
      %v3833 = vpop.f32.mrb[0].mxu0
      %3834 = vmatprep.mubr.f32.mxu0 0.0
      %3835 = vmatmul.mubr.f32.gmra.mrb[0].mxu0 %v3651
      %v3836 = vpop.f32.mrb[0].mxu0
      %v3837 = vadd.f32 0.0, %v3836
      %v3838 = vpop.f32.mrb[0].mxu0
      %3839 = vmatprep.mubr.f32.mxu0 0.0
      %3840 = vmatmul.mubr.f32.gmra.mrb[0].mxu0 %v3654
      %v3841 = vpop.f32.mrb[0].mxu0
      %v3842 = vadd.f32 0.0, %v3841
      %v3843 = vpop.f32.mrb[0].mxu0
      %3844 = vmatprep.mubr.f32.mxu0 0.0
      %3845 = vmatmul.mubr.f32.gmra.mrb[0].mxu0 %v3657
      %v3846 = vpop.f32.mrb[0].mxu0
      %v3847 = vadd.f32 0.0, %v3846
      %v3848 = vpop.f32.mrb[0].mxu0
      %3849 = vmatprep.mubr.f32.mxu0 0.0
      %3850 = vmatmul.mubr.f32.gmra.mrb[0].mxu0 %v3660
      %v3851 = vpop.f32.mrb[0].mxu0
      %v3852 = vadd.f32 0.0, %v3851
      %v3853 = vpop.f32.mrb[0].mxu0
      %3854 = vmatprep.mubr.f32.mxu0 0.0
      %3855 = vmatmul.mubr.f32.gmra.mrb[0].mxu0 %v3663
      %v3856 = vpop.f32.mrb[0].mxu0
      %v3857 = vadd.f32 0.0, %v3856
      %v3858 = vpop.f32.mrb[0].mxu0
      %3859 = vmatprep.mubr.f32.mxu0 0.0
      %3860 = vmatmul.mubr.f32.gmra.mrb[0].mxu0 %v3666
      %v3861 = vpop.f32.mrb[0].mxu0
      %v3862 = vadd.f32 0.0, %v3861
      %v3863 = vpop.f32.mrb[0].mxu0
      %3864 = vmatprep.mubr.f32.mxu0 0.0
      %3865 = vmatmul.mubr.f32.gmra.mrb[0].mxu0 %v3669
      %v3866 = vpop.f32.mrb[0].mxu0
      %v3867 = vadd.f32 0.0, %v3866
      %v3868 = vpop.f32.mrb[0].mxu0
      %3869 = vmatprep.mubr.f32.mxu0 0.0
      %3870 = vmatmul.mubr.f32.gmra.mrb[0].mxu0 %v3672
      %v3871 = vpop.f32.mrb[0].mxu0
      %v3872 = vadd.f32 0.0, %v3871
      %v3873 = vpop.f32.mrb[0].mxu0
      %3874 = vmatprep.mubr.f32.mxu0 0.0
      %3875 = vmatmul.mubr.f32.gmra.mrb[0].mxu0 %v3675
      %v3876 = vpop.f32.mrb[0].mxu0
      %v3877 = vadd.f32 0.0, %v3876
      %v3878 = vpop.f32.mrb[0].mxu0
      %3879 = vmatprep.mubr.f32.mxu0 0.0
      %3880 = vmatmul.mubr.f32.gmra.mrb[0].mxu0 %v3678
      %v3881 = vpop.f32.mrb[0].mxu0
      %v3882 = vadd.f32 0.0, %v3881
      %v3883 = vpop.f32.mrb[0].mxu0
      %3884 = vmatprep.mubr.f32.mxu0 0.0
      %3885 = vmatmul.mubr.f32.gmra.mrb[0].mxu0 %v3681
      %v3886 = vpop.f32.mrb[0].mxu0
      %v3887 = vadd.f32 0.0, %v3886
      %v3888 = vpop.f32.mrb[0].mxu0
      %3889 = vmatprep.mubr.f32.mxu0 0.0
      %3890 = vmatmul.mubr.f32.gmra.mrb[0].mxu0 %v3684
      %v3891 = vpop.f32.mrb[0].mxu0
      %v3892 = vadd.f32 0.0, %v3891
      %v3893 = vpop.f32.mrb[0].mxu0
      %3894 = vmatprep.mubr.f32.mxu0 0.0
      %3895 = vmatmul.mubr.f32.gmra.mrb[0].mxu0 %v3687
      %v3896 = vpop.f32.mrb[0].mxu0
      %v3897 = vadd.f32 0.0, %v3896
      %v3898 = vpop.f32.mrb[0].mxu0
      %3899 = vmatprep.mubr.f32.mxu0 0.0
      %3900 = vmatmul.mubr.f32.gmra.mrb[0].mxu0 %v3690
      %v3901 = vpop.f32.mrb[0].mxu0
      %v3902 = vadd.f32 0.0, %v3901
      %v3903 = vpop.f32.mrb[0].mxu0
      %3904 = vmatprep.mubr.f32.mxu0 0.0
      %3905 = vmatmul.mubr.f32.gmra.mrb[0].mxu0 %v3693
      %v3906 = vpop.f32.mrb[0].mxu0
      %v3907 = vadd.f32 0.0, %v3906
      %v3908 = vpop.f32.mrb[0].mxu0
      %3909 = vmatprep.mubr.f32.mxu0 0.0
      %3910 = vmatmul.mubr.f32.gmra.mrb[0].mxu0 %v3696
      %v3911 = vpop.f32.mrb[0].mxu0
      %v3912 = vadd.f32 0.0, %v3911
      %v3913 = vpop.f32.mrb[0].mxu0
      %3914 = vmatprep.mubr.f32.mxu0 0.0
      %3915 = vmatmul.mubr.f32.gmra.mrb[0].mxu0 %v3699
      %v3916 = vpop.f32.mrb[0].mxu0
      %v3917 = vadd.f32 0.0, %v3916
      %v3918 = vpop.f32.mrb[0].mxu0
      %3919 = vmatprep.mubr.f32.mxu0 0.0
      %3920 = vmatmul.mubr.f32.gmra.mrb[0].mxu0 %v3702
      %v3921 = vpop.f32.mrb[0].mxu0
      %v3922 = vadd.f32 0.0, %v3921
      %v3923 = vpop.f32.mrb[0].mxu0
      %3924 = vmatprep.mubr.f32.mxu0 0.0
      %3925 = vmatmul.mubr.f32.gmra.mrb[0].mxu0 %v3705
      %v3926 = vpop.f32.mrb[0].mxu0
      %v3927 = vadd.f32 0.0, %v3926
      %v3928 = vpop.f32.mrb[0].mxu0
      %3929 = vmatprep.mubr.f32.mxu0 0.0
      %3930 = vmatmul.mubr.f32.gmra.mrb[0].mxu0 %v3708
      %v3931 = vpop.f32.mrb[0].mxu0
      %v3932 = vadd.f32 0.0, %v3931
      %v3933 = vpop.f32.mrb[0].mxu0
      %3934 = vdwg.mxu0
      %v3935 = vadd.f32 %v3541, %v3777
      %v3936 = vadd.f32 %v3542, %v3782
      %v3937 = vadd.f32 %v3543, %v3787
      %v3938 = vadd.f32 %v3544, %v3792
      %v3939 = vadd.f32 %v3545, %v3797
      %v3940 = vadd.f32 %v3546, %v3802
      %v3941 = vadd.f32 %v3547, %v3807
      %v3942 = vadd.f32 %v3548, %v3812
      %v3943 = vadd.f32 %v3549, %v3817
      %v3944 = vadd.f32 %v3550, %v3822
      %v3945 = vadd.f32 %v3551, %v3827
      %v3946 = vadd.f32 %v3552, %v3832
      %v3947 = vadd.f32 %v3553, %v3837
      %v3948 = vadd.f32 %v3554, %v3842
      %v3949 = vadd.f32 %v3555, %v3847
      %v3950 = vadd.f32 %v3556, %v3852
      %v3951 = vadd.f32 %v3557, %v3857
      %v3952 = vadd.f32 %v3558, %v3862
      %v3953 = vadd.f32 %v3559, %v3867
      %v3954 = vadd.f32 %v3560, %v3872
      %v3955 = vadd.f32 %v3561, %v3877
      %v3956 = vadd.f32 %v3562, %v3882
      %v3957 = vadd.f32 %v3563, %v3887
      %v3958 = vadd.f32 %v3564, %v3892
      %v3959 = vadd.f32 %v3565, %v3897
      %v3960 = vadd.f32 %v3566, %v3902
      %v3961 = vadd.f32 %v3567, %v3907
      %v3962 = vadd.f32 %v3568, %v3912
      %v3963 = vadd.f32 %v3569, %v3917
      %v3964 = vadd.f32 %v3570, %v3922
      %v3965 = vadd.f32 %v3571, %v3927
      %v3966 = vadd.f32 %v3572, %v3932
      %v3967 = vpack.c.bf16 %v3936, %v3935
      %v3968 = vpack.c.bf16 %v3938, %v3937
      %v3969 = vpack.c.bf16 %v3940, %v3939
      %v3970 = vpack.c.bf16 %v3942, %v3941
      %v3971 = vpack.c.bf16 %v3944, %v3943
      %v3972 = vpack.c.bf16 %v3946, %v3945
      %v3973 = vpack.c.bf16 %v3948, %v3947
      %v3974 = vpack.c.bf16 %v3950, %v3949
      %v3975 = vpack.c.bf16 %v3952, %v3951
      %v3976 = vpack.c.bf16 %v3954, %v3953
      %v3977 = vpack.c.bf16 %v3956, %v3955
      %v3978 = vpack.c.bf16 %v3958, %v3957
      %v3979 = vpack.c.bf16 %v3960, %v3959
      %v3980 = vpack.c.bf16 %v3962, %v3961
      %v3981 = vpack.c.bf16 %v3964, %v3963
      %v3982 = vpack.c.bf16 %v3966, %v3965
      %v3999 = vunpack.c.l.b16 %v3967
      %v4000 = vunpack.c.h.b16 %v3967
      %v4001 = vunpack.c.l.b16 %v3968
      %v4002 = vunpack.c.h.b16 %v3968
      %v4003 = vunpack.c.l.b16 %v3969
      %v4004 = vunpack.c.h.b16 %v3969
      %v4005 = vunpack.c.l.b16 %v3970
      %v4006 = vunpack.c.h.b16 %v3970
      %v4007 = vunpack.c.l.b16 %v3971
      %v4008 = vunpack.c.h.b16 %v3971
      %v4009 = vunpack.c.l.b16 %v3972
      %v4010 = vunpack.c.h.b16 %v3972
      %v4011 = vunpack.c.l.b16 %v3973
      %v4012 = vunpack.c.h.b16 %v3973
      %v4013 = vunpack.c.l.b16 %v3974
      %v4014 = vunpack.c.h.b16 %v3974
      %v4015 = vunpack.c.l.b16 %v3975
      %v4016 = vunpack.c.h.b16 %v3975
      %v4017 = vunpack.c.l.b16 %v3976
      %v4018 = vunpack.c.h.b16 %v3976
      %v4019 = vunpack.c.l.b16 %v3977
      %v4020 = vunpack.c.h.b16 %v3977
      %v4021 = vunpack.c.l.b16 %v3978
      %v4022 = vunpack.c.h.b16 %v3978
      %v4023 = vunpack.c.l.b16 %v3979
      %v4024 = vunpack.c.h.b16 %v3979
      %v4025 = vunpack.c.l.b16 %v3980
      %v4026 = vunpack.c.h.b16 %v3980
      %v4027 = vunpack.c.l.b16 %v3981
      %v4028 = vunpack.c.h.b16 %v3981
      %v4029 = vunpack.c.l.b16 %v3982
      %v4030 = vunpack.c.h.b16 %v3982
      %v4031 = vpack.c.b16 %v3999, %v3999
      %v4032 = vpack.c.b16 %v4000, %v4000
      %v4033 = vpack.c.b16 %v4001, %v4001
      %v4034 = vpack.c.b16 %v4002, %v4002
      %v4035 = vpack.c.b16 %v4003, %v4003
      %v4036 = vpack.c.b16 %v4004, %v4004
      %v4037 = vpack.c.b16 %v4005, %v4005
      %v4038 = vpack.c.b16 %v4006, %v4006
      %v4039 = vpack.c.b16 %v4007, %v4007
      %v4040 = vpack.c.b16 %v4008, %v4008
      %v4041 = vpack.c.b16 %v4009, %v4009
      %v4042 = vpack.c.b16 %v4010, %v4010
      %v4043 = vpack.c.b16 %v4011, %v4011
      %v4044 = vpack.c.b16 %v4012, %v4012
      %v4045 = vpack.c.b16 %v4013, %v4013
      %v4046 = vpack.c.b16 %v4014, %v4014
      %v4047 = vpack.c.b16 %v4015, %v4015
      %v4048 = vpack.c.b16 %v4016, %v4016
      %v4049 = vpack.c.b16 %v4017, %v4017
      %v4050 = vpack.c.b16 %v4018, %v4018
      %v4051 = vpack.c.b16 %v4019, %v4019
      %v4052 = vpack.c.b16 %v4020, %v4020
      %v4053 = vpack.c.b16 %v4021, %v4021
      %v4054 = vpack.c.b16 %v4022, %v4022
      %v4055 = vpack.c.b16 %v4023, %v4023
      %v4056 = vpack.c.b16 %v4024, %v4024
      %v4057 = vpack.c.b16 %v4025, %v4025
      %v4058 = vpack.c.b16 %v4026, %v4026
      %v4059 = vpack.c.b16 %v4027, %v4027
      %v4060 = vpack.c.b16 %v4028, %v4028
      %v4061 = vpack.c.b16 %v4029, %v4029
      %v4062 = vpack.c.b16 %v4030, %v4030
      %vm4095 = vcmask 519168
      %4096 = vst.msk [vmem:[%s231] sm:$0xf] %vm4095, %v4031
      %4097 = vst.msk [vmem:[%s231 + $0x4] sm:$0xf] %vm4095, %v4032
      %4098 = vst.msk [vmem:[%s231 + $0x8] sm:$0xf] %vm4095, %v4033
      %4099 = vst.msk [vmem:[%s231 + $0xc] sm:$0xf] %vm4095, %v4034
      %4100 = vst.msk [vmem:[%s231 + $0x10] sm:$0xf] %vm4095, %v4035
      %4101 = vst.msk [vmem:[%s231 + $0x14] sm:$0xf] %vm4095, %v4036
      %4102 = vst.msk [vmem:[%s231 + $0x18] sm:$0xf] %vm4095, %v4037
      %4103 = vst.msk [vmem:[%s231 + $0x1c] sm:$0xf] %vm4095, %v4038
      %4104 = vst.msk [vmem:[%s231 + $0x20] sm:$0xf] %vm4095, %v4039
      %4105 = vst.msk [vmem:[%s231 + $0x24] sm:$0xf] %vm4095, %v4040
      %4106 = vst.msk [vmem:[%s231 + $0x28] sm:$0xf] %vm4095, %v4041
      %4107 = vst.msk [vmem:[%s231 + $0x2c] sm:$0xf] %vm4095, %v4042
      %4108 = vst.msk [vmem:[%s231 + $0x30] sm:$0xf] %vm4095, %v4043
      %4109 = vst.msk [vmem:[%s231 + $0x34] sm:$0xf] %vm4095, %v4044
      %4110 = vst.msk [vmem:[%s231 + $0x38] sm:$0xf] %vm4095, %v4045
      %4111 = vst.msk [vmem:[%s231 + $0x3c] sm:$0xf] %vm4095, %v4046
      %4112 = vst.msk [vmem:[%s231 + $0x40] sm:$0xf] %vm4095, %v4047
      %4113 = vst.msk [vmem:[%s231 + $0x44] sm:$0xf] %vm4095, %v4048
      %4114 = vst.msk [vmem:[%s231 + $0x48] sm:$0xf] %vm4095, %v4049
      %4115 = vst.msk [vmem:[%s231 + $0x4c] sm:$0xf] %vm4095, %v4050
      %4116 = vst.msk [vmem:[%s231 + $0x50] sm:$0xf] %vm4095, %v4051
      %4117 = vst.msk [vmem:[%s231 + $0x54] sm:$0xf] %vm4095, %v4052
      %4118 = vst.msk [vmem:[%s231 + $0x58] sm:$0xf] %vm4095, %v4053
      %4119 = vst.msk [vmem:[%s231 + $0x5c] sm:$0xf] %vm4095, %v4054
      %4120 = vst.msk [vmem:[%s231 + $0x60] sm:$0xf] %vm4095, %v4055
      %4121 = vst.msk [vmem:[%s231 + $0x64] sm:$0xf] %vm4095, %v4056
      %4122 = vst.msk [vmem:[%s231 + $0x68] sm:$0xf] %vm4095, %v4057
      %4123 = vst.msk [vmem:[%s231 + $0x6c] sm:$0xf] %vm4095, %v4058
      %4124 = vst.msk [vmem:[%s231 + $0x70] sm:$0xf] %vm4095, %v4059
      %4125 = vst.msk [vmem:[%s231 + $0x74] sm:$0xf] %vm4095, %v4060
      %4126 = vst.msk [vmem:[%s231 + $0x78] sm:$0xf] %vm4095, %v4061
      %4127 = vst.msk [vmem:[%s231 + $0x7c] sm:$0xf] %vm4095, %v4062
      %v4128 = vunpack.c.l.bf16 %v3967
      %v4129 = vunpack.c.h.bf16 %v3967
      %v4130 = vunpack.c.l.bf16 %v3968
      %v4131 = vunpack.c.h.bf16 %v3968
      %v4132 = vunpack.c.l.bf16 %v3969
      %v4133 = vunpack.c.h.bf16 %v3969
      %v4134 = vunpack.c.l.bf16 %v3970
      %v4135 = vunpack.c.h.bf16 %v3970
      %v4136 = vunpack.c.l.bf16 %v3971
      %v4137 = vunpack.c.h.bf16 %v3971
      %v4138 = vunpack.c.l.bf16 %v3972
      %v4139 = vunpack.c.h.bf16 %v3972
      %v4140 = vunpack.c.l.bf16 %v3973
      %v4141 = vunpack.c.h.bf16 %v3973
      %v4142 = vunpack.c.l.bf16 %v3974
      %v4143 = vunpack.c.h.bf16 %v3974
      %v4144 = vunpack.c.l.bf16 %v3975
      %v4145 = vunpack.c.h.bf16 %v3975
      %v4146 = vunpack.c.l.bf16 %v3976
      %v4147 = vunpack.c.h.bf16 %v3976
      %v4148 = vunpack.c.l.bf16 %v3977
      %v4149 = vunpack.c.h.bf16 %v3977
      %v4150 = vunpack.c.l.bf16 %v3978
      %v4151 = vunpack.c.h.bf16 %v3978
      %v4152 = vunpack.c.l.bf16 %v3979
      %v4153 = vunpack.c.h.bf16 %v3979
      %v4154 = vunpack.c.l.bf16 %v3980
      %v4155 = vunpack.c.h.bf16 %v3980
      %v4156 = vunpack.c.l.bf16 %v3981
      %v4157 = vunpack.c.h.bf16 %v3981
      %v4158 = vunpack.c.l.bf16 %v3982
      %v4159 = vunpack.c.h.bf16 %v3982
      %v4160 = vsel %vm410, %v4128, 0.0
      %v4161 = vsel %vm410, %v4129, 0.0
      %v4162 = vadd.f32 %v4160, %v4161
      %v4163 = vsel %vm410, %v4130, 0.0
      %v4164 = vadd.f32 %v4162, %v4163
      %v4165 = vsel %vm410, %v4131, 0.0
      %v4166 = vadd.f32 %v4164, %v4165
      %v4167 = vsel %vm410, %v4132, 0.0
      %v4168 = vadd.f32 %v4166, %v4167
      %v4169 = vsel %vm410, %v4133, 0.0
      %v4170 = vadd.f32 %v4168, %v4169
      %v4171 = vsel %vm410, %v4134, 0.0
      %v4172 = vadd.f32 %v4170, %v4171
      %v4173 = vsel %vm410, %v4135, 0.0
      %v4174 = vadd.f32 %v4172, %v4173
      %v4175 = vsel %vm410, %v4136, 0.0
      %v4176 = vadd.f32 %v4174, %v4175
      %v4177 = vsel %vm410, %v4137, 0.0
      %v4178 = vadd.f32 %v4176, %v4177
      %v4179 = vsel %vm410, %v4138, 0.0
      %v4180 = vadd.f32 %v4178, %v4179
      %v4181 = vsel %vm410, %v4139, 0.0
      %v4182 = vadd.f32 %v4180, %v4181
      %v4183 = vsel %vm410, %v4140, 0.0
      %v4184 = vadd.f32 %v4182, %v4183
      %v4185 = vsel %vm410, %v4141, 0.0
      %v4186 = vadd.f32 %v4184, %v4185
      %v4187 = vsel %vm410, %v4142, 0.0
      %v4188 = vadd.f32 %v4186, %v4187
      %v4189 = vsel %vm410, %v4143, 0.0
      %v4190 = vadd.f32 %v4188, %v4189
      %v4191 = vsel %vm410, %v4144, 0.0
      %v4192 = vadd.f32 %v4190, %v4191
      %v4193 = vsel %vm410, %v4145, 0.0
      %v4194 = vadd.f32 %v4192, %v4193
      %v4195 = vsel %vm410, %v4146, 0.0
      %v4196 = vadd.f32 %v4194, %v4195
      %v4197 = vsel %vm410, %v4147, 0.0
      %v4198 = vadd.f32 %v4196, %v4197
      %v4199 = vsel %vm410, %v4148, 0.0
      %v4200 = vadd.f32 %v4198, %v4199
      %v4201 = vsel %vm410, %v4149, 0.0
      %v4202 = vadd.f32 %v4200, %v4201
      %v4203 = vsel %vm410, %v4150, 0.0
      %v4204 = vadd.f32 %v4202, %v4203
      %v4205 = vsel %vm410, %v4151, 0.0
      %v4206 = vadd.f32 %v4204, %v4205
      %v4207 = vsel %vm410, %v4152, 0.0
      %v4208 = vadd.f32 %v4206, %v4207
      %v4209 = vsel %vm410, %v4153, 0.0
      %v4210 = vadd.f32 %v4208, %v4209
      %v4211 = vsel %vm410, %v4154, 0.0
      %v4212 = vadd.f32 %v4210, %v4211
      %v4213 = vsel %vm410, %v4155, 0.0
      %v4214 = vadd.f32 %v4212, %v4213
      %v4215 = vsel %vm410, %v4156, 0.0
      %v4216 = vadd.f32 %v4214, %v4215
      %v4217 = vsel %vm410, %v4157, 0.0
      %v4218 = vadd.f32 %v4216, %v4217
      %v4219 = vsel %vm410, %v4158, 0.0
      %v4220 = vadd.f32 %v4218, %v4219
      %v4221 = vsel %vm410, %v4159, 0.0
      %v4222 = vadd.f32 %v4220, %v4221
      %v4223 = vrot.slane %v4222, 4
      %v4224 = vadd.f32 %v4222, %v4223
      %v4225 = vrot.slane %v4224, 2
      %v4226 = vadd.f32 %v4224, %v4225
      %v4227 = vrot.slane %v4226, 1
      %v4228 = vadd.f32 %v4226, %v4227
      %v4229 = vmul.f32 %v4128, %v4128
      %v4230 = vmul.f32 %v4129, %v4129
      %v4231 = vmul.f32 %v4130, %v4130
      %v4232 = vmul.f32 %v4131, %v4131
      %v4233 = vmul.f32 %v4132, %v4132
      %v4234 = vmul.f32 %v4133, %v4133
      %v4235 = vmul.f32 %v4134, %v4134
      %v4236 = vmul.f32 %v4135, %v4135
      %v4237 = vmul.f32 %v4136, %v4136
      %v4238 = vmul.f32 %v4137, %v4137
      %v4239 = vmul.f32 %v4138, %v4138
      %v4240 = vmul.f32 %v4139, %v4139
      %v4241 = vmul.f32 %v4140, %v4140
      %v4242 = vmul.f32 %v4141, %v4141
      %v4243 = vmul.f32 %v4142, %v4142
      %v4244 = vmul.f32 %v4143, %v4143
      %v4245 = vmul.f32 %v4144, %v4144
      %v4246 = vmul.f32 %v4145, %v4145
      %v4247 = vmul.f32 %v4146, %v4146
      %v4248 = vmul.f32 %v4147, %v4147
      %v4249 = vmul.f32 %v4148, %v4148
      %v4250 = vmul.f32 %v4149, %v4149
      %v4251 = vmul.f32 %v4150, %v4150
      %v4252 = vmul.f32 %v4151, %v4151
      %v4253 = vmul.f32 %v4152, %v4152
      %v4254 = vmul.f32 %v4153, %v4153
      %v4255 = vmul.f32 %v4154, %v4154
      %v4256 = vmul.f32 %v4155, %v4155
      %v4257 = vmul.f32 %v4156, %v4156
      %v4258 = vmul.f32 %v4157, %v4157
      %v4259 = vmul.f32 %v4158, %v4158
      %v4260 = vmul.f32 %v4159, %v4159
      %v4261 = vsel %vm410, %v4229, 0.0
      %v4262 = vsel %vm410, %v4230, 0.0
      %v4263 = vadd.f32 %v4261, %v4262
      %v4264 = vsel %vm410, %v4231, 0.0
      %v4265 = vadd.f32 %v4263, %v4264
      %v4266 = vsel %vm410, %v4232, 0.0
      %v4267 = vadd.f32 %v4265, %v4266
      %v4268 = vsel %vm410, %v4233, 0.0
      %v4269 = vadd.f32 %v4267, %v4268
      %v4270 = vsel %vm410, %v4234, 0.0
      %v4271 = vadd.f32 %v4269, %v4270
      %v4272 = vsel %vm410, %v4235, 0.0
      %v4273 = vadd.f32 %v4271, %v4272
      %v4274 = vsel %vm410, %v4236, 0.0
      %v4275 = vadd.f32 %v4273, %v4274
      %v4276 = vsel %vm410, %v4237, 0.0
      %v4277 = vadd.f32 %v4275, %v4276
      %v4278 = vsel %vm410, %v4238, 0.0
      %v4279 = vadd.f32 %v4277, %v4278
      %v4280 = vsel %vm410, %v4239, 0.0
      %v4281 = vadd.f32 %v4279, %v4280
      %v4282 = vsel %vm410, %v4240, 0.0
      %v4283 = vadd.f32 %v4281, %v4282
      %v4284 = vsel %vm410, %v4241, 0.0
      %v4285 = vadd.f32 %v4283, %v4284
      %v4286 = vsel %vm410, %v4242, 0.0
      %v4287 = vadd.f32 %v4285, %v4286
      %v4288 = vsel %vm410, %v4243, 0.0
      %v4289 = vadd.f32 %v4287, %v4288
      %v4290 = vsel %vm410, %v4244, 0.0
      %v4291 = vadd.f32 %v4289, %v4290
      %v4292 = vsel %vm410, %v4245, 0.0
      %v4293 = vadd.f32 %v4291, %v4292
      %v4294 = vsel %vm410, %v4246, 0.0
      %v4295 = vadd.f32 %v4293, %v4294
      %v4296 = vsel %vm410, %v4247, 0.0
      %v4297 = vadd.f32 %v4295, %v4296
      %v4298 = vsel %vm410, %v4248, 0.0
      %v4299 = vadd.f32 %v4297, %v4298
      %v4300 = vsel %vm410, %v4249, 0.0
      %v4301 = vadd.f32 %v4299, %v4300
      %v4302 = vsel %vm410, %v4250, 0.0
      %v4303 = vadd.f32 %v4301, %v4302
      %v4304 = vsel %vm410, %v4251, 0.0
      %v4305 = vadd.f32 %v4303, %v4304
      %v4306 = vsel %vm410, %v4252, 0.0
      %v4307 = vadd.f32 %v4305, %v4306
      %v4308 = vsel %vm410, %v4253, 0.0
      %v4309 = vadd.f32 %v4307, %v4308
      %v4310 = vsel %vm410, %v4254, 0.0
      %v4311 = vadd.f32 %v4309, %v4310
      %v4312 = vsel %vm410, %v4255, 0.0
      %v4313 = vadd.f32 %v4311, %v4312
      %v4314 = vsel %vm410, %v4256, 0.0
      %v4315 = vadd.f32 %v4313, %v4314
      %v4316 = vsel %vm410, %v4257, 0.0
      %v4317 = vadd.f32 %v4315, %v4316
      %v4318 = vsel %vm410, %v4258, 0.0
      %v4319 = vadd.f32 %v4317, %v4318
      %v4320 = vsel %vm410, %v4259, 0.0
      %v4321 = vadd.f32 %v4319, %v4320
      %v4322 = vsel %vm410, %v4260, 0.0
      %v4323 = vadd.f32 %v4321, %v4322
      %v4324 = vrot.slane %v4323, 4
      %v4325 = vadd.f32 %v4323, %v4324
      %v4326 = vrot.slane %v4325, 2
      %v4327 = vadd.f32 %v4325, %v4326
      %v4328 = vrot.slane %v4327, 1
      %v4329 = vadd.f32 %v4327, %v4328
      %vm4330 = vcmask 1040384
      %v4331 = vsel %vm4330, %v4228, %v4329
      %4332 = vst.msk [vmem:[%s235] sm:$0x3] %vm413, %v4331
      %p4333 = scmp.lt.s32.totalorder %s17, 1
      %s4334 = scalar_select %p4333, %s17, 1
      %s4335 = smul.addr %s4334, 32
      %s4336 = smul.addr %s4335, 4
      %s4337 = scalar_lea.vmem %s4, %s4336
      %p4338 = scmp.lt.s32.totalorder %s17, 1
      %s4339 = scalar_select %p4338, %s17, 1
      %s4340 = smul.addr %s4339, 2
      %s4341 = scalar_lea.vmem %s5, %s4340
      // Predicated region
      $region37: #{bottleneck_forward.5} parent=35 // pred_check
        %p4342 = pneg %p124
      $region38: #{bottleneck_forward.5} parent=35 // pred_check_branch
        %4344 = sbr.rel (%p4342) target = $region40
      $region39: #{bottleneck_forward.5} parent=35 // pred_region
        _
      $region40: #{bottleneck_forward.5} parent=35 // pred_fallthru
        _
      // Predicated region
      $region41: #{bottleneck_forward.5} parent=35 // pred_check
        %p4345 = pneg %p150
      $region42: #{bottleneck_forward.5} parent=35 // pred_check_branch
        %4347 = sbr.rel (%p4345) target = $region44
      $region43: #{bottleneck_forward.5} parent=35 // pred_region
        _
      $region44: #{bottleneck_forward.5} parent=35 // pred_fallthru
        _
    $region36: #{bottleneck_forward.5} parent=5 // pred_fallthru
      _
    %p4348 = scmp.le.s32.totalorder 2, %s12
    // Predicated region
    $region45: #{bottleneck_forward.5} parent=5 // pred_check
      %p4349 = pneg %p4348
    $region46: #{bottleneck_forward.5} parent=5 // pred_check_branch
      %4351 = sbr.rel (%p4349) target = $region48
    $region47: #{bottleneck_forward.5} parent=5 // pred_region
      %s4352 = ssub.s32 %s12, 2
      // Predicated region
      $region49: #{bottleneck_forward.5} parent=47 // pred_check
        %p4353 = pneg %p130
      $region50: #{bottleneck_forward.5} parent=47 // pred_check_branch
        %4355 = sbr.rel (%p4353) target = $region52
      $region51: #{bottleneck_forward.5} parent=47 // pred_region
        %p4356 = scmp.lt.s32.totalorder %s18, 1
        %s4357 = scalar_select %p4356, %s18, 1
        %s4358 = smul.addr %s4357, 32
        %s4359 = smul.addr %s4358, 4
        %s4360 = scalar_lea.vmem %s4, %s4359
      $region52: #{bottleneck_forward.5} parent=47 // pred_fallthru
        _
      // Predicated region
      $region53: #{bottleneck_forward.5} parent=47 // pred_check
        %p4361 = pneg %p156
      $region54: #{bottleneck_forward.5} parent=47 // pred_check_branch
        %4363 = sbr.rel (%p4361) target = $region56
      $region55: #{bottleneck_forward.5} parent=47 // pred_region
        %p4364 = scmp.lt.s32.totalorder %s18, 1
        %s4365 = scalar_select %p4364, %s18, 1
        %s4366 = smul.addr %s4365, 2
        %s4367 = scalar_lea.vmem %s5, %s4366
      $region56: #{bottleneck_forward.5} parent=47 // pred_fallthru
        _
    $region48: #{bottleneck_forward.5} parent=5 // pred_fallthru
      _
  $region6: #{bottleneck_forward.5} parent=0 // loop_footer
    %s16 = sadd.s32 1, %s12
  $region7: #{bottleneck_forward.5} parent=0 // loop_footer_branch
    %11 = sbr.rel target = $region3
  $region8: #{bottleneck_forward.5} parent=0 // loop_exit
    _

</llo_original>
